<compile_context>
chip_gen: v6e
topology: v6e:2x2x1
jax: 0.10.0
libtpu: 0.0.40
codegen_flags: <defaults>
</compile_context>

<pallas_src>
import numpy as np

import jax
import jax.numpy as jnp
from jax.experimental import pallas as pl
from jax.experimental.pallas import tpu as pltpu

# ----------------------------- configuration --------------------------------
LAYERS = 2
HIDDEN = 32            # LSTM hidden size
ZDIM = 8               # latent dim (z params = 2 * ZDIM)
C0 = 4                 # encoder-0 conv output channels
IMG_H, IMG_W, CHANS = 16, 16, 1
IMG_FLAT = IMG_H * IMG_W * CHANS            # 256
N_CONTEXT = 2
T_STEPS = 4
F0 = (IMG_H // 2) * (IMG_W // 2) * C0       # 256 : flattened layer-0 features
F1 = 64                                     # layer-1 feature dim
FEAT_DIMS = [F0, F1]
DEC_OUT_DIMS = [IMG_FLAT, F0]
DEC_OUT_ACTS = ["sigmoid", "relu"]

# flat weight ordering (wrapper passes them positionally; kernel rebuilds dict)
WEIGHT_NAMES = tuple(
    ["enc0_w", "enc0_b", "enc1_w", "enc1_b"]
    + [f"init_{k}{l}" for l in range(LAYERS) for k in ("w", "b")]
    + [f"{net}_{k}{l}" for net in ("q", "p") for l in range(LAYERS)
       for k in ("wx", "wh", "b", "hw", "hb")]
    + [f"d_{k}{l}" for l in range(LAYERS) for k in ("wx", "wh", "b", "ow", "ob")]
)


# ------------------------------- fused kernel --------------------------------
def _fused_kernel(*refs):
    nw = len(WEIGHT_NAMES)
    ctx_ref = refs[0]                                   # (N_CONTEXT, B, 256)
    seq_ref = refs[1]                                   # (1, B, 256)  frame t
    W = dict(zip(WEIGHT_NAMES, refs[2:2 + nw]))
    pred0_ref = refs[2 + nw]                            # (B, 256)
    zp_refs = refs[3 + nw:3 + nw + LAYERS]              # L x (B, 2*ZDIM)
    enc_s = refs[3 + nw + LAYERS:3 + nw + 2 * LAYERS]   # (B,F0), (B,F1)
    qh_s, qc_s, ph_s, pc_s, dh_s, dc_s = refs[3 + nw + 2 * LAYERS:]  # (L,B,H)

    H = HIDDEN
    t = pl.program_id(0)

    def matmul(x, w_ref, b_ref):
        return (jnp.dot(x, w_ref[...], preferred_element_type=jnp.float32)
                + b_ref[...])

    def lstm(x, h, c, wx_ref, wh_ref, b_ref):
        gates = (jnp.dot(x, wx_ref[...], preferred_element_type=jnp.float32)
                 + jnp.dot(h, wh_ref[...], preferred_element_type=jnp.float32)
                 + b_ref[...])
        i = jax.nn.sigmoid(gates[:, 0 * H:1 * H])
        f = jax.nn.sigmoid(gates[:, 1 * H:2 * H])
        g = jnp.tanh(gates[:, 2 * H:3 * H])
        o = jax.nn.sigmoid(gates[:, 3 * H:4 * H])
        c_new = f * c + i * g
        h_new = o * jnp.tanh(c_new)
        return h_new, c_new

    def encode(l, x):
        if l == 0:   # conv folded into a dense (256,256) matmul at init time
            return jnp.maximum(matmul(x, W["enc0_w"], W["enc0_b"]), 0.0)
        return jnp.maximum(matmul(x, W["enc1_w"], W["enc1_b"]), 0.0)

    # ------------- context / init phase (torch.no_grad() region), t == 0 -----
    @pl.when(t == 0)
    def _context_init():
        for c in range(N_CONTEXT):
            feat = None
            for l in range(LAYERS):
                feat = encode(l, ctx_ref[c] if l == 0 else feat)
                enc_s[l][...] = feat
                # fused init heads, layout [d_h | d_c | q_h | q_c | p_h | p_c]
                init = jnp.tanh(matmul(feat, W[f"init_w{l}"], W[f"init_b{l}"]))
                dh_s[l] = init[:, 0 * H:1 * H]
                dc_s[l] = init[:, 1 * H:2 * H]
                qh_s[l] = init[:, 2 * H:3 * H]
                qc_s[l] = init[:, 3 * H:4 * H]
                ph_s[l] = init[:, 4 * H:5 * H]
                pc_s[l] = init[:, 5 * H:6 * H]
        for zp_ref in zp_refs:          # p_net has not run yet at t == 0
            zp_ref[...] = jnp.zeros_like(zp_ref)

    # ---------------------------- one rollout step ----------------------------
    # enc_prev aliases enc in the reference, so the prior sees the same features
    # as the posterior at this step.
    enc_feat = [enc_s[l][...] for l in range(LAYERS)]
    preds = [None] * LAYERS

    for l_r in reversed(range(LAYERS)):                 # top-down pass
        f_in = enc_feat[l_r]

        # posterior RNN + z head
        h_new, c_new = lstm(f_in, qh_s[l_r], qc_s[l_r],
                            W[f"q_wx{l_r}"], W[f"q_wh{l_r}"], W[f"q_b{l_r}"])
        qh_s[l_r] = h_new
        qc_s[l_r] = c_new
        z_qparams = matmul(h_new, W[f"q_hw{l_r}"], W[f"q_hb{l_r}"])
        qz_sample = z_qparams[:, :ZDIM]                 # eval: Gaussian mean

        # prior RNN + z head (only for t > 0, as in the reference)
        @pl.when(t > 0)
        def _prior(l_r=l_r, f_in=f_in):
            ph_new, pc_new = lstm(f_in, ph_s[l_r], pc_s[l_r],
                                  W[f"p_wx{l_r}"], W[f"p_wh{l_r}"],
                                  W[f"p_b{l_r}"])
            ph_s[l_r] = ph_new
            pc_s[l_r] = pc_new
            zp_refs[l_r][...] = matmul(ph_new, W[f"p_hw{l_r}"],
                                       W[f"p_hb{l_r}"])

        # decoder RNN + output head
        dh_new, dc_new = lstm(qz_sample, dh_s[l_r], dc_s[l_r],
                              W[f"d_wx{l_r}"], W[f"d_wh{l_r}"], W[f"d_b{l_r}"])
        dh_s[l_r] = dh_new
        dc_s[l_r] = dc_new
        out = matmul(dh_new, W[f"d_ow{l_r}"], W[f"d_ob{l_r}"])
        if DEC_OUT_ACTS[l_r] == "sigmoid":
            preds[l_r] = jax.nn.sigmoid(out)
        else:
            preds[l_r] = jnp.maximum(out, 0.0)

    pred0_ref[...] = preds[0]

    # bottom-up PredNet error units + re-encode (fused |diff| -> matmul)
    feat = None
    for l in range(LAYERS):
        target = seq_ref[0] if l == 0 else feat
        err = jnp.abs(target - preds[l])
        feat = encode(l, err)
        enc_s[l][...] = feat


# ------------------------------ forward wrapper -------------------------------
def hvrnn_prednet_forward(params, imseq):
    """imseq: (B, N_CONTEXT + T, H, W, C) NHWC. Returns (z_pparams, pred0)."""
    B = imseq.shape[0]
    T = imseq.shape[1] - N_CONTEXT
    assert T >= 2, "z_pparams requires at least 2 rollout steps"

    ctx = jnp.transpose(
        imseq[:, :N_CONTEXT].reshape(B, N_CONTEXT, IMG_FLAT), (1, 0, 2))
    seq = jnp.transpose(
        imseq[:, N_CONTEXT:].reshape(B, T, IMG_FLAT), (1, 0, 2))
    weights = [params[n] for n in WEIGHT_NAMES]

    def full_spec(shape):           # whole array, constant block index per step
        nd = len(shape)
        return pl.BlockSpec(shape, lambda t, _n=nd: (0,) * _n)

    in_specs = ([full_spec(ctx.shape),
                 pl.BlockSpec((1, B, IMG_FLAT), lambda t: (t, 0, 0))]
                + [full_spec(w.shape) for w in weights])

    out_shape = ((jax.ShapeDtypeStruct((B, IMG_FLAT), jnp.float32),)
                 + tuple(jax.ShapeDtypeStruct((B, 2 * ZDIM), jnp.float32)
                         for _ in range(LAYERS)))
    out_specs = ((pl.BlockSpec((B, IMG_FLAT), lambda t: (0, 0)),)
                 + tuple(pl.BlockSpec((B, 2 * ZDIM), lambda t: (0, 0))
                         for _ in range(LAYERS)))

    scratch_shapes = (
        [pltpu.VMEM((B, FEAT_DIMS[l]), jnp.float32) for l in range(LAYERS)]
        + [pltpu.VMEM((LAYERS, B, HIDDEN), jnp.float32) for _ in range(6)])

    outs = pl.pallas_call(
        _fused_kernel,
        out_shape=out_shape,
        grid_spec=pltpu.PrefetchScalarGridSpec(
            num_scalar_prefetch=0,
            grid=(T,),
            in_specs=in_specs,
            out_specs=out_specs,
            scratch_shapes=scratch_shapes),
        compiler_params=pltpu.CompilerParams(
            dimension_semantics=("arbitrary",)),   # time axis is sequential
    )(ctx, seq, *weights)

    pred0 = outs[0].reshape(B, IMG_H, IMG_W, CHANS)
    z_pparams = list(outs[1:])
    return z_pparams, pred0


# ---------------------------- parameter init ---------------------------------
def _conv3x3_s2_as_matrix(w, b):
    """Fold a 3x3 / stride-2 / pad-1 conv (CHANS->C0) into a dense matmul."""
    w = np.asarray(w, np.float32)
    b = np.asarray(b, np.float32)
    Ho, Wo = IMG_H // 2, IMG_W // 2
    M = np.zeros((IMG_H * IMG_W * CHANS, Ho * Wo * C0), np.float32)
    for oi in range(Ho):
        for oj in range(Wo):
            col = (oi * Wo + oj) * C0
            for di in range(3):
                for dj in range(3):
                    ii = 2 * oi + di - 1
                    jj = 2 * oj + dj - 1
                    if 0 <= ii < IMG_H and 0 <= jj < IMG_W:
                        for ci in range(CHANS):
                            row = (ii * IMG_W + jj) * CHANS + ci
                            M[row, col:col + C0] += w[di, dj, ci, :]
    bias = np.tile(b, Ho * Wo).reshape(1, -1).astype(np.float32)
    return jnp.asarray(M), jnp.asarray(bias)


def init_params(key):
    keys = iter(jax.random.split(key, 64))

    def normal(shape, scale=0.1):
        return scale * jax.random.normal(next(keys), shape, jnp.float32)

    p = {}
    # encoder 0: 3x3 s2 conv folded to a dense (256, 256) matrix + relu
    conv_w = normal((3, 3, CHANS, C0))
    conv_b = jnp.zeros((C0,), jnp.float32)
    p["enc0_w"], p["enc0_b"] = _conv3x3_s2_as_matrix(conv_w, conv_b)
    # encoder 1: dense 256 -> 64 + relu
    p["enc1_w"] = normal((F0, F1))
    p["enc1_b"] = jnp.zeros((1, F1), jnp.float32)

    # fused init heads per layer, layout [d_h | d_c | q_h | q_c | p_h | p_c]
    for l in range(LAYERS):
        p[f"init_w{l}"] = jnp.concatenate(
            [normal((FEAT_DIMS[l], HIDDEN)) for _ in range(6)], axis=1)
        p[f"init_b{l}"] = jnp.zeros((1, 6 * HIDDEN), jnp.float32)

    # posterior / prior LSTM cells + z-param heads
    for net in ("q", "p"):
        for l in range(LAYERS):
            p[f"{net}_wx{l}"] = normal((FEAT_DIMS[l], 4 * HIDDEN))
            p[f"{net}_wh{l}"] = normal((HIDDEN, 4 * HIDDEN))
            p[f"{net}_b{l}"] = jnp.zeros((1, 4 * HIDDEN), jnp.float32)
            p[f"{net}_hw{l}"] = normal((HIDDEN, 2 * ZDIM))
            p[f"{net}_hb{l}"] = jnp.zeros((1, 2 * ZDIM), jnp.float32)

    # decoder LSTM cells + output heads
    for l in range(LAYERS):
        p[f"d_wx{l}"] = normal((ZDIM, 4 * HIDDEN))
        p[f"d_wh{l}"] = normal((HIDDEN, 4 * HIDDEN))
        p[f"d_b{l}"] = jnp.zeros((1, 4 * HIDDEN), jnp.float32)
        p[f"d_ow{l}"] = normal((HIDDEN, DEC_OUT_DIMS[l]))
        p[f"d_ob{l}"] = jnp.zeros((1, DEC_OUT_DIMS[l]), jnp.float32)
    return p


# ----------------------------------- main -------------------------------------
if __name__ == "__main__":
    key = jax.random.PRNGKey(0)
    kparams, kdata = jax.random.split(key)
    params = init_params(kparams)

    B = 2
    imseq = jax.random.uniform(
        kdata, (B, N_CONTEXT + T_STEPS, IMG_H, IMG_W, CHANS), jnp.float32)

    fwd = jax.jit(hvrnn_prednet_forward)
    z_pparams, pred0 = fwd(params, imseq)
    jax.block_until_ready(pred0)
    jax.block_until_ready(z_pparams)

    assert pred0.shape == (B, IMG_H, IMG_W, CHANS)
    for l in range(LAYERS):
        assert z_pparams[l].shape == (B, 2 * ZDIM)
    print("KERNEL_OK")
</pallas_src>

<mosaic_0001>
module attributes {stable_mosaic.version = 11 : i64} {
  func.func @_fused_kernel(%arg0: i32, %arg1: memref<2x2x256xf32, #tpu.memory_space<vmem>>, %arg2: memref<1x2x256xf32, #tpu.memory_space<vmem>>, %arg3: memref<256x256xf32, #tpu.memory_space<vmem>>, %arg4: memref<1x256xf32, #tpu.memory_space<vmem>>, %arg5: memref<256x64xf32, #tpu.memory_space<vmem>>, %arg6: memref<1x64xf32, #tpu.memory_space<vmem>>, %arg7: memref<256x192xf32, #tpu.memory_space<vmem>>, %arg8: memref<1x192xf32, #tpu.memory_space<vmem>>, %arg9: memref<64x192xf32, #tpu.memory_space<vmem>>, %arg10: memref<1x192xf32, #tpu.memory_space<vmem>>, %arg11: memref<256x128xf32, #tpu.memory_space<vmem>>, %arg12: memref<32x128xf32, #tpu.memory_space<vmem>>, %arg13: memref<1x128xf32, #tpu.memory_space<vmem>>, %arg14: memref<32x16xf32, #tpu.memory_space<vmem>>, %arg15: memref<1x16xf32, #tpu.memory_space<vmem>>, %arg16: memref<64x128xf32, #tpu.memory_space<vmem>>, %arg17: memref<32x128xf32, #tpu.memory_space<vmem>>, %arg18: memref<1x128xf32, #tpu.memory_space<vmem>>, %arg19: memref<32x16xf32, #tpu.memory_space<vmem>>, %arg20: memref<1x16xf32, #tpu.memory_space<vmem>>, %arg21: memref<256x128xf32, #tpu.memory_space<vmem>>, %arg22: memref<32x128xf32, #tpu.memory_space<vmem>>, %arg23: memref<1x128xf32, #tpu.memory_space<vmem>>, %arg24: memref<32x16xf32, #tpu.memory_space<vmem>>, %arg25: memref<1x16xf32, #tpu.memory_space<vmem>>, %arg26: memref<64x128xf32, #tpu.memory_space<vmem>>, %arg27: memref<32x128xf32, #tpu.memory_space<vmem>>, %arg28: memref<1x128xf32, #tpu.memory_space<vmem>>, %arg29: memref<32x16xf32, #tpu.memory_space<vmem>>, %arg30: memref<1x16xf32, #tpu.memory_space<vmem>>, %arg31: memref<8x128xf32, #tpu.memory_space<vmem>>, %arg32: memref<32x128xf32, #tpu.memory_space<vmem>>, %arg33: memref<1x128xf32, #tpu.memory_space<vmem>>, %arg34: memref<32x256xf32, #tpu.memory_space<vmem>>, %arg35: memref<1x256xf32, #tpu.memory_space<vmem>>, %arg36: memref<8x128xf32, #tpu.memory_space<vmem>>, %arg37: memref<32x128xf32, #tpu.memory_space<vmem>>, %arg38: memref<1x128xf32, #tpu.memory_space<vmem>>, %arg39: memref<32x256xf32, #tpu.memory_space<vmem>>, %arg40: memref<1x256xf32, #tpu.memory_space<vmem>>, %arg41: memref<2x256xf32, #tpu.memory_space<vmem>>, %arg42: memref<2x16xf32, #tpu.memory_space<vmem>>, %arg43: memref<2x16xf32, #tpu.memory_space<vmem>>, %arg44: memref<2x256xf32, #tpu.memory_space<vmem>>, %arg45: memref<2x64xf32, #tpu.memory_space<vmem>>, %arg46: memref<2x2x32xf32, #tpu.memory_space<vmem>>, %arg47: memref<2x2x32xf32, #tpu.memory_space<vmem>>, %arg48: memref<2x2x32xf32, #tpu.memory_space<vmem>>, %arg49: memref<2x2x32xf32, #tpu.memory_space<vmem>>, %arg50: memref<2x2x32xf32, #tpu.memory_space<vmem>>, %arg51: memref<2x2x32xf32, #tpu.memory_space<vmem>>) attributes {dimension_semantics = [#tpu.dimension_semantics<arbitrary>], iteration_bounds = array<i64: 4>, scalar_prefetch = 0 : i64, scratch_operands = 8 : i64, tpu.core_type = #tpu.core_type<tc>, window_params = [{pipeline_mode = #tpu.pipeline_mode<synchronous>, transform_indices = @transform_0, window_bounds = array<i64: 2, 2, 256>}, {transform_indices = @transform_1, window_bounds = array<i64: 1, 2, 256>}, {pipeline_mode = #tpu.pipeline_mode<synchronous>, transform_indices = @transform_2, window_bounds = array<i64: 256, 256>}, {pipeline_mode = #tpu.pipeline_mode<synchronous>, transform_indices = @transform_3, window_bounds = array<i64: 1, 256>}, {pipeline_mode = #tpu.pipeline_mode<synchronous>, transform_indices = @transform_4, window_bounds = array<i64: 256, 64>}, {pipeline_mode = #tpu.pipeline_mode<synchronous>, transform_indices = @transform_5, window_bounds = array<i64: 1, 64>}, {pipeline_mode = #tpu.pipeline_mode<synchronous>, transform_indices = @transform_6, window_bounds = array<i64: 256, 192>}, {pipeline_mode = #tpu.pipeline_mode<synchronous>, transform_indices = @transform_7, window_bounds = array<i64: 1, 192>}, {pipeline_mode = #tpu.pipeline_mode<synchronous>, transform_indices = @transform_8, window_bounds = array<i64: 64, 192>}, {pipeline_mode = #tpu.pipeline_mode<synchronous>, transform_indices = @transform_9, window_bounds = array<i64: 1, 192>}, {pipeline_mode = #tpu.pipeline_mode<synchronous>, transform_indices = @transform_10, window_bounds = array<i64: 256, 128>}, {pipeline_mode = #tpu.pipeline_mode<synchronous>, transform_indices = @transform_11, window_bounds = array<i64: 32, 128>}, {pipeline_mode = #tpu.pipeline_mode<synchronous>, transform_indices = @transform_12, window_bounds = array<i64: 1, 128>}, {pipeline_mode = #tpu.pipeline_mode<synchronous>, transform_indices = @transform_13, window_bounds = array<i64: 32, 16>}, {pipeline_mode = #tpu.pipeline_mode<synchronous>, transform_indices = @transform_14, window_bounds = array<i64: 1, 16>}, {pipeline_mode = #tpu.pipeline_mode<synchronous>, transform_indices = @transform_15, window_bounds = array<i64: 64, 128>}, {pipeline_mode = #tpu.pipeline_mode<synchronous>, transform_indices = @transform_16, window_bounds = array<i64: 32, 128>}, {pipeline_mode = #tpu.pipeline_mode<synchronous>, transform_indices = @transform_17, window_bounds = array<i64: 1, 128>}, {pipeline_mode = #tpu.pipeline_mode<synchronous>, transform_indices = @transform_18, window_bounds = array<i64: 32, 16>}, {pipeline_mode = #tpu.pipeline_mode<synchronous>, transform_indices = @transform_19, window_bounds = array<i64: 1, 16>}, {pipeline_mode = #tpu.pipeline_mode<synchronous>, transform_indices = @transform_20, window_bounds = array<i64: 256, 128>}, {pipeline_mode = #tpu.pipeline_mode<synchronous>, transform_indices = @transform_21, window_bounds = array<i64: 32, 128>}, {pipeline_mode = #tpu.pipeline_mode<synchronous>, transform_indices = @transform_22, window_bounds = array<i64: 1, 128>}, {pipeline_mode = #tpu.pipeline_mode<synchronous>, transform_indices = @transform_23, window_bounds = array<i64: 32, 16>}, {pipeline_mode = #tpu.pipeline_mode<synchronous>, transform_indices = @transform_24, window_bounds = array<i64: 1, 16>}, {pipeline_mode = #tpu.pipeline_mode<synchronous>, transform_indices = @transform_25, window_bounds = array<i64: 64, 128>}, {pipeline_mode = #tpu.pipeline_mode<synchronous>, transform_indices = @transform_26, window_bounds = array<i64: 32, 128>}, {pipeline_mode = #tpu.pipeline_mode<synchronous>, transform_indices = @transform_27, window_bounds = array<i64: 1, 128>}, {pipeline_mode = #tpu.pipeline_mode<synchronous>, transform_indices = @transform_28, window_bounds = array<i64: 32, 16>}, {pipeline_mode = #tpu.pipeline_mode<synchronous>, transform_indices = @transform_29, window_bounds = array<i64: 1, 16>}, {pipeline_mode = #tpu.pipeline_mode<synchronous>, transform_indices = @transform_30, window_bounds = array<i64: 8, 128>}, {pipeline_mode = #tpu.pipeline_mode<synchronous>, transform_indices = @transform_31, window_bounds = array<i64: 32, 128>}, {pipeline_mode = #tpu.pipeline_mode<synchronous>, transform_indices = @transform_32, window_bounds = array<i64: 1, 128>}, {pipeline_mode = #tpu.pipeline_mode<synchronous>, transform_indices = @transform_33, window_bounds = array<i64: 32, 256>}, {pipeline_mode = #tpu.pipeline_mode<synchronous>, transform_indices = @transform_34, window_bounds = array<i64: 1, 256>}, {pipeline_mode = #tpu.pipeline_mode<synchronous>, transform_indices = @transform_35, window_bounds = array<i64: 8, 128>}, {pipeline_mode = #tpu.pipeline_mode<synchronous>, transform_indices = @transform_36, window_bounds = array<i64: 32, 128>}, {pipeline_mode = #tpu.pipeline_mode<synchronous>, transform_indices = @transform_37, window_bounds = array<i64: 1, 128>}, {pipeline_mode = #tpu.pipeline_mode<synchronous>, transform_indices = @transform_38, window_bounds = array<i64: 32, 256>}, {pipeline_mode = #tpu.pipeline_mode<synchronous>, transform_indices = @transform_39, window_bounds = array<i64: 1, 256>}, {pipeline_mode = #tpu.pipeline_mode<synchronous>, transform_indices = @transform_40, window_bounds = array<i64: 2, 256>}, {pipeline_mode = #tpu.pipeline_mode<synchronous>, transform_indices = @transform_41, window_bounds = array<i64: 2, 16>}, {pipeline_mode = #tpu.pipeline_mode<synchronous>, transform_indices = @transform_42, window_bounds = array<i64: 2, 16>}]} {
    %c0_i32 = arith.constant 0 : i32
    %0 = arith.cmpi eq, %arg0, %c0_i32 : i32
    %1 = arith.extui %0 : i1 to i32
    %c0_i32_0 = arith.constant 0 : i32
    %2 = arith.cmpi ne, %1, %c0_i32_0 : i32
    scf.if %2 {
      %c0_141 = arith.constant 0 : index
      %c0_142 = arith.constant 0 : index
      %c0_143 = arith.constant 0 : index
      %235 = vector.load %arg1[%c0_141, %c0_142, %c0_143] : memref<2x2x256xf32, #tpu.memory_space<vmem>>, vector<1x2x256xf32>
      %236 = vector.shape_cast %235 : vector<1x2x256xf32> to vector<2x256xf32>
      %c0_144 = arith.constant 0 : index
      %c0_145 = arith.constant 0 : index
      %237 = vector.load %arg3[%c0_144, %c0_145] : memref<256x256xf32, #tpu.memory_space<vmem>>, vector<256x256xf32>
      %cst_146 = arith.constant dense<0.000000e+00> : vector<2x256xf32>
      %238 = tpu.matmul %236, %237, %cst_146 {dimension_numbers = #tpu.dot_dimension_numbers<[1], [0], [0], [1], [0, 0, 1, 1], [], []>} : vector<2x256xf32>, vector<256x256xf32>, vector<2x256xf32> -> vector<2x256xf32>
      %c0_147 = arith.constant 0 : index
      %c0_148 = arith.constant 0 : index
      %239 = vector.load %arg4[%c0_147, %c0_148] : memref<1x256xf32, #tpu.memory_space<vmem>>, vector<1x256xf32>
      %240 = vector.broadcast %239 : vector<1x256xf32> to vector<2x256xf32>
      %241 = arith.addf %238, %240 : vector<2x256xf32>
      %cst_149 = arith.constant 0.000000e+00 : f32
      %242 = vector.broadcast %cst_149 : f32 to vector<2x256xf32>
      %243 = arith.maximumf %241, %242 : vector<2x256xf32>
      %c0_150 = arith.constant 0 : index
      %c0_151 = arith.constant 0 : index
      %244 = vector.load %arg44[%c0_150, %c0_151] : memref<2x256xf32, #tpu.memory_space<vmem>>, vector<2x256xf32>
      tpu.vector_store %arg44[%c0_150, %c0_151], %243 {strides = array<i32>} : memref<2x256xf32, #tpu.memory_space<vmem>>, vector<2x256xf32>,
      %c0_152 = arith.constant 0 : index
      %c0_153 = arith.constant 0 : index
      %245 = vector.load %arg7[%c0_152, %c0_153] : memref<256x192xf32, #tpu.memory_space<vmem>>, vector<256x192xf32>
      %cst_154 = arith.constant dense<0.000000e+00> : vector<2x192xf32>
      %246 = tpu.matmul %243, %245, %cst_154 {dimension_numbers = #tpu.dot_dimension_numbers<[1], [0], [0], [1], [0, 0, 1, 1], [], []>} : vector<2x256xf32>, vector<256x192xf32>, vector<2x192xf32> -> vector<2x192xf32>
      %c0_155 = arith.constant 0 : index
      %c0_156 = arith.constant 0 : index
      %247 = vector.load %arg8[%c0_155, %c0_156] : memref<1x192xf32, #tpu.memory_space<vmem>>, vector<1x192xf32>
      %248 = vector.broadcast %247 : vector<1x192xf32> to vector<2x192xf32>
      %249 = arith.addf %246, %248 : vector<2x192xf32>
      %250 = math.tanh %249 : vector<2x192xf32>
      %251 = vector.extract_strided_slice %250 {offsets = [0, 0], sizes = [2, 32], strides = [1, 1]} : vector<2x192xf32> to vector<2x32xf32>
      %c0_157 = arith.constant 0 : index
      %c0_158 = arith.constant 0 : index
      %c0_159 = arith.constant 0 : index
      %252 = vector.load %arg50[%c0_157, %c0_158, %c0_159] : memref<2x2x32xf32, #tpu.memory_space<vmem>>, vector<1x2x32xf32>
      %253 = vector.shape_cast %252 : vector<1x2x32xf32> to vector<2x32xf32>
      %254 = vector.shape_cast %251 : vector<2x32xf32> to vector<1x2x32xf32>
      tpu.vector_store %arg50[%c0_157, %c0_158, %c0_159], %254 {strides = array<i32>} : memref<2x2x32xf32, #tpu.memory_space<vmem>>, vector<1x2x32xf32>,
      %255 = vector.extract_strided_slice %250 {offsets = [0, 32], sizes = [2, 32], strides = [1, 1]} : vector<2x192xf32> to vector<2x32xf32>
      %c0_160 = arith.constant 0 : index
      %c0_161 = arith.constant 0 : index
      %c0_162 = arith.constant 0 : index
      %256 = vector.load %arg51[%c0_160, %c0_161, %c0_162] : memref<2x2x32xf32, #tpu.memory_space<vmem>>, vector<1x2x32xf32>
      %257 = vector.shape_cast %256 : vector<1x2x32xf32> to vector<2x32xf32>
      %258 = vector.shape_cast %255 : vector<2x32xf32> to vector<1x2x32xf32>
      tpu.vector_store %arg51[%c0_160, %c0_161, %c0_162], %258 {strides = array<i32>} : memref<2x2x32xf32, #tpu.memory_space<vmem>>, vector<1x2x32xf32>,
      %259 = vector.extract_strided_slice %250 {offsets = [0, 64], sizes = [2, 32], strides = [1, 1]} : vector<2x192xf32> to vector<2x32xf32>
      %c0_163 = arith.constant 0 : index
      %c0_164 = arith.constant 0 : index
      %c0_165 = arith.constant 0 : index
      %260 = vector.load %arg46[%c0_163, %c0_164, %c0_165] : memref<2x2x32xf32, #tpu.memory_space<vmem>>, vector<1x2x32xf32>
      %261 = vector.shape_cast %260 : vector<1x2x32xf32> to vector<2x32xf32>
      %262 = vector.shape_cast %259 : vector<2x32xf32> to vector<1x2x32xf32>
      tpu.vector_store %arg46[%c0_163, %c0_164, %c0_165], %262 {strides = array<i32>} : memref<2x2x32xf32, #tpu.memory_space<vmem>>, vector<1x2x32xf32>,
      %263 = vector.extract_strided_slice %250 {offsets = [0, 96], sizes = [2, 32], strides = [1, 1]} : vector<2x192xf32> to vector<2x32xf32>
      %c0_166 = arith.constant 0 : index
      %c0_167 = arith.constant 0 : index
      %c0_168 = arith.constant 0 : index
      %264 = vector.load %arg47[%c0_166, %c0_167, %c0_168] : memref<2x2x32xf32, #tpu.memory_space<vmem>>, vector<1x2x32xf32>
      %265 = vector.shape_cast %264 : vector<1x2x32xf32> to vector<2x32xf32>
      %266 = vector.shape_cast %263 : vector<2x32xf32> to vector<1x2x32xf32>
      tpu.vector_store %arg47[%c0_166, %c0_167, %c0_168], %266 {strides = array<i32>} : memref<2x2x32xf32, #tpu.memory_space<vmem>>, vector<1x2x32xf32>,
      %267 = vector.extract_strided_slice %250 {offsets = [0, 128], sizes = [2, 32], strides = [1, 1]} : vector<2x192xf32> to vector<2x32xf32>
      %c0_169 = arith.constant 0 : index
      %c0_170 = arith.constant 0 : index
      %c0_171 = arith.constant 0 : index
      %268 = vector.load %arg48[%c0_169, %c0_170, %c0_171] : memref<2x2x32xf32, #tpu.memory_space<vmem>>, vector<1x2x32xf32>
      %269 = vector.shape_cast %268 : vector<1x2x32xf32> to vector<2x32xf32>
      %270 = vector.shape_cast %267 : vector<2x32xf32> to vector<1x2x32xf32>
      tpu.vector_store %arg48[%c0_169, %c0_170, %c0_171], %270 {strides = array<i32>} : memref<2x2x32xf32, #tpu.memory_space<vmem>>, vector<1x2x32xf32>,
      %271 = vector.extract_strided_slice %250 {offsets = [0, 160], sizes = [2, 32], strides = [1, 1]} : vector<2x192xf32> to vector<2x32xf32>
      %c0_172 = arith.constant 0 : index
      %c0_173 = arith.constant 0 : index
      %c0_174 = arith.constant 0 : index
      %272 = vector.load %arg49[%c0_172, %c0_173, %c0_174] : memref<2x2x32xf32, #tpu.memory_space<vmem>>, vector<1x2x32xf32>
      %273 = vector.shape_cast %272 : vector<1x2x32xf32> to vector<2x32xf32>
      %274 = vector.shape_cast %271 : vector<2x32xf32> to vector<1x2x32xf32>
      tpu.vector_store %arg49[%c0_172, %c0_173, %c0_174], %274 {strides = array<i32>} : memref<2x2x32xf32, #tpu.memory_space<vmem>>, vector<1x2x32xf32>,
      %c0_175 = arith.constant 0 : index
      %c0_176 = arith.constant 0 : index
      %275 = vector.load %arg5[%c0_175, %c0_176] : memref<256x64xf32, #tpu.memory_space<vmem>>, vector<256x64xf32>
      %cst_177 = arith.constant dense<0.000000e+00> : vector<2x64xf32>
      %276 = tpu.matmul %243, %275, %cst_177 {dimension_numbers = #tpu.dot_dimension_numbers<[1], [0], [0], [1], [0, 0, 1, 1], [], []>} : vector<2x256xf32>, vector<256x64xf32>, vector<2x64xf32> -> vector<2x64xf32>
      %c0_178 = arith.constant 0 : index
      %c0_179 = arith.constant 0 : index
      %277 = vector.load %arg6[%c0_178, %c0_179] : memref<1x64xf32, #tpu.memory_space<vmem>>, vector<1x64xf32>
      %278 = vector.broadcast %277 : vector<1x64xf32> to vector<2x64xf32>
      %279 = arith.addf %276, %278 : vector<2x64xf32>
      %cst_180 = arith.constant 0.000000e+00 : f32
      %280 = vector.broadcast %cst_180 : f32 to vector<2x64xf32>
      %281 = arith.maximumf %279, %280 : vector<2x64xf32>
      %c0_181 = arith.constant 0 : index
      %c0_182 = arith.constant 0 : index
      %282 = vector.load %arg45[%c0_181, %c0_182] : memref<2x64xf32, #tpu.memory_space<vmem>>, vector<2x64xf32>
      tpu.vector_store %arg45[%c0_181, %c0_182], %281 {strides = array<i32>} : memref<2x64xf32, #tpu.memory_space<vmem>>, vector<2x64xf32>,
      %c0_183 = arith.constant 0 : index
      %c0_184 = arith.constant 0 : index
      %283 = vector.load %arg9[%c0_183, %c0_184] : memref<64x192xf32, #tpu.memory_space<vmem>>, vector<64x192xf32>
      %cst_185 = arith.constant dense<0.000000e+00> : vector<2x192xf32>
      %284 = tpu.matmul %281, %283, %cst_185 {dimension_numbers = #tpu.dot_dimension_numbers<[1], [0], [0], [1], [0, 0, 1, 1], [], []>} : vector<2x64xf32>, vector<64x192xf32>, vector<2x192xf32> -> vector<2x192xf32>
      %c0_186 = arith.constant 0 : index
      %c0_187 = arith.constant 0 : index
      %285 = vector.load %arg10[%c0_186, %c0_187] : memref<1x192xf32, #tpu.memory_space<vmem>>, vector<1x192xf32>
      %286 = vector.broadcast %285 : vector<1x192xf32> to vector<2x192xf32>
      %287 = arith.addf %284, %286 : vector<2x192xf32>
      %288 = math.tanh %287 : vector<2x192xf32>
      %289 = vector.extract_strided_slice %288 {offsets = [0, 0], sizes = [2, 32], strides = [1, 1]} : vector<2x192xf32> to vector<2x32xf32>
      %c1_188 = arith.constant 1 : index
      %c0_189 = arith.constant 0 : index
      %c0_190 = arith.constant 0 : index
      %290 = vector.load %arg50[%c1_188, %c0_189, %c0_190] : memref<2x2x32xf32, #tpu.memory_space<vmem>>, vector<1x2x32xf32>
      %291 = vector.shape_cast %290 : vector<1x2x32xf32> to vector<2x32xf32>
      %292 = vector.shape_cast %289 : vector<2x32xf32> to vector<1x2x32xf32>
      tpu.vector_store %arg50[%c1_188, %c0_189, %c0_190], %292 {strides = array<i32>} : memref<2x2x32xf32, #tpu.memory_space<vmem>>, vector<1x2x32xf32>,
      %293 = vector.extract_strided_slice %288 {offsets = [0, 32], sizes = [2, 32], strides = [1, 1]} : vector<2x192xf32> to vector<2x32xf32>
      %c1_191 = arith.constant 1 : index
      %c0_192 = arith.constant 0 : index
      %c0_193 = arith.constant 0 : index
      %294 = vector.load %arg51[%c1_191, %c0_192, %c0_193] : memref<2x2x32xf32, #tpu.memory_space<vmem>>, vector<1x2x32xf32>
      %295 = vector.shape_cast %294 : vector<1x2x32xf32> to vector<2x32xf32>
      %296 = vector.shape_cast %293 : vector<2x32xf32> to vector<1x2x32xf32>
      tpu.vector_store %arg51[%c1_191, %c0_192, %c0_193], %296 {strides = array<i32>} : memref<2x2x32xf32, #tpu.memory_space<vmem>>, vector<1x2x32xf32>,
      %297 = vector.extract_strided_slice %288 {offsets = [0, 64], sizes = [2, 32], strides = [1, 1]} : vector<2x192xf32> to vector<2x32xf32>
      %c1_194 = arith.constant 1 : index
      %c0_195 = arith.constant 0 : index
      %c0_196 = arith.constant 0 : index
      %298 = vector.load %arg46[%c1_194, %c0_195, %c0_196] : memref<2x2x32xf32, #tpu.memory_space<vmem>>, vector<1x2x32xf32>
      %299 = vector.shape_cast %298 : vector<1x2x32xf32> to vector<2x32xf32>
      %300 = vector.shape_cast %297 : vector<2x32xf32> to vector<1x2x32xf32>
      tpu.vector_store %arg46[%c1_194, %c0_195, %c0_196], %300 {strides = array<i32>} : memref<2x2x32xf32, #tpu.memory_space<vmem>>, vector<1x2x32xf32>,
      %301 = vector.extract_strided_slice %288 {offsets = [0, 96], sizes = [2, 32], strides = [1, 1]} : vector<2x192xf32> to vector<2x32xf32>
      %c1_197 = arith.constant 1 : index
      %c0_198 = arith.constant 0 : index
      %c0_199 = arith.constant 0 : index
      %302 = vector.load %arg47[%c1_197, %c0_198, %c0_199] : memref<2x2x32xf32, #tpu.memory_space<vmem>>, vector<1x2x32xf32>
      %303 = vector.shape_cast %302 : vector<1x2x32xf32> to vector<2x32xf32>
      %304 = vector.shape_cast %301 : vector<2x32xf32> to vector<1x2x32xf32>
      tpu.vector_store %arg47[%c1_197, %c0_198, %c0_199], %304 {strides = array<i32>} : memref<2x2x32xf32, #tpu.memory_space<vmem>>, vector<1x2x32xf32>,
      %305 = vector.extract_strided_slice %288 {offsets = [0, 128], sizes = [2, 32], strides = [1, 1]} : vector<2x192xf32> to vector<2x32xf32>
      %c1_200 = arith.constant 1 : index
      %c0_201 = arith.constant 0 : index
      %c0_202 = arith.constant 0 : index
      %306 = vector.load %arg48[%c1_200, %c0_201, %c0_202] : memref<2x2x32xf32, #tpu.memory_space<vmem>>, vector<1x2x32xf32>
      %307 = vector.shape_cast %306 : vector<1x2x32xf32> to vector<2x32xf32>
      %308 = vector.shape_cast %305 : vector<2x32xf32> to vector<1x2x32xf32>
      tpu.vector_store %arg48[%c1_200, %c0_201, %c0_202], %308 {strides = array<i32>} : memref<2x2x32xf32, #tpu.memory_space<vmem>>, vector<1x2x32xf32>,
      %309 = vector.extract_strided_slice %288 {offsets = [0, 160], sizes = [2, 32], strides = [1, 1]} : vector<2x192xf32> to vector<2x32xf32>
      %c1_203 = arith.constant 1 : index
      %c0_204 = arith.constant 0 : index
      %c0_205 = arith.constant 0 : index
      %310 = vector.load %arg49[%c1_203, %c0_204, %c0_205] : memref<2x2x32xf32, #tpu.memory_space<vmem>>, vector<1x2x32xf32>
      %311 = vector.shape_cast %310 : vector<1x2x32xf32> to vector<2x32xf32>
      %312 = vector.shape_cast %309 : vector<2x32xf32> to vector<1x2x32xf32>
      tpu.vector_store %arg49[%c1_203, %c0_204, %c0_205], %312 {strides = array<i32>} : memref<2x2x32xf32, #tpu.memory_space<vmem>>, vector<1x2x32xf32>,
      %c1_206 = arith.constant 1 : index
      %c0_207 = arith.constant 0 : index
      %c0_208 = arith.constant 0 : index
      %313 = vector.load %arg1[%c1_206, %c0_207, %c0_208] : memref<2x2x256xf32, #tpu.memory_space<vmem>>, vector<1x2x256xf32>
      %314 = vector.shape_cast %313 : vector<1x2x256xf32> to vector<2x256xf32>
      %c0_209 = arith.constant 0 : index
      %c0_210 = arith.constant 0 : index
      %315 = vector.load %arg3[%c0_209, %c0_210] : memref<256x256xf32, #tpu.memory_space<vmem>>, vector<256x256xf32>
      %cst_211 = arith.constant dense<0.000000e+00> : vector<2x256xf32>
      %316 = tpu.matmul %314, %315, %cst_211 {dimension_numbers = #tpu.dot_dimension_numbers<[1], [0], [0], [1], [0, 0, 1, 1], [], []>} : vector<2x256xf32>, vector<256x256xf32>, vector<2x256xf32> -> vector<2x256xf32>
      %c0_212 = arith.constant 0 : index
      %c0_213 = arith.constant 0 : index
      %317 = vector.load %arg4[%c0_212, %c0_213] : memref<1x256xf32, #tpu.memory_space<vmem>>, vector<1x256xf32>
      %318 = vector.broadcast %317 : vector<1x256xf32> to vector<2x256xf32>
      %319 = arith.addf %316, %318 : vector<2x256xf32>
      %cst_214 = arith.constant 0.000000e+00 : f32
      %320 = vector.broadcast %cst_214 : f32 to vector<2x256xf32>
      %321 = arith.maximumf %319, %320 : vector<2x256xf32>
      %c0_215 = arith.constant 0 : index
      %c0_216 = arith.constant 0 : index
      %322 = vector.load %arg44[%c0_215, %c0_216] : memref<2x256xf32, #tpu.memory_space<vmem>>, vector<2x256xf32>
      tpu.vector_store %arg44[%c0_215, %c0_216], %321 {strides = array<i32>} : memref<2x256xf32, #tpu.memory_space<vmem>>, vector<2x256xf32>,
      %c0_217 = arith.constant 0 : index
      %c0_218 = arith.constant 0 : index
      %323 = vector.load %arg7[%c0_217, %c0_218] : memref<256x192xf32, #tpu.memory_space<vmem>>, vector<256x192xf32>
      %cst_219 = arith.constant dense<0.000000e+00> : vector<2x192xf32>
      %324 = tpu.matmul %321, %323, %cst_219 {dimension_numbers = #tpu.dot_dimension_numbers<[1], [0], [0], [1], [0, 0, 1, 1], [], []>} : vector<2x256xf32>, vector<256x192xf32>, vector<2x192xf32> -> vector<2x192xf32>
      %c0_220 = arith.constant 0 : index
      %c0_221 = arith.constant 0 : index
      %325 = vector.load %arg8[%c0_220, %c0_221] : memref<1x192xf32, #tpu.memory_space<vmem>>, vector<1x192xf32>
      %326 = vector.broadcast %325 : vector<1x192xf32> to vector<2x192xf32>
      %327 = arith.addf %324, %326 : vector<2x192xf32>
      %328 = math.tanh %327 : vector<2x192xf32>
      %329 = vector.extract_strided_slice %328 {offsets = [0, 0], sizes = [2, 32], strides = [1, 1]} : vector<2x192xf32> to vector<2x32xf32>
      %c0_222 = arith.constant 0 : index
      %c0_223 = arith.constant 0 : index
      %c0_224 = arith.constant 0 : index
      %330 = vector.load %arg50[%c0_222, %c0_223, %c0_224] : memref<2x2x32xf32, #tpu.memory_space<vmem>>, vector<1x2x32xf32>
      %331 = vector.shape_cast %330 : vector<1x2x32xf32> to vector<2x32xf32>
      %332 = vector.shape_cast %329 : vector<2x32xf32> to vector<1x2x32xf32>
      tpu.vector_store %arg50[%c0_222, %c0_223, %c0_224], %332 {strides = array<i32>} : memref<2x2x32xf32, #tpu.memory_space<vmem>>, vector<1x2x32xf32>,
      %333 = vector.extract_strided_slice %328 {offsets = [0, 32], sizes = [2, 32], strides = [1, 1]} : vector<2x192xf32> to vector<2x32xf32>
      %c0_225 = arith.constant 0 : index
      %c0_226 = arith.constant 0 : index
      %c0_227 = arith.constant 0 : index
      %334 = vector.load %arg51[%c0_225, %c0_226, %c0_227] : memref<2x2x32xf32, #tpu.memory_space<vmem>>, vector<1x2x32xf32>
      %335 = vector.shape_cast %334 : vector<1x2x32xf32> to vector<2x32xf32>
      %336 = vector.shape_cast %333 : vector<2x32xf32> to vector<1x2x32xf32>
      tpu.vector_store %arg51[%c0_225, %c0_226, %c0_227], %336 {strides = array<i32>} : memref<2x2x32xf32, #tpu.memory_space<vmem>>, vector<1x2x32xf32>,
      %337 = vector.extract_strided_slice %328 {offsets = [0, 64], sizes = [2, 32], strides = [1, 1]} : vector<2x192xf32> to vector<2x32xf32>
      %c0_228 = arith.constant 0 : index
      %c0_229 = arith.constant 0 : index
      %c0_230 = arith.constant 0 : index
      %338 = vector.load %arg46[%c0_228, %c0_229, %c0_230] : memref<2x2x32xf32, #tpu.memory_space<vmem>>, vector<1x2x32xf32>
      %339 = vector.shape_cast %338 : vector<1x2x32xf32> to vector<2x32xf32>
      %340 = vector.shape_cast %337 : vector<2x32xf32> to vector<1x2x32xf32>
      tpu.vector_store %arg46[%c0_228, %c0_229, %c0_230], %340 {strides = array<i32>} : memref<2x2x32xf32, #tpu.memory_space<vmem>>, vector<1x2x32xf32>,
      %341 = vector.extract_strided_slice %328 {offsets = [0, 96], sizes = [2, 32], strides = [1, 1]} : vector<2x192xf32> to vector<2x32xf32>
      %c0_231 = arith.constant 0 : index
      %c0_232 = arith.constant 0 : index
      %c0_233 = arith.constant 0 : index
      %342 = vector.load %arg47[%c0_231, %c0_232, %c0_233] : memref<2x2x32xf32, #tpu.memory_space<vmem>>, vector<1x2x32xf32>
      %343 = vector.shape_cast %342 : vector<1x2x32xf32> to vector<2x32xf32>
      %344 = vector.shape_cast %341 : vector<2x32xf32> to vector<1x2x32xf32>
      tpu.vector_store %arg47[%c0_231, %c0_232, %c0_233], %344 {strides = array<i32>} : memref<2x2x32xf32, #tpu.memory_space<vmem>>, vector<1x2x32xf32>,
      %345 = vector.extract_strided_slice %328 {offsets = [0, 128], sizes = [2, 32], strides = [1, 1]} : vector<2x192xf32> to vector<2x32xf32>
      %c0_234 = arith.constant 0 : index
      %c0_235 = arith.constant 0 : index
      %c0_236 = arith.constant 0 : index
      %346 = vector.load %arg48[%c0_234, %c0_235, %c0_236] : memref<2x2x32xf32, #tpu.memory_space<vmem>>, vector<1x2x32xf32>
      %347 = vector.shape_cast %346 : vector<1x2x32xf32> to vector<2x32xf32>
      %348 = vector.shape_cast %345 : vector<2x32xf32> to vector<1x2x32xf32>
      tpu.vector_store %arg48[%c0_234, %c0_235, %c0_236], %348 {strides = array<i32>} : memref<2x2x32xf32, #tpu.memory_space<vmem>>, vector<1x2x32xf32>,
      %349 = vector.extract_strided_slice %328 {offsets = [0, 160], sizes = [2, 32], strides = [1, 1]} : vector<2x192xf32> to vector<2x32xf32>
      %c0_237 = arith.constant 0 : index
      %c0_238 = arith.constant 0 : index
      %c0_239 = arith.constant 0 : index
      %350 = vector.load %arg49[%c0_237, %c0_238, %c0_239] : memref<2x2x32xf32, #tpu.memory_space<vmem>>, vector<1x2x32xf32>
      %351 = vector.shape_cast %350 : vector<1x2x32xf32> to vector<2x32xf32>
      %352 = vector.shape_cast %349 : vector<2x32xf32> to vector<1x2x32xf32>
      tpu.vector_store %arg49[%c0_237, %c0_238, %c0_239], %352 {strides = array<i32>} : memref<2x2x32xf32, #tpu.memory_space<vmem>>, vector<1x2x32xf32>,
      %c0_240 = arith.constant 0 : index
      %c0_241 = arith.constant 0 : index
      %353 = vector.load %arg5[%c0_240, %c0_241] : memref<256x64xf32, #tpu.memory_space<vmem>>, vector<256x64xf32>
      %cst_242 = arith.constant dense<0.000000e+00> : vector<2x64xf32>
      %354 = tpu.matmul %321, %353, %cst_242 {dimension_numbers = #tpu.dot_dimension_numbers<[1], [0], [0], [1], [0, 0, 1, 1], [], []>} : vector<2x256xf32>, vector<256x64xf32>, vector<2x64xf32> -> vector<2x64xf32>
      %c0_243 = arith.constant 0 : index
      %c0_244 = arith.constant 0 : index
      %355 = vector.load %arg6[%c0_243, %c0_244] : memref<1x64xf32, #tpu.memory_space<vmem>>, vector<1x64xf32>
      %356 = vector.broadcast %355 : vector<1x64xf32> to vector<2x64xf32>
      %357 = arith.addf %354, %356 : vector<2x64xf32>
      %cst_245 = arith.constant 0.000000e+00 : f32
      %358 = vector.broadcast %cst_245 : f32 to vector<2x64xf32>
      %359 = arith.maximumf %357, %358 : vector<2x64xf32>
      %c0_246 = arith.constant 0 : index
      %c0_247 = arith.constant 0 : index
      %360 = vector.load %arg45[%c0_246, %c0_247] : memref<2x64xf32, #tpu.memory_space<vmem>>, vector<2x64xf32>
      tpu.vector_store %arg45[%c0_246, %c0_247], %359 {strides = array<i32>} : memref<2x64xf32, #tpu.memory_space<vmem>>, vector<2x64xf32>,
      %c0_248 = arith.constant 0 : index
      %c0_249 = arith.constant 0 : index
      %361 = vector.load %arg9[%c0_248, %c0_249] : memref<64x192xf32, #tpu.memory_space<vmem>>, vector<64x192xf32>
      %cst_250 = arith.constant dense<0.000000e+00> : vector<2x192xf32>
      %362 = tpu.matmul %359, %361, %cst_250 {dimension_numbers = #tpu.dot_dimension_numbers<[1], [0], [0], [1], [0, 0, 1, 1], [], []>} : vector<2x64xf32>, vector<64x192xf32>, vector<2x192xf32> -> vector<2x192xf32>
      %c0_251 = arith.constant 0 : index
      %c0_252 = arith.constant 0 : index
      %363 = vector.load %arg10[%c0_251, %c0_252] : memref<1x192xf32, #tpu.memory_space<vmem>>, vector<1x192xf32>
      %364 = vector.broadcast %363 : vector<1x192xf32> to vector<2x192xf32>
      %365 = arith.addf %362, %364 : vector<2x192xf32>
      %366 = math.tanh %365 : vector<2x192xf32>
      %367 = vector.extract_strided_slice %366 {offsets = [0, 0], sizes = [2, 32], strides = [1, 1]} : vector<2x192xf32> to vector<2x32xf32>
      %c1_253 = arith.constant 1 : index
      %c0_254 = arith.constant 0 : index
      %c0_255 = arith.constant 0 : index
      %368 = vector.load %arg50[%c1_253, %c0_254, %c0_255] : memref<2x2x32xf32, #tpu.memory_space<vmem>>, vector<1x2x32xf32>
      %369 = vector.shape_cast %368 : vector<1x2x32xf32> to vector<2x32xf32>
      %370 = vector.shape_cast %367 : vector<2x32xf32> to vector<1x2x32xf32>
      tpu.vector_store %arg50[%c1_253, %c0_254, %c0_255], %370 {strides = array<i32>} : memref<2x2x32xf32, #tpu.memory_space<vmem>>, vector<1x2x32xf32>,
      %371 = vector.extract_strided_slice %366 {offsets = [0, 32], sizes = [2, 32], strides = [1, 1]} : vector<2x192xf32> to vector<2x32xf32>
      %c1_256 = arith.constant 1 : index
      %c0_257 = arith.constant 0 : index
      %c0_258 = arith.constant 0 : index
      %372 = vector.load %arg51[%c1_256, %c0_257, %c0_258] : memref<2x2x32xf32, #tpu.memory_space<vmem>>, vector<1x2x32xf32>
      %373 = vector.shape_cast %372 : vector<1x2x32xf32> to vector<2x32xf32>
      %374 = vector.shape_cast %371 : vector<2x32xf32> to vector<1x2x32xf32>
      tpu.vector_store %arg51[%c1_256, %c0_257, %c0_258], %374 {strides = array<i32>} : memref<2x2x32xf32, #tpu.memory_space<vmem>>, vector<1x2x32xf32>,
      %375 = vector.extract_strided_slice %366 {offsets = [0, 64], sizes = [2, 32], strides = [1, 1]} : vector<2x192xf32> to vector<2x32xf32>
      %c1_259 = arith.constant 1 : index
      %c0_260 = arith.constant 0 : index
      %c0_261 = arith.constant 0 : index
      %376 = vector.load %arg46[%c1_259, %c0_260, %c0_261] : memref<2x2x32xf32, #tpu.memory_space<vmem>>, vector<1x2x32xf32>
      %377 = vector.shape_cast %376 : vector<1x2x32xf32> to vector<2x32xf32>
      %378 = vector.shape_cast %375 : vector<2x32xf32> to vector<1x2x32xf32>
      tpu.vector_store %arg46[%c1_259, %c0_260, %c0_261], %378 {strides = array<i32>} : memref<2x2x32xf32, #tpu.memory_space<vmem>>, vector<1x2x32xf32>,
      %379 = vector.extract_strided_slice %366 {offsets = [0, 96], sizes = [2, 32], strides = [1, 1]} : vector<2x192xf32> to vector<2x32xf32>
      %c1_262 = arith.constant 1 : index
      %c0_263 = arith.constant 0 : index
      %c0_264 = arith.constant 0 : index
      %380 = vector.load %arg47[%c1_262, %c0_263, %c0_264] : memref<2x2x32xf32, #tpu.memory_space<vmem>>, vector<1x2x32xf32>
      %381 = vector.shape_cast %380 : vector<1x2x32xf32> to vector<2x32xf32>
      %382 = vector.shape_cast %379 : vector<2x32xf32> to vector<1x2x32xf32>
      tpu.vector_store %arg47[%c1_262, %c0_263, %c0_264], %382 {strides = array<i32>} : memref<2x2x32xf32, #tpu.memory_space<vmem>>, vector<1x2x32xf32>,
      %383 = vector.extract_strided_slice %366 {offsets = [0, 128], sizes = [2, 32], strides = [1, 1]} : vector<2x192xf32> to vector<2x32xf32>
      %c1_265 = arith.constant 1 : index
      %c0_266 = arith.constant 0 : index
      %c0_267 = arith.constant 0 : index
      %384 = vector.load %arg48[%c1_265, %c0_266, %c0_267] : memref<2x2x32xf32, #tpu.memory_space<vmem>>, vector<1x2x32xf32>
      %385 = vector.shape_cast %384 : vector<1x2x32xf32> to vector<2x32xf32>
      %386 = vector.shape_cast %383 : vector<2x32xf32> to vector<1x2x32xf32>
      tpu.vector_store %arg48[%c1_265, %c0_266, %c0_267], %386 {strides = array<i32>} : memref<2x2x32xf32, #tpu.memory_space<vmem>>, vector<1x2x32xf32>,
      %387 = vector.extract_strided_slice %366 {offsets = [0, 160], sizes = [2, 32], strides = [1, 1]} : vector<2x192xf32> to vector<2x32xf32>
      %c1_268 = arith.constant 1 : index
      %c0_269 = arith.constant 0 : index
      %c0_270 = arith.constant 0 : index
      %388 = vector.load %arg49[%c1_268, %c0_269, %c0_270] : memref<2x2x32xf32, #tpu.memory_space<vmem>>, vector<1x2x32xf32>
      %389 = vector.shape_cast %388 : vector<1x2x32xf32> to vector<2x32xf32>
      %390 = vector.shape_cast %387 : vector<2x32xf32> to vector<1x2x32xf32>
      tpu.vector_store %arg49[%c1_268, %c0_269, %c0_270], %390 {strides = array<i32>} : memref<2x2x32xf32, #tpu.memory_space<vmem>>, vector<1x2x32xf32>,
      %cst_271 = arith.constant 0.000000e+00 : f32
      %391 = vector.broadcast %cst_271 : f32 to vector<2x16xf32>
      %c0_272 = arith.constant 0 : index
      %c0_273 = arith.constant 0 : index
      %392 = vector.load %arg42[%c0_272, %c0_273] : memref<2x16xf32, #tpu.memory_space<vmem>>, vector<2x16xf32>
      tpu.vector_store %arg42[%c0_272, %c0_273], %391 {strides = array<i32>} : memref<2x16xf32, #tpu.memory_space<vmem>>, vector<2x16xf32>,
      %cst_274 = arith.constant 0.000000e+00 : f32
      %393 = vector.broadcast %cst_274 : f32 to vector<2x16xf32>
      %c0_275 = arith.constant 0 : index
      %c0_276 = arith.constant 0 : index
      %394 = vector.load %arg43[%c0_275, %c0_276] : memref<2x16xf32, #tpu.memory_space<vmem>>, vector<2x16xf32>
      tpu.vector_store %arg43[%c0_275, %c0_276], %393 {strides = array<i32>} : memref<2x16xf32, #tpu.memory_space<vmem>>, vector<2x16xf32>,
    } else {
    }
    %c0 = arith.constant 0 : index
    %c0_1 = arith.constant 0 : index
    %3 = vector.load %arg44[%c0, %c0_1] : memref<2x256xf32, #tpu.memory_space<vmem>>, vector<2x256xf32>
    %c0_2 = arith.constant 0 : index
    %c0_3 = arith.constant 0 : index
    %4 = vector.load %arg45[%c0_2, %c0_3] : memref<2x64xf32, #tpu.memory_space<vmem>>, vector<2x64xf32>
    %c1 = arith.constant 1 : index
    %c0_4 = arith.constant 0 : index
    %c0_5 = arith.constant 0 : index
    %5 = vector.load %arg46[%c1, %c0_4, %c0_5] : memref<2x2x32xf32, #tpu.memory_space<vmem>>, vector<1x2x32xf32>
    %6 = vector.shape_cast %5 : vector<1x2x32xf32> to vector<2x32xf32>
    %c1_6 = arith.constant 1 : index
    %c0_7 = arith.constant 0 : index
    %c0_8 = arith.constant 0 : index
    %7 = vector.load %arg47[%c1_6, %c0_7, %c0_8] : memref<2x2x32xf32, #tpu.memory_space<vmem>>, vector<1x2x32xf32>
    %8 = vector.shape_cast %7 : vector<1x2x32xf32> to vector<2x32xf32>
    %c0_9 = arith.constant 0 : index
    %c0_10 = arith.constant 0 : index
    %9 = vector.load %arg16[%c0_9, %c0_10] : memref<64x128xf32, #tpu.memory_space<vmem>>, vector<64x128xf32>
    %cst = arith.constant dense<0.000000e+00> : vector<2x128xf32>
    %10 = tpu.matmul %4, %9, %cst {dimension_numbers = #tpu.dot_dimension_numbers<[1], [0], [0], [1], [0, 0, 1, 1], [], []>} : vector<2x64xf32>, vector<64x128xf32>, vector<2x128xf32> -> vector<2x128xf32>
    %c0_11 = arith.constant 0 : index
    %c0_12 = arith.constant 0 : index
    %11 = vector.load %arg17[%c0_11, %c0_12] : memref<32x128xf32, #tpu.memory_space<vmem>>, vector<32x128xf32>
    %cst_13 = arith.constant dense<0.000000e+00> : vector<2x128xf32>
    %12 = tpu.matmul %6, %11, %cst_13 {dimension_numbers = #tpu.dot_dimension_numbers<[1], [0], [0], [1], [0, 0, 1, 1], [], []>} : vector<2x32xf32>, vector<32x128xf32>, vector<2x128xf32> -> vector<2x128xf32>
    %13 = arith.addf %10, %12 : vector<2x128xf32>
    %c0_14 = arith.constant 0 : index
    %c0_15 = arith.constant 0 : index
    %14 = vector.load %arg18[%c0_14, %c0_15] : memref<1x128xf32, #tpu.memory_space<vmem>>, vector<1x128xf32>
    %15 = vector.broadcast %14 : vector<1x128xf32> to vector<2x128xf32>
    %16 = arith.addf %13, %15 : vector<2x128xf32>
    %17 = vector.extract_strided_slice %16 {offsets = [0, 0], sizes = [2, 32], strides = [1, 1]} : vector<2x128xf32> to vector<2x32xf32>
    %18 = arith.negf %17 : vector<2x32xf32>
    %19 = math.exp %18 : vector<2x32xf32>
    %cst_16 = arith.constant 1.000000e+00 : f32
    %20 = vector.broadcast %cst_16 : f32 to vector<2x32xf32>
    %21 = arith.addf %20, %19 : vector<2x32xf32>
    %22 = arith.divf %20, %21 : vector<2x32xf32>
    %23 = vector.extract_strided_slice %16 {offsets = [0, 32], sizes = [2, 32], strides = [1, 1]} : vector<2x128xf32> to vector<2x32xf32>
    %24 = arith.negf %23 : vector<2x32xf32>
    %25 = math.exp %24 : vector<2x32xf32>
    %cst_17 = arith.constant 1.000000e+00 : f32
    %26 = vector.broadcast %cst_17 : f32 to vector<2x32xf32>
    %27 = arith.addf %26, %25 : vector<2x32xf32>
    %28 = arith.divf %26, %27 : vector<2x32xf32>
    %29 = vector.extract_strided_slice %16 {offsets = [0, 64], sizes = [2, 32], strides = [1, 1]} : vector<2x128xf32> to vector<2x32xf32>
    %30 = math.tanh %29 : vector<2x32xf32>
    %31 = vector.extract_strided_slice %16 {offsets = [0, 96], sizes = [2, 32], strides = [1, 1]} : vector<2x128xf32> to vector<2x32xf32>
    %32 = arith.negf %31 : vector<2x32xf32>
    %33 = math.exp %32 : vector<2x32xf32>
    %cst_18 = arith.constant 1.000000e+00 : f32
    %34 = vector.broadcast %cst_18 : f32 to vector<2x32xf32>
    %35 = arith.addf %34, %33 : vector<2x32xf32>
    %36 = arith.divf %34, %35 : vector<2x32xf32>
    %37 = arith.mulf %28, %8 : vector<2x32xf32>
    %38 = arith.mulf %22, %30 : vector<2x32xf32>
    %39 = arith.addf %37, %38 : vector<2x32xf32>
    %40 = math.tanh %39 : vector<2x32xf32>
    %41 = arith.mulf %36, %40 : vector<2x32xf32>
    %c1_19 = arith.constant 1 : index
    %c0_20 = arith.constant 0 : index
    %c0_21 = arith.constant 0 : index
    %42 = vector.load %arg46[%c1_19, %c0_20, %c0_21] : memref<2x2x32xf32, #tpu.memory_space<vmem>>, vector<1x2x32xf32>
    %43 = vector.shape_cast %42 : vector<1x2x32xf32> to vector<2x32xf32>
    %44 = vector.shape_cast %41 : vector<2x32xf32> to vector<1x2x32xf32>
    tpu.vector_store %arg46[%c1_19, %c0_20, %c0_21], %44 {strides = array<i32>} : memref<2x2x32xf32, #tpu.memory_space<vmem>>, vector<1x2x32xf32>,
    %c1_22 = arith.constant 1 : index
    %c0_23 = arith.constant 0 : index
    %c0_24 = arith.constant 0 : index
    %45 = vector.load %arg47[%c1_22, %c0_23, %c0_24] : memref<2x2x32xf32, #tpu.memory_space<vmem>>, vector<1x2x32xf32>
    %46 = vector.shape_cast %45 : vector<1x2x32xf32> to vector<2x32xf32>
    %47 = vector.shape_cast %39 : vector<2x32xf32> to vector<1x2x32xf32>
    tpu.vector_store %arg47[%c1_22, %c0_23, %c0_24], %47 {strides = array<i32>} : memref<2x2x32xf32, #tpu.memory_space<vmem>>, vector<1x2x32xf32>,
    %c0_25 = arith.constant 0 : index
    %c0_26 = arith.constant 0 : index
    %48 = vector.load %arg19[%c0_25, %c0_26] : memref<32x16xf32, #tpu.memory_space<vmem>>, vector<32x16xf32>
    %cst_27 = arith.constant dense<0.000000e+00> : vector<2x16xf32>
    %49 = tpu.matmul %41, %48, %cst_27 {dimension_numbers = #tpu.dot_dimension_numbers<[1], [0], [0], [1], [0, 0, 1, 1], [], []>} : vector<2x32xf32>, vector<32x16xf32>, vector<2x16xf32> -> vector<2x16xf32>
    %c0_28 = arith.constant 0 : index
    %c0_29 = arith.constant 0 : index
    %50 = vector.load %arg20[%c0_28, %c0_29] : memref<1x16xf32, #tpu.memory_space<vmem>>, vector<1x16xf32>
    %51 = vector.broadcast %50 : vector<1x16xf32> to vector<2x16xf32>
    %52 = arith.addf %49, %51 : vector<2x16xf32>
    %53 = vector.extract_strided_slice %52 {offsets = [0, 0], sizes = [2, 8], strides = [1, 1]} : vector<2x16xf32> to vector<2x8xf32>
    %c0_i32_30 = arith.constant 0 : i32
    %54 = arith.cmpi sgt, %arg0, %c0_i32_30 : i32
    %55 = arith.extui %54 : i1 to i32
    %c0_i32_31 = arith.constant 0 : i32
    %56 = arith.cmpi ne, %55, %c0_i32_31 : i32
    scf.if %56 {
      %c1_141 = arith.constant 1 : index
      %c0_142 = arith.constant 0 : index
      %c0_143 = arith.constant 0 : index
      %235 = vector.load %arg48[%c1_141, %c0_142, %c0_143] : memref<2x2x32xf32, #tpu.memory_space<vmem>>, vector<1x2x32xf32>
      %236 = vector.shape_cast %235 : vector<1x2x32xf32> to vector<2x32xf32>
      %c1_144 = arith.constant 1 : index
      %c0_145 = arith.constant 0 : index
      %c0_146 = arith.constant 0 : index
      %237 = vector.load %arg49[%c1_144, %c0_145, %c0_146] : memref<2x2x32xf32, #tpu.memory_space<vmem>>, vector<1x2x32xf32>
      %238 = vector.shape_cast %237 : vector<1x2x32xf32> to vector<2x32xf32>
      %c0_147 = arith.constant 0 : index
      %c0_148 = arith.constant 0 : index
      %239 = vector.load %arg26[%c0_147, %c0_148] : memref<64x128xf32, #tpu.memory_space<vmem>>, vector<64x128xf32>
      %cst_149 = arith.constant dense<0.000000e+00> : vector<2x128xf32>
      %240 = tpu.matmul %4, %239, %cst_149 {dimension_numbers = #tpu.dot_dimension_numbers<[1], [0], [0], [1], [0, 0, 1, 1], [], []>} : vector<2x64xf32>, vector<64x128xf32>, vector<2x128xf32> -> vector<2x128xf32>
      %c0_150 = arith.constant 0 : index
      %c0_151 = arith.constant 0 : index
      %241 = vector.load %arg27[%c0_150, %c0_151] : memref<32x128xf32, #tpu.memory_space<vmem>>, vector<32x128xf32>
      %cst_152 = arith.constant dense<0.000000e+00> : vector<2x128xf32>
      %242 = tpu.matmul %236, %241, %cst_152 {dimension_numbers = #tpu.dot_dimension_numbers<[1], [0], [0], [1], [0, 0, 1, 1], [], []>} : vector<2x32xf32>, vector<32x128xf32>, vector<2x128xf32> -> vector<2x128xf32>
      %243 = arith.addf %240, %242 : vector<2x128xf32>
      %c0_153 = arith.constant 0 : index
      %c0_154 = arith.constant 0 : index
      %244 = vector.load %arg28[%c0_153, %c0_154] : memref<1x128xf32, #tpu.memory_space<vmem>>, vector<1x128xf32>
      %245 = vector.broadcast %244 : vector<1x128xf32> to vector<2x128xf32>
      %246 = arith.addf %243, %245 : vector<2x128xf32>
      %247 = vector.extract_strided_slice %246 {offsets = [0, 0], sizes = [2, 32], strides = [1, 1]} : vector<2x128xf32> to vector<2x32xf32>
      %248 = arith.negf %247 : vector<2x32xf32>
      %249 = math.exp %248 : vector<2x32xf32>
      %cst_155 = arith.constant 1.000000e+00 : f32
      %250 = vector.broadcast %cst_155 : f32 to vector<2x32xf32>
      %251 = arith.addf %250, %249 : vector<2x32xf32>
      %252 = arith.divf %250, %251 : vector<2x32xf32>
      %253 = vector.extract_strided_slice %246 {offsets = [0, 32], sizes = [2, 32], strides = [1, 1]} : vector<2x128xf32> to vector<2x32xf32>
      %254 = arith.negf %253 : vector<2x32xf32>
      %255 = math.exp %254 : vector<2x32xf32>
      %cst_156 = arith.constant 1.000000e+00 : f32
      %256 = vector.broadcast %cst_156 : f32 to vector<2x32xf32>
      %257 = arith.addf %256, %255 : vector<2x32xf32>
      %258 = arith.divf %256, %257 : vector<2x32xf32>
      %259 = vector.extract_strided_slice %246 {offsets = [0, 64], sizes = [2, 32], strides = [1, 1]} : vector<2x128xf32> to vector<2x32xf32>
      %260 = math.tanh %259 : vector<2x32xf32>
      %261 = vector.extract_strided_slice %246 {offsets = [0, 96], sizes = [2, 32], strides = [1, 1]} : vector<2x128xf32> to vector<2x32xf32>
      %262 = arith.negf %261 : vector<2x32xf32>
      %263 = math.exp %262 : vector<2x32xf32>
      %cst_157 = arith.constant 1.000000e+00 : f32
      %264 = vector.broadcast %cst_157 : f32 to vector<2x32xf32>
      %265 = arith.addf %264, %263 : vector<2x32xf32>
      %266 = arith.divf %264, %265 : vector<2x32xf32>
      %267 = arith.mulf %258, %238 : vector<2x32xf32>
      %268 = arith.mulf %252, %260 : vector<2x32xf32>
      %269 = arith.addf %267, %268 : vector<2x32xf32>
      %270 = math.tanh %269 : vector<2x32xf32>
      %271 = arith.mulf %266, %270 : vector<2x32xf32>
      %c1_158 = arith.constant 1 : index
      %c0_159 = arith.constant 0 : index
      %c0_160 = arith.constant 0 : index
      %272 = vector.load %arg48[%c1_158, %c0_159, %c0_160] : memref<2x2x32xf32, #tpu.memory_space<vmem>>, vector<1x2x32xf32>
      %273 = vector.shape_cast %272 : vector<1x2x32xf32> to vector<2x32xf32>
      %274 = vector.shape_cast %271 : vector<2x32xf32> to vector<1x2x32xf32>
      tpu.vector_store %arg48[%c1_158, %c0_159, %c0_160], %274 {strides = array<i32>} : memref<2x2x32xf32, #tpu.memory_space<vmem>>, vector<1x2x32xf32>,
      %c1_161 = arith.constant 1 : index
      %c0_162 = arith.constant 0 : index
      %c0_163 = arith.constant 0 : index
      %275 = vector.load %arg49[%c1_161, %c0_162, %c0_163] : memref<2x2x32xf32, #tpu.memory_space<vmem>>, vector<1x2x32xf32>
      %276 = vector.shape_cast %275 : vector<1x2x32xf32> to vector<2x32xf32>
      %277 = vector.shape_cast %269 : vector<2x32xf32> to vector<1x2x32xf32>
      tpu.vector_store %arg49[%c1_161, %c0_162, %c0_163], %277 {strides = array<i32>} : memref<2x2x32xf32, #tpu.memory_space<vmem>>, vector<1x2x32xf32>,
      %c0_164 = arith.constant 0 : index
      %c0_165 = arith.constant 0 : index
      %278 = vector.load %arg29[%c0_164, %c0_165] : memref<32x16xf32, #tpu.memory_space<vmem>>, vector<32x16xf32>
      %cst_166 = arith.constant dense<0.000000e+00> : vector<2x16xf32>
      %279 = tpu.matmul %271, %278, %cst_166 {dimension_numbers = #tpu.dot_dimension_numbers<[1], [0], [0], [1], [0, 0, 1, 1], [], []>} : vector<2x32xf32>, vector<32x16xf32>, vector<2x16xf32> -> vector<2x16xf32>
      %c0_167 = arith.constant 0 : index
      %c0_168 = arith.constant 0 : index
      %280 = vector.load %arg30[%c0_167, %c0_168] : memref<1x16xf32, #tpu.memory_space<vmem>>, vector<1x16xf32>
      %281 = vector.broadcast %280 : vector<1x16xf32> to vector<2x16xf32>
      %282 = arith.addf %279, %281 : vector<2x16xf32>
      %c0_169 = arith.constant 0 : index
      %c0_170 = arith.constant 0 : index
      %283 = vector.load %arg43[%c0_169, %c0_170] : memref<2x16xf32, #tpu.memory_space<vmem>>, vector<2x16xf32>
      tpu.vector_store %arg43[%c0_169, %c0_170], %282 {strides = array<i32>} : memref<2x16xf32, #tpu.memory_space<vmem>>, vector<2x16xf32>,
    } else {
    }
    %c1_32 = arith.constant 1 : index
    %c0_33 = arith.constant 0 : index
    %c0_34 = arith.constant 0 : index
    %57 = vector.load %arg50[%c1_32, %c0_33, %c0_34] : memref<2x2x32xf32, #tpu.memory_space<vmem>>, vector<1x2x32xf32>
    %58 = vector.shape_cast %57 : vector<1x2x32xf32> to vector<2x32xf32>
    %c1_35 = arith.constant 1 : index
    %c0_36 = arith.constant 0 : index
    %c0_37 = arith.constant 0 : index
    %59 = vector.load %arg51[%c1_35, %c0_36, %c0_37] : memref<2x2x32xf32, #tpu.memory_space<vmem>>, vector<1x2x32xf32>
    %60 = vector.shape_cast %59 : vector<1x2x32xf32> to vector<2x32xf32>
    %c0_38 = arith.constant 0 : index
    %c0_39 = arith.constant 0 : index
    %61 = vector.load %arg36[%c0_38, %c0_39] : memref<8x128xf32, #tpu.memory_space<vmem>>, vector<8x128xf32>
    %cst_40 = arith.constant dense<0.000000e+00> : vector<2x128xf32>
    %62 = tpu.matmul %53, %61, %cst_40 {dimension_numbers = #tpu.dot_dimension_numbers<[1], [0], [0], [1], [0, 0, 1, 1], [], []>} : vector<2x8xf32>, vector<8x128xf32>, vector<2x128xf32> -> vector<2x128xf32>
    %c0_41 = arith.constant 0 : index
    %c0_42 = arith.constant 0 : index
    %63 = vector.load %arg37[%c0_41, %c0_42] : memref<32x128xf32, #tpu.memory_space<vmem>>, vector<32x128xf32>
    %cst_43 = arith.constant dense<0.000000e+00> : vector<2x128xf32>
    %64 = tpu.matmul %58, %63, %cst_43 {dimension_numbers = #tpu.dot_dimension_numbers<[1], [0], [0], [1], [0, 0, 1, 1], [], []>} : vector<2x32xf32>, vector<32x128xf32>, vector<2x128xf32> -> vector<2x128xf32>
    %65 = arith.addf %62, %64 : vector<2x128xf32>
    %c0_44 = arith.constant 0 : index
    %c0_45 = arith.constant 0 : index
    %66 = vector.load %arg38[%c0_44, %c0_45] : memref<1x128xf32, #tpu.memory_space<vmem>>, vector<1x128xf32>
    %67 = vector.broadcast %66 : vector<1x128xf32> to vector<2x128xf32>
    %68 = arith.addf %65, %67 : vector<2x128xf32>
    %69 = vector.extract_strided_slice %68 {offsets = [0, 0], sizes = [2, 32], strides = [1, 1]} : vector<2x128xf32> to vector<2x32xf32>
    %70 = arith.negf %69 : vector<2x32xf32>
    %71 = math.exp %70 : vector<2x32xf32>
    %cst_46 = arith.constant 1.000000e+00 : f32
    %72 = vector.broadcast %cst_46 : f32 to vector<2x32xf32>
    %73 = arith.addf %72, %71 : vector<2x32xf32>
    %74 = arith.divf %72, %73 : vector<2x32xf32>
    %75 = vector.extract_strided_slice %68 {offsets = [0, 32], sizes = [2, 32], strides = [1, 1]} : vector<2x128xf32> to vector<2x32xf32>
    %76 = arith.negf %75 : vector<2x32xf32>
    %77 = math.exp %76 : vector<2x32xf32>
    %cst_47 = arith.constant 1.000000e+00 : f32
    %78 = vector.broadcast %cst_47 : f32 to vector<2x32xf32>
    %79 = arith.addf %78, %77 : vector<2x32xf32>
    %80 = arith.divf %78, %79 : vector<2x32xf32>
    %81 = vector.extract_strided_slice %68 {offsets = [0, 64], sizes = [2, 32], strides = [1, 1]} : vector<2x128xf32> to vector<2x32xf32>
    %82 = math.tanh %81 : vector<2x32xf32>
    %83 = vector.extract_strided_slice %68 {offsets = [0, 96], sizes = [2, 32], strides = [1, 1]} : vector<2x128xf32> to vector<2x32xf32>
    %84 = arith.negf %83 : vector<2x32xf32>
    %85 = math.exp %84 : vector<2x32xf32>
    %cst_48 = arith.constant 1.000000e+00 : f32
    %86 = vector.broadcast %cst_48 : f32 to vector<2x32xf32>
    %87 = arith.addf %86, %85 : vector<2x32xf32>
    %88 = arith.divf %86, %87 : vector<2x32xf32>
    %89 = arith.mulf %80, %60 : vector<2x32xf32>
    %90 = arith.mulf %74, %82 : vector<2x32xf32>
    %91 = arith.addf %89, %90 : vector<2x32xf32>
    %92 = math.tanh %91 : vector<2x32xf32>
    %93 = arith.mulf %88, %92 : vector<2x32xf32>
    %c1_49 = arith.constant 1 : index
    %c0_50 = arith.constant 0 : index
    %c0_51 = arith.constant 0 : index
    %94 = vector.load %arg50[%c1_49, %c0_50, %c0_51] : memref<2x2x32xf32, #tpu.memory_space<vmem>>, vector<1x2x32xf32>
    %95 = vector.shape_cast %94 : vector<1x2x32xf32> to vector<2x32xf32>
    %96 = vector.shape_cast %93 : vector<2x32xf32> to vector<1x2x32xf32>
    tpu.vector_store %arg50[%c1_49, %c0_50, %c0_51], %96 {strides = array<i32>} : memref<2x2x32xf32, #tpu.memory_space<vmem>>, vector<1x2x32xf32>,
    %c1_52 = arith.constant 1 : index
    %c0_53 = arith.constant 0 : index
    %c0_54 = arith.constant 0 : index
    %97 = vector.load %arg51[%c1_52, %c0_53, %c0_54] : memref<2x2x32xf32, #tpu.memory_space<vmem>>, vector<1x2x32xf32>
    %98 = vector.shape_cast %97 : vector<1x2x32xf32> to vector<2x32xf32>
    %99 = vector.shape_cast %91 : vector<2x32xf32> to vector<1x2x32xf32>
    tpu.vector_store %arg51[%c1_52, %c0_53, %c0_54], %99 {strides = array<i32>} : memref<2x2x32xf32, #tpu.memory_space<vmem>>, vector<1x2x32xf32>,
    %c0_55 = arith.constant 0 : index
    %c0_56 = arith.constant 0 : index
    %100 = vector.load %arg39[%c0_55, %c0_56] : memref<32x256xf32, #tpu.memory_space<vmem>>, vector<32x256xf32>
    %cst_57 = arith.constant dense<0.000000e+00> : vector<2x256xf32>
    %101 = tpu.matmul %93, %100, %cst_57 {dimension_numbers = #tpu.dot_dimension_numbers<[1], [0], [0], [1], [0, 0, 1, 1], [], []>} : vector<2x32xf32>, vector<32x256xf32>, vector<2x256xf32> -> vector<2x256xf32>
    %c0_58 = arith.constant 0 : index
    %c0_59 = arith.constant 0 : index
    %102 = vector.load %arg40[%c0_58, %c0_59] : memref<1x256xf32, #tpu.memory_space<vmem>>, vector<1x256xf32>
    %103 = vector.broadcast %102 : vector<1x256xf32> to vector<2x256xf32>
    %104 = arith.addf %101, %103 : vector<2x256xf32>
    %cst_60 = arith.constant 0.000000e+00 : f32
    %105 = vector.broadcast %cst_60 : f32 to vector<2x256xf32>
    %106 = arith.maximumf %104, %105 : vector<2x256xf32>
    %c0_61 = arith.constant 0 : index
    %c0_62 = arith.constant 0 : index
    %c0_63 = arith.constant 0 : index
    %107 = vector.load %arg46[%c0_61, %c0_62, %c0_63] : memref<2x2x32xf32, #tpu.memory_space<vmem>>, vector<1x2x32xf32>
    %108 = vector.shape_cast %107 : vector<1x2x32xf32> to vector<2x32xf32>
    %c0_64 = arith.constant 0 : index
    %c0_65 = arith.constant 0 : index
    %c0_66 = arith.constant 0 : index
    %109 = vector.load %arg47[%c0_64, %c0_65, %c0_66] : memref<2x2x32xf32, #tpu.memory_space<vmem>>, vector<1x2x32xf32>
    %110 = vector.shape_cast %109 : vector<1x2x32xf32> to vector<2x32xf32>
    %c0_67 = arith.constant 0 : index
    %c0_68 = arith.constant 0 : index
    %111 = vector.load %arg11[%c0_67, %c0_68] : memref<256x128xf32, #tpu.memory_space<vmem>>, vector<256x128xf32>
    %cst_69 = arith.constant dense<0.000000e+00> : vector<2x128xf32>
    %112 = tpu.matmul %3, %111, %cst_69 {dimension_numbers = #tpu.dot_dimension_numbers<[1], [0], [0], [1], [0, 0, 1, 1], [], []>} : vector<2x256xf32>, vector<256x128xf32>, vector<2x128xf32> -> vector<2x128xf32>
    %c0_70 = arith.constant 0 : index
    %c0_71 = arith.constant 0 : index
    %113 = vector.load %arg12[%c0_70, %c0_71] : memref<32x128xf32, #tpu.memory_space<vmem>>, vector<32x128xf32>
    %cst_72 = arith.constant dense<0.000000e+00> : vector<2x128xf32>
    %114 = tpu.matmul %108, %113, %cst_72 {dimension_numbers = #tpu.dot_dimension_numbers<[1], [0], [0], [1], [0, 0, 1, 1], [], []>} : vector<2x32xf32>, vector<32x128xf32>, vector<2x128xf32> -> vector<2x128xf32>
    %115 = arith.addf %112, %114 : vector<2x128xf32>
    %c0_73 = arith.constant 0 : index
    %c0_74 = arith.constant 0 : index
    %116 = vector.load %arg13[%c0_73, %c0_74] : memref<1x128xf32, #tpu.memory_space<vmem>>, vector<1x128xf32>
    %117 = vector.broadcast %116 : vector<1x128xf32> to vector<2x128xf32>
    %118 = arith.addf %115, %117 : vector<2x128xf32>
    %119 = vector.extract_strided_slice %118 {offsets = [0, 0], sizes = [2, 32], strides = [1, 1]} : vector<2x128xf32> to vector<2x32xf32>
    %120 = arith.negf %119 : vector<2x32xf32>
    %121 = math.exp %120 : vector<2x32xf32>
    %cst_75 = arith.constant 1.000000e+00 : f32
    %122 = vector.broadcast %cst_75 : f32 to vector<2x32xf32>
    %123 = arith.addf %122, %121 : vector<2x32xf32>
    %124 = arith.divf %122, %123 : vector<2x32xf32>
    %125 = vector.extract_strided_slice %118 {offsets = [0, 32], sizes = [2, 32], strides = [1, 1]} : vector<2x128xf32> to vector<2x32xf32>
    %126 = arith.negf %125 : vector<2x32xf32>
    %127 = math.exp %126 : vector<2x32xf32>
    %cst_76 = arith.constant 1.000000e+00 : f32
    %128 = vector.broadcast %cst_76 : f32 to vector<2x32xf32>
    %129 = arith.addf %128, %127 : vector<2x32xf32>
    %130 = arith.divf %128, %129 : vector<2x32xf32>
    %131 = vector.extract_strided_slice %118 {offsets = [0, 64], sizes = [2, 32], strides = [1, 1]} : vector<2x128xf32> to vector<2x32xf32>
    %132 = math.tanh %131 : vector<2x32xf32>
    %133 = vector.extract_strided_slice %118 {offsets = [0, 96], sizes = [2, 32], strides = [1, 1]} : vector<2x128xf32> to vector<2x32xf32>
    %134 = arith.negf %133 : vector<2x32xf32>
    %135 = math.exp %134 : vector<2x32xf32>
    %cst_77 = arith.constant 1.000000e+00 : f32
    %136 = vector.broadcast %cst_77 : f32 to vector<2x32xf32>
    %137 = arith.addf %136, %135 : vector<2x32xf32>
    %138 = arith.divf %136, %137 : vector<2x32xf32>
    %139 = arith.mulf %130, %110 : vector<2x32xf32>
    %140 = arith.mulf %124, %132 : vector<2x32xf32>
    %141 = arith.addf %139, %140 : vector<2x32xf32>
    %142 = math.tanh %141 : vector<2x32xf32>
    %143 = arith.mulf %138, %142 : vector<2x32xf32>
    %c0_78 = arith.constant 0 : index
    %c0_79 = arith.constant 0 : index
    %c0_80 = arith.constant 0 : index
    %144 = vector.load %arg46[%c0_78, %c0_79, %c0_80] : memref<2x2x32xf32, #tpu.memory_space<vmem>>, vector<1x2x32xf32>
    %145 = vector.shape_cast %144 : vector<1x2x32xf32> to vector<2x32xf32>
    %146 = vector.shape_cast %143 : vector<2x32xf32> to vector<1x2x32xf32>
    tpu.vector_store %arg46[%c0_78, %c0_79, %c0_80], %146 {strides = array<i32>} : memref<2x2x32xf32, #tpu.memory_space<vmem>>, vector<1x2x32xf32>,
    %c0_81 = arith.constant 0 : index
    %c0_82 = arith.constant 0 : index
    %c0_83 = arith.constant 0 : index
    %147 = vector.load %arg47[%c0_81, %c0_82, %c0_83] : memref<2x2x32xf32, #tpu.memory_space<vmem>>, vector<1x2x32xf32>
    %148 = vector.shape_cast %147 : vector<1x2x32xf32> to vector<2x32xf32>
    %149 = vector.shape_cast %141 : vector<2x32xf32> to vector<1x2x32xf32>
    tpu.vector_store %arg47[%c0_81, %c0_82, %c0_83], %149 {strides = array<i32>} : memref<2x2x32xf32, #tpu.memory_space<vmem>>, vector<1x2x32xf32>,
    %c0_84 = arith.constant 0 : index
    %c0_85 = arith.constant 0 : index
    %150 = vector.load %arg14[%c0_84, %c0_85] : memref<32x16xf32, #tpu.memory_space<vmem>>, vector<32x16xf32>
    %cst_86 = arith.constant dense<0.000000e+00> : vector<2x16xf32>
    %151 = tpu.matmul %143, %150, %cst_86 {dimension_numbers = #tpu.dot_dimension_numbers<[1], [0], [0], [1], [0, 0, 1, 1], [], []>} : vector<2x32xf32>, vector<32x16xf32>, vector<2x16xf32> -> vector<2x16xf32>
    %c0_87 = arith.constant 0 : index
    %c0_88 = arith.constant 0 : index
    %152 = vector.load %arg15[%c0_87, %c0_88] : memref<1x16xf32, #tpu.memory_space<vmem>>, vector<1x16xf32>
    %153 = vector.broadcast %152 : vector<1x16xf32> to vector<2x16xf32>
    %154 = arith.addf %151, %153 : vector<2x16xf32>
    %155 = vector.extract_strided_slice %154 {offsets = [0, 0], sizes = [2, 8], strides = [1, 1]} : vector<2x16xf32> to vector<2x8xf32>
    %c0_i32_89 = arith.constant 0 : i32
    %156 = arith.cmpi sgt, %arg0, %c0_i32_89 : i32
    %157 = arith.extui %156 : i1 to i32
    %c0_i32_90 = arith.constant 0 : i32
    %158 = arith.cmpi ne, %157, %c0_i32_90 : i32
    scf.if %158 {
      %c0_141 = arith.constant 0 : index
      %c0_142 = arith.constant 0 : index
      %c0_143 = arith.constant 0 : index
      %235 = vector.load %arg48[%c0_141, %c0_142, %c0_143] : memref<2x2x32xf32, #tpu.memory_space<vmem>>, vector<1x2x32xf32>
      %236 = vector.shape_cast %235 : vector<1x2x32xf32> to vector<2x32xf32>
      %c0_144 = arith.constant 0 : index
      %c0_145 = arith.constant 0 : index
      %c0_146 = arith.constant 0 : index
      %237 = vector.load %arg49[%c0_144, %c0_145, %c0_146] : memref<2x2x32xf32, #tpu.memory_space<vmem>>, vector<1x2x32xf32>
      %238 = vector.shape_cast %237 : vector<1x2x32xf32> to vector<2x32xf32>
      %c0_147 = arith.constant 0 : index
      %c0_148 = arith.constant 0 : index
      %239 = vector.load %arg21[%c0_147, %c0_148] : memref<256x128xf32, #tpu.memory_space<vmem>>, vector<256x128xf32>
      %cst_149 = arith.constant dense<0.000000e+00> : vector<2x128xf32>
      %240 = tpu.matmul %3, %239, %cst_149 {dimension_numbers = #tpu.dot_dimension_numbers<[1], [0], [0], [1], [0, 0, 1, 1], [], []>} : vector<2x256xf32>, vector<256x128xf32>, vector<2x128xf32> -> vector<2x128xf32>
      %c0_150 = arith.constant 0 : index
      %c0_151 = arith.constant 0 : index
      %241 = vector.load %arg22[%c0_150, %c0_151] : memref<32x128xf32, #tpu.memory_space<vmem>>, vector<32x128xf32>
      %cst_152 = arith.constant dense<0.000000e+00> : vector<2x128xf32>
      %242 = tpu.matmul %236, %241, %cst_152 {dimension_numbers = #tpu.dot_dimension_numbers<[1], [0], [0], [1], [0, 0, 1, 1], [], []>} : vector<2x32xf32>, vector<32x128xf32>, vector<2x128xf32> -> vector<2x128xf32>
      %243 = arith.addf %240, %242 : vector<2x128xf32>
      %c0_153 = arith.constant 0 : index
      %c0_154 = arith.constant 0 : index
      %244 = vector.load %arg23[%c0_153, %c0_154] : memref<1x128xf32, #tpu.memory_space<vmem>>, vector<1x128xf32>
      %245 = vector.broadcast %244 : vector<1x128xf32> to vector<2x128xf32>
      %246 = arith.addf %243, %245 : vector<2x128xf32>
      %247 = vector.extract_strided_slice %246 {offsets = [0, 0], sizes = [2, 32], strides = [1, 1]} : vector<2x128xf32> to vector<2x32xf32>
      %248 = arith.negf %247 : vector<2x32xf32>
      %249 = math.exp %248 : vector<2x32xf32>
      %cst_155 = arith.constant 1.000000e+00 : f32
      %250 = vector.broadcast %cst_155 : f32 to vector<2x32xf32>
      %251 = arith.addf %250, %249 : vector<2x32xf32>
      %252 = arith.divf %250, %251 : vector<2x32xf32>
      %253 = vector.extract_strided_slice %246 {offsets = [0, 32], sizes = [2, 32], strides = [1, 1]} : vector<2x128xf32> to vector<2x32xf32>
      %254 = arith.negf %253 : vector<2x32xf32>
      %255 = math.exp %254 : vector<2x32xf32>
      %cst_156 = arith.constant 1.000000e+00 : f32
      %256 = vector.broadcast %cst_156 : f32 to vector<2x32xf32>
      %257 = arith.addf %256, %255 : vector<2x32xf32>
      %258 = arith.divf %256, %257 : vector<2x32xf32>
      %259 = vector.extract_strided_slice %246 {offsets = [0, 64], sizes = [2, 32], strides = [1, 1]} : vector<2x128xf32> to vector<2x32xf32>
      %260 = math.tanh %259 : vector<2x32xf32>
      %261 = vector.extract_strided_slice %246 {offsets = [0, 96], sizes = [2, 32], strides = [1, 1]} : vector<2x128xf32> to vector<2x32xf32>
      %262 = arith.negf %261 : vector<2x32xf32>
      %263 = math.exp %262 : vector<2x32xf32>
      %cst_157 = arith.constant 1.000000e+00 : f32
      %264 = vector.broadcast %cst_157 : f32 to vector<2x32xf32>
      %265 = arith.addf %264, %263 : vector<2x32xf32>
      %266 = arith.divf %264, %265 : vector<2x32xf32>
      %267 = arith.mulf %258, %238 : vector<2x32xf32>
      %268 = arith.mulf %252, %260 : vector<2x32xf32>
      %269 = arith.addf %267, %268 : vector<2x32xf32>
      %270 = math.tanh %269 : vector<2x32xf32>
      %271 = arith.mulf %266, %270 : vector<2x32xf32>
      %c0_158 = arith.constant 0 : index
      %c0_159 = arith.constant 0 : index
      %c0_160 = arith.constant 0 : index
      %272 = vector.load %arg48[%c0_158, %c0_159, %c0_160] : memref<2x2x32xf32, #tpu.memory_space<vmem>>, vector<1x2x32xf32>
      %273 = vector.shape_cast %272 : vector<1x2x32xf32> to vector<2x32xf32>
      %274 = vector.shape_cast %271 : vector<2x32xf32> to vector<1x2x32xf32>
      tpu.vector_store %arg48[%c0_158, %c0_159, %c0_160], %274 {strides = array<i32>} : memref<2x2x32xf32, #tpu.memory_space<vmem>>, vector<1x2x32xf32>,
      %c0_161 = arith.constant 0 : index
      %c0_162 = arith.constant 0 : index
      %c0_163 = arith.constant 0 : index
      %275 = vector.load %arg49[%c0_161, %c0_162, %c0_163] : memref<2x2x32xf32, #tpu.memory_space<vmem>>, vector<1x2x32xf32>
      %276 = vector.shape_cast %275 : vector<1x2x32xf32> to vector<2x32xf32>
      %277 = vector.shape_cast %269 : vector<2x32xf32> to vector<1x2x32xf32>
      tpu.vector_store %arg49[%c0_161, %c0_162, %c0_163], %277 {strides = array<i32>} : memref<2x2x32xf32, #tpu.memory_space<vmem>>, vector<1x2x32xf32>,
      %c0_164 = arith.constant 0 : index
      %c0_165 = arith.constant 0 : index
      %278 = vector.load %arg24[%c0_164, %c0_165] : memref<32x16xf32, #tpu.memory_space<vmem>>, vector<32x16xf32>
      %cst_166 = arith.constant dense<0.000000e+00> : vector<2x16xf32>
      %279 = tpu.matmul %271, %278, %cst_166 {dimension_numbers = #tpu.dot_dimension_numbers<[1], [0], [0], [1], [0, 0, 1, 1], [], []>} : vector<2x32xf32>, vector<32x16xf32>, vector<2x16xf32> -> vector<2x16xf32>
      %c0_167 = arith.constant 0 : index
      %c0_168 = arith.constant 0 : index
      %280 = vector.load %arg25[%c0_167, %c0_168] : memref<1x16xf32, #tpu.memory_space<vmem>>, vector<1x16xf32>
      %281 = vector.broadcast %280 : vector<1x16xf32> to vector<2x16xf32>
      %282 = arith.addf %279, %281 : vector<2x16xf32>
      %c0_169 = arith.constant 0 : index
      %c0_170 = arith.constant 0 : index
      %283 = vector.load %arg42[%c0_169, %c0_170] : memref<2x16xf32, #tpu.memory_space<vmem>>, vector<2x16xf32>
      tpu.vector_store %arg42[%c0_169, %c0_170], %282 {strides = array<i32>} : memref<2x16xf32, #tpu.memory_space<vmem>>, vector<2x16xf32>,
    } else {
    }
    %c0_91 = arith.constant 0 : index
    %c0_92 = arith.constant 0 : index
    %c0_93 = arith.constant 0 : index
    %159 = vector.load %arg50[%c0_91, %c0_92, %c0_93] : memref<2x2x32xf32, #tpu.memory_space<vmem>>, vector<1x2x32xf32>
    %160 = vector.shape_cast %159 : vector<1x2x32xf32> to vector<2x32xf32>
    %c0_94 = arith.constant 0 : index
    %c0_95 = arith.constant 0 : index
    %c0_96 = arith.constant 0 : index
    %161 = vector.load %arg51[%c0_94, %c0_95, %c0_96] : memref<2x2x32xf32, #tpu.memory_space<vmem>>, vector<1x2x32xf32>
    %162 = vector.shape_cast %161 : vector<1x2x32xf32> to vector<2x32xf32>
    %c0_97 = arith.constant 0 : index
    %c0_98 = arith.constant 0 : index
    %163 = vector.load %arg31[%c0_97, %c0_98] : memref<8x128xf32, #tpu.memory_space<vmem>>, vector<8x128xf32>
    %cst_99 = arith.constant dense<0.000000e+00> : vector<2x128xf32>
    %164 = tpu.matmul %155, %163, %cst_99 {dimension_numbers = #tpu.dot_dimension_numbers<[1], [0], [0], [1], [0, 0, 1, 1], [], []>} : vector<2x8xf32>, vector<8x128xf32>, vector<2x128xf32> -> vector<2x128xf32>
    %c0_100 = arith.constant 0 : index
    %c0_101 = arith.constant 0 : index
    %165 = vector.load %arg32[%c0_100, %c0_101] : memref<32x128xf32, #tpu.memory_space<vmem>>, vector<32x128xf32>
    %cst_102 = arith.constant dense<0.000000e+00> : vector<2x128xf32>
    %166 = tpu.matmul %160, %165, %cst_102 {dimension_numbers = #tpu.dot_dimension_numbers<[1], [0], [0], [1], [0, 0, 1, 1], [], []>} : vector<2x32xf32>, vector<32x128xf32>, vector<2x128xf32> -> vector<2x128xf32>
    %167 = arith.addf %164, %166 : vector<2x128xf32>
    %c0_103 = arith.constant 0 : index
    %c0_104 = arith.constant 0 : index
    %168 = vector.load %arg33[%c0_103, %c0_104] : memref<1x128xf32, #tpu.memory_space<vmem>>, vector<1x128xf32>
    %169 = vector.broadcast %168 : vector<1x128xf32> to vector<2x128xf32>
    %170 = arith.addf %167, %169 : vector<2x128xf32>
    %171 = vector.extract_strided_slice %170 {offsets = [0, 0], sizes = [2, 32], strides = [1, 1]} : vector<2x128xf32> to vector<2x32xf32>
    %172 = arith.negf %171 : vector<2x32xf32>
    %173 = math.exp %172 : vector<2x32xf32>
    %cst_105 = arith.constant 1.000000e+00 : f32
    %174 = vector.broadcast %cst_105 : f32 to vector<2x32xf32>
    %175 = arith.addf %174, %173 : vector<2x32xf32>
    %176 = arith.divf %174, %175 : vector<2x32xf32>
    %177 = vector.extract_strided_slice %170 {offsets = [0, 32], sizes = [2, 32], strides = [1, 1]} : vector<2x128xf32> to vector<2x32xf32>
    %178 = arith.negf %177 : vector<2x32xf32>
    %179 = math.exp %178 : vector<2x32xf32>
    %cst_106 = arith.constant 1.000000e+00 : f32
    %180 = vector.broadcast %cst_106 : f32 to vector<2x32xf32>
    %181 = arith.addf %180, %179 : vector<2x32xf32>
    %182 = arith.divf %180, %181 : vector<2x32xf32>
    %183 = vector.extract_strided_slice %170 {offsets = [0, 64], sizes = [2, 32], strides = [1, 1]} : vector<2x128xf32> to vector<2x32xf32>
    %184 = math.tanh %183 : vector<2x32xf32>
    %185 = vector.extract_strided_slice %170 {offsets = [0, 96], sizes = [2, 32], strides = [1, 1]} : vector<2x128xf32> to vector<2x32xf32>
    %186 = arith.negf %185 : vector<2x32xf32>
    %187 = math.exp %186 : vector<2x32xf32>
    %cst_107 = arith.constant 1.000000e+00 : f32
    %188 = vector.broadcast %cst_107 : f32 to vector<2x32xf32>
    %189 = arith.addf %188, %187 : vector<2x32xf32>
    %190 = arith.divf %188, %189 : vector<2x32xf32>
    %191 = arith.mulf %182, %162 : vector<2x32xf32>
    %192 = arith.mulf %176, %184 : vector<2x32xf32>
    %193 = arith.addf %191, %192 : vector<2x32xf32>
    %194 = math.tanh %193 : vector<2x32xf32>
    %195 = arith.mulf %190, %194 : vector<2x32xf32>
    %c0_108 = arith.constant 0 : index
    %c0_109 = arith.constant 0 : index
    %c0_110 = arith.constant 0 : index
    %196 = vector.load %arg50[%c0_108, %c0_109, %c0_110] : memref<2x2x32xf32, #tpu.memory_space<vmem>>, vector<1x2x32xf32>
    %197 = vector.shape_cast %196 : vector<1x2x32xf32> to vector<2x32xf32>
    %198 = vector.shape_cast %195 : vector<2x32xf32> to vector<1x2x32xf32>
    tpu.vector_store %arg50[%c0_108, %c0_109, %c0_110], %198 {strides = array<i32>} : memref<2x2x32xf32, #tpu.memory_space<vmem>>, vector<1x2x32xf32>,
    %c0_111 = arith.constant 0 : index
    %c0_112 = arith.constant 0 : index
    %c0_113 = arith.constant 0 : index
    %199 = vector.load %arg51[%c0_111, %c0_112, %c0_113] : memref<2x2x32xf32, #tpu.memory_space<vmem>>, vector<1x2x32xf32>
    %200 = vector.shape_cast %199 : vector<1x2x32xf32> to vector<2x32xf32>
    %201 = vector.shape_cast %193 : vector<2x32xf32> to vector<1x2x32xf32>
    tpu.vector_store %arg51[%c0_111, %c0_112, %c0_113], %201 {strides = array<i32>} : memref<2x2x32xf32, #tpu.memory_space<vmem>>, vector<1x2x32xf32>,
    %c0_114 = arith.constant 0 : index
    %c0_115 = arith.constant 0 : index
    %202 = vector.load %arg34[%c0_114, %c0_115] : memref<32x256xf32, #tpu.memory_space<vmem>>, vector<32x256xf32>
    %cst_116 = arith.constant dense<0.000000e+00> : vector<2x256xf32>
    %203 = tpu.matmul %195, %202, %cst_116 {dimension_numbers = #tpu.dot_dimension_numbers<[1], [0], [0], [1], [0, 0, 1, 1], [], []>} : vector<2x32xf32>, vector<32x256xf32>, vector<2x256xf32> -> vector<2x256xf32>
    %c0_117 = arith.constant 0 : index
    %c0_118 = arith.constant 0 : index
    %204 = vector.load %arg35[%c0_117, %c0_118] : memref<1x256xf32, #tpu.memory_space<vmem>>, vector<1x256xf32>
    %205 = vector.broadcast %204 : vector<1x256xf32> to vector<2x256xf32>
    %206 = arith.addf %203, %205 : vector<2x256xf32>
    %207 = arith.negf %206 : vector<2x256xf32>
    %208 = math.exp %207 : vector<2x256xf32>
    %cst_119 = arith.constant 1.000000e+00 : f32
    %209 = vector.broadcast %cst_119 : f32 to vector<2x256xf32>
    %210 = arith.addf %209, %208 : vector<2x256xf32>
    %211 = arith.divf %209, %210 : vector<2x256xf32>
    %c0_120 = arith.constant 0 : index
    %c0_121 = arith.constant 0 : index
    %212 = vector.load %arg41[%c0_120, %c0_121] : memref<2x256xf32, #tpu.memory_space<vmem>>, vector<2x256xf32>
    tpu.vector_store %arg41[%c0_120, %c0_121], %211 {strides = array<i32>} : memref<2x256xf32, #tpu.memory_space<vmem>>, vector<2x256xf32>,
    %c0_122 = arith.constant 0 : index
    %c0_123 = arith.constant 0 : index
    %c0_124 = arith.constant 0 : index
    %213 = vector.load %arg2[%c0_122, %c0_123, %c0_124] : memref<1x2x256xf32, #tpu.memory_space<vmem>>, vector<1x2x256xf32>
    %214 = vector.shape_cast %213 : vector<1x2x256xf32> to vector<2x256xf32>
    %215 = arith.subf %214, %211 : vector<2x256xf32>
    %216 = math.absf %215 : vector<2x256xf32>
    %c0_125 = arith.constant 0 : index
    %c0_126 = arith.constant 0 : index
    %217 = vector.load %arg3[%c0_125, %c0_126] : memref<256x256xf32, #tpu.memory_space<vmem>>, vector<256x256xf32>
    %cst_127 = arith.constant dense<0.000000e+00> : vector<2x256xf32>
    %218 = tpu.matmul %216, %217, %cst_127 {dimension_numbers = #tpu.dot_dimension_numbers<[1], [0], [0], [1], [0, 0, 1, 1], [], []>} : vector<2x256xf32>, vector<256x256xf32>, vector<2x256xf32> -> vector<2x256xf32>
    %c0_128 = arith.constant 0 : index
    %c0_129 = arith.constant 0 : index
    %219 = vector.load %arg4[%c0_128, %c0_129] : memref<1x256xf32, #tpu.memory_space<vmem>>, vector<1x256xf32>
    %220 = vector.broadcast %219 : vector<1x256xf32> to vector<2x256xf32>
    %221 = arith.addf %218, %220 : vector<2x256xf32>
    %cst_130 = arith.constant 0.000000e+00 : f32
    %222 = vector.broadcast %cst_130 : f32 to vector<2x256xf32>
    %223 = arith.maximumf %221, %222 : vector<2x256xf32>
    %c0_131 = arith.constant 0 : index
    %c0_132 = arith.constant 0 : index
    %224 = vector.load %arg44[%c0_131, %c0_132] : memref<2x256xf32, #tpu.memory_space<vmem>>, vector<2x256xf32>
    tpu.vector_store %arg44[%c0_131, %c0_132], %223 {strides = array<i32>} : memref<2x256xf32, #tpu.memory_space<vmem>>, vector<2x256xf32>,
    %225 = arith.subf %223, %106 : vector<2x256xf32>
    %226 = math.absf %225 : vector<2x256xf32>
    %c0_133 = arith.constant 0 : index
    %c0_134 = arith.constant 0 : index
    %227 = vector.load %arg5[%c0_133, %c0_134] : memref<256x64xf32, #tpu.memory_space<vmem>>, vector<256x64xf32>
    %cst_135 = arith.constant dense<0.000000e+00> : vector<2x64xf32>
    %228 = tpu.matmul %226, %227, %cst_135 {dimension_numbers = #tpu.dot_dimension_numbers<[1], [0], [0], [1], [0, 0, 1, 1], [], []>} : vector<2x256xf32>, vector<256x64xf32>, vector<2x64xf32> -> vector<2x64xf32>
    %c0_136 = arith.constant 0 : index
    %c0_137 = arith.constant 0 : index
    %229 = vector.load %arg6[%c0_136, %c0_137] : memref<1x64xf32, #tpu.memory_space<vmem>>, vector<1x64xf32>
    %230 = vector.broadcast %229 : vector<1x64xf32> to vector<2x64xf32>
    %231 = arith.addf %228, %230 : vector<2x64xf32>
    %cst_138 = arith.constant 0.000000e+00 : f32
    %232 = vector.broadcast %cst_138 : f32 to vector<2x64xf32>
    %233 = arith.maximumf %231, %232 : vector<2x64xf32>
    %c0_139 = arith.constant 0 : index
    %c0_140 = arith.constant 0 : index
    %234 = vector.load %arg45[%c0_139, %c0_140] : memref<2x64xf32, #tpu.memory_space<vmem>>, vector<2x64xf32>
    tpu.vector_store %arg45[%c0_139, %c0_140], %233 {strides = array<i32>} : memref<2x64xf32, #tpu.memory_space<vmem>>, vector<2x64xf32>,
    return
  }
  func.func @transform_0(%arg0: i32) -> (i32, i32, i32) {
    %c0_i32 = arith.constant 0 : i32
    %c0_i32_0 = arith.constant 0 : i32
    %c0_i32_1 = arith.constant 0 : i32
    %c0_i32_2 = arith.constant 0 : i32
    return %c0_i32, %c0_i32_0, %c0_i32_1 : i32, i32, i32
  }
  func.func @transform_1(%arg0: i32) -> (i32, i32, i32) {
    %c0_i32 = arith.constant 0 : i32
    %c0_i32_0 = arith.constant 0 : i32
    %c0_i32_1 = arith.constant 0 : i32
    return %arg0, %c0_i32, %c0_i32_0 : i32, i32, i32
  }
  func.func @transform_2(%arg0: i32) -> (i32, i32) {
    %c0_i32 = arith.constant 0 : i32
    %c0_i32_0 = arith.constant 0 : i32
    %c0_i32_1 = arith.constant 0 : i32
    return %c0_i32, %c0_i32_0 : i32, i32
  }
  func.func @transform_3(%arg0: i32) -> (i32, i32) {
    %c0_i32 = arith.constant 0 : i32
    %c0_i32_0 = arith.constant 0 : i32
    %c0_i32_1 = arith.constant 0 : i32
    return %c0_i32, %c0_i32_0 : i32, i32
  }
  func.func @transform_4(%arg0: i32) -> (i32, i32) {
    %c0_i32 = arith.constant 0 : i32
    %c0_i32_0 = arith.constant 0 : i32
    %c0_i32_1 = arith.constant 0 : i32
    return %c0_i32, %c0_i32_0 : i32, i32
  }
  func.func @transform_5(%arg0: i32) -> (i32, i32) {
    %c0_i32 = arith.constant 0 : i32
    %c0_i32_0 = arith.constant 0 : i32
    %c0_i32_1 = arith.constant 0 : i32
    return %c0_i32, %c0_i32_0 : i32, i32
  }
  func.func @transform_6(%arg0: i32) -> (i32, i32) {
    %c0_i32 = arith.constant 0 : i32
    %c0_i32_0 = arith.constant 0 : i32
    %c0_i32_1 = arith.constant 0 : i32
    return %c0_i32, %c0_i32_0 : i32, i32
  }
  func.func @transform_7(%arg0: i32) -> (i32, i32) {
    %c0_i32 = arith.constant 0 : i32
    %c0_i32_0 = arith.constant 0 : i32
    %c0_i32_1 = arith.constant 0 : i32
    return %c0_i32, %c0_i32_0 : i32, i32
  }
  func.func @transform_8(%arg0: i32) -> (i32, i32) {
    %c0_i32 = arith.constant 0 : i32
    %c0_i32_0 = arith.constant 0 : i32
    %c0_i32_1 = arith.constant 0 : i32
    return %c0_i32, %c0_i32_0 : i32, i32
  }
  func.func @transform_9(%arg0: i32) -> (i32, i32) {
    %c0_i32 = arith.constant 0 : i32
    %c0_i32_0 = arith.constant 0 : i32
    %c0_i32_1 = arith.constant 0 : i32
    return %c0_i32, %c0_i32_0 : i32, i32
  }
  func.func @transform_10(%arg0: i32) -> (i32, i32) {
    %c0_i32 = arith.constant 0 : i32
    %c0_i32_0 = arith.constant 0 : i32
    %c0_i32_1 = arith.constant 0 : i32
    return %c0_i32, %c0_i32_0 : i32, i32
  }
  func.func @transform_11(%arg0: i32) -> (i32, i32) {
    %c0_i32 = arith.constant 0 : i32
    %c0_i32_0 = arith.constant 0 : i32
    %c0_i32_1 = arith.constant 0 : i32
    return %c0_i32, %c0_i32_0 : i32, i32
  }
  func.func @transform_12(%arg0: i32) -> (i32, i32) {
    %c0_i32 = arith.constant 0 : i32
    %c0_i32_0 = arith.constant 0 : i32
    %c0_i32_1 = arith.constant 0 : i32
    return %c0_i32, %c0_i32_0 : i32, i32
  }
  func.func @transform_13(%arg0: i32) -> (i32, i32) {
    %c0_i32 = arith.constant 0 : i32
    %c0_i32_0 = arith.constant 0 : i32
    %c0_i32_1 = arith.constant 0 : i32
    return %c0_i32, %c0_i32_0 : i32, i32
  }
  func.func @transform_14(%arg0: i32) -> (i32, i32) {
    %c0_i32 = arith.constant 0 : i32
    %c0_i32_0 = arith.constant 0 : i32
    %c0_i32_1 = arith.constant 0 : i32
    return %c0_i32, %c0_i32_0 : i32, i32
  }
  func.func @transform_15(%arg0: i32) -> (i32, i32) {
    %c0_i32 = arith.constant 0 : i32
    %c0_i32_0 = arith.constant 0 : i32
    %c0_i32_1 = arith.constant 0 : i32
    return %c0_i32, %c0_i32_0 : i32, i32
  }
  func.func @transform_16(%arg0: i32) -> (i32, i32) {
    %c0_i32 = arith.constant 0 : i32
    %c0_i32_0 = arith.constant 0 : i32
    %c0_i32_1 = arith.constant 0 : i32
    return %c0_i32, %c0_i32_0 : i32, i32
  }
  func.func @transform_17(%arg0: i32) -> (i32, i32) {
    %c0_i32 = arith.constant 0 : i32
    %c0_i32_0 = arith.constant 0 : i32
    %c0_i32_1 = arith.constant 0 : i32
    return %c0_i32, %c0_i32_0 : i32, i32
  }
  func.func @transform_18(%arg0: i32) -> (i32, i32) {
    %c0_i32 = arith.constant 0 : i32
    %c0_i32_0 = arith.constant 0 : i32
    %c0_i32_1 = arith.constant 0 : i32
    return %c0_i32, %c0_i32_0 : i32, i32
  }
  func.func @transform_19(%arg0: i32) -> (i32, i32) {
    %c0_i32 = arith.constant 0 : i32
    %c0_i32_0 = arith.constant 0 : i32
    %c0_i32_1 = arith.constant 0 : i32
    return %c0_i32, %c0_i32_0 : i32, i32
  }
  func.func @transform_20(%arg0: i32) -> (i32, i32) {
    %c0_i32 = arith.constant 0 : i32
    %c0_i32_0 = arith.constant 0 : i32
    %c0_i32_1 = arith.constant 0 : i32
    return %c0_i32, %c0_i32_0 : i32, i32
  }
  func.func @transform_21(%arg0: i32) -> (i32, i32) {
    %c0_i32 = arith.constant 0 : i32
    %c0_i32_0 = arith.constant 0 : i32
    %c0_i32_1 = arith.constant 0 : i32
    return %c0_i32, %c0_i32_0 : i32, i32
  }
  func.func @transform_22(%arg0: i32) -> (i32, i32) {
    %c0_i32 = arith.constant 0 : i32
    %c0_i32_0 = arith.constant 0 : i32
    %c0_i32_1 = arith.constant 0 : i32
    return %c0_i32, %c0_i32_0 : i32, i32
  }
  func.func @transform_23(%arg0: i32) -> (i32, i32) {
    %c0_i32 = arith.constant 0 : i32
    %c0_i32_0 = arith.constant 0 : i32
    %c0_i32_1 = arith.constant 0 : i32
    return %c0_i32, %c0_i32_0 : i32, i32
  }
  func.func @transform_24(%arg0: i32) -> (i32, i32) {
    %c0_i32 = arith.constant 0 : i32
    %c0_i32_0 = arith.constant 0 : i32
    %c0_i32_1 = arith.constant 0 : i32
    return %c0_i32, %c0_i32_0 : i32, i32
  }
  func.func @transform_25(%arg0: i32) -> (i32, i32) {
    %c0_i32 = arith.constant 0 : i32
    %c0_i32_0 = arith.constant 0 : i32
    %c0_i32_1 = arith.constant 0 : i32
    return %c0_i32, %c0_i32_0 : i32, i32
  }
  func.func @transform_26(%arg0: i32) -> (i32, i32) {
    %c0_i32 = arith.constant 0 : i32
    %c0_i32_0 = arith.constant 0 : i32
    %c0_i32_1 = arith.constant 0 : i32
    return %c0_i32, %c0_i32_0 : i32, i32
  }
  func.func @transform_27(%arg0: i32) -> (i32, i32) {
    %c0_i32 = arith.constant 0 : i32
    %c0_i32_0 = arith.constant 0 : i32
    %c0_i32_1 = arith.constant 0 : i32
    return %c0_i32, %c0_i32_0 : i32, i32
  }
  func.func @transform_28(%arg0: i32) -> (i32, i32) {
    %c0_i32 = arith.constant 0 : i32
    %c0_i32_0 = arith.constant 0 : i32
    %c0_i32_1 = arith.constant 0 : i32
    return %c0_i32, %c0_i32_0 : i32, i32
  }
  func.func @transform_29(%arg0: i32) -> (i32, i32) {
    %c0_i32 = arith.constant 0 : i32
    %c0_i32_0 = arith.constant 0 : i32
    %c0_i32_1 = arith.constant 0 : i32
    return %c0_i32, %c0_i32_0 : i32, i32
  }
  func.func @transform_30(%arg0: i32) -> (i32, i32) {
    %c0_i32 = arith.constant 0 : i32
    %c0_i32_0 = arith.constant 0 : i32
    %c0_i32_1 = arith.constant 0 : i32
    return %c0_i32, %c0_i32_0 : i32, i32
  }
  func.func @transform_31(%arg0: i32) -> (i32, i32) {
    %c0_i32 = arith.constant 0 : i32
    %c0_i32_0 = arith.constant 0 : i32
    %c0_i32_1 = arith.constant 0 : i32
    return %c0_i32, %c0_i32_0 : i32, i32
  }
  func.func @transform_32(%arg0: i32) -> (i32, i32) {
    %c0_i32 = arith.constant 0 : i32
    %c0_i32_0 = arith.constant 0 : i32
    %c0_i32_1 = arith.constant 0 : i32
    return %c0_i32, %c0_i32_0 : i32, i32
  }
  func.func @transform_33(%arg0: i32) -> (i32, i32) {
    %c0_i32 = arith.constant 0 : i32
    %c0_i32_0 = arith.constant 0 : i32
    %c0_i32_1 = arith.constant 0 : i32
    return %c0_i32, %c0_i32_0 : i32, i32
  }
  func.func @transform_34(%arg0: i32) -> (i32, i32) {
    %c0_i32 = arith.constant 0 : i32
    %c0_i32_0 = arith.constant 0 : i32
    %c0_i32_1 = arith.constant 0 : i32
    return %c0_i32, %c0_i32_0 : i32, i32
  }
  func.func @transform_35(%arg0: i32) -> (i32, i32) {
    %c0_i32 = arith.constant 0 : i32
    %c0_i32_0 = arith.constant 0 : i32
    %c0_i32_1 = arith.constant 0 : i32
    return %c0_i32, %c0_i32_0 : i32, i32
  }
  func.func @transform_36(%arg0: i32) -> (i32, i32) {
    %c0_i32 = arith.constant 0 : i32
    %c0_i32_0 = arith.constant 0 : i32
    %c0_i32_1 = arith.constant 0 : i32
    return %c0_i32, %c0_i32_0 : i32, i32
  }
  func.func @transform_37(%arg0: i32) -> (i32, i32) {
    %c0_i32 = arith.constant 0 : i32
    %c0_i32_0 = arith.constant 0 : i32
    %c0_i32_1 = arith.constant 0 : i32
    return %c0_i32, %c0_i32_0 : i32, i32
  }
  func.func @transform_38(%arg0: i32) -> (i32, i32) {
    %c0_i32 = arith.constant 0 : i32
    %c0_i32_0 = arith.constant 0 : i32
    %c0_i32_1 = arith.constant 0 : i32
    return %c0_i32, %c0_i32_0 : i32, i32
  }
  func.func @transform_39(%arg0: i32) -> (i32, i32) {
    %c0_i32 = arith.constant 0 : i32
    %c0_i32_0 = arith.constant 0 : i32
    %c0_i32_1 = arith.constant 0 : i32
    return %c0_i32, %c0_i32_0 : i32, i32
  }
  func.func @transform_40(%arg0: i32) -> (i32, i32) {
    %c0_i32 = arith.constant 0 : i32
    %c0_i32_0 = arith.constant 0 : i32
    %c0_i32_1 = arith.constant 0 : i32
    return %c0_i32, %c0_i32_0 : i32, i32
  }
  func.func @transform_41(%arg0: i32) -> (i32, i32) {
    %c0_i32 = arith.constant 0 : i32
    %c0_i32_0 = arith.constant 0 : i32
    %c0_i32_1 = arith.constant 0 : i32
    return %c0_i32, %c0_i32_0 : i32, i32
  }
  func.func @transform_42(%arg0: i32) -> (i32, i32) {
    %c0_i32 = arith.constant 0 : i32
    %c0_i32_0 = arith.constant 0 : i32
    %c0_i32_1 = arith.constant 0 : i32
    return %c0_i32, %c0_i32_0 : i32, i32
  }
}

</mosaic_0001>

<llo_original>
// kernel: hvrnn_prednet_forward.1
$region0: #{hvrnn_prednet_forward.1}
  #allocation0 [shape = 'u32[]', space=smem, size = 0x4, offset = 0x4, fixed_abs, tag = 'smem constant byte address 0x4 - core index']
  #allocation1 [shape = 'u32[144,128]{1,0:T(1,128)}', space=vmem, size = 0x12000, scoped, tag = 'internal scratch']
  #allocation2 [shape = 'f32[2,256]{1,0:T(2,128)}', space=vmem, size = 0x800, scoped, tag = 'scratch operand']
  #allocation3 [shape = 'f32[2,64]{1,0:T(2,128)}', space=vmem, size = 0x400, scoped, tag = 'scratch operand']
  #allocation4 [shape = 'f32[2,2,32]{2,1,0:T(2,128)}', space=vmem, size = 0x800, scoped, tag = 'scratch operand']
  #allocation5 [shape = 'f32[2,2,32]{2,1,0:T(2,128)}', space=vmem, size = 0x800, scoped, tag = 'scratch operand']
  #allocation6 [shape = 'f32[2,2,32]{2,1,0:T(2,128)}', space=vmem, size = 0x800, scoped, tag = 'scratch operand']
  #allocation7 [shape = 'f32[2,2,32]{2,1,0:T(2,128)}', space=vmem, size = 0x800, scoped, tag = 'scratch operand']
  #allocation8 [shape = 'f32[2,2,32]{2,1,0:T(2,128)}', space=vmem, size = 0x800, scoped, tag = 'scratch operand']
  #allocation9 [shape = 'f32[2,2,32]{2,1,0:T(2,128)}', space=vmem, size = 0x800, scoped, tag = 'scratch operand']
  %s0 = inlined_call_operand.smem [shape: u32[43], index: -1, kind: input, shape index: {}]
  %s1 = sld [smem:[%s0]]
  %s2 = scalar_lea.smem %s0, 1
  %s3 = sld [smem:[%s2]]
  %s4 = scalar_lea.smem %s0, 2
  %s5 = sld [smem:[%s4]]
  %s6 = scalar_lea.smem %s0, 3
  %s7 = sld [smem:[%s6]]
  %s8 = scalar_lea.smem %s0, 4
  %s9 = sld [smem:[%s8]]
  %s10 = scalar_lea.smem %s0, 5
  %s11 = sld [smem:[%s10]]
  %s12 = scalar_lea.smem %s0, 6
  %s13 = sld [smem:[%s12]]
  %s14 = scalar_lea.smem %s0, 7
  %s15 = sld [smem:[%s14]]
  %s16 = scalar_lea.smem %s0, 8
  %s17 = sld [smem:[%s16]]
  %s18 = scalar_lea.smem %s0, 9
  %s19 = sld [smem:[%s18]]
  %s20 = scalar_lea.smem %s0, 10
  %s21 = sld [smem:[%s20]]
  %s22 = scalar_lea.smem %s0, 11
  %s23 = sld [smem:[%s22]]
  %s24 = scalar_lea.smem %s0, 12
  %s25 = sld [smem:[%s24]]
  %s26 = scalar_lea.smem %s0, 13
  %s27 = sld [smem:[%s26]]
  %s28 = scalar_lea.smem %s0, 14
  %s29 = sld [smem:[%s28]]
  %s30 = scalar_lea.smem %s0, 15
  %s31 = sld [smem:[%s30]]
  %s32 = scalar_lea.smem %s0, 16
  %s33 = sld [smem:[%s32]]
  %s34 = scalar_lea.smem %s0, 17
  %s35 = sld [smem:[%s34]]
  %s36 = scalar_lea.smem %s0, 18
  %s37 = sld [smem:[%s36]]
  %s38 = scalar_lea.smem %s0, 19
  %s39 = sld [smem:[%s38]]
  %s40 = scalar_lea.smem %s0, 20
  %s41 = sld [smem:[%s40]]
  %s42 = scalar_lea.smem %s0, 21
  %s43 = sld [smem:[%s42]]
  %s44 = scalar_lea.smem %s0, 22
  %s45 = sld [smem:[%s44]]
  %s46 = scalar_lea.smem %s0, 23
  %s47 = sld [smem:[%s46]]
  %s48 = scalar_lea.smem %s0, 24
  %s49 = sld [smem:[%s48]]
  %s50 = scalar_lea.smem %s0, 25
  %s51 = sld [smem:[%s50]]
  %s52 = scalar_lea.smem %s0, 26
  %s53 = sld [smem:[%s52]]
  %s54 = scalar_lea.smem %s0, 27
  %s55 = sld [smem:[%s54]]
  %s56 = scalar_lea.smem %s0, 28
  %s57 = sld [smem:[%s56]]
  %s58 = scalar_lea.smem %s0, 29
  %s59 = sld [smem:[%s58]]
  %s60 = scalar_lea.smem %s0, 30
  %s61 = sld [smem:[%s60]]
  %s62 = scalar_lea.smem %s0, 31
  %s63 = sld [smem:[%s62]]
  %s64 = scalar_lea.smem %s0, 32
  %s65 = sld [smem:[%s64]]
  %s66 = scalar_lea.smem %s0, 33
  %s67 = sld [smem:[%s66]]
  %s68 = scalar_lea.smem %s0, 34
  %s69 = sld [smem:[%s68]]
  %s70 = scalar_lea.smem %s0, 35
  %s71 = sld [smem:[%s70]]
  %s72 = scalar_lea.smem %s0, 36
  %s73 = sld [smem:[%s72]]
  %s74 = scalar_lea.smem %s0, 37
  %s75 = sld [smem:[%s74]]
  %s76 = scalar_lea.smem %s0, 38
  %s77 = sld [smem:[%s76]]
  %s78 = scalar_lea.smem %s0, 39
  %s79 = sld [smem:[%s78]]
  %s80 = scalar_lea.smem %s0, 40
  %s81 = sld [smem:[%s80]]
  %s82 = scalar_lea.smem %s0, 41
  %s83 = sld [smem:[%s82]]
  %s84 = scalar_lea.smem %s0, 42
  %s85 = sld [smem:[%s84]]
  %86 = xla_tuple %s81, %s83, %s85
  %s87 = sld [smem:[#allocation0]]
  $region293: #{hvrnn_prednet_forward.1} parent=0
    _
  %s89 = ssub.s32 1, %s87
  %s90 = scalar_select 0, %s89, %s87
  $region1: #{hvrnn_prednet_forward.1} parent=0
    #allocation10 [shape = 'u8[1024]{0}', space=vmem, size = 0x400, scoped, tag = 'input window, operand 9, single buffered']
    #allocation11 [shape = 's32[2]{0}', space=sflag, size = 0x8, scoped, tag = 'scoped memory for hvrnn_prednet_forward.1']
    #allocation12 [shape = 's32[2]{0}', space=sflag, size = 0x8, scoped, tag = 'scoped memory for hvrnn_prednet_forward.1']
    #allocation13 [shape = 'u8[512]{0}', space=vmem, size = 0x400, scoped, tag = 'input window, operand 12, single buffered']
    #allocation14 [shape = 's32[1]{0}', space=sflag, size = 0x4, scoped, tag = 'scoped memory for hvrnn_prednet_forward.1']
    #allocation15 [shape = 'u8[512]{0}', space=vmem, size = 0x400, scoped, tag = 'input window, operand 14, single buffered']
    #allocation16 [shape = 'u8[512]{0}', space=vmem, size = 0x400, scoped, tag = 'input window, operand 17, single buffered']
    #allocation17 [shape = 's32[1]{0}', space=sflag, size = 0x4, scoped, tag = 'scoped memory for hvrnn_prednet_forward.1']
    #allocation18 [shape = 'u8[512]{0}', space=vmem, size = 0x400, scoped, tag = 'input window, operand 19, single buffered']
    #allocation19 [shape = 'u8[16384]{0}', space=vmem, size = 0x4000, scoped, tag = 'input window, operand 21, single buffered']
    #allocation20 [shape = 's32[1]{0}', space=sflag, size = 0x4, scoped, tag = 'scoped memory for hvrnn_prednet_forward.1']
    #allocation21 [shape = 'u8[512]{0}', space=vmem, size = 0x400, scoped, tag = 'input window, operand 22, single buffered']
    #allocation22 [shape = 'u8[512]{0}', space=vmem, size = 0x400, scoped, tag = 'input window, operand 24, single buffered']
    #allocation23 [shape = 's32[1]{0}', space=sflag, size = 0x4, scoped, tag = 'scoped memory for hvrnn_prednet_forward.1']
    #allocation24 [shape = 'u8[16384]{0}', space=vmem, size = 0x4000, scoped, tag = 'input window, operand 26, single buffered']
    #allocation25 [shape = 'u8[512]{0}', space=vmem, size = 0x400, scoped, tag = 'input window, operand 27, single buffered']
    #allocation26 [shape = 's32[1]{0}', space=sflag, size = 0x4, scoped, tag = 'scoped memory for hvrnn_prednet_forward.1']
    #allocation27 [shape = 'u8[512]{0}', space=vmem, size = 0x400, scoped, tag = 'input window, operand 29, single buffered']
    #allocation28 [shape = 'u8[16384]{0}', space=vmem, size = 0x4000, scoped, tag = 'input window, operand 31, single buffered']
    #allocation29 [shape = 's32[1]{0}', space=sflag, size = 0x4, scoped, tag = 'scoped memory for hvrnn_prednet_forward.1']
    #allocation30 [shape = 'u8[512]{0}', space=vmem, size = 0x400, scoped, tag = 'input window, operand 32, single buffered']
    #allocation31 [shape = 'u8[1024]{0}', space=vmem, size = 0x400, scoped, tag = 'input window, operand 34, single buffered']
    #allocation32 [shape = 's32[1]{0}', space=sflag, size = 0x4, scoped, tag = 'scoped memory for hvrnn_prednet_forward.1']
    #allocation33 [shape = 'u8[4096]{0}', space=vmem, size = 0x1000, scoped, tag = 'input window, operand 35, single buffered']
    #allocation34 [shape = 'u8[16384]{0}', space=vmem, size = 0x4000, scoped, tag = 'input window, operand 36, single buffered']
    #allocation35 [shape = 's32[1]{0}', space=sflag, size = 0x4, scoped, tag = 'scoped memory for hvrnn_prednet_forward.1']
    #allocation36 [shape = 'u8[512]{0}', space=vmem, size = 0x400, scoped, tag = 'input window, operand 37, single buffered']
    #allocation37 [shape = 'u8[1024]{0}', space=vmem, size = 0x400, scoped, tag = 'input window, operand 39, single buffered']
    #allocation38 [shape = 's32[1]{0}', space=sflag, size = 0x4, scoped, tag = 'scoped memory for hvrnn_prednet_forward.1']
    #allocation39 [shape = 'u8[1024]{0}', space=vmem, size = 0x400, scoped, tag = 'output window, operand 1, single buffered']
    #allocation40 [shape = 'u8[1024]{0}', space=vmem, size = 0x400, scoped, tag = 'output window, operand 2, single buffered']
    #allocation41 [shape = 's32[1]{0}', space=sflag, size = 0x4, scoped, tag = 'scoped memory for hvrnn_prednet_forward.1']
    %91 = vsyncpa [#allocation11], 0
    %92 = vsyncpa [#allocation14], 0
    %93 = vsyncpa [#allocation17], 0
    %94 = vsyncpa [#allocation20], 0
    %95 = vsyncpa [#allocation23], 0
    %96 = vsyncpa [#allocation26], 0
    %97 = vsyncpa [#allocation29], 0
    %98 = vsyncpa [#allocation32], 0
    %99 = vsyncpa [#allocation35], 0
    %100 = vsyncpa [#allocation38], 0
    %101 = vsyncpa [#allocation12], 0
    %102 = vsyncpa [#allocation41], 0
    loop: start=0, step=1, limit=6
    $region2: #{hvrnn_prednet_forward.1} parent=1 // loop_pre_header
      _
    $region3: #{hvrnn_prednet_forward.1} parent=1 // loop_header
      %s104 = sphi 0, %s108
      %p105 = scmp.ge.s32.totalorder %s104, 6
      %s112 = sphi 0, %s112
      %s114 = sphi 0, %s112
      %s115 = sphi 0, %s114
      %s129 = sphi 0, %s115
      %s135 = sphi 0, %s137
      %s138 = sphi 0, %s135
      %s139 = sphi 0, %s138
      %s155 = sphi 0, %s139
      %s159 = sphi 0, %s159
      %s161 = sphi 0, %s159
      %s162 = sphi 0, %s161
      %s176 = sphi 0, %s162
      %s180 = sphi 0, %s180
      %s182 = sphi 0, %s180
      %s183 = sphi 0, %s182
      %s197 = sphi 0, %s183
      %s201 = sphi 0, %s201
      %s203 = sphi 0, %s201
      %s204 = sphi 0, %s203
      %s218 = sphi 0, %s204
      %s222 = sphi 0, %s222
      %s224 = sphi 0, %s222
      %s225 = sphi 0, %s224
      %s239 = sphi 0, %s225
      %s243 = sphi 0, %s243
      %s245 = sphi 0, %s243
      %s246 = sphi 0, %s245
      %s260 = sphi 0, %s246
      %s264 = sphi 0, %s264
      %s266 = sphi 0, %s264
      %s267 = sphi 0, %s266
      %s281 = sphi 0, %s267
      %s285 = sphi 0, %s285
      %s287 = sphi 0, %s285
      %s288 = sphi 0, %s287
      %s302 = sphi 0, %s288
      %s306 = sphi 0, %s306
      %s308 = sphi 0, %s306
      %s309 = sphi 0, %s308
      %s323 = sphi 0, %s309
      %s327 = sphi 0, %s327
      %s329 = sphi 0, %s327
      %s330 = sphi 0, %s329
      %s344 = sphi 0, %s330
      %s348 = sphi 0, %s348
      %s350 = sphi 0, %s348
      %s351 = sphi 0, %s350
      %s365 = sphi 0, %s351
      %s369 = sphi 0, %s369
      %s371 = sphi 0, %s369
      %s372 = sphi 0, %s371
      %s386 = sphi 0, %s372
      %s390 = sphi 0, %s390
      %s392 = sphi 0, %s390
      %s393 = sphi 0, %s392
      %s407 = sphi 0, %s393
      %s411 = sphi 0, %s411
      %s413 = sphi 0, %s411
      %s414 = sphi 0, %s413
      %s428 = sphi 0, %s414
      %s432 = sphi 0, %s432
      %s434 = sphi 0, %s432
      %s435 = sphi 0, %s434
      %s449 = sphi 0, %s435
      %s453 = sphi 0, %s453
      %s455 = sphi 0, %s453
      %s456 = sphi 0, %s455
      %s470 = sphi 0, %s456
      %s474 = sphi 0, %s474
      %s476 = sphi 0, %s474
      %s477 = sphi 0, %s476
      %s491 = sphi 0, %s477
      %s495 = sphi 0, %s495
      %s497 = sphi 0, %s495
      %s498 = sphi 0, %s497
      %s512 = sphi 0, %s498
      %s516 = sphi 0, %s516
      %s518 = sphi 0, %s516
      %s519 = sphi 0, %s518
      %s533 = sphi 0, %s519
      %s537 = sphi 0, %s537
      %s539 = sphi 0, %s537
      %s540 = sphi 0, %s539
      %s554 = sphi 0, %s540
      %s558 = sphi 0, %s558
      %s560 = sphi 0, %s558
      %s561 = sphi 0, %s560
      %s575 = sphi 0, %s561
      %s579 = sphi 0, %s579
      %s581 = sphi 0, %s579
      %s582 = sphi 0, %s581
      %s596 = sphi 0, %s582
      %s600 = sphi 0, %s600
      %s602 = sphi 0, %s600
      %s603 = sphi 0, %s602
      %s617 = sphi 0, %s603
      %s621 = sphi 0, %s621
      %s623 = sphi 0, %s621
      %s624 = sphi 0, %s623
      %s638 = sphi 0, %s624
      %s642 = sphi 0, %s642
      %s644 = sphi 0, %s642
      %s645 = sphi 0, %s644
      %s659 = sphi 0, %s645
      %s663 = sphi 0, %s663
      %s665 = sphi 0, %s663
      %s666 = sphi 0, %s665
      %s680 = sphi 0, %s666
      %s684 = sphi 0, %s684
      %s686 = sphi 0, %s684
      %s687 = sphi 0, %s686
      %s701 = sphi 0, %s687
      %s705 = sphi 0, %s705
      %s707 = sphi 0, %s705
      %s708 = sphi 0, %s707
      %s722 = sphi 0, %s708
      %s726 = sphi 0, %s726
      %s728 = sphi 0, %s726
      %s729 = sphi 0, %s728
      %s743 = sphi 0, %s729
      %s747 = sphi 0, %s747
      %s749 = sphi 0, %s747
      %s750 = sphi 0, %s749
      %s764 = sphi 0, %s750
      %s768 = sphi 0, %s768
      %s770 = sphi 0, %s768
      %s771 = sphi 0, %s770
      %s785 = sphi 0, %s771
      %s789 = sphi 0, %s789
      %s791 = sphi 0, %s789
      %s792 = sphi 0, %s791
      %s806 = sphi 0, %s792
      %s810 = sphi 0, %s810
      %s812 = sphi 0, %s810
      %s813 = sphi 0, %s812
      %s827 = sphi 0, %s813
      %s831 = sphi 0, %s831
      %s833 = sphi 0, %s831
      %s834 = sphi 0, %s833
      %s848 = sphi 0, %s834
      %s852 = sphi 0, %s852
      %s854 = sphi 0, %s852
      %s855 = sphi 0, %s854
      %s869 = sphi 0, %s855
      %s873 = sphi 0, %s873
      %s875 = sphi 0, %s873
      %s876 = sphi 0, %s875
      %s890 = sphi 0, %s876
      %s894 = sphi 0, %s894
      %s896 = sphi 0, %s894
      %s897 = sphi 0, %s896
      %s911 = sphi 0, %s897
      %s915 = sphi 0, %s915
      %s917 = sphi 0, %s915
      %s918 = sphi 0, %s917
      %s932 = sphi 0, %s918
      %s936 = sphi 0, %s936
      %s938 = sphi 0, %s936
      %s939 = sphi 0, %s938
      %s953 = sphi 0, %s939
      %s957 = sphi 0, %s957
      %s959 = sphi 0, %s957
      %s960 = sphi 0, %s959
      %s974 = sphi 0, %s960
      %s978 = sphi 0, %s978
      %s980 = sphi 0, %s978
      %s981 = sphi 0, %s980
      %s995 = sphi 0, %s981
      %s999 = sphi 0, %s999
      %s1001 = sphi 0, %s999
      %s1002 = sphi 0, %s1001
      %s1016 = sphi 0, %s1002
    $region4: #{hvrnn_prednet_forward.1} parent=1 // loop_header_branch
      %107 = sbr.rel (%p105) target = $region8
    $region5: #{hvrnn_prednet_forward.1} parent=1 // loop_body
      %s109 = ssub.s32 %s104, 1
      %s110 = ssub.s32 %s104, 2
      %s111 = sadd.s32 %s104, 1
      %s113 = sadd.s32 %s112, 1
      %p116 = scmp.eq.s32.totalorder %s104, 3
      %p117 = scmp.ne.s32.totalorder %s112, %s114
      %p118 = scmp.eq.s32.totalorder %s104, 0
      %p119 = por %p117, %p118
      %p120 = scmp.ne.s32.totalorder %s112, %s114
      %p121 = scmp.eq.s32.totalorder %s109, 3
      %p122 = por %p120, %p121
      %p123 = scmp.ne.s32.totalorder %s114, %s115
      %p124 = scmp.eq.s32.totalorder %s109, 0
      %p125 = por %p123, %p124
      %p126 = scmp.ne.s32.totalorder %s114, %s115
      %p127 = scmp.eq.s32.totalorder %s110, 3
      %p128 = por %p126, %p127
      %p130 = scmp.ne.s32.totalorder %s115, %s129
      %p131 = scmp.eq.s32.totalorder %s110, 0
      %p132 = por %p130, %p131
      %s133 = ssub.s32 %s104, %s111
      %p134 = scmp.eq.s32.totalorder %s133, 0
      %s136 = sadd.s32 %s135, 1
      %s137 = scalar_select %p134, %s135, %s136
      %p140 = pneg %p134
      %p141 = scmp.eq.s32.totalorder %s104, 3
      %p142 = por %p140, %p141
      %p143 = scmp.ne.s32.totalorder %s135, %s138
      %p144 = scmp.eq.s32.totalorder %s104, 0
      %p145 = por %p143, %p144
      %p146 = scmp.ne.s32.totalorder %s135, %s138
      %p147 = scmp.eq.s32.totalorder %s109, 3
      %p148 = por %p146, %p147
      %p149 = scmp.ne.s32.totalorder %s138, %s139
      %p150 = scmp.eq.s32.totalorder %s109, 0
      %p151 = por %p149, %p150
      %p152 = scmp.ne.s32.totalorder %s138, %s139
      %p153 = scmp.eq.s32.totalorder %s110, 3
      %p154 = por %p152, %p153
      %p156 = scmp.ne.s32.totalorder %s139, %s155
      %p157 = scmp.eq.s32.totalorder %s110, 0
      %p158 = por %p156, %p157
      %s160 = sadd.s32 %s159, 1
      %p163 = scmp.eq.s32.totalorder %s104, 3
      %p164 = scmp.ne.s32.totalorder %s159, %s161
      %p165 = scmp.eq.s32.totalorder %s104, 0
      %p166 = por %p164, %p165
      %p167 = scmp.ne.s32.totalorder %s159, %s161
      %p168 = scmp.eq.s32.totalorder %s109, 3
      %p169 = por %p167, %p168
      %p170 = scmp.ne.s32.totalorder %s161, %s162
      %p171 = scmp.eq.s32.totalorder %s109, 0
      %p172 = por %p170, %p171
      %p173 = scmp.ne.s32.totalorder %s161, %s162
      %p174 = scmp.eq.s32.totalorder %s110, 3
      %p175 = por %p173, %p174
      %p177 = scmp.ne.s32.totalorder %s162, %s176
      %p178 = scmp.eq.s32.totalorder %s110, 0
      %p179 = por %p177, %p178
      %s181 = sadd.s32 %s180, 1
      %p184 = scmp.eq.s32.totalorder %s104, 3
      %p185 = scmp.ne.s32.totalorder %s180, %s182
      %p186 = scmp.eq.s32.totalorder %s104, 0
      %p187 = por %p185, %p186
      %p188 = scmp.ne.s32.totalorder %s180, %s182
      %p189 = scmp.eq.s32.totalorder %s109, 3
      %p190 = por %p188, %p189
      %p191 = scmp.ne.s32.totalorder %s182, %s183
      %p192 = scmp.eq.s32.totalorder %s109, 0
      %p193 = por %p191, %p192
      %p194 = scmp.ne.s32.totalorder %s182, %s183
      %p195 = scmp.eq.s32.totalorder %s110, 3
      %p196 = por %p194, %p195
      %p198 = scmp.ne.s32.totalorder %s183, %s197
      %p199 = scmp.eq.s32.totalorder %s110, 0
      %p200 = por %p198, %p199
      %s202 = sadd.s32 %s201, 1
      %p205 = scmp.eq.s32.totalorder %s104, 3
      %p206 = scmp.ne.s32.totalorder %s201, %s203
      %p207 = scmp.eq.s32.totalorder %s104, 0
      %p208 = por %p206, %p207
      %p209 = scmp.ne.s32.totalorder %s201, %s203
      %p210 = scmp.eq.s32.totalorder %s109, 3
      %p211 = por %p209, %p210
      %p212 = scmp.ne.s32.totalorder %s203, %s204
      %p213 = scmp.eq.s32.totalorder %s109, 0
      %p214 = por %p212, %p213
      %p215 = scmp.ne.s32.totalorder %s203, %s204
      %p216 = scmp.eq.s32.totalorder %s110, 3
      %p217 = por %p215, %p216
      %p219 = scmp.ne.s32.totalorder %s204, %s218
      %p220 = scmp.eq.s32.totalorder %s110, 0
      %p221 = por %p219, %p220
      %s223 = sadd.s32 %s222, 1
      %p226 = scmp.eq.s32.totalorder %s104, 3
      %p227 = scmp.ne.s32.totalorder %s222, %s224
      %p228 = scmp.eq.s32.totalorder %s104, 0
      %p229 = por %p227, %p228
      %p230 = scmp.ne.s32.totalorder %s222, %s224
      %p231 = scmp.eq.s32.totalorder %s109, 3
      %p232 = por %p230, %p231
      %p233 = scmp.ne.s32.totalorder %s224, %s225
      %p234 = scmp.eq.s32.totalorder %s109, 0
      %p235 = por %p233, %p234
      %p236 = scmp.ne.s32.totalorder %s224, %s225
      %p237 = scmp.eq.s32.totalorder %s110, 3
      %p238 = por %p236, %p237
      %p240 = scmp.ne.s32.totalorder %s225, %s239
      %p241 = scmp.eq.s32.totalorder %s110, 0
      %p242 = por %p240, %p241
      %s244 = sadd.s32 %s243, 1
      %p247 = scmp.eq.s32.totalorder %s104, 3
      %p248 = scmp.ne.s32.totalorder %s243, %s245
      %p249 = scmp.eq.s32.totalorder %s104, 0
      %p250 = por %p248, %p249
      %p251 = scmp.ne.s32.totalorder %s243, %s245
      %p252 = scmp.eq.s32.totalorder %s109, 3
      %p253 = por %p251, %p252
      %p254 = scmp.ne.s32.totalorder %s245, %s246
      %p255 = scmp.eq.s32.totalorder %s109, 0
      %p256 = por %p254, %p255
      %p257 = scmp.ne.s32.totalorder %s245, %s246
      %p258 = scmp.eq.s32.totalorder %s110, 3
      %p259 = por %p257, %p258
      %p261 = scmp.ne.s32.totalorder %s246, %s260
      %p262 = scmp.eq.s32.totalorder %s110, 0
      %p263 = por %p261, %p262
      %s265 = sadd.s32 %s264, 1
      %p268 = scmp.eq.s32.totalorder %s104, 3
      %p269 = scmp.ne.s32.totalorder %s264, %s266
      %p270 = scmp.eq.s32.totalorder %s104, 0
      %p271 = por %p269, %p270
      %p272 = scmp.ne.s32.totalorder %s264, %s266
      %p273 = scmp.eq.s32.totalorder %s109, 3
      %p274 = por %p272, %p273
      %p275 = scmp.ne.s32.totalorder %s266, %s267
      %p276 = scmp.eq.s32.totalorder %s109, 0
      %p277 = por %p275, %p276
      %p278 = scmp.ne.s32.totalorder %s266, %s267
      %p279 = scmp.eq.s32.totalorder %s110, 3
      %p280 = por %p278, %p279
      %p282 = scmp.ne.s32.totalorder %s267, %s281
      %p283 = scmp.eq.s32.totalorder %s110, 0
      %p284 = por %p282, %p283
      %s286 = sadd.s32 %s285, 1
      %p289 = scmp.eq.s32.totalorder %s104, 3
      %p290 = scmp.ne.s32.totalorder %s285, %s287
      %p291 = scmp.eq.s32.totalorder %s104, 0
      %p292 = por %p290, %p291
      %p293 = scmp.ne.s32.totalorder %s285, %s287
      %p294 = scmp.eq.s32.totalorder %s109, 3
      %p295 = por %p293, %p294
      %p296 = scmp.ne.s32.totalorder %s287, %s288
      %p297 = scmp.eq.s32.totalorder %s109, 0
      %p298 = por %p296, %p297
      %p299 = scmp.ne.s32.totalorder %s287, %s288
      %p300 = scmp.eq.s32.totalorder %s110, 3
      %p301 = por %p299, %p300
      %p303 = scmp.ne.s32.totalorder %s288, %s302
      %p304 = scmp.eq.s32.totalorder %s110, 0
      %p305 = por %p303, %p304
      %s307 = sadd.s32 %s306, 1
      %p310 = scmp.eq.s32.totalorder %s104, 3
      %p311 = scmp.ne.s32.totalorder %s306, %s308
      %p312 = scmp.eq.s32.totalorder %s104, 0
      %p313 = por %p311, %p312
      %p314 = scmp.ne.s32.totalorder %s306, %s308
      %p315 = scmp.eq.s32.totalorder %s109, 3
      %p316 = por %p314, %p315
      %p317 = scmp.ne.s32.totalorder %s308, %s309
      %p318 = scmp.eq.s32.totalorder %s109, 0
      %p319 = por %p317, %p318
      %p320 = scmp.ne.s32.totalorder %s308, %s309
      %p321 = scmp.eq.s32.totalorder %s110, 3
      %p322 = por %p320, %p321
      %p324 = scmp.ne.s32.totalorder %s309, %s323
      %p325 = scmp.eq.s32.totalorder %s110, 0
      %p326 = por %p324, %p325
      %s328 = sadd.s32 %s327, 1
      %p331 = scmp.eq.s32.totalorder %s104, 3
      %p332 = scmp.ne.s32.totalorder %s327, %s329
      %p333 = scmp.eq.s32.totalorder %s104, 0
      %p334 = por %p332, %p333
      %p335 = scmp.ne.s32.totalorder %s327, %s329
      %p336 = scmp.eq.s32.totalorder %s109, 3
      %p337 = por %p335, %p336
      %p338 = scmp.ne.s32.totalorder %s329, %s330
      %p339 = scmp.eq.s32.totalorder %s109, 0
      %p340 = por %p338, %p339
      %p341 = scmp.ne.s32.totalorder %s329, %s330
      %p342 = scmp.eq.s32.totalorder %s110, 3
      %p343 = por %p341, %p342
      %p345 = scmp.ne.s32.totalorder %s330, %s344
      %p346 = scmp.eq.s32.totalorder %s110, 0
      %p347 = por %p345, %p346
      %s349 = sadd.s32 %s348, 1
      %p352 = scmp.eq.s32.totalorder %s104, 3
      %p353 = scmp.ne.s32.totalorder %s348, %s350
      %p354 = scmp.eq.s32.totalorder %s104, 0
      %p355 = por %p353, %p354
      %p356 = scmp.ne.s32.totalorder %s348, %s350
      %p357 = scmp.eq.s32.totalorder %s109, 3
      %p358 = por %p356, %p357
      %p359 = scmp.ne.s32.totalorder %s350, %s351
      %p360 = scmp.eq.s32.totalorder %s109, 0
      %p361 = por %p359, %p360
      %p362 = scmp.ne.s32.totalorder %s350, %s351
      %p363 = scmp.eq.s32.totalorder %s110, 3
      %p364 = por %p362, %p363
      %p366 = scmp.ne.s32.totalorder %s351, %s365
      %p367 = scmp.eq.s32.totalorder %s110, 0
      %p368 = por %p366, %p367
      %s370 = sadd.s32 %s369, 1
      %p373 = scmp.eq.s32.totalorder %s104, 3
      %p374 = scmp.ne.s32.totalorder %s369, %s371
      %p375 = scmp.eq.s32.totalorder %s104, 0
      %p376 = por %p374, %p375
      %p377 = scmp.ne.s32.totalorder %s369, %s371
      %p378 = scmp.eq.s32.totalorder %s109, 3
      %p379 = por %p377, %p378
      %p380 = scmp.ne.s32.totalorder %s371, %s372
      %p381 = scmp.eq.s32.totalorder %s109, 0
      %p382 = por %p380, %p381
      %p383 = scmp.ne.s32.totalorder %s371, %s372
      %p384 = scmp.eq.s32.totalorder %s110, 3
      %p385 = por %p383, %p384
      %p387 = scmp.ne.s32.totalorder %s372, %s386
      %p388 = scmp.eq.s32.totalorder %s110, 0
      %p389 = por %p387, %p388
      %s391 = sadd.s32 %s390, 1
      %p394 = scmp.eq.s32.totalorder %s104, 3
      %p395 = scmp.ne.s32.totalorder %s390, %s392
      %p396 = scmp.eq.s32.totalorder %s104, 0
      %p397 = por %p395, %p396
      %p398 = scmp.ne.s32.totalorder %s390, %s392
      %p399 = scmp.eq.s32.totalorder %s109, 3
      %p400 = por %p398, %p399
      %p401 = scmp.ne.s32.totalorder %s392, %s393
      %p402 = scmp.eq.s32.totalorder %s109, 0
      %p403 = por %p401, %p402
      %p404 = scmp.ne.s32.totalorder %s392, %s393
      %p405 = scmp.eq.s32.totalorder %s110, 3
      %p406 = por %p404, %p405
      %p408 = scmp.ne.s32.totalorder %s393, %s407
      %p409 = scmp.eq.s32.totalorder %s110, 0
      %p410 = por %p408, %p409
      %s412 = sadd.s32 %s411, 1
      %p415 = scmp.eq.s32.totalorder %s104, 3
      %p416 = scmp.ne.s32.totalorder %s411, %s413
      %p417 = scmp.eq.s32.totalorder %s104, 0
      %p418 = por %p416, %p417
      %p419 = scmp.ne.s32.totalorder %s411, %s413
      %p420 = scmp.eq.s32.totalorder %s109, 3
      %p421 = por %p419, %p420
      %p422 = scmp.ne.s32.totalorder %s413, %s414
      %p423 = scmp.eq.s32.totalorder %s109, 0
      %p424 = por %p422, %p423
      %p425 = scmp.ne.s32.totalorder %s413, %s414
      %p426 = scmp.eq.s32.totalorder %s110, 3
      %p427 = por %p425, %p426
      %p429 = scmp.ne.s32.totalorder %s414, %s428
      %p430 = scmp.eq.s32.totalorder %s110, 0
      %p431 = por %p429, %p430
      %s433 = sadd.s32 %s432, 1
      %p436 = scmp.eq.s32.totalorder %s104, 3
      %p437 = scmp.ne.s32.totalorder %s432, %s434
      %p438 = scmp.eq.s32.totalorder %s104, 0
      %p439 = por %p437, %p438
      %p440 = scmp.ne.s32.totalorder %s432, %s434
      %p441 = scmp.eq.s32.totalorder %s109, 3
      %p442 = por %p440, %p441
      %p443 = scmp.ne.s32.totalorder %s434, %s435
      %p444 = scmp.eq.s32.totalorder %s109, 0
      %p445 = por %p443, %p444
      %p446 = scmp.ne.s32.totalorder %s434, %s435
      %p447 = scmp.eq.s32.totalorder %s110, 3
      %p448 = por %p446, %p447
      %p450 = scmp.ne.s32.totalorder %s435, %s449
      %p451 = scmp.eq.s32.totalorder %s110, 0
      %p452 = por %p450, %p451
      %s454 = sadd.s32 %s453, 1
      %p457 = scmp.eq.s32.totalorder %s104, 3
      %p458 = scmp.ne.s32.totalorder %s453, %s455
      %p459 = scmp.eq.s32.totalorder %s104, 0
      %p460 = por %p458, %p459
      %p461 = scmp.ne.s32.totalorder %s453, %s455
      %p462 = scmp.eq.s32.totalorder %s109, 3
      %p463 = por %p461, %p462
      %p464 = scmp.ne.s32.totalorder %s455, %s456
      %p465 = scmp.eq.s32.totalorder %s109, 0
      %p466 = por %p464, %p465
      %p467 = scmp.ne.s32.totalorder %s455, %s456
      %p468 = scmp.eq.s32.totalorder %s110, 3
      %p469 = por %p467, %p468
      %p471 = scmp.ne.s32.totalorder %s456, %s470
      %p472 = scmp.eq.s32.totalorder %s110, 0
      %p473 = por %p471, %p472
      %s475 = sadd.s32 %s474, 1
      %p478 = scmp.eq.s32.totalorder %s104, 3
      %p479 = scmp.ne.s32.totalorder %s474, %s476
      %p480 = scmp.eq.s32.totalorder %s104, 0
      %p481 = por %p479, %p480
      %p482 = scmp.ne.s32.totalorder %s474, %s476
      %p483 = scmp.eq.s32.totalorder %s109, 3
      %p484 = por %p482, %p483
      %p485 = scmp.ne.s32.totalorder %s476, %s477
      %p486 = scmp.eq.s32.totalorder %s109, 0
      %p487 = por %p485, %p486
      %p488 = scmp.ne.s32.totalorder %s476, %s477
      %p489 = scmp.eq.s32.totalorder %s110, 3
      %p490 = por %p488, %p489
      %p492 = scmp.ne.s32.totalorder %s477, %s491
      %p493 = scmp.eq.s32.totalorder %s110, 0
      %p494 = por %p492, %p493
      %s496 = sadd.s32 %s495, 1
      %p499 = scmp.eq.s32.totalorder %s104, 3
      %p500 = scmp.ne.s32.totalorder %s495, %s497
      %p501 = scmp.eq.s32.totalorder %s104, 0
      %p502 = por %p500, %p501
      %p503 = scmp.ne.s32.totalorder %s495, %s497
      %p504 = scmp.eq.s32.totalorder %s109, 3
      %p505 = por %p503, %p504
      %p506 = scmp.ne.s32.totalorder %s497, %s498
      %p507 = scmp.eq.s32.totalorder %s109, 0
      %p508 = por %p506, %p507
      %p509 = scmp.ne.s32.totalorder %s497, %s498
      %p510 = scmp.eq.s32.totalorder %s110, 3
      %p511 = por %p509, %p510
      %p513 = scmp.ne.s32.totalorder %s498, %s512
      %p514 = scmp.eq.s32.totalorder %s110, 0
      %p515 = por %p513, %p514
      %s517 = sadd.s32 %s516, 1
      %p520 = scmp.eq.s32.totalorder %s104, 3
      %p521 = scmp.ne.s32.totalorder %s516, %s518
      %p522 = scmp.eq.s32.totalorder %s104, 0
      %p523 = por %p521, %p522
      %p524 = scmp.ne.s32.totalorder %s516, %s518
      %p525 = scmp.eq.s32.totalorder %s109, 3
      %p526 = por %p524, %p525
      %p527 = scmp.ne.s32.totalorder %s518, %s519
      %p528 = scmp.eq.s32.totalorder %s109, 0
      %p529 = por %p527, %p528
      %p530 = scmp.ne.s32.totalorder %s518, %s519
      %p531 = scmp.eq.s32.totalorder %s110, 3
      %p532 = por %p530, %p531
      %p534 = scmp.ne.s32.totalorder %s519, %s533
      %p535 = scmp.eq.s32.totalorder %s110, 0
      %p536 = por %p534, %p535
      %s538 = sadd.s32 %s537, 1
      %p541 = scmp.eq.s32.totalorder %s104, 3
      %p542 = scmp.ne.s32.totalorder %s537, %s539
      %p543 = scmp.eq.s32.totalorder %s104, 0
      %p544 = por %p542, %p543
      %p545 = scmp.ne.s32.totalorder %s537, %s539
      %p546 = scmp.eq.s32.totalorder %s109, 3
      %p547 = por %p545, %p546
      %p548 = scmp.ne.s32.totalorder %s539, %s540
      %p549 = scmp.eq.s32.totalorder %s109, 0
      %p550 = por %p548, %p549
      %p551 = scmp.ne.s32.totalorder %s539, %s540
      %p552 = scmp.eq.s32.totalorder %s110, 3
      %p553 = por %p551, %p552
      %p555 = scmp.ne.s32.totalorder %s540, %s554
      %p556 = scmp.eq.s32.totalorder %s110, 0
      %p557 = por %p555, %p556
      %s559 = sadd.s32 %s558, 1
      %p562 = scmp.eq.s32.totalorder %s104, 3
      %p563 = scmp.ne.s32.totalorder %s558, %s560
      %p564 = scmp.eq.s32.totalorder %s104, 0
      %p565 = por %p563, %p564
      %p566 = scmp.ne.s32.totalorder %s558, %s560
      %p567 = scmp.eq.s32.totalorder %s109, 3
      %p568 = por %p566, %p567
      %p569 = scmp.ne.s32.totalorder %s560, %s561
      %p570 = scmp.eq.s32.totalorder %s109, 0
      %p571 = por %p569, %p570
      %p572 = scmp.ne.s32.totalorder %s560, %s561
      %p573 = scmp.eq.s32.totalorder %s110, 3
      %p574 = por %p572, %p573
      %p576 = scmp.ne.s32.totalorder %s561, %s575
      %p577 = scmp.eq.s32.totalorder %s110, 0
      %p578 = por %p576, %p577
      %s580 = sadd.s32 %s579, 1
      %p583 = scmp.eq.s32.totalorder %s104, 3
      %p584 = scmp.ne.s32.totalorder %s579, %s581
      %p585 = scmp.eq.s32.totalorder %s104, 0
      %p586 = por %p584, %p585
      %p587 = scmp.ne.s32.totalorder %s579, %s581
      %p588 = scmp.eq.s32.totalorder %s109, 3
      %p589 = por %p587, %p588
      %p590 = scmp.ne.s32.totalorder %s581, %s582
      %p591 = scmp.eq.s32.totalorder %s109, 0
      %p592 = por %p590, %p591
      %p593 = scmp.ne.s32.totalorder %s581, %s582
      %p594 = scmp.eq.s32.totalorder %s110, 3
      %p595 = por %p593, %p594
      %p597 = scmp.ne.s32.totalorder %s582, %s596
      %p598 = scmp.eq.s32.totalorder %s110, 0
      %p599 = por %p597, %p598
      %s601 = sadd.s32 %s600, 1
      %p604 = scmp.eq.s32.totalorder %s104, 3
      %p605 = scmp.ne.s32.totalorder %s600, %s602
      %p606 = scmp.eq.s32.totalorder %s104, 0
      %p607 = por %p605, %p606
      %p608 = scmp.ne.s32.totalorder %s600, %s602
      %p609 = scmp.eq.s32.totalorder %s109, 3
      %p610 = por %p608, %p609
      %p611 = scmp.ne.s32.totalorder %s602, %s603
      %p612 = scmp.eq.s32.totalorder %s109, 0
      %p613 = por %p611, %p612
      %p614 = scmp.ne.s32.totalorder %s602, %s603
      %p615 = scmp.eq.s32.totalorder %s110, 3
      %p616 = por %p614, %p615
      %p618 = scmp.ne.s32.totalorder %s603, %s617
      %p619 = scmp.eq.s32.totalorder %s110, 0
      %p620 = por %p618, %p619
      %s622 = sadd.s32 %s621, 1
      %p625 = scmp.eq.s32.totalorder %s104, 3
      %p626 = scmp.ne.s32.totalorder %s621, %s623
      %p627 = scmp.eq.s32.totalorder %s104, 0
      %p628 = por %p626, %p627
      %p629 = scmp.ne.s32.totalorder %s621, %s623
      %p630 = scmp.eq.s32.totalorder %s109, 3
      %p631 = por %p629, %p630
      %p632 = scmp.ne.s32.totalorder %s623, %s624
      %p633 = scmp.eq.s32.totalorder %s109, 0
      %p634 = por %p632, %p633
      %p635 = scmp.ne.s32.totalorder %s623, %s624
      %p636 = scmp.eq.s32.totalorder %s110, 3
      %p637 = por %p635, %p636
      %p639 = scmp.ne.s32.totalorder %s624, %s638
      %p640 = scmp.eq.s32.totalorder %s110, 0
      %p641 = por %p639, %p640
      %s643 = sadd.s32 %s642, 1
      %p646 = scmp.eq.s32.totalorder %s104, 3
      %p647 = scmp.ne.s32.totalorder %s642, %s644
      %p648 = scmp.eq.s32.totalorder %s104, 0
      %p649 = por %p647, %p648
      %p650 = scmp.ne.s32.totalorder %s642, %s644
      %p651 = scmp.eq.s32.totalorder %s109, 3
      %p652 = por %p650, %p651
      %p653 = scmp.ne.s32.totalorder %s644, %s645
      %p654 = scmp.eq.s32.totalorder %s109, 0
      %p655 = por %p653, %p654
      %p656 = scmp.ne.s32.totalorder %s644, %s645
      %p657 = scmp.eq.s32.totalorder %s110, 3
      %p658 = por %p656, %p657
      %p660 = scmp.ne.s32.totalorder %s645, %s659
      %p661 = scmp.eq.s32.totalorder %s110, 0
      %p662 = por %p660, %p661
      %s664 = sadd.s32 %s663, 1
      %p667 = scmp.eq.s32.totalorder %s104, 3
      %p668 = scmp.ne.s32.totalorder %s663, %s665
      %p669 = scmp.eq.s32.totalorder %s104, 0
      %p670 = por %p668, %p669
      %p671 = scmp.ne.s32.totalorder %s663, %s665
      %p672 = scmp.eq.s32.totalorder %s109, 3
      %p673 = por %p671, %p672
      %p674 = scmp.ne.s32.totalorder %s665, %s666
      %p675 = scmp.eq.s32.totalorder %s109, 0
      %p676 = por %p674, %p675
      %p677 = scmp.ne.s32.totalorder %s665, %s666
      %p678 = scmp.eq.s32.totalorder %s110, 3
      %p679 = por %p677, %p678
      %p681 = scmp.ne.s32.totalorder %s666, %s680
      %p682 = scmp.eq.s32.totalorder %s110, 0
      %p683 = por %p681, %p682
      %s685 = sadd.s32 %s684, 1
      %p688 = scmp.eq.s32.totalorder %s104, 3
      %p689 = scmp.ne.s32.totalorder %s684, %s686
      %p690 = scmp.eq.s32.totalorder %s104, 0
      %p691 = por %p689, %p690
      %p692 = scmp.ne.s32.totalorder %s684, %s686
      %p693 = scmp.eq.s32.totalorder %s109, 3
      %p694 = por %p692, %p693
      %p695 = scmp.ne.s32.totalorder %s686, %s687
      %p696 = scmp.eq.s32.totalorder %s109, 0
      %p697 = por %p695, %p696
      %p698 = scmp.ne.s32.totalorder %s686, %s687
      %p699 = scmp.eq.s32.totalorder %s110, 3
      %p700 = por %p698, %p699
      %p702 = scmp.ne.s32.totalorder %s687, %s701
      %p703 = scmp.eq.s32.totalorder %s110, 0
      %p704 = por %p702, %p703
      %s706 = sadd.s32 %s705, 1
      %p709 = scmp.eq.s32.totalorder %s104, 3
      %p710 = scmp.ne.s32.totalorder %s705, %s707
      %p711 = scmp.eq.s32.totalorder %s104, 0
      %p712 = por %p710, %p711
      %p713 = scmp.ne.s32.totalorder %s705, %s707
      %p714 = scmp.eq.s32.totalorder %s109, 3
      %p715 = por %p713, %p714
      %p716 = scmp.ne.s32.totalorder %s707, %s708
      %p717 = scmp.eq.s32.totalorder %s109, 0
      %p718 = por %p716, %p717
      %p719 = scmp.ne.s32.totalorder %s707, %s708
      %p720 = scmp.eq.s32.totalorder %s110, 3
      %p721 = por %p719, %p720
      %p723 = scmp.ne.s32.totalorder %s708, %s722
      %p724 = scmp.eq.s32.totalorder %s110, 0
      %p725 = por %p723, %p724
      %s727 = sadd.s32 %s726, 1
      %p730 = scmp.eq.s32.totalorder %s104, 3
      %p731 = scmp.ne.s32.totalorder %s726, %s728
      %p732 = scmp.eq.s32.totalorder %s104, 0
      %p733 = por %p731, %p732
      %p734 = scmp.ne.s32.totalorder %s726, %s728
      %p735 = scmp.eq.s32.totalorder %s109, 3
      %p736 = por %p734, %p735
      %p737 = scmp.ne.s32.totalorder %s728, %s729
      %p738 = scmp.eq.s32.totalorder %s109, 0
      %p739 = por %p737, %p738
      %p740 = scmp.ne.s32.totalorder %s728, %s729
      %p741 = scmp.eq.s32.totalorder %s110, 3
      %p742 = por %p740, %p741
      %p744 = scmp.ne.s32.totalorder %s729, %s743
      %p745 = scmp.eq.s32.totalorder %s110, 0
      %p746 = por %p744, %p745
      %s748 = sadd.s32 %s747, 1
      %p751 = scmp.eq.s32.totalorder %s104, 3
      %p752 = scmp.ne.s32.totalorder %s747, %s749
      %p753 = scmp.eq.s32.totalorder %s104, 0
      %p754 = por %p752, %p753
      %p755 = scmp.ne.s32.totalorder %s747, %s749
      %p756 = scmp.eq.s32.totalorder %s109, 3
      %p757 = por %p755, %p756
      %p758 = scmp.ne.s32.totalorder %s749, %s750
      %p759 = scmp.eq.s32.totalorder %s109, 0
      %p760 = por %p758, %p759
      %p761 = scmp.ne.s32.totalorder %s749, %s750
      %p762 = scmp.eq.s32.totalorder %s110, 3
      %p763 = por %p761, %p762
      %p765 = scmp.ne.s32.totalorder %s750, %s764
      %p766 = scmp.eq.s32.totalorder %s110, 0
      %p767 = por %p765, %p766
      %s769 = sadd.s32 %s768, 1
      %p772 = scmp.eq.s32.totalorder %s104, 3
      %p773 = scmp.ne.s32.totalorder %s768, %s770
      %p774 = scmp.eq.s32.totalorder %s104, 0
      %p775 = por %p773, %p774
      %p776 = scmp.ne.s32.totalorder %s768, %s770
      %p777 = scmp.eq.s32.totalorder %s109, 3
      %p778 = por %p776, %p777
      %p779 = scmp.ne.s32.totalorder %s770, %s771
      %p780 = scmp.eq.s32.totalorder %s109, 0
      %p781 = por %p779, %p780
      %p782 = scmp.ne.s32.totalorder %s770, %s771
      %p783 = scmp.eq.s32.totalorder %s110, 3
      %p784 = por %p782, %p783
      %p786 = scmp.ne.s32.totalorder %s771, %s785
      %p787 = scmp.eq.s32.totalorder %s110, 0
      %p788 = por %p786, %p787
      %s790 = sadd.s32 %s789, 1
      %p793 = scmp.eq.s32.totalorder %s104, 3
      %p794 = scmp.ne.s32.totalorder %s789, %s791
      %p795 = scmp.eq.s32.totalorder %s104, 0
      %p796 = por %p794, %p795
      %p797 = scmp.ne.s32.totalorder %s789, %s791
      %p798 = scmp.eq.s32.totalorder %s109, 3
      %p799 = por %p797, %p798
      %p800 = scmp.ne.s32.totalorder %s791, %s792
      %p801 = scmp.eq.s32.totalorder %s109, 0
      %p802 = por %p800, %p801
      %p803 = scmp.ne.s32.totalorder %s791, %s792
      %p804 = scmp.eq.s32.totalorder %s110, 3
      %p805 = por %p803, %p804
      %p807 = scmp.ne.s32.totalorder %s792, %s806
      %p808 = scmp.eq.s32.totalorder %s110, 0
      %p809 = por %p807, %p808
      %s811 = sadd.s32 %s810, 1
      %p814 = scmp.eq.s32.totalorder %s104, 3
      %p815 = scmp.ne.s32.totalorder %s810, %s812
      %p816 = scmp.eq.s32.totalorder %s104, 0
      %p817 = por %p815, %p816
      %p818 = scmp.ne.s32.totalorder %s810, %s812
      %p819 = scmp.eq.s32.totalorder %s109, 3
      %p820 = por %p818, %p819
      %p821 = scmp.ne.s32.totalorder %s812, %s813
      %p822 = scmp.eq.s32.totalorder %s109, 0
      %p823 = por %p821, %p822
      %p824 = scmp.ne.s32.totalorder %s812, %s813
      %p825 = scmp.eq.s32.totalorder %s110, 3
      %p826 = por %p824, %p825
      %p828 = scmp.ne.s32.totalorder %s813, %s827
      %p829 = scmp.eq.s32.totalorder %s110, 0
      %p830 = por %p828, %p829
      %s832 = sadd.s32 %s831, 1
      %p835 = scmp.eq.s32.totalorder %s104, 3
      %p836 = scmp.ne.s32.totalorder %s831, %s833
      %p837 = scmp.eq.s32.totalorder %s104, 0
      %p838 = por %p836, %p837
      %p839 = scmp.ne.s32.totalorder %s831, %s833
      %p840 = scmp.eq.s32.totalorder %s109, 3
      %p841 = por %p839, %p840
      %p842 = scmp.ne.s32.totalorder %s833, %s834
      %p843 = scmp.eq.s32.totalorder %s109, 0
      %p844 = por %p842, %p843
      %p845 = scmp.ne.s32.totalorder %s833, %s834
      %p846 = scmp.eq.s32.totalorder %s110, 3
      %p847 = por %p845, %p846
      %p849 = scmp.ne.s32.totalorder %s834, %s848
      %p850 = scmp.eq.s32.totalorder %s110, 0
      %p851 = por %p849, %p850
      %s853 = sadd.s32 %s852, 1
      %p856 = scmp.eq.s32.totalorder %s104, 3
      %p857 = scmp.ne.s32.totalorder %s852, %s854
      %p858 = scmp.eq.s32.totalorder %s104, 0
      %p859 = por %p857, %p858
      %p860 = scmp.ne.s32.totalorder %s852, %s854
      %p861 = scmp.eq.s32.totalorder %s109, 3
      %p862 = por %p860, %p861
      %p863 = scmp.ne.s32.totalorder %s854, %s855
      %p864 = scmp.eq.s32.totalorder %s109, 0
      %p865 = por %p863, %p864
      %p866 = scmp.ne.s32.totalorder %s854, %s855
      %p867 = scmp.eq.s32.totalorder %s110, 3
      %p868 = por %p866, %p867
      %p870 = scmp.ne.s32.totalorder %s855, %s869
      %p871 = scmp.eq.s32.totalorder %s110, 0
      %p872 = por %p870, %p871
      %s874 = sadd.s32 %s873, 1
      %p877 = scmp.eq.s32.totalorder %s104, 3
      %p878 = scmp.ne.s32.totalorder %s873, %s875
      %p879 = scmp.eq.s32.totalorder %s104, 0
      %p880 = por %p878, %p879
      %p881 = scmp.ne.s32.totalorder %s873, %s875
      %p882 = scmp.eq.s32.totalorder %s109, 3
      %p883 = por %p881, %p882
      %p884 = scmp.ne.s32.totalorder %s875, %s876
      %p885 = scmp.eq.s32.totalorder %s109, 0
      %p886 = por %p884, %p885
      %p887 = scmp.ne.s32.totalorder %s875, %s876
      %p888 = scmp.eq.s32.totalorder %s110, 3
      %p889 = por %p887, %p888
      %p891 = scmp.ne.s32.totalorder %s876, %s890
      %p892 = scmp.eq.s32.totalorder %s110, 0
      %p893 = por %p891, %p892
      %s895 = sadd.s32 %s894, 1
      %p898 = scmp.eq.s32.totalorder %s104, 3
      %p899 = scmp.ne.s32.totalorder %s894, %s896
      %p900 = scmp.eq.s32.totalorder %s104, 0
      %p901 = por %p899, %p900
      %p902 = scmp.ne.s32.totalorder %s894, %s896
      %p903 = scmp.eq.s32.totalorder %s109, 3
      %p904 = por %p902, %p903
      %p905 = scmp.ne.s32.totalorder %s896, %s897
      %p906 = scmp.eq.s32.totalorder %s109, 0
      %p907 = por %p905, %p906
      %p908 = scmp.ne.s32.totalorder %s896, %s897
      %p909 = scmp.eq.s32.totalorder %s110, 3
      %p910 = por %p908, %p909
      %p912 = scmp.ne.s32.totalorder %s897, %s911
      %p913 = scmp.eq.s32.totalorder %s110, 0
      %p914 = por %p912, %p913
      %s916 = sadd.s32 %s915, 1
      %p919 = scmp.eq.s32.totalorder %s104, 3
      %p920 = scmp.ne.s32.totalorder %s915, %s917
      %p921 = scmp.eq.s32.totalorder %s104, 0
      %p922 = por %p920, %p921
      %p923 = scmp.ne.s32.totalorder %s915, %s917
      %p924 = scmp.eq.s32.totalorder %s109, 3
      %p925 = por %p923, %p924
      %p926 = scmp.ne.s32.totalorder %s917, %s918
      %p927 = scmp.eq.s32.totalorder %s109, 0
      %p928 = por %p926, %p927
      %p929 = scmp.ne.s32.totalorder %s917, %s918
      %p930 = scmp.eq.s32.totalorder %s110, 3
      %p931 = por %p929, %p930
      %p933 = scmp.ne.s32.totalorder %s918, %s932
      %p934 = scmp.eq.s32.totalorder %s110, 0
      %p935 = por %p933, %p934
      %s937 = sadd.s32 %s936, 1
      %p940 = scmp.eq.s32.totalorder %s104, 3
      %p941 = scmp.ne.s32.totalorder %s936, %s938
      %p942 = scmp.eq.s32.totalorder %s104, 0
      %p943 = por %p941, %p942
      %p944 = scmp.ne.s32.totalorder %s936, %s938
      %p945 = scmp.eq.s32.totalorder %s109, 3
      %p946 = por %p944, %p945
      %p947 = scmp.ne.s32.totalorder %s938, %s939
      %p948 = scmp.eq.s32.totalorder %s109, 0
      %p949 = por %p947, %p948
      %p950 = scmp.ne.s32.totalorder %s938, %s939
      %p951 = scmp.eq.s32.totalorder %s110, 3
      %p952 = por %p950, %p951
      %p954 = scmp.ne.s32.totalorder %s939, %s953
      %p955 = scmp.eq.s32.totalorder %s110, 0
      %p956 = por %p954, %p955
      %s958 = sadd.s32 %s957, 1
      %p961 = scmp.eq.s32.totalorder %s104, 3
      %p962 = scmp.ne.s32.totalorder %s957, %s959
      %p963 = scmp.eq.s32.totalorder %s104, 0
      %p964 = por %p962, %p963
      %p965 = scmp.ne.s32.totalorder %s957, %s959
      %p966 = scmp.eq.s32.totalorder %s109, 3
      %p967 = por %p965, %p966
      %p968 = scmp.ne.s32.totalorder %s959, %s960
      %p969 = scmp.eq.s32.totalorder %s109, 0
      %p970 = por %p968, %p969
      %p971 = scmp.ne.s32.totalorder %s959, %s960
      %p972 = scmp.eq.s32.totalorder %s110, 3
      %p973 = por %p971, %p972
      %p975 = scmp.ne.s32.totalorder %s960, %s974
      %p976 = scmp.eq.s32.totalorder %s110, 0
      %p977 = por %p975, %p976
      %s979 = sadd.s32 %s978, 1
      %p982 = scmp.eq.s32.totalorder %s104, 3
      %p983 = scmp.ne.s32.totalorder %s978, %s980
      %p984 = scmp.eq.s32.totalorder %s104, 0
      %p985 = por %p983, %p984
      %p986 = scmp.ne.s32.totalorder %s978, %s980
      %p987 = scmp.eq.s32.totalorder %s109, 3
      %p988 = por %p986, %p987
      %p989 = scmp.ne.s32.totalorder %s980, %s981
      %p990 = scmp.eq.s32.totalorder %s109, 0
      %p991 = por %p989, %p990
      %p992 = scmp.ne.s32.totalorder %s980, %s981
      %p993 = scmp.eq.s32.totalorder %s110, 3
      %p994 = por %p992, %p993
      %p996 = scmp.ne.s32.totalorder %s981, %s995
      %p997 = scmp.eq.s32.totalorder %s110, 0
      %p998 = por %p996, %p997
      %s1000 = sadd.s32 %s999, 1
      %p1003 = scmp.eq.s32.totalorder %s104, 3
      %p1004 = scmp.ne.s32.totalorder %s999, %s1001
      %p1005 = scmp.eq.s32.totalorder %s104, 0
      %p1006 = por %p1004, %p1005
      %p1007 = scmp.ne.s32.totalorder %s999, %s1001
      %p1008 = scmp.eq.s32.totalorder %s109, 3
      %p1009 = por %p1007, %p1008
      %p1010 = scmp.ne.s32.totalorder %s1001, %s1002
      %p1011 = scmp.eq.s32.totalorder %s109, 0
      %p1012 = por %p1010, %p1011
      %p1013 = scmp.ne.s32.totalorder %s1001, %s1002
      %p1014 = scmp.eq.s32.totalorder %s110, 3
      %p1015 = por %p1013, %p1014
      %p1017 = scmp.ne.s32.totalorder %s1002, %s1016
      %p1018 = scmp.eq.s32.totalorder %s110, 0
      %p1019 = por %p1017, %p1018
      %p1020 = scmp.le.s32.totalorder 1, %s104
      %p1021 = scmp.lt.s32.totalorder %s104, 5
      %p1022 = pnand %p1020, %p1021
      %p1023 = pneg %p1022
      // Predicated region
      $region9: #{hvrnn_prednet_forward.1} parent=5 // pred_check
        _
      $region10: #{hvrnn_prednet_forward.1} parent=5 // pred_check_branch
        %1025 = sbr.rel (%p1022) target = $region12
      $region11: #{hvrnn_prednet_forward.1} parent=5 // pred_region
        %s1026 = ssub.s32 %s104, 1
        // Predicated region
        $region13: #{hvrnn_prednet_forward.1} parent=11 // pred_check
          %p1027 = pneg %p125
        $region14: #{hvrnn_prednet_forward.1} parent=11 // pred_check_branch
          %1029 = sbr.rel (%p1027) target = $region16
        $region15: #{hvrnn_prednet_forward.1} parent=11 // pred_region
          _
        $region16: #{hvrnn_prednet_forward.1} parent=11 // pred_fallthru
          _
        // Predicated region
        $region17: #{hvrnn_prednet_forward.1} parent=11 // pred_check
          %p1030 = pneg %p172
        $region18: #{hvrnn_prednet_forward.1} parent=11 // pred_check_branch
          %1032 = sbr.rel (%p1030) target = $region20
        $region19: #{hvrnn_prednet_forward.1} parent=11 // pred_region
          _
        $region20: #{hvrnn_prednet_forward.1} parent=11 // pred_fallthru
          _
        // Predicated region
        $region21: #{hvrnn_prednet_forward.1} parent=11 // pred_check
          %p1033 = pneg %p193
        $region22: #{hvrnn_prednet_forward.1} parent=11 // pred_check_branch
          %1035 = sbr.rel (%p1033) target = $region24
        $region23: #{hvrnn_prednet_forward.1} parent=11 // pred_region
          _
        $region24: #{hvrnn_prednet_forward.1} parent=11 // pred_fallthru
          _
        // Predicated region
        $region25: #{hvrnn_prednet_forward.1} parent=11 // pred_check
          %p1036 = pneg %p214
        $region26: #{hvrnn_prednet_forward.1} parent=11 // pred_check_branch
          %1038 = sbr.rel (%p1036) target = $region28
        $region27: #{hvrnn_prednet_forward.1} parent=11 // pred_region
          _
        $region28: #{hvrnn_prednet_forward.1} parent=11 // pred_fallthru
          _
        // Predicated region
        $region29: #{hvrnn_prednet_forward.1} parent=11 // pred_check
          %p1039 = pneg %p235
        $region30: #{hvrnn_prednet_forward.1} parent=11 // pred_check_branch
          %1041 = sbr.rel (%p1039) target = $region32
        $region31: #{hvrnn_prednet_forward.1} parent=11 // pred_region
          _
        $region32: #{hvrnn_prednet_forward.1} parent=11 // pred_fallthru
          _
        // Predicated region
        $region33: #{hvrnn_prednet_forward.1} parent=11 // pred_check
          %p1042 = pneg %p256
        $region34: #{hvrnn_prednet_forward.1} parent=11 // pred_check_branch
          %1044 = sbr.rel (%p1042) target = $region36
        $region35: #{hvrnn_prednet_forward.1} parent=11 // pred_region
          _
        $region36: #{hvrnn_prednet_forward.1} parent=11 // pred_fallthru
          _
        // Predicated region
        $region37: #{hvrnn_prednet_forward.1} parent=11 // pred_check
          %p1045 = pneg %p277
        $region38: #{hvrnn_prednet_forward.1} parent=11 // pred_check_branch
          %1047 = sbr.rel (%p1045) target = $region40
        $region39: #{hvrnn_prednet_forward.1} parent=11 // pred_region
          _
        $region40: #{hvrnn_prednet_forward.1} parent=11 // pred_fallthru
          _
        // Predicated region
        $region41: #{hvrnn_prednet_forward.1} parent=11 // pred_check
          %p1048 = pneg %p298
        $region42: #{hvrnn_prednet_forward.1} parent=11 // pred_check_branch
          %1050 = sbr.rel (%p1048) target = $region44
        $region43: #{hvrnn_prednet_forward.1} parent=11 // pred_region
          _
        $region44: #{hvrnn_prednet_forward.1} parent=11 // pred_fallthru
          _
        // Predicated region
        $region45: #{hvrnn_prednet_forward.1} parent=11 // pred_check
          %p1051 = pneg %p319
        $region46: #{hvrnn_prednet_forward.1} parent=11 // pred_check_branch
          %1053 = sbr.rel (%p1051) target = $region48
        $region47: #{hvrnn_prednet_forward.1} parent=11 // pred_region
          %s1055 = ssub.s32 32, 32
          %1056 = vsyncadd [#allocation11], %s1055
          %s1058 = sshll.u32 [#allocation10], 4
          %s1059 = int_to_ptr.vmem [resolvable:$true] %s1058
          %1061 = dma.hbm_to_vmem [thread:$0]  %s19, 32, %s1059, [#allocation11]
        $region48: #{hvrnn_prednet_forward.1} parent=11 // pred_fallthru
          _
        // Predicated region
        $region49: #{hvrnn_prednet_forward.1} parent=11 // pred_check
          %p1062 = pneg %p340
        $region50: #{hvrnn_prednet_forward.1} parent=11 // pred_check_branch
          %1064 = sbr.rel (%p1062) target = $region52
        $region51: #{hvrnn_prednet_forward.1} parent=11 // pred_region
          _
        $region52: #{hvrnn_prednet_forward.1} parent=11 // pred_fallthru
          _
        // Predicated region
        $region53: #{hvrnn_prednet_forward.1} parent=11 // pred_check
          %p1065 = pneg %p361
        $region54: #{hvrnn_prednet_forward.1} parent=11 // pred_check_branch
          %1067 = sbr.rel (%p1065) target = $region56
        $region55: #{hvrnn_prednet_forward.1} parent=11 // pred_region
          _
        $region56: #{hvrnn_prednet_forward.1} parent=11 // pred_fallthru
          _
        // Predicated region
        $region57: #{hvrnn_prednet_forward.1} parent=11 // pred_check
          %p1068 = pneg %p382
        $region58: #{hvrnn_prednet_forward.1} parent=11 // pred_check_branch
          %1070 = sbr.rel (%p1068) target = $region60
        $region59: #{hvrnn_prednet_forward.1} parent=11 // pred_region
          %s1072 = ssub.s32 16, 16
          %1073 = vsyncadd [#allocation14], %s1072
          %s1075 = sshll.u32 [#allocation13], 4
          %s1076 = int_to_ptr.vmem [resolvable:$true] %s1075
          %1078 = dma.hbm_to_vmem [thread:$0]  %s25, 16, %s1076, [#allocation14]
        $region60: #{hvrnn_prednet_forward.1} parent=11 // pred_fallthru
          _
        // Predicated region
        $region61: #{hvrnn_prednet_forward.1} parent=11 // pred_check
          %p1079 = pneg %p403
        $region62: #{hvrnn_prednet_forward.1} parent=11 // pred_check_branch
          %1081 = sbr.rel (%p1079) target = $region64
        $region63: #{hvrnn_prednet_forward.1} parent=11 // pred_region
          _
        $region64: #{hvrnn_prednet_forward.1} parent=11 // pred_fallthru
          _
        // Predicated region
        $region65: #{hvrnn_prednet_forward.1} parent=11 // pred_check
          %p1082 = pneg %p424
        $region66: #{hvrnn_prednet_forward.1} parent=11 // pred_check_branch
          %1084 = sbr.rel (%p1082) target = $region68
        $region67: #{hvrnn_prednet_forward.1} parent=11 // pred_region
          %s1086 = ssub.s32 16, 16
          %1087 = vsyncadd [#allocation14], %s1086
          %s1089 = sshll.u32 [#allocation15], 4
          %s1090 = int_to_ptr.vmem [resolvable:$true] %s1089
          %1092 = dma.hbm_to_vmem [thread:$0]  %s29, 16, %s1090, [#allocation14]
        $region68: #{hvrnn_prednet_forward.1} parent=11 // pred_fallthru
          _
        // Predicated region
        $region69: #{hvrnn_prednet_forward.1} parent=11 // pred_check
          %p1093 = pneg %p445
        $region70: #{hvrnn_prednet_forward.1} parent=11 // pred_check_branch
          %1095 = sbr.rel (%p1093) target = $region72
        $region71: #{hvrnn_prednet_forward.1} parent=11 // pred_region
          _
        $region72: #{hvrnn_prednet_forward.1} parent=11 // pred_fallthru
          _
        // Predicated region
        $region73: #{hvrnn_prednet_forward.1} parent=11 // pred_check
          %p1096 = pneg %p466
        $region74: #{hvrnn_prednet_forward.1} parent=11 // pred_check_branch
          %1098 = sbr.rel (%p1096) target = $region76
        $region75: #{hvrnn_prednet_forward.1} parent=11 // pred_region
          _
        $region76: #{hvrnn_prednet_forward.1} parent=11 // pred_fallthru
          _
        // Predicated region
        $region77: #{hvrnn_prednet_forward.1} parent=11 // pred_check
          %p1099 = pneg %p487
        $region78: #{hvrnn_prednet_forward.1} parent=11 // pred_check_branch
          %1101 = sbr.rel (%p1099) target = $region80
        $region79: #{hvrnn_prednet_forward.1} parent=11 // pred_region
          %s1103 = ssub.s32 16, 16
          %1104 = vsyncadd [#allocation17], %s1103
          %s1106 = sshll.u32 [#allocation16], 4
          %s1107 = int_to_ptr.vmem [resolvable:$true] %s1106
          %1109 = dma.hbm_to_vmem [thread:$0]  %s35, 16, %s1107, [#allocation17]
        $region80: #{hvrnn_prednet_forward.1} parent=11 // pred_fallthru
          _
        // Predicated region
        $region81: #{hvrnn_prednet_forward.1} parent=11 // pred_check
          %p1110 = pneg %p508
        $region82: #{hvrnn_prednet_forward.1} parent=11 // pred_check_branch
          %1112 = sbr.rel (%p1110) target = $region84
        $region83: #{hvrnn_prednet_forward.1} parent=11 // pred_region
          _
        $region84: #{hvrnn_prednet_forward.1} parent=11 // pred_fallthru
          _
        // Predicated region
        $region85: #{hvrnn_prednet_forward.1} parent=11 // pred_check
          %p1113 = pneg %p529
        $region86: #{hvrnn_prednet_forward.1} parent=11 // pred_check_branch
          %1115 = sbr.rel (%p1113) target = $region88
        $region87: #{hvrnn_prednet_forward.1} parent=11 // pred_region
          %s1117 = ssub.s32 16, 16
          %1118 = vsyncadd [#allocation17], %s1117
          %s1120 = sshll.u32 [#allocation18], 4
          %s1121 = int_to_ptr.vmem [resolvable:$true] %s1120
          %1123 = dma.hbm_to_vmem [thread:$0]  %s39, 16, %s1121, [#allocation17]
        $region88: #{hvrnn_prednet_forward.1} parent=11 // pred_fallthru
          _
        // Predicated region
        $region89: #{hvrnn_prednet_forward.1} parent=11 // pred_check
          %p1124 = pneg %p550
        $region90: #{hvrnn_prednet_forward.1} parent=11 // pred_check_branch
          %1126 = sbr.rel (%p1124) target = $region92
        $region91: #{hvrnn_prednet_forward.1} parent=11 // pred_region
          _
        $region92: #{hvrnn_prednet_forward.1} parent=11 // pred_fallthru
          _
        // Predicated region
        $region93: #{hvrnn_prednet_forward.1} parent=11 // pred_check
          %p1127 = pneg %p571
        $region94: #{hvrnn_prednet_forward.1} parent=11 // pred_check_branch
          %1129 = sbr.rel (%p1127) target = $region96
        $region95: #{hvrnn_prednet_forward.1} parent=11 // pred_region
          %s1131 = ssub.s32 512, 512
          %1132 = vsyncadd [#allocation20], %s1131
          %s1133 = sshll.u32 [#allocation19], 4
          %s1134 = int_to_ptr.vmem [resolvable:$true] %s1133
          %1139 = dma.hbm_to_vmem [thread:$0]  %s43, 512, %s1134, [#allocation20], 128, 128, 8
        $region96: #{hvrnn_prednet_forward.1} parent=11 // pred_fallthru
          _
        // Predicated region
        $region97: #{hvrnn_prednet_forward.1} parent=11 // pred_check
          %p1140 = pneg %p592
        $region98: #{hvrnn_prednet_forward.1} parent=11 // pred_check_branch
          %1142 = sbr.rel (%p1140) target = $region100
        $region99: #{hvrnn_prednet_forward.1} parent=11 // pred_region
          %s1144 = ssub.s32 16, 16
          %1145 = vsyncadd [#allocation20], %s1144
          %s1147 = sshll.u32 [#allocation21], 4
          %s1148 = int_to_ptr.vmem [resolvable:$true] %s1147
          %1150 = dma.hbm_to_vmem [thread:$0]  %s45, 16, %s1148, [#allocation20]
        $region100: #{hvrnn_prednet_forward.1} parent=11 // pred_fallthru
          _
        // Predicated region
        $region101: #{hvrnn_prednet_forward.1} parent=11 // pred_check
          %p1151 = pneg %p613
        $region102: #{hvrnn_prednet_forward.1} parent=11 // pred_check_branch
          %1153 = sbr.rel (%p1151) target = $region104
        $region103: #{hvrnn_prednet_forward.1} parent=11 // pred_region
          _
        $region104: #{hvrnn_prednet_forward.1} parent=11 // pred_fallthru
          _
        // Predicated region
        $region105: #{hvrnn_prednet_forward.1} parent=11 // pred_check
          %p1154 = pneg %p634
        $region106: #{hvrnn_prednet_forward.1} parent=11 // pred_check_branch
          %1156 = sbr.rel (%p1154) target = $region108
        $region107: #{hvrnn_prednet_forward.1} parent=11 // pred_region
          %s1158 = ssub.s32 16, 16
          %1159 = vsyncadd [#allocation23], %s1158
          %s1161 = sshll.u32 [#allocation22], 4
          %s1162 = int_to_ptr.vmem [resolvable:$true] %s1161
          %1164 = dma.hbm_to_vmem [thread:$0]  %s49, 16, %s1162, [#allocation23]
        $region108: #{hvrnn_prednet_forward.1} parent=11 // pred_fallthru
          _
        // Predicated region
        $region109: #{hvrnn_prednet_forward.1} parent=11 // pred_check
          %p1165 = pneg %p655
        $region110: #{hvrnn_prednet_forward.1} parent=11 // pred_check_branch
          %1167 = sbr.rel (%p1165) target = $region112
        $region111: #{hvrnn_prednet_forward.1} parent=11 // pred_region
          _
        $region112: #{hvrnn_prednet_forward.1} parent=11 // pred_fallthru
          _
        // Predicated region
        $region113: #{hvrnn_prednet_forward.1} parent=11 // pred_check
          %p1168 = pneg %p676
        $region114: #{hvrnn_prednet_forward.1} parent=11 // pred_check_branch
          %1170 = sbr.rel (%p1168) target = $region116
        $region115: #{hvrnn_prednet_forward.1} parent=11 // pred_region
          %s1172 = ssub.s32 512, 512
          %1173 = vsyncadd [#allocation23], %s1172
          %s1174 = sshll.u32 [#allocation24], 4
          %s1175 = int_to_ptr.vmem [resolvable:$true] %s1174
          %1180 = dma.hbm_to_vmem [thread:$0]  %s53, 512, %s1175, [#allocation23], 128, 128, 8
        $region116: #{hvrnn_prednet_forward.1} parent=11 // pred_fallthru
          _
        // Predicated region
        $region117: #{hvrnn_prednet_forward.1} parent=11 // pred_check
          %p1181 = pneg %p697
        $region118: #{hvrnn_prednet_forward.1} parent=11 // pred_check_branch
          %1183 = sbr.rel (%p1181) target = $region120
        $region119: #{hvrnn_prednet_forward.1} parent=11 // pred_region
          %s1185 = ssub.s32 16, 16
          %1186 = vsyncadd [#allocation26], %s1185
          %s1188 = sshll.u32 [#allocation25], 4
          %s1189 = int_to_ptr.vmem [resolvable:$true] %s1188
          %1191 = dma.hbm_to_vmem [thread:$0]  %s55, 16, %s1189, [#allocation26]
        $region120: #{hvrnn_prednet_forward.1} parent=11 // pred_fallthru
          _
        // Predicated region
        $region121: #{hvrnn_prednet_forward.1} parent=11 // pred_check
          %p1192 = pneg %p718
        $region122: #{hvrnn_prednet_forward.1} parent=11 // pred_check_branch
          %1194 = sbr.rel (%p1192) target = $region124
        $region123: #{hvrnn_prednet_forward.1} parent=11 // pred_region
          _
        $region124: #{hvrnn_prednet_forward.1} parent=11 // pred_fallthru
          _
        // Predicated region
        $region125: #{hvrnn_prednet_forward.1} parent=11 // pred_check
          %p1195 = pneg %p739
        $region126: #{hvrnn_prednet_forward.1} parent=11 // pred_check_branch
          %1197 = sbr.rel (%p1195) target = $region128
        $region127: #{hvrnn_prednet_forward.1} parent=11 // pred_region
          %s1199 = ssub.s32 16, 16
          %1200 = vsyncadd [#allocation26], %s1199
          %s1202 = sshll.u32 [#allocation27], 4
          %s1203 = int_to_ptr.vmem [resolvable:$true] %s1202
          %1205 = dma.hbm_to_vmem [thread:$0]  %s59, 16, %s1203, [#allocation26]
        $region128: #{hvrnn_prednet_forward.1} parent=11 // pred_fallthru
          _
        // Predicated region
        $region129: #{hvrnn_prednet_forward.1} parent=11 // pred_check
          %p1206 = pneg %p760
        $region130: #{hvrnn_prednet_forward.1} parent=11 // pred_check_branch
          %1208 = sbr.rel (%p1206) target = $region132
        $region131: #{hvrnn_prednet_forward.1} parent=11 // pred_region
          _
        $region132: #{hvrnn_prednet_forward.1} parent=11 // pred_fallthru
          _
        // Predicated region
        $region133: #{hvrnn_prednet_forward.1} parent=11 // pred_check
          %p1209 = pneg %p781
        $region134: #{hvrnn_prednet_forward.1} parent=11 // pred_check_branch
          %1211 = sbr.rel (%p1209) target = $region136
        $region135: #{hvrnn_prednet_forward.1} parent=11 // pred_region
          %s1213 = ssub.s32 512, 512
          %1214 = vsyncadd [#allocation29], %s1213
          %s1215 = sshll.u32 [#allocation28], 4
          %s1216 = int_to_ptr.vmem [resolvable:$true] %s1215
          %1221 = dma.hbm_to_vmem [thread:$0]  %s63, 512, %s1216, [#allocation29], 128, 128, 8
        $region136: #{hvrnn_prednet_forward.1} parent=11 // pred_fallthru
          _
        // Predicated region
        $region137: #{hvrnn_prednet_forward.1} parent=11 // pred_check
          %p1222 = pneg %p802
        $region138: #{hvrnn_prednet_forward.1} parent=11 // pred_check_branch
          %1224 = sbr.rel (%p1222) target = $region140
        $region139: #{hvrnn_prednet_forward.1} parent=11 // pred_region
          %s1226 = ssub.s32 16, 16
          %1227 = vsyncadd [#allocation29], %s1226
          %s1229 = sshll.u32 [#allocation30], 4
          %s1230 = int_to_ptr.vmem [resolvable:$true] %s1229
          %1232 = dma.hbm_to_vmem [thread:$0]  %s65, 16, %s1230, [#allocation29]
        $region140: #{hvrnn_prednet_forward.1} parent=11 // pred_fallthru
          _
        // Predicated region
        $region141: #{hvrnn_prednet_forward.1} parent=11 // pred_check
          %p1233 = pneg %p823
        $region142: #{hvrnn_prednet_forward.1} parent=11 // pred_check_branch
          %1235 = sbr.rel (%p1233) target = $region144
        $region143: #{hvrnn_prednet_forward.1} parent=11 // pred_region
          _
        $region144: #{hvrnn_prednet_forward.1} parent=11 // pred_fallthru
          _
        // Predicated region
        $region145: #{hvrnn_prednet_forward.1} parent=11 // pred_check
          %p1236 = pneg %p844
        $region146: #{hvrnn_prednet_forward.1} parent=11 // pred_check_branch
          %1238 = sbr.rel (%p1236) target = $region148
        $region147: #{hvrnn_prednet_forward.1} parent=11 // pred_region
          %s1240 = ssub.s32 32, 32
          %1241 = vsyncadd [#allocation32], %s1240
          %s1243 = sshll.u32 [#allocation31], 4
          %s1244 = int_to_ptr.vmem [resolvable:$true] %s1243
          %1246 = dma.hbm_to_vmem [thread:$0]  %s69, 32, %s1244, [#allocation32]
        $region148: #{hvrnn_prednet_forward.1} parent=11 // pred_fallthru
          _
        // Predicated region
        $region149: #{hvrnn_prednet_forward.1} parent=11 // pred_check
          %p1247 = pneg %p865
        $region150: #{hvrnn_prednet_forward.1} parent=11 // pred_check_branch
          %1249 = sbr.rel (%p1247) target = $region152
        $region151: #{hvrnn_prednet_forward.1} parent=11 // pred_region
          %s1251 = ssub.s32 128, 128
          %1252 = vsyncadd [#allocation32], %s1251
          %s1254 = sshll.u32 [#allocation33], 4
          %s1255 = int_to_ptr.vmem [resolvable:$true] %s1254
          %1257 = dma.hbm_to_vmem [thread:$0]  %s71, 128, %s1255, [#allocation32]
        $region152: #{hvrnn_prednet_forward.1} parent=11 // pred_fallthru
          _
        // Predicated region
        $region153: #{hvrnn_prednet_forward.1} parent=11 // pred_check
          %p1258 = pneg %p886
        $region154: #{hvrnn_prednet_forward.1} parent=11 // pred_check_branch
          %1260 = sbr.rel (%p1258) target = $region156
        $region155: #{hvrnn_prednet_forward.1} parent=11 // pred_region
          %s1262 = ssub.s32 512, 512
          %1263 = vsyncadd [#allocation35], %s1262
          %s1264 = sshll.u32 [#allocation34], 4
          %s1265 = int_to_ptr.vmem [resolvable:$true] %s1264
          %1270 = dma.hbm_to_vmem [thread:$0]  %s73, 512, %s1265, [#allocation35], 128, 128, 8
        $region156: #{hvrnn_prednet_forward.1} parent=11 // pred_fallthru
          _
        // Predicated region
        $region157: #{hvrnn_prednet_forward.1} parent=11 // pred_check
          %p1271 = pneg %p907
        $region158: #{hvrnn_prednet_forward.1} parent=11 // pred_check_branch
          %1273 = sbr.rel (%p1271) target = $region160
        $region159: #{hvrnn_prednet_forward.1} parent=11 // pred_region
          %s1275 = ssub.s32 16, 16
          %1276 = vsyncadd [#allocation35], %s1275
          %s1278 = sshll.u32 [#allocation36], 4
          %s1279 = int_to_ptr.vmem [resolvable:$true] %s1278
          %1281 = dma.hbm_to_vmem [thread:$0]  %s75, 16, %s1279, [#allocation35]
        $region160: #{hvrnn_prednet_forward.1} parent=11 // pred_fallthru
          _
        // Predicated region
        $region161: #{hvrnn_prednet_forward.1} parent=11 // pred_check
          %p1282 = pneg %p928
        $region162: #{hvrnn_prednet_forward.1} parent=11 // pred_check_branch
          %1284 = sbr.rel (%p1282) target = $region164
        $region163: #{hvrnn_prednet_forward.1} parent=11 // pred_region
          _
        $region164: #{hvrnn_prednet_forward.1} parent=11 // pred_fallthru
          _
        // Predicated region
        $region165: #{hvrnn_prednet_forward.1} parent=11 // pred_check
          %p1285 = pneg %p949
        $region166: #{hvrnn_prednet_forward.1} parent=11 // pred_check_branch
          %1287 = sbr.rel (%p1285) target = $region168
        $region167: #{hvrnn_prednet_forward.1} parent=11 // pred_region
          %s1289 = ssub.s32 32, 32
          %1290 = vsyncadd [#allocation38], %s1289
          %s1292 = sshll.u32 [#allocation37], 4
          %s1293 = int_to_ptr.vmem [resolvable:$true] %s1292
          %1295 = dma.hbm_to_vmem [thread:$0]  %s79, 32, %s1293, [#allocation38]
        $region168: #{hvrnn_prednet_forward.1} parent=11 // pred_fallthru
          _
      $region12: #{hvrnn_prednet_forward.1} parent=5 // pred_fallthru
        _
      %p1296 = scmp.lt.s32.totalorder %s104, 4
      // Predicated region
      $region169: #{hvrnn_prednet_forward.1} parent=5 // pred_check
        %p1297 = pneg %p1296
      $region170: #{hvrnn_prednet_forward.1} parent=5 // pred_check_branch
        %1299 = sbr.rel (%p1297) target = $region172
      $region171: #{hvrnn_prednet_forward.1} parent=5 // pred_region
        // Predicated region
        $region173: #{hvrnn_prednet_forward.1} parent=171 // pred_check
          %p1300 = pneg %p145
        $region174: #{hvrnn_prednet_forward.1} parent=171 // pred_check_branch
          %1302 = sbr.rel (%p1300) target = $region176
        $region175: #{hvrnn_prednet_forward.1} parent=171 // pred_region
          %p1303 = scmp.lt.s32.totalorder %s104, 3
          %s1304 = scalar_select %p1303, %s104, 3
          %s1305 = smul.addr %s1304, 2
          %s1306 = smul.addr %s1305, 2
          %s1307 = scalar_lea.vmem %s3, %s1306
        $region176: #{hvrnn_prednet_forward.1} parent=171 // pred_fallthru
          _
      $region172: #{hvrnn_prednet_forward.1} parent=5 // pred_fallthru
        _
      %p1308 = scmp.le.s32.totalorder 1, %s104
      %p1309 = scmp.lt.s32.totalorder %s104, 5
      %p1310 = pnand %p1308, %p1309
      %p1311 = pneg %p1310
      // Predicated region
      $region177: #{hvrnn_prednet_forward.1} parent=5 // pred_check
        _
      $region178: #{hvrnn_prednet_forward.1} parent=5 // pred_check_branch
        %1313 = sbr.rel (%p1310) target = $region180
      $region179: #{hvrnn_prednet_forward.1} parent=5 // pred_region
        %s1314 = ssub.s32 %s104, 1
        // Predicated region
        $region181: #{hvrnn_prednet_forward.1} parent=179 // pred_check
          %p1315 = pneg %p319
        $region182: #{hvrnn_prednet_forward.1} parent=179 // pred_check_branch
          %1317 = sbr.rel (%p1315) target = $region184
        $region183: #{hvrnn_prednet_forward.1} parent=179 // pred_region
          %1318 = dma.done [#allocation11], 32
        $region184: #{hvrnn_prednet_forward.1} parent=179 // pred_fallthru
          _
        // Predicated region
        $region185: #{hvrnn_prednet_forward.1} parent=179 // pred_check
          %p1319 = pneg %p382
        $region186: #{hvrnn_prednet_forward.1} parent=179 // pred_check_branch
          %1321 = sbr.rel (%p1319) target = $region188
        $region187: #{hvrnn_prednet_forward.1} parent=179 // pred_region
          %1322 = dma.done [#allocation14], 16
        $region188: #{hvrnn_prednet_forward.1} parent=179 // pred_fallthru
          _
        // Predicated region
        $region189: #{hvrnn_prednet_forward.1} parent=179 // pred_check
          %p1323 = pneg %p424
        $region190: #{hvrnn_prednet_forward.1} parent=179 // pred_check_branch
          %1325 = sbr.rel (%p1323) target = $region192
        $region191: #{hvrnn_prednet_forward.1} parent=179 // pred_region
          %1326 = dma.done [#allocation14], 16
        $region192: #{hvrnn_prednet_forward.1} parent=179 // pred_fallthru
          _
        // Predicated region
        $region193: #{hvrnn_prednet_forward.1} parent=179 // pred_check
          %p1327 = pneg %p487
        $region194: #{hvrnn_prednet_forward.1} parent=179 // pred_check_branch
          %1329 = sbr.rel (%p1327) target = $region196
        $region195: #{hvrnn_prednet_forward.1} parent=179 // pred_region
          %1330 = dma.done [#allocation17], 16
        $region196: #{hvrnn_prednet_forward.1} parent=179 // pred_fallthru
          _
        // Predicated region
        $region197: #{hvrnn_prednet_forward.1} parent=179 // pred_check
          %p1331 = pneg %p529
        $region198: #{hvrnn_prednet_forward.1} parent=179 // pred_check_branch
          %1333 = sbr.rel (%p1331) target = $region200
        $region199: #{hvrnn_prednet_forward.1} parent=179 // pred_region
          %1334 = dma.done [#allocation17], 16
        $region200: #{hvrnn_prednet_forward.1} parent=179 // pred_fallthru
          _
        // Predicated region
        $region201: #{hvrnn_prednet_forward.1} parent=179 // pred_check
          %p1335 = pneg %p571
        $region202: #{hvrnn_prednet_forward.1} parent=179 // pred_check_branch
          %1337 = sbr.rel (%p1335) target = $region204
        $region203: #{hvrnn_prednet_forward.1} parent=179 // pred_region
          %1338 = dma.done [#allocation20], 512
        $region204: #{hvrnn_prednet_forward.1} parent=179 // pred_fallthru
          _
        // Predicated region
        $region205: #{hvrnn_prednet_forward.1} parent=179 // pred_check
          %p1339 = pneg %p592
        $region206: #{hvrnn_prednet_forward.1} parent=179 // pred_check_branch
          %1341 = sbr.rel (%p1339) target = $region208
        $region207: #{hvrnn_prednet_forward.1} parent=179 // pred_region
          %1342 = dma.done [#allocation20], 16
        $region208: #{hvrnn_prednet_forward.1} parent=179 // pred_fallthru
          _
        // Predicated region
        $region209: #{hvrnn_prednet_forward.1} parent=179 // pred_check
          %p1343 = pneg %p634
        $region210: #{hvrnn_prednet_forward.1} parent=179 // pred_check_branch
          %1345 = sbr.rel (%p1343) target = $region212
        $region211: #{hvrnn_prednet_forward.1} parent=179 // pred_region
          %1346 = dma.done [#allocation23], 16
        $region212: #{hvrnn_prednet_forward.1} parent=179 // pred_fallthru
          _
        // Predicated region
        $region213: #{hvrnn_prednet_forward.1} parent=179 // pred_check
          %p1347 = pneg %p676
        $region214: #{hvrnn_prednet_forward.1} parent=179 // pred_check_branch
          %1349 = sbr.rel (%p1347) target = $region216
        $region215: #{hvrnn_prednet_forward.1} parent=179 // pred_region
          %1350 = dma.done [#allocation23], 512
        $region216: #{hvrnn_prednet_forward.1} parent=179 // pred_fallthru
          _
        // Predicated region
        $region217: #{hvrnn_prednet_forward.1} parent=179 // pred_check
          %p1351 = pneg %p697
        $region218: #{hvrnn_prednet_forward.1} parent=179 // pred_check_branch
          %1353 = sbr.rel (%p1351) target = $region220
        $region219: #{hvrnn_prednet_forward.1} parent=179 // pred_region
          %1354 = dma.done [#allocation26], 16
        $region220: #{hvrnn_prednet_forward.1} parent=179 // pred_fallthru
          _
        // Predicated region
        $region221: #{hvrnn_prednet_forward.1} parent=179 // pred_check
          %p1355 = pneg %p739
        $region222: #{hvrnn_prednet_forward.1} parent=179 // pred_check_branch
          %1357 = sbr.rel (%p1355) target = $region224
        $region223: #{hvrnn_prednet_forward.1} parent=179 // pred_region
          %1358 = dma.done [#allocation26], 16
        $region224: #{hvrnn_prednet_forward.1} parent=179 // pred_fallthru
          _
        // Predicated region
        $region225: #{hvrnn_prednet_forward.1} parent=179 // pred_check
          %p1359 = pneg %p781
        $region226: #{hvrnn_prednet_forward.1} parent=179 // pred_check_branch
          %1361 = sbr.rel (%p1359) target = $region228
        $region227: #{hvrnn_prednet_forward.1} parent=179 // pred_region
          %1362 = dma.done [#allocation29], 512
        $region228: #{hvrnn_prednet_forward.1} parent=179 // pred_fallthru
          _
        // Predicated region
        $region229: #{hvrnn_prednet_forward.1} parent=179 // pred_check
          %p1363 = pneg %p802
        $region230: #{hvrnn_prednet_forward.1} parent=179 // pred_check_branch
          %1365 = sbr.rel (%p1363) target = $region232
        $region231: #{hvrnn_prednet_forward.1} parent=179 // pred_region
          %1366 = dma.done [#allocation29], 16
        $region232: #{hvrnn_prednet_forward.1} parent=179 // pred_fallthru
          _
        // Predicated region
        $region233: #{hvrnn_prednet_forward.1} parent=179 // pred_check
          %p1367 = pneg %p844
        $region234: #{hvrnn_prednet_forward.1} parent=179 // pred_check_branch
          %1369 = sbr.rel (%p1367) target = $region236
        $region235: #{hvrnn_prednet_forward.1} parent=179 // pred_region
          %1370 = dma.done [#allocation32], 32
        $region236: #{hvrnn_prednet_forward.1} parent=179 // pred_fallthru
          _
        // Predicated region
        $region237: #{hvrnn_prednet_forward.1} parent=179 // pred_check
          %p1371 = pneg %p865
        $region238: #{hvrnn_prednet_forward.1} parent=179 // pred_check_branch
          %1373 = sbr.rel (%p1371) target = $region240
        $region239: #{hvrnn_prednet_forward.1} parent=179 // pred_region
          %1374 = dma.done [#allocation32], 128
        $region240: #{hvrnn_prednet_forward.1} parent=179 // pred_fallthru
          _
        // Predicated region
        $region241: #{hvrnn_prednet_forward.1} parent=179 // pred_check
          %p1375 = pneg %p886
        $region242: #{hvrnn_prednet_forward.1} parent=179 // pred_check_branch
          %1377 = sbr.rel (%p1375) target = $region244
        $region243: #{hvrnn_prednet_forward.1} parent=179 // pred_region
          %1378 = dma.done [#allocation35], 512
        $region244: #{hvrnn_prednet_forward.1} parent=179 // pred_fallthru
          _
        // Predicated region
        $region245: #{hvrnn_prednet_forward.1} parent=179 // pred_check
          %p1379 = pneg %p907
        $region246: #{hvrnn_prednet_forward.1} parent=179 // pred_check_branch
          %1381 = sbr.rel (%p1379) target = $region248
        $region247: #{hvrnn_prednet_forward.1} parent=179 // pred_region
          %1382 = dma.done [#allocation35], 16
        $region248: #{hvrnn_prednet_forward.1} parent=179 // pred_fallthru
          _
        // Predicated region
        $region249: #{hvrnn_prednet_forward.1} parent=179 // pred_check
          %p1383 = pneg %p949
        $region250: #{hvrnn_prednet_forward.1} parent=179 // pred_check_branch
          %1385 = sbr.rel (%p1383) target = $region252
        $region251: #{hvrnn_prednet_forward.1} parent=179 // pred_region
          %1386 = dma.done [#allocation38], 32
        $region252: #{hvrnn_prednet_forward.1} parent=179 // pred_fallthru
          _
        %p1387 = pneg %p125
        %p1388 = pneg %p122
        %p1389 = scmp.lt.s32.totalorder %s109, 3
        %s1390 = scalar_select %p1389, %s109, 3
        %s1391 = smul.addr %s1390, 2
        %s1392 = smul.addr %s1391, 2
        %s1393 = scalar_lea.vmem %s3, %s1392
        %p1394 = pneg %p151
        %p1395 = pneg %p148
        %p1396 = pneg %p172
        %p1397 = pneg %p169
        %p1398 = pneg %p193
        %p1399 = pneg %p190
        %p1400 = pneg %p214
        %p1401 = pneg %p211
        %p1402 = pneg %p235
        %p1403 = pneg %p232
        %p1404 = pneg %p256
        %p1405 = pneg %p253
        %p1406 = pneg %p277
        %p1407 = pneg %p274
        %p1408 = pneg %p298
        %p1409 = pneg %p295
        %p1410 = pneg %p319
        %p1411 = pneg %p316
        %p1412 = pneg %p340
        %p1413 = pneg %p337
        %p1414 = pneg %p361
        %p1415 = pneg %p358
        %p1416 = pneg %p382
        %p1417 = pneg %p379
        %p1418 = pneg %p403
        %p1419 = pneg %p400
        %p1420 = pneg %p424
        %p1421 = pneg %p421
        %p1422 = pneg %p445
        %p1423 = pneg %p442
        %p1424 = pneg %p466
        %p1425 = pneg %p463
        %p1426 = pneg %p487
        %p1427 = pneg %p484
        %p1428 = pneg %p508
        %p1429 = pneg %p505
        %p1430 = pneg %p529
        %p1431 = pneg %p526
        %p1432 = pneg %p550
        %p1433 = pneg %p547
        %p1434 = pneg %p571
        %p1435 = pneg %p568
        %p1436 = pneg %p592
        %p1437 = pneg %p589
        %p1438 = pneg %p613
        %p1439 = pneg %p610
        %p1440 = pneg %p634
        %p1441 = pneg %p631
        %p1442 = pneg %p655
        %p1443 = pneg %p652
        %p1444 = pneg %p676
        %p1445 = pneg %p673
        %p1446 = pneg %p697
        %p1447 = pneg %p694
        %p1448 = pneg %p718
        %p1449 = pneg %p715
        %p1450 = pneg %p739
        %p1451 = pneg %p736
        %p1452 = pneg %p760
        %p1453 = pneg %p757
        %p1454 = pneg %p781
        %p1455 = pneg %p778
        %p1456 = pneg %p802
        %p1457 = pneg %p799
        %p1458 = pneg %p823
        %p1459 = pneg %p820
        %p1460 = pneg %p844
        %p1461 = pneg %p841
        %p1462 = pneg %p865
        %p1463 = pneg %p862
        %p1464 = pneg %p886
        %p1465 = pneg %p883
        %p1466 = pneg %p907
        %p1467 = pneg %p904
        %p1468 = pneg %p928
        %p1469 = pneg %p925
        %p1470 = pneg %p949
        %p1471 = pneg %p946
        %p1472 = pneg %p970
        %p1473 = pneg %p967
        %p1474 = pneg %p991
        %p1475 = pneg %p988
        %p1476 = pneg %p1012
        %p1477 = pneg %p1009
        %p1478 = scmp.lt.s32.totalorder %s109, 3
        %s1479 = scalar_select %p1478, %s109, 3
        %s1480 = smul.addr %s1479, 2
        %s1481 = smul.addr %s1480, 2
        %s1482 = scalar_lea.vmem %s3, %s1481
        %p1483 = scmp.eq.s32.totalorder %s109, 0
        // Predicated region
        $region253: #{hvrnn_prednet_forward.1} parent=179 // pred_check
          %p1484 = pneg %p1483
        $region254: #{hvrnn_prednet_forward.1} parent=179 // pred_check_branch
          %1486 = sbr.rel (%p1484) target = $region256
        $region255: #{hvrnn_prednet_forward.1} parent=179 // pred_region
          %v1487 = vld [vmem:[%s1] sm:$0xf]
          %v1488 = vld [vmem:[%s5] sm:$0xff]
          %v1489 = vld [vmem:[%s5 + $0x8] sm:$0xff]
          %v1490 = vld [vmem:[%s5 + $0x10] sm:$0xff]
          %v1491 = vld [vmem:[%s5 + $0x18] sm:$0xff]
          %v1492 = vld [vmem:[%s5 + $0x20] sm:$0xff]
          %v1493 = vld [vmem:[%s5 + $0x28] sm:$0xff]
          %v1494 = vld [vmem:[%s5 + $0x30] sm:$0xff]
          %v1495 = vld [vmem:[%s5 + $0x38] sm:$0xff]
          %v1496 = vld [vmem:[%s5 + $0x40] sm:$0xff]
          %v1497 = vld [vmem:[%s5 + $0x48] sm:$0xff]
          %v1498 = vld [vmem:[%s5 + $0x50] sm:$0xff]
          %v1499 = vld [vmem:[%s5 + $0x58] sm:$0xff]
          %v1500 = vld [vmem:[%s5 + $0x60] sm:$0xff]
          %v1501 = vld [vmem:[%s5 + $0x68] sm:$0xff]
          %v1502 = vld [vmem:[%s5 + $0x70] sm:$0xff]
          %v1503 = vld [vmem:[%s5 + $0x78] sm:$0xff]
          %v1504 = vld [vmem:[%s5 + $0x80] sm:$0xff]
          %v1505 = vld [vmem:[%s5 + $0x88] sm:$0xff]
          %v1506 = vld [vmem:[%s5 + $0x90] sm:$0xff]
          %v1507 = vld [vmem:[%s5 + $0x98] sm:$0xff]
          %v1508 = vld [vmem:[%s5 + $0xa0] sm:$0xff]
          %v1509 = vld [vmem:[%s5 + $0xa8] sm:$0xff]
          %v1510 = vld [vmem:[%s5 + $0xb0] sm:$0xff]
          %v1511 = vld [vmem:[%s5 + $0xb8] sm:$0xff]
          %v1512 = vld [vmem:[%s5 + $0xc0] sm:$0xff]
          %v1513 = vld [vmem:[%s5 + $0xc8] sm:$0xff]
          %v1514 = vld [vmem:[%s5 + $0xd0] sm:$0xff]
          %v1515 = vld [vmem:[%s5 + $0xd8] sm:$0xff]
          %v1516 = vld [vmem:[%s5 + $0xe0] sm:$0xff]
          %v1517 = vld [vmem:[%s5 + $0xe8] sm:$0xff]
          %v1518 = vld [vmem:[%s5 + $0xf0] sm:$0xff]
          %v1519 = vld [vmem:[%s5 + $0xf8] sm:$0xff]
          %v1520 = vld [vmem:[%s5 + $0x100] sm:$0xff]
          %v1521 = vld [vmem:[%s5 + $0x108] sm:$0xff]
          %v1522 = vld [vmem:[%s5 + $0x110] sm:$0xff]
          %v1523 = vld [vmem:[%s5 + $0x118] sm:$0xff]
          %v1524 = vld [vmem:[%s5 + $0x120] sm:$0xff]
          %v1525 = vld [vmem:[%s5 + $0x128] sm:$0xff]
          %v1526 = vld [vmem:[%s5 + $0x130] sm:$0xff]
          %v1527 = vld [vmem:[%s5 + $0x138] sm:$0xff]
          %v1528 = vld [vmem:[%s5 + $0x140] sm:$0xff]
          %v1529 = vld [vmem:[%s5 + $0x148] sm:$0xff]
          %v1530 = vld [vmem:[%s5 + $0x150] sm:$0xff]
          %v1531 = vld [vmem:[%s5 + $0x158] sm:$0xff]
          %v1532 = vld [vmem:[%s5 + $0x160] sm:$0xff]
          %v1533 = vld [vmem:[%s5 + $0x168] sm:$0xff]
          %v1534 = vld [vmem:[%s5 + $0x170] sm:$0xff]
          %v1535 = vld [vmem:[%s5 + $0x178] sm:$0xff]
          %v1536 = vld [vmem:[%s5 + $0x180] sm:$0xff]
          %v1537 = vld [vmem:[%s5 + $0x188] sm:$0xff]
          %v1538 = vld [vmem:[%s5 + $0x190] sm:$0xff]
          %v1539 = vld [vmem:[%s5 + $0x198] sm:$0xff]
          %v1540 = vld [vmem:[%s5 + $0x1a0] sm:$0xff]
          %v1541 = vld [vmem:[%s5 + $0x1a8] sm:$0xff]
          %v1542 = vld [vmem:[%s5 + $0x1b0] sm:$0xff]
          %v1543 = vld [vmem:[%s5 + $0x1b8] sm:$0xff]
          %v1544 = vld [vmem:[%s5 + $0x1c0] sm:$0xff]
          %v1545 = vld [vmem:[%s5 + $0x1c8] sm:$0xff]
          %v1546 = vld [vmem:[%s5 + $0x1d0] sm:$0xff]
          %v1547 = vld [vmem:[%s5 + $0x1d8] sm:$0xff]
          %v1548 = vld [vmem:[%s5 + $0x1e0] sm:$0xff]
          %v1549 = vld [vmem:[%s5 + $0x1e8] sm:$0xff]
          %v1550 = vld [vmem:[%s5 + $0x1f0] sm:$0xff]
          %v1551 = vld [vmem:[%s5 + $0x1f8] sm:$0xff]
          %v1552 = vld [vmem:[%s7] sm:$0x3]
          %v1554 = vlaneseq
          %v1555 = vshrl.u32 %v1554, 7
          %v1556 = vsub.s32 0, %v1555
          %v1557 = vrot.slane %v1552, %v1556
          %v1558 = vlaneseq
          %v1559 = vshrl.u32 %v1558, 7
          %v1560 = vsub.s32 1, %v1559
          %v1561 = vrot.slane %v1552, %v1560
          %v1566 = vunpack.c.l.s4 1983009808
          %v1567 = vunpack.c.0.s8 %v1566
          %v1568 = vlaneseq
          %v1569 = vshrl.u32 %v1568, 7
          %v1570 = vsub.s32 %v1567, %v1569
          %v1571 = vrot.slane %v1487, %v1570
          %v1572 = vcombine.high %v1571, %v1571
          %1575 = vmatprep.subr.mxu0 %v1519
          %1576 = vmatpush1.msra.mxu0 %v1518
          %1577 = vmatprep.subr.mxu0 %v1517
          %1578 = vmatpush1.msra.mxu0 %v1516
          %1579 = vmatprep.subr.mxu0 %v1515
          %1580 = vmatpush1.msra.mxu0 %v1514
          %1581 = vmatprep.subr.mxu0 %v1513
          %1582 = vmatpush1.msra.mxu0 %v1512
          %1583 = vmatprep.subr.mxu0 %v1511
          %1584 = vmatpush1.msra.mxu0 %v1510
          %1585 = vmatprep.subr.mxu0 %v1509
          %1586 = vmatpush1.msra.mxu0 %v1508
          %1587 = vmatprep.subr.mxu0 %v1507
          %1588 = vmatpush1.msra.mxu0 %v1506
          %1589 = vmatprep.subr.mxu0 %v1505
          %1590 = vmatpush1.msra.mxu0 %v1504
          %1591 = vmatprep.subr.mxu0 %v1503
          %1592 = vmatpush1.msra.mxu0 %v1502
          %1593 = vmatprep.subr.mxu0 %v1501
          %1594 = vmatpush1.msra.mxu0 %v1500
          %1595 = vmatprep.subr.mxu0 %v1499
          %1596 = vmatpush1.msra.mxu0 %v1498
          %1597 = vmatprep.subr.mxu0 %v1497
          %1598 = vmatpush1.msra.mxu0 %v1496
          %1599 = vmatprep.subr.mxu0 %v1495
          %1600 = vmatpush1.msra.mxu0 %v1494
          %1601 = vmatprep.subr.mxu0 %v1493
          %1602 = vmatpush1.msra.mxu0 %v1492
          %1603 = vmatprep.subr.mxu0 %v1491
          %1604 = vmatpush1.msra.mxu0 %v1490
          %1605 = vmatprep.subr.mxu0 %v1489
          %1606 = vmatpush1.msra.mxu0 %v1488
          %1607 = vmatprep.subr.mxu0 %v1551
          %1608 = vmatpush2.msra.mxu0 %v1550
          %1609 = vmatprep.subr.mxu0 %v1549
          %1610 = vmatpush2.msra.mxu0 %v1548
          %1611 = vmatprep.subr.mxu0 %v1547
          %1612 = vmatpush2.msra.mxu0 %v1546
          %1613 = vmatprep.subr.mxu0 %v1545
          %1614 = vmatpush2.msra.mxu0 %v1544
          %1615 = vmatprep.subr.mxu0 %v1543
          %1616 = vmatpush2.msra.mxu0 %v1542
          %1617 = vmatprep.subr.mxu0 %v1541
          %1618 = vmatpush2.msra.mxu0 %v1540
          %1619 = vmatprep.subr.mxu0 %v1539
          %1620 = vmatpush2.msra.mxu0 %v1538
          %1621 = vmatprep.subr.mxu0 %v1537
          %1622 = vmatpush2.msra.mxu0 %v1536
          %1623 = vmatprep.subr.mxu0 %v1535
          %1624 = vmatpush2.msra.mxu0 %v1534
          %1625 = vmatprep.subr.mxu0 %v1533
          %1626 = vmatpush2.msra.mxu0 %v1532
          %1627 = vmatprep.subr.mxu0 %v1531
          %1628 = vmatpush2.msra.mxu0 %v1530
          %1629 = vmatprep.subr.mxu0 %v1529
          %1630 = vmatpush2.msra.mxu0 %v1528
          %1631 = vmatprep.subr.mxu0 %v1527
          %1632 = vmatpush2.msra.mxu0 %v1526
          %1633 = vmatprep.subr.mxu0 %v1525
          %1634 = vmatpush2.msra.mxu0 %v1524
          %1635 = vmatprep.subr.mxu0 %v1523
          %1636 = vmatpush2.msra.mxu0 %v1522
          %1637 = vmatprep.subr.mxu0 %v1521
          %1638 = vmatpush2.msra.mxu0 %v1520
          %1639 = vmatprep.mubr.f32.mxu0 %v1572
          %1640 = vmatmul.mubr.f32.gmra.mxu0 %v1571
          %v1641 = vpop.f32.mrf.mxu0
          %v1642 = vadd.f32 %v1557, %v1641
          %v1643 = vpop.f32.mrf.mxu0
          %v1644 = vadd.f32 %v1561, %v1643
          %1645 = vdwg.mxu0
          %v1646 = vmax.f32 %v1642, 0.0
          %v1647 = vmax.f32 %v1644, 0.0
          %v1650 = vcombine.low %v1646, %v1647
          %v1652 = vunpack.c.l.s4 1983009808
          %v1653 = vunpack.c.0.s8 %v1652
          %v1654 = vlaneseq
          %v1655 = vshrl.u32 %v1654, 7
          %v1656 = vsub.s32 %v1653, %v1655
          %v1657 = vrot.slane %v1650, %v1656
          %1659 = vst [vmem:[#allocation2] sm:$0xf] %v1657
          %v1660 = vld [vmem:[%s13] sm:$0xff]
          %v1661 = vld [vmem:[%s13 + $0x8] sm:$0xff]
          %v1662 = vld [vmem:[%s13 + $0x10] sm:$0xff]
          %v1663 = vld [vmem:[%s13 + $0x18] sm:$0xff]
          %v1664 = vld [vmem:[%s13 + $0x20] sm:$0xff]
          %v1665 = vld [vmem:[%s13 + $0x28] sm:$0xff]
          %v1666 = vld [vmem:[%s13 + $0x30] sm:$0xff]
          %v1667 = vld [vmem:[%s13 + $0x38] sm:$0xff]
          %v1668 = vld [vmem:[%s13 + $0x40] sm:$0xff]
          %v1669 = vld [vmem:[%s13 + $0x48] sm:$0xff]
          %v1670 = vld [vmem:[%s13 + $0x50] sm:$0xff]
          %v1671 = vld [vmem:[%s13 + $0x58] sm:$0xff]
          %v1672 = vld [vmem:[%s13 + $0x60] sm:$0xff]
          %v1673 = vld [vmem:[%s13 + $0x68] sm:$0xff]
          %v1674 = vld [vmem:[%s13 + $0x70] sm:$0xff]
          %v1675 = vld [vmem:[%s13 + $0x78] sm:$0xff]
          %v1676 = vld [vmem:[%s13 + $0x80] sm:$0xff]
          %v1677 = vld [vmem:[%s13 + $0x88] sm:$0xff]
          %v1678 = vld [vmem:[%s13 + $0x90] sm:$0xff]
          %v1679 = vld [vmem:[%s13 + $0x98] sm:$0xff]
          %v1680 = vld [vmem:[%s13 + $0xa0] sm:$0xff]
          %v1681 = vld [vmem:[%s13 + $0xa8] sm:$0xff]
          %v1682 = vld [vmem:[%s13 + $0xb0] sm:$0xff]
          %v1683 = vld [vmem:[%s13 + $0xb8] sm:$0xff]
          %v1684 = vld [vmem:[%s13 + $0xc0] sm:$0xff]
          %v1685 = vld [vmem:[%s13 + $0xc8] sm:$0xff]
          %v1686 = vld [vmem:[%s13 + $0xd0] sm:$0xff]
          %v1687 = vld [vmem:[%s13 + $0xd8] sm:$0xff]
          %v1688 = vld [vmem:[%s13 + $0xe0] sm:$0xff]
          %v1689 = vld [vmem:[%s13 + $0xe8] sm:$0xff]
          %v1690 = vld [vmem:[%s13 + $0xf0] sm:$0xff]
          %v1691 = vld [vmem:[%s13 + $0xf8] sm:$0xff]
          %v1692 = vld [vmem:[%s13 + $0x100] sm:$0xff]
          %v1693 = vld [vmem:[%s13 + $0x108] sm:$0xff]
          %v1694 = vld [vmem:[%s13 + $0x110] sm:$0xff]
          %v1695 = vld [vmem:[%s13 + $0x118] sm:$0xff]
          %v1696 = vld [vmem:[%s13 + $0x120] sm:$0xff]
          %v1697 = vld [vmem:[%s13 + $0x128] sm:$0xff]
          %v1698 = vld [vmem:[%s13 + $0x130] sm:$0xff]
          %v1699 = vld [vmem:[%s13 + $0x138] sm:$0xff]
          %v1700 = vld [vmem:[%s13 + $0x140] sm:$0xff]
          %v1701 = vld [vmem:[%s13 + $0x148] sm:$0xff]
          %v1702 = vld [vmem:[%s13 + $0x150] sm:$0xff]
          %v1703 = vld [vmem:[%s13 + $0x158] sm:$0xff]
          %v1704 = vld [vmem:[%s13 + $0x160] sm:$0xff]
          %v1705 = vld [vmem:[%s13 + $0x168] sm:$0xff]
          %v1706 = vld [vmem:[%s13 + $0x170] sm:$0xff]
          %v1707 = vld [vmem:[%s13 + $0x178] sm:$0xff]
          %v1708 = vld [vmem:[%s13 + $0x180] sm:$0xff]
          %v1709 = vld [vmem:[%s13 + $0x188] sm:$0xff]
          %v1710 = vld [vmem:[%s13 + $0x190] sm:$0xff]
          %v1711 = vld [vmem:[%s13 + $0x198] sm:$0xff]
          %v1712 = vld [vmem:[%s13 + $0x1a0] sm:$0xff]
          %v1713 = vld [vmem:[%s13 + $0x1a8] sm:$0xff]
          %v1714 = vld [vmem:[%s13 + $0x1b0] sm:$0xff]
          %v1715 = vld [vmem:[%s13 + $0x1b8] sm:$0xff]
          %v1716 = vld [vmem:[%s13 + $0x1c0] sm:$0xff]
          %v1717 = vld [vmem:[%s13 + $0x1c8] sm:$0xff]
          %v1718 = vld [vmem:[%s13 + $0x1d0] sm:$0xff]
          %v1719 = vld [vmem:[%s13 + $0x1d8] sm:$0xff]
          %v1720 = vld [vmem:[%s13 + $0x1e0] sm:$0xff]
          %v1721 = vld [vmem:[%s13 + $0x1e8] sm:$0xff]
          %v1722 = vld [vmem:[%s13 + $0x1f0] sm:$0xff]
          %v1723 = vld [vmem:[%s13 + $0x1f8] sm:$0xff]
          %v1724 = vld [vmem:[%s15] sm:$0x3]
          %v1726 = vlaneseq
          %v1727 = vshrl.u32 %v1726, 7
          %v1728 = vsub.s32 0, %v1727
          %v1729 = vrot.slane %v1724, %v1728
          %v1730 = vlaneseq
          %v1731 = vshrl.u32 %v1730, 7
          %v1732 = vsub.s32 1, %v1731
          %v1733 = vrot.slane %v1724, %v1732
          %1736 = vmatprep.subr.mxu0 %v1691
          %1737 = vmatpush1.msra.mxu0 %v1690
          %1738 = vmatprep.subr.mxu0 %v1689
          %1739 = vmatpush1.msra.mxu0 %v1688
          %1740 = vmatprep.subr.mxu0 %v1687
          %1741 = vmatpush1.msra.mxu0 %v1686
          %1742 = vmatprep.subr.mxu0 %v1685
          %1743 = vmatpush1.msra.mxu0 %v1684
          %1744 = vmatprep.subr.mxu0 %v1683
          %1745 = vmatpush1.msra.mxu0 %v1682
          %1746 = vmatprep.subr.mxu0 %v1681
          %1747 = vmatpush1.msra.mxu0 %v1680
          %1748 = vmatprep.subr.mxu0 %v1679
          %1749 = vmatpush1.msra.mxu0 %v1678
          %1750 = vmatprep.subr.mxu0 %v1677
          %1751 = vmatpush1.msra.mxu0 %v1676
          %1752 = vmatprep.subr.mxu0 %v1675
          %1753 = vmatpush1.msra.mxu0 %v1674
          %1754 = vmatprep.subr.mxu0 %v1673
          %1755 = vmatpush1.msra.mxu0 %v1672
          %1756 = vmatprep.subr.mxu0 %v1671
          %1757 = vmatpush1.msra.mxu0 %v1670
          %1758 = vmatprep.subr.mxu0 %v1669
          %1759 = vmatpush1.msra.mxu0 %v1668
          %1760 = vmatprep.subr.mxu0 %v1667
          %1761 = vmatpush1.msra.mxu0 %v1666
          %1762 = vmatprep.subr.mxu0 %v1665
          %1763 = vmatpush1.msra.mxu0 %v1664
          %1764 = vmatprep.subr.mxu0 %v1663
          %1765 = vmatpush1.msra.mxu0 %v1662
          %1766 = vmatprep.subr.mxu0 %v1661
          %1767 = vmatpush1.msra.mxu0 %v1660
          %1768 = vmatprep.subr.mxu0 %v1723
          %1769 = vmatpush2.msra.mxu0 %v1722
          %1770 = vmatprep.subr.mxu0 %v1721
          %1771 = vmatpush2.msra.mxu0 %v1720
          %1772 = vmatprep.subr.mxu0 %v1719
          %1773 = vmatpush2.msra.mxu0 %v1718
          %1774 = vmatprep.subr.mxu0 %v1717
          %1775 = vmatpush2.msra.mxu0 %v1716
          %1776 = vmatprep.subr.mxu0 %v1715
          %1777 = vmatpush2.msra.mxu0 %v1714
          %1778 = vmatprep.subr.mxu0 %v1713
          %1779 = vmatpush2.msra.mxu0 %v1712
          %1780 = vmatprep.subr.mxu0 %v1711
          %1781 = vmatpush2.msra.mxu0 %v1710
          %1782 = vmatprep.subr.mxu0 %v1709
          %1783 = vmatpush2.msra.mxu0 %v1708
          %1784 = vmatprep.subr.mxu0 %v1707
          %1785 = vmatpush2.msra.mxu0 %v1706
          %1786 = vmatprep.subr.mxu0 %v1705
          %1787 = vmatpush2.msra.mxu0 %v1704
          %1788 = vmatprep.subr.mxu0 %v1703
          %1789 = vmatpush2.msra.mxu0 %v1702
          %1790 = vmatprep.subr.mxu0 %v1701
          %1791 = vmatpush2.msra.mxu0 %v1700
          %1792 = vmatprep.subr.mxu0 %v1699
          %1793 = vmatpush2.msra.mxu0 %v1698
          %1794 = vmatprep.subr.mxu0 %v1697
          %1795 = vmatpush2.msra.mxu0 %v1696
          %1796 = vmatprep.subr.mxu0 %v1695
          %1797 = vmatpush2.msra.mxu0 %v1694
          %1798 = vmatprep.subr.mxu0 %v1693
          %1799 = vmatpush2.msra.mxu0 %v1692
          %1800 = vmatprep.mubr.f32.mxu0 %v1647
          %1801 = vmatmul.mubr.f32.gmra.mxu0 %v1646
          %v1802 = vpop.f32.mrf.mxu0
          %v1803 = vadd.f32 %v1729, %v1802
          %v1804 = vpop.f32.mrf.mxu0
          %v1805 = vadd.f32 %v1733, %v1804
          %1806 = vdwg.mxu0
          %v1807 = vtanh.pop %v1803
          %v1808 = vtanh.pop %v1805
          %vm1809 = vcmask 254976
          %1810 = vst.msk [vmem:[#allocation8] sm:$0x3] %vm1809, %v1807
          %1812 = vrot.lane.b32.xlu0 %v1807, 96
          %v1813 = vpop.permute.xlu0 %1812
          %1815 = vst.msk [vmem:[#allocation9] sm:$0x3] %vm1809, %v1813
          %1816 = vrot.lane.b32.xlu0 %v1807, 64
          %v1817 = vpop.permute.xlu0 %1816
          %1819 = vst.msk [vmem:[#allocation4] sm:$0x3] %vm1809, %v1817
          %1820 = vrot.lane.b32.xlu0 %v1807, 32
          %v1821 = vpop.permute.xlu0 %1820
          %1823 = vst.msk [vmem:[#allocation5] sm:$0x3] %vm1809, %v1821
          %1824 = vst.msk [vmem:[#allocation6] sm:$0x3] %vm1809, %v1808
          %1826 = vrot.lane.b32.xlu0 %v1808, 96
          %v1827 = vpop.permute.xlu0 %1826
          %1829 = vst.msk [vmem:[#allocation7] sm:$0x3] %vm1809, %v1827
          %v1830 = vld [vmem:[%s9] sm:$0xff]
          %v1831 = vld [vmem:[%s9 + $0x8] sm:$0xff]
          %v1832 = vld [vmem:[%s9 + $0x10] sm:$0xff]
          %v1833 = vld [vmem:[%s9 + $0x18] sm:$0xff]
          %v1834 = vld [vmem:[%s9 + $0x20] sm:$0xff]
          %v1835 = vld [vmem:[%s9 + $0x28] sm:$0xff]
          %v1836 = vld [vmem:[%s9 + $0x30] sm:$0xff]
          %v1837 = vld [vmem:[%s9 + $0x38] sm:$0xff]
          %v1838 = vld [vmem:[%s9 + $0x40] sm:$0xff]
          %v1839 = vld [vmem:[%s9 + $0x48] sm:$0xff]
          %v1840 = vld [vmem:[%s9 + $0x50] sm:$0xff]
          %v1841 = vld [vmem:[%s9 + $0x58] sm:$0xff]
          %v1842 = vld [vmem:[%s9 + $0x60] sm:$0xff]
          %v1843 = vld [vmem:[%s9 + $0x68] sm:$0xff]
          %v1844 = vld [vmem:[%s9 + $0x70] sm:$0xff]
          %v1845 = vld [vmem:[%s9 + $0x78] sm:$0xff]
          %v1846 = vld [vmem:[%s9 + $0x80] sm:$0xff]
          %v1847 = vld [vmem:[%s9 + $0x88] sm:$0xff]
          %v1848 = vld [vmem:[%s9 + $0x90] sm:$0xff]
          %v1849 = vld [vmem:[%s9 + $0x98] sm:$0xff]
          %v1850 = vld [vmem:[%s9 + $0xa0] sm:$0xff]
          %v1851 = vld [vmem:[%s9 + $0xa8] sm:$0xff]
          %v1852 = vld [vmem:[%s9 + $0xb0] sm:$0xff]
          %v1853 = vld [vmem:[%s9 + $0xb8] sm:$0xff]
          %v1854 = vld [vmem:[%s9 + $0xc0] sm:$0xff]
          %v1855 = vld [vmem:[%s9 + $0xc8] sm:$0xff]
          %v1856 = vld [vmem:[%s9 + $0xd0] sm:$0xff]
          %v1857 = vld [vmem:[%s9 + $0xd8] sm:$0xff]
          %v1858 = vld [vmem:[%s9 + $0xe0] sm:$0xff]
          %v1859 = vld [vmem:[%s9 + $0xe8] sm:$0xff]
          %v1860 = vld [vmem:[%s9 + $0xf0] sm:$0xff]
          %v1861 = vld [vmem:[%s9 + $0xf8] sm:$0xff]
          %v1862 = vld [vmem:[%s11] sm:$0x1]
          %v1864 = vlaneseq
          %v1865 = vshrl.u32 %v1864, 7
          %v1866 = vsub.s32 0, %v1865
          %v1867 = vrot.slane %v1862, %v1866
          %1869 = vmatprep.subr.mxu0 0.0
          %1870 = vmatpush1.msra.mxu0 %v1845
          %1871 = vmatprep.subr.mxu0 0.0
          %1872 = vmatpush1.msra.mxu0 %v1844
          %1873 = vmatprep.subr.mxu0 0.0
          %1874 = vmatpush1.msra.mxu0 %v1843
          %1875 = vmatprep.subr.mxu0 0.0
          %1876 = vmatpush1.msra.mxu0 %v1842
          %1877 = vmatprep.subr.mxu0 0.0
          %1878 = vmatpush1.msra.mxu0 %v1841
          %1879 = vmatprep.subr.mxu0 0.0
          %1880 = vmatpush1.msra.mxu0 %v1840
          %1881 = vmatprep.subr.mxu0 0.0
          %1882 = vmatpush1.msra.mxu0 %v1839
          %1883 = vmatprep.subr.mxu0 0.0
          %1884 = vmatpush1.msra.mxu0 %v1838
          %1885 = vmatprep.subr.mxu0 0.0
          %1886 = vmatpush1.msra.mxu0 %v1837
          %1887 = vmatprep.subr.mxu0 0.0
          %1888 = vmatpush1.msra.mxu0 %v1836
          %1889 = vmatprep.subr.mxu0 0.0
          %1890 = vmatpush1.msra.mxu0 %v1835
          %1891 = vmatprep.subr.mxu0 0.0
          %1892 = vmatpush1.msra.mxu0 %v1834
          %1893 = vmatprep.subr.mxu0 0.0
          %1894 = vmatpush1.msra.mxu0 %v1833
          %1895 = vmatprep.subr.mxu0 0.0
          %1896 = vmatpush1.msra.mxu0 %v1832
          %1897 = vmatprep.subr.mxu0 0.0
          %1898 = vmatpush1.msra.mxu0 %v1831
          %1899 = vmatprep.subr.mxu0 0.0
          %1900 = vmatpush1.msra.mxu0 %v1830
          %1901 = vmatprep.subr.mxu0 0.0
          %1902 = vmatpush2.msra.mxu0 %v1861
          %1903 = vmatprep.subr.mxu0 0.0
          %1904 = vmatpush2.msra.mxu0 %v1860
          %1905 = vmatprep.subr.mxu0 0.0
          %1906 = vmatpush2.msra.mxu0 %v1859
          %1907 = vmatprep.subr.mxu0 0.0
          %1908 = vmatpush2.msra.mxu0 %v1858
          %1909 = vmatprep.subr.mxu0 0.0
          %1910 = vmatpush2.msra.mxu0 %v1857
          %1911 = vmatprep.subr.mxu0 0.0
          %1912 = vmatpush2.msra.mxu0 %v1856
          %1913 = vmatprep.subr.mxu0 0.0
          %1914 = vmatpush2.msra.mxu0 %v1855
          %1915 = vmatprep.subr.mxu0 0.0
          %1916 = vmatpush2.msra.mxu0 %v1854
          %1917 = vmatprep.subr.mxu0 0.0
          %1918 = vmatpush2.msra.mxu0 %v1853
          %1919 = vmatprep.subr.mxu0 0.0
          %1920 = vmatpush2.msra.mxu0 %v1852
          %1921 = vmatprep.subr.mxu0 0.0
          %1922 = vmatpush2.msra.mxu0 %v1851
          %1923 = vmatprep.subr.mxu0 0.0
          %1924 = vmatpush2.msra.mxu0 %v1850
          %1925 = vmatprep.subr.mxu0 0.0
          %1926 = vmatpush2.msra.mxu0 %v1849
          %1927 = vmatprep.subr.mxu0 0.0
          %1928 = vmatpush2.msra.mxu0 %v1848
          %1929 = vmatprep.subr.mxu0 0.0
          %1930 = vmatpush2.msra.mxu0 %v1847
          %1931 = vmatprep.subr.mxu0 0.0
          %1932 = vmatpush2.msra.mxu0 %v1846
          %1933 = vmatprep.mubr.f32.mxu0 %v1647
          %1934 = vmatmul.mubr.f32.gmra.mxu0 %v1646
          %v1935 = vpop.f32.mrf.mxu0
          %v1936 = vadd.f32 %v1867, %v1935
          %v1937 = vpop.f32.mrf.mxu0
          %1938 = vdwg.mxu0
          %v1939 = vmax.f32 %v1936, 0.0
          %vm1940 = vcmask 517120
          %1941 = vst.msk [vmem:[#allocation3] sm:$0x3] %vm1940, %v1939
          %v1942 = vld [vmem:[%s17] sm:$0xff]
          %v1943 = vld [vmem:[%s17 + $0x8] sm:$0xff]
          %v1944 = vld [vmem:[%s17 + $0x10] sm:$0xff]
          %v1945 = vld [vmem:[%s17 + $0x18] sm:$0xff]
          %v1946 = vld [vmem:[%s17 + $0x20] sm:$0xff]
          %v1947 = vld [vmem:[%s17 + $0x28] sm:$0xff]
          %v1948 = vld [vmem:[%s17 + $0x30] sm:$0xff]
          %v1949 = vld [vmem:[%s17 + $0x38] sm:$0xff]
          %v1950 = vld [vmem:[%s17 + $0x40] sm:$0xff]
          %v1951 = vld [vmem:[%s17 + $0x48] sm:$0xff]
          %v1952 = vld [vmem:[%s17 + $0x50] sm:$0xff]
          %v1953 = vld [vmem:[%s17 + $0x58] sm:$0xff]
          %v1954 = vld [vmem:[%s17 + $0x60] sm:$0xff]
          %v1955 = vld [vmem:[%s17 + $0x68] sm:$0xff]
          %v1956 = vld [vmem:[%s17 + $0x70] sm:$0xff]
          %v1957 = vld [vmem:[%s17 + $0x78] sm:$0xff]
          %v1958 = vld [vmem:[#allocation10] sm:$0x3]
          %v1960 = vlaneseq
          %v1961 = vshrl.u32 %v1960, 7
          %v1962 = vsub.s32 0, %v1961
          %v1963 = vrot.slane %v1958, %v1962
          %v1964 = vlaneseq
          %v1965 = vshrl.u32 %v1964, 7
          %v1966 = vsub.s32 1, %v1965
          %v1967 = vrot.slane %v1958, %v1966
          %vm1970 = vcmask 523264
          %v1972 = vsel %vm1970, %v1939, 0
          %1974 = vmatprep.subr.mxu0 0.0
          %1975 = vmatpush1.msra.mxu0 0.0
          %1976 = vmatprep.subr.mxu0 0.0
          %1977 = vmatpush1.msra.mxu0 0.0
          %1978 = vmatprep.subr.mxu0 0.0
          %1979 = vmatpush1.msra.mxu0 0.0
          %1980 = vmatprep.subr.mxu0 0.0
          %1981 = vmatpush1.msra.mxu0 0.0
          %1982 = vmatprep.subr.mxu0 0.0
          %1983 = vmatpush1.msra.mxu0 0.0
          %1984 = vmatprep.subr.mxu0 0.0
          %1985 = vmatpush1.msra.mxu0 0.0
          %1986 = vmatprep.subr.mxu0 0.0
          %1987 = vmatpush1.msra.mxu0 0.0
          %1988 = vmatprep.subr.mxu0 0.0
          %1989 = vmatpush1.msra.mxu0 0.0
          %1990 = vmatprep.subr.mxu0 %v1957
          %1991 = vmatpush1.msra.mxu0 %v1956
          %1992 = vmatprep.subr.mxu0 %v1955
          %1993 = vmatpush1.msra.mxu0 %v1954
          %1994 = vmatprep.subr.mxu0 %v1953
          %1995 = vmatpush1.msra.mxu0 %v1952
          %1996 = vmatprep.subr.mxu0 %v1951
          %1997 = vmatpush1.msra.mxu0 %v1950
          %1998 = vmatprep.subr.mxu0 %v1949
          %1999 = vmatpush1.msra.mxu0 %v1948
          %2000 = vmatprep.subr.mxu0 %v1947
          %2001 = vmatpush1.msra.mxu0 %v1946
          %2002 = vmatprep.subr.mxu0 %v1945
          %2003 = vmatpush1.msra.mxu0 %v1944
          %2004 = vmatprep.subr.mxu0 %v1943
          %2005 = vmatpush1.msra.mxu0 %v1942
          %2006 = vmatprep.subr.mxu0 0.0
          %2007 = vmatpush2.msra.mxu0 0.0
          %2008 = vmatprep.subr.mxu0 0.0
          %2009 = vmatpush2.msra.mxu0 0.0
          %2010 = vmatprep.subr.mxu0 0.0
          %2011 = vmatpush2.msra.mxu0 0.0
          %2012 = vmatprep.subr.mxu0 0.0
          %2013 = vmatpush2.msra.mxu0 0.0
          %2014 = vmatprep.subr.mxu0 0.0
          %2015 = vmatpush2.msra.mxu0 0.0
          %2016 = vmatprep.subr.mxu0 0.0
          %2017 = vmatpush2.msra.mxu0 0.0
          %2018 = vmatprep.subr.mxu0 0.0
          %2019 = vmatpush2.msra.mxu0 0.0
          %2020 = vmatprep.subr.mxu0 0.0
          %2021 = vmatpush2.msra.mxu0 0.0
          %2022 = vmatprep.subr.mxu0 0.0
          %2023 = vmatpush2.msra.mxu0 0.0
          %2024 = vmatprep.subr.mxu0 0.0
          %2025 = vmatpush2.msra.mxu0 0.0
          %2026 = vmatprep.subr.mxu0 0.0
          %2027 = vmatpush2.msra.mxu0 0.0
          %2028 = vmatprep.subr.mxu0 0.0
          %2029 = vmatpush2.msra.mxu0 0.0
          %2030 = vmatprep.subr.mxu0 0.0
          %2031 = vmatpush2.msra.mxu0 0.0
          %2032 = vmatprep.subr.mxu0 0.0
          %2033 = vmatpush2.msra.mxu0 0.0
          %2034 = vmatprep.subr.mxu0 0.0
          %2035 = vmatpush2.msra.mxu0 0.0
          %2036 = vmatprep.subr.mxu0 0.0
          %2037 = vmatpush2.msra.mxu0 0.0
          %2038 = vmatprep.mubr.f32.mxu0 0.0
          %2039 = vmatmul.mubr.f32.gmra.mxu0 %v1972
          %v2040 = vpop.f32.mrf.mxu0
          %v2041 = vadd.f32 %v1963, %v2040
          %v2042 = vpop.f32.mrf.mxu0
          %v2043 = vadd.f32 %v1967, %v2042
          %2044 = vdwg.mxu0
          %v2045 = vtanh.pop %v2041
          %v2046 = vtanh.pop %v2043
          %s2047 = scalar_lea.vmem [#allocation8], 2
          %2048 = vst.msk [vmem:[%s2047] sm:$0x3] %vm1809, %v2045
          %2050 = vrot.lane.b32.xlu0 %v2045, 96
          %v2051 = vpop.permute.xlu0 %2050
          %s2053 = scalar_lea.vmem [#allocation9], 2
          %2054 = vst.msk [vmem:[%s2053] sm:$0x3] %vm1809, %v2051
          %2055 = vrot.lane.b32.xlu0 %v2045, 64
          %v2056 = vpop.permute.xlu0 %2055
          %s2058 = scalar_lea.vmem [#allocation4], 2
          %2059 = vst.msk [vmem:[%s2058] sm:$0x3] %vm1809, %v2056
          %2060 = vrot.lane.b32.xlu0 %v2045, 32
          %v2061 = vpop.permute.xlu0 %2060
          %s2063 = scalar_lea.vmem [#allocation5], 2
          %2064 = vst.msk [vmem:[%s2063] sm:$0x3] %vm1809, %v2061
          %s2065 = scalar_lea.vmem [#allocation6], 2
          %2066 = vst.msk [vmem:[%s2065] sm:$0x3] %vm1809, %v2046
          %2068 = vrot.lane.b32.xlu0 %v2046, 96
          %v2069 = vpop.permute.xlu0 %2068
          %s2071 = scalar_lea.vmem [#allocation7], 2
          %2072 = vst.msk [vmem:[%s2071] sm:$0x3] %vm1809, %v2069
          %s2073 = scalar_lea.vmem %s1, 4
          %v2074 = vld [vmem:[%s2073] sm:$0xf]
          %v2075 = vld [vmem:[%s5] sm:$0xff]
          %v2076 = vld [vmem:[%s5 + $0x8] sm:$0xff]
          %v2077 = vld [vmem:[%s5 + $0x10] sm:$0xff]
          %v2078 = vld [vmem:[%s5 + $0x18] sm:$0xff]
          %v2079 = vld [vmem:[%s5 + $0x20] sm:$0xff]
          %v2080 = vld [vmem:[%s5 + $0x28] sm:$0xff]
          %v2081 = vld [vmem:[%s5 + $0x30] sm:$0xff]
          %v2082 = vld [vmem:[%s5 + $0x38] sm:$0xff]
          %v2083 = vld [vmem:[%s5 + $0x40] sm:$0xff]
          %v2084 = vld [vmem:[%s5 + $0x48] sm:$0xff]
          %v2085 = vld [vmem:[%s5 + $0x50] sm:$0xff]
          %v2086 = vld [vmem:[%s5 + $0x58] sm:$0xff]
          %v2087 = vld [vmem:[%s5 + $0x60] sm:$0xff]
          %v2088 = vld [vmem:[%s5 + $0x68] sm:$0xff]
          %v2089 = vld [vmem:[%s5 + $0x70] sm:$0xff]
          %v2090 = vld [vmem:[%s5 + $0x78] sm:$0xff]
          %v2091 = vld [vmem:[%s5 + $0x80] sm:$0xff]
          %v2092 = vld [vmem:[%s5 + $0x88] sm:$0xff]
          %v2093 = vld [vmem:[%s5 + $0x90] sm:$0xff]
          %v2094 = vld [vmem:[%s5 + $0x98] sm:$0xff]
          %v2095 = vld [vmem:[%s5 + $0xa0] sm:$0xff]
          %v2096 = vld [vmem:[%s5 + $0xa8] sm:$0xff]
          %v2097 = vld [vmem:[%s5 + $0xb0] sm:$0xff]
          %v2098 = vld [vmem:[%s5 + $0xb8] sm:$0xff]
          %v2099 = vld [vmem:[%s5 + $0xc0] sm:$0xff]
          %v2100 = vld [vmem:[%s5 + $0xc8] sm:$0xff]
          %v2101 = vld [vmem:[%s5 + $0xd0] sm:$0xff]
          %v2102 = vld [vmem:[%s5 + $0xd8] sm:$0xff]
          %v2103 = vld [vmem:[%s5 + $0xe0] sm:$0xff]
          %v2104 = vld [vmem:[%s5 + $0xe8] sm:$0xff]
          %v2105 = vld [vmem:[%s5 + $0xf0] sm:$0xff]
          %v2106 = vld [vmem:[%s5 + $0xf8] sm:$0xff]
          %v2107 = vld [vmem:[%s5 + $0x100] sm:$0xff]
          %v2108 = vld [vmem:[%s5 + $0x108] sm:$0xff]
          %v2109 = vld [vmem:[%s5 + $0x110] sm:$0xff]
          %v2110 = vld [vmem:[%s5 + $0x118] sm:$0xff]
          %v2111 = vld [vmem:[%s5 + $0x120] sm:$0xff]
          %v2112 = vld [vmem:[%s5 + $0x128] sm:$0xff]
          %v2113 = vld [vmem:[%s5 + $0x130] sm:$0xff]
          %v2114 = vld [vmem:[%s5 + $0x138] sm:$0xff]
          %v2115 = vld [vmem:[%s5 + $0x140] sm:$0xff]
          %v2116 = vld [vmem:[%s5 + $0x148] sm:$0xff]
          %v2117 = vld [vmem:[%s5 + $0x150] sm:$0xff]
          %v2118 = vld [vmem:[%s5 + $0x158] sm:$0xff]
          %v2119 = vld [vmem:[%s5 + $0x160] sm:$0xff]
          %v2120 = vld [vmem:[%s5 + $0x168] sm:$0xff]
          %v2121 = vld [vmem:[%s5 + $0x170] sm:$0xff]
          %v2122 = vld [vmem:[%s5 + $0x178] sm:$0xff]
          %v2123 = vld [vmem:[%s5 + $0x180] sm:$0xff]
          %v2124 = vld [vmem:[%s5 + $0x188] sm:$0xff]
          %v2125 = vld [vmem:[%s5 + $0x190] sm:$0xff]
          %v2126 = vld [vmem:[%s5 + $0x198] sm:$0xff]
          %v2127 = vld [vmem:[%s5 + $0x1a0] sm:$0xff]
          %v2128 = vld [vmem:[%s5 + $0x1a8] sm:$0xff]
          %v2129 = vld [vmem:[%s5 + $0x1b0] sm:$0xff]
          %v2130 = vld [vmem:[%s5 + $0x1b8] sm:$0xff]
          %v2131 = vld [vmem:[%s5 + $0x1c0] sm:$0xff]
          %v2132 = vld [vmem:[%s5 + $0x1c8] sm:$0xff]
          %v2133 = vld [vmem:[%s5 + $0x1d0] sm:$0xff]
          %v2134 = vld [vmem:[%s5 + $0x1d8] sm:$0xff]
          %v2135 = vld [vmem:[%s5 + $0x1e0] sm:$0xff]
          %v2136 = vld [vmem:[%s5 + $0x1e8] sm:$0xff]
          %v2137 = vld [vmem:[%s5 + $0x1f0] sm:$0xff]
          %v2138 = vld [vmem:[%s5 + $0x1f8] sm:$0xff]
          %v2139 = vld [vmem:[%s7] sm:$0x3]
          %v2141 = vlaneseq
          %v2142 = vshrl.u32 %v2141, 7
          %v2143 = vsub.s32 0, %v2142
          %v2144 = vrot.slane %v2139, %v2143
          %v2145 = vlaneseq
          %v2146 = vshrl.u32 %v2145, 7
          %v2147 = vsub.s32 1, %v2146
          %v2148 = vrot.slane %v2139, %v2147
          %v2153 = vunpack.c.l.s4 1983009808
          %v2154 = vunpack.c.0.s8 %v2153
          %v2155 = vlaneseq
          %v2156 = vshrl.u32 %v2155, 7
          %v2157 = vsub.s32 %v2154, %v2156
          %v2158 = vrot.slane %v2074, %v2157
          %v2159 = vcombine.high %v2158, %v2158
          %2162 = vmatprep.subr.mxu0 %v2106
          %2163 = vmatpush1.msra.mxu0 %v2105
          %2164 = vmatprep.subr.mxu0 %v2104
          %2165 = vmatpush1.msra.mxu0 %v2103
          %2166 = vmatprep.subr.mxu0 %v2102
          %2167 = vmatpush1.msra.mxu0 %v2101
          %2168 = vmatprep.subr.mxu0 %v2100
          %2169 = vmatpush1.msra.mxu0 %v2099
          %2170 = vmatprep.subr.mxu0 %v2098
          %2171 = vmatpush1.msra.mxu0 %v2097
          %2172 = vmatprep.subr.mxu0 %v2096
          %2173 = vmatpush1.msra.mxu0 %v2095
          %2174 = vmatprep.subr.mxu0 %v2094
          %2175 = vmatpush1.msra.mxu0 %v2093
          %2176 = vmatprep.subr.mxu0 %v2092
          %2177 = vmatpush1.msra.mxu0 %v2091
          %2178 = vmatprep.subr.mxu0 %v2090
          %2179 = vmatpush1.msra.mxu0 %v2089
          %2180 = vmatprep.subr.mxu0 %v2088
          %2181 = vmatpush1.msra.mxu0 %v2087
          %2182 = vmatprep.subr.mxu0 %v2086
          %2183 = vmatpush1.msra.mxu0 %v2085
          %2184 = vmatprep.subr.mxu0 %v2084
          %2185 = vmatpush1.msra.mxu0 %v2083
          %2186 = vmatprep.subr.mxu0 %v2082
          %2187 = vmatpush1.msra.mxu0 %v2081
          %2188 = vmatprep.subr.mxu0 %v2080
          %2189 = vmatpush1.msra.mxu0 %v2079
          %2190 = vmatprep.subr.mxu0 %v2078
          %2191 = vmatpush1.msra.mxu0 %v2077
          %2192 = vmatprep.subr.mxu0 %v2076
          %2193 = vmatpush1.msra.mxu0 %v2075
          %2194 = vmatprep.subr.mxu0 %v2138
          %2195 = vmatpush2.msra.mxu0 %v2137
          %2196 = vmatprep.subr.mxu0 %v2136
          %2197 = vmatpush2.msra.mxu0 %v2135
          %2198 = vmatprep.subr.mxu0 %v2134
          %2199 = vmatpush2.msra.mxu0 %v2133
          %2200 = vmatprep.subr.mxu0 %v2132
          %2201 = vmatpush2.msra.mxu0 %v2131
          %2202 = vmatprep.subr.mxu0 %v2130
          %2203 = vmatpush2.msra.mxu0 %v2129
          %2204 = vmatprep.subr.mxu0 %v2128
          %2205 = vmatpush2.msra.mxu0 %v2127
          %2206 = vmatprep.subr.mxu0 %v2126
          %2207 = vmatpush2.msra.mxu0 %v2125
          %2208 = vmatprep.subr.mxu0 %v2124
          %2209 = vmatpush2.msra.mxu0 %v2123
          %2210 = vmatprep.subr.mxu0 %v2122
          %2211 = vmatpush2.msra.mxu0 %v2121
          %2212 = vmatprep.subr.mxu0 %v2120
          %2213 = vmatpush2.msra.mxu0 %v2119
          %2214 = vmatprep.subr.mxu0 %v2118
          %2215 = vmatpush2.msra.mxu0 %v2117
          %2216 = vmatprep.subr.mxu0 %v2116
          %2217 = vmatpush2.msra.mxu0 %v2115
          %2218 = vmatprep.subr.mxu0 %v2114
          %2219 = vmatpush2.msra.mxu0 %v2113
          %2220 = vmatprep.subr.mxu0 %v2112
          %2221 = vmatpush2.msra.mxu0 %v2111
          %2222 = vmatprep.subr.mxu0 %v2110
          %2223 = vmatpush2.msra.mxu0 %v2109
          %2224 = vmatprep.subr.mxu0 %v2108
          %2225 = vmatpush2.msra.mxu0 %v2107
          %2226 = vmatprep.mubr.f32.mxu0 %v2159
          %2227 = vmatmul.mubr.f32.gmra.mxu0 %v2158
          %v2228 = vpop.f32.mrf.mxu0
          %v2229 = vadd.f32 %v2144, %v2228
          %v2230 = vpop.f32.mrf.mxu0
          %v2231 = vadd.f32 %v2148, %v2230
          %2232 = vdwg.mxu0
          %v2233 = vmax.f32 %v2229, 0.0
          %v2234 = vmax.f32 %v2231, 0.0
          %v2237 = vcombine.low %v2233, %v2234
          %v2239 = vunpack.c.l.s4 1983009808
          %v2240 = vunpack.c.0.s8 %v2239
          %v2241 = vlaneseq
          %v2242 = vshrl.u32 %v2241, 7
          %v2243 = vsub.s32 %v2240, %v2242
          %v2244 = vrot.slane %v2237, %v2243
          %2246 = vst [vmem:[#allocation2] sm:$0xf] %v2244
          %v2247 = vld [vmem:[%s13] sm:$0xff]
          %v2248 = vld [vmem:[%s13 + $0x8] sm:$0xff]
          %v2249 = vld [vmem:[%s13 + $0x10] sm:$0xff]
          %v2250 = vld [vmem:[%s13 + $0x18] sm:$0xff]
          %v2251 = vld [vmem:[%s13 + $0x20] sm:$0xff]
          %v2252 = vld [vmem:[%s13 + $0x28] sm:$0xff]
          %v2253 = vld [vmem:[%s13 + $0x30] sm:$0xff]
          %v2254 = vld [vmem:[%s13 + $0x38] sm:$0xff]
          %v2255 = vld [vmem:[%s13 + $0x40] sm:$0xff]
          %v2256 = vld [vmem:[%s13 + $0x48] sm:$0xff]
          %v2257 = vld [vmem:[%s13 + $0x50] sm:$0xff]
          %v2258 = vld [vmem:[%s13 + $0x58] sm:$0xff]
          %v2259 = vld [vmem:[%s13 + $0x60] sm:$0xff]
          %v2260 = vld [vmem:[%s13 + $0x68] sm:$0xff]
          %v2261 = vld [vmem:[%s13 + $0x70] sm:$0xff]
          %v2262 = vld [vmem:[%s13 + $0x78] sm:$0xff]
          %v2263 = vld [vmem:[%s13 + $0x80] sm:$0xff]
          %v2264 = vld [vmem:[%s13 + $0x88] sm:$0xff]
          %v2265 = vld [vmem:[%s13 + $0x90] sm:$0xff]
          %v2266 = vld [vmem:[%s13 + $0x98] sm:$0xff]
          %v2267 = vld [vmem:[%s13 + $0xa0] sm:$0xff]
          %v2268 = vld [vmem:[%s13 + $0xa8] sm:$0xff]
          %v2269 = vld [vmem:[%s13 + $0xb0] sm:$0xff]
          %v2270 = vld [vmem:[%s13 + $0xb8] sm:$0xff]
          %v2271 = vld [vmem:[%s13 + $0xc0] sm:$0xff]
          %v2272 = vld [vmem:[%s13 + $0xc8] sm:$0xff]
          %v2273 = vld [vmem:[%s13 + $0xd0] sm:$0xff]
          %v2274 = vld [vmem:[%s13 + $0xd8] sm:$0xff]
          %v2275 = vld [vmem:[%s13 + $0xe0] sm:$0xff]
          %v2276 = vld [vmem:[%s13 + $0xe8] sm:$0xff]
          %v2277 = vld [vmem:[%s13 + $0xf0] sm:$0xff]
          %v2278 = vld [vmem:[%s13 + $0xf8] sm:$0xff]
          %v2279 = vld [vmem:[%s13 + $0x100] sm:$0xff]
          %v2280 = vld [vmem:[%s13 + $0x108] sm:$0xff]
          %v2281 = vld [vmem:[%s13 + $0x110] sm:$0xff]
          %v2282 = vld [vmem:[%s13 + $0x118] sm:$0xff]
          %v2283 = vld [vmem:[%s13 + $0x120] sm:$0xff]
          %v2284 = vld [vmem:[%s13 + $0x128] sm:$0xff]
          %v2285 = vld [vmem:[%s13 + $0x130] sm:$0xff]
          %v2286 = vld [vmem:[%s13 + $0x138] sm:$0xff]
          %v2287 = vld [vmem:[%s13 + $0x140] sm:$0xff]
          %v2288 = vld [vmem:[%s13 + $0x148] sm:$0xff]
          %v2289 = vld [vmem:[%s13 + $0x150] sm:$0xff]
          %v2290 = vld [vmem:[%s13 + $0x158] sm:$0xff]
          %v2291 = vld [vmem:[%s13 + $0x160] sm:$0xff]
          %v2292 = vld [vmem:[%s13 + $0x168] sm:$0xff]
          %v2293 = vld [vmem:[%s13 + $0x170] sm:$0xff]
          %v2294 = vld [vmem:[%s13 + $0x178] sm:$0xff]
          %v2295 = vld [vmem:[%s13 + $0x180] sm:$0xff]
          %v2296 = vld [vmem:[%s13 + $0x188] sm:$0xff]
          %v2297 = vld [vmem:[%s13 + $0x190] sm:$0xff]
          %v2298 = vld [vmem:[%s13 + $0x198] sm:$0xff]
          %v2299 = vld [vmem:[%s13 + $0x1a0] sm:$0xff]
          %v2300 = vld [vmem:[%s13 + $0x1a8] sm:$0xff]
          %v2301 = vld [vmem:[%s13 + $0x1b0] sm:$0xff]
          %v2302 = vld [vmem:[%s13 + $0x1b8] sm:$0xff]
          %v2303 = vld [vmem:[%s13 + $0x1c0] sm:$0xff]
          %v2304 = vld [vmem:[%s13 + $0x1c8] sm:$0xff]
          %v2305 = vld [vmem:[%s13 + $0x1d0] sm:$0xff]
          %v2306 = vld [vmem:[%s13 + $0x1d8] sm:$0xff]
          %v2307 = vld [vmem:[%s13 + $0x1e0] sm:$0xff]
          %v2308 = vld [vmem:[%s13 + $0x1e8] sm:$0xff]
          %v2309 = vld [vmem:[%s13 + $0x1f0] sm:$0xff]
          %v2310 = vld [vmem:[%s13 + $0x1f8] sm:$0xff]
          %v2311 = vld [vmem:[%s15] sm:$0x3]
          %v2313 = vlaneseq
          %v2314 = vshrl.u32 %v2313, 7
          %v2315 = vsub.s32 0, %v2314
          %v2316 = vrot.slane %v2311, %v2315
          %v2317 = vlaneseq
          %v2318 = vshrl.u32 %v2317, 7
          %v2319 = vsub.s32 1, %v2318
          %v2320 = vrot.slane %v2311, %v2319
          %2323 = vmatprep.subr.mxu0 %v2278
          %2324 = vmatpush1.msra.mxu0 %v2277
          %2325 = vmatprep.subr.mxu0 %v2276
          %2326 = vmatpush1.msra.mxu0 %v2275
          %2327 = vmatprep.subr.mxu0 %v2274
          %2328 = vmatpush1.msra.mxu0 %v2273
          %2329 = vmatprep.subr.mxu0 %v2272
          %2330 = vmatpush1.msra.mxu0 %v2271
          %2331 = vmatprep.subr.mxu0 %v2270
          %2332 = vmatpush1.msra.mxu0 %v2269
          %2333 = vmatprep.subr.mxu0 %v2268
          %2334 = vmatpush1.msra.mxu0 %v2267
          %2335 = vmatprep.subr.mxu0 %v2266
          %2336 = vmatpush1.msra.mxu0 %v2265
          %2337 = vmatprep.subr.mxu0 %v2264
          %2338 = vmatpush1.msra.mxu0 %v2263
          %2339 = vmatprep.subr.mxu0 %v2262
          %2340 = vmatpush1.msra.mxu0 %v2261
          %2341 = vmatprep.subr.mxu0 %v2260
          %2342 = vmatpush1.msra.mxu0 %v2259
          %2343 = vmatprep.subr.mxu0 %v2258
          %2344 = vmatpush1.msra.mxu0 %v2257
          %2345 = vmatprep.subr.mxu0 %v2256
          %2346 = vmatpush1.msra.mxu0 %v2255
          %2347 = vmatprep.subr.mxu0 %v2254
          %2348 = vmatpush1.msra.mxu0 %v2253
          %2349 = vmatprep.subr.mxu0 %v2252
          %2350 = vmatpush1.msra.mxu0 %v2251
          %2351 = vmatprep.subr.mxu0 %v2250
          %2352 = vmatpush1.msra.mxu0 %v2249
          %2353 = vmatprep.subr.mxu0 %v2248
          %2354 = vmatpush1.msra.mxu0 %v2247
          %2355 = vmatprep.subr.mxu0 %v2310
          %2356 = vmatpush2.msra.mxu0 %v2309
          %2357 = vmatprep.subr.mxu0 %v2308
          %2358 = vmatpush2.msra.mxu0 %v2307
          %2359 = vmatprep.subr.mxu0 %v2306
          %2360 = vmatpush2.msra.mxu0 %v2305
          %2361 = vmatprep.subr.mxu0 %v2304
          %2362 = vmatpush2.msra.mxu0 %v2303
          %2363 = vmatprep.subr.mxu0 %v2302
          %2364 = vmatpush2.msra.mxu0 %v2301
          %2365 = vmatprep.subr.mxu0 %v2300
          %2366 = vmatpush2.msra.mxu0 %v2299
          %2367 = vmatprep.subr.mxu0 %v2298
          %2368 = vmatpush2.msra.mxu0 %v2297
          %2369 = vmatprep.subr.mxu0 %v2296
          %2370 = vmatpush2.msra.mxu0 %v2295
          %2371 = vmatprep.subr.mxu0 %v2294
          %2372 = vmatpush2.msra.mxu0 %v2293
          %2373 = vmatprep.subr.mxu0 %v2292
          %2374 = vmatpush2.msra.mxu0 %v2291
          %2375 = vmatprep.subr.mxu0 %v2290
          %2376 = vmatpush2.msra.mxu0 %v2289
          %2377 = vmatprep.subr.mxu0 %v2288
          %2378 = vmatpush2.msra.mxu0 %v2287
          %2379 = vmatprep.subr.mxu0 %v2286
          %2380 = vmatpush2.msra.mxu0 %v2285
          %2381 = vmatprep.subr.mxu0 %v2284
          %2382 = vmatpush2.msra.mxu0 %v2283
          %2383 = vmatprep.subr.mxu0 %v2282
          %2384 = vmatpush2.msra.mxu0 %v2281
          %2385 = vmatprep.subr.mxu0 %v2280
          %2386 = vmatpush2.msra.mxu0 %v2279
          %2387 = vmatprep.mubr.f32.mxu0 %v2234
          %2388 = vmatmul.mubr.f32.gmra.mxu0 %v2233
          %v2389 = vpop.f32.mrf.mxu0
          %v2390 = vadd.f32 %v2316, %v2389
          %v2391 = vpop.f32.mrf.mxu0
          %v2392 = vadd.f32 %v2320, %v2391
          %2393 = vdwg.mxu0
          %v2394 = vtanh.pop %v2390
          %v2395 = vtanh.pop %v2392
          %2396 = vst.msk [vmem:[#allocation8] sm:$0x3] %vm1809, %v2394
          %2398 = vrot.lane.b32.xlu0 %v2394, 96
          %v2399 = vpop.permute.xlu0 %2398
          %2401 = vst.msk [vmem:[#allocation9] sm:$0x3] %vm1809, %v2399
          %2402 = vrot.lane.b32.xlu0 %v2394, 64
          %v2403 = vpop.permute.xlu0 %2402
          %2405 = vst.msk [vmem:[#allocation4] sm:$0x3] %vm1809, %v2403
          %2406 = vrot.lane.b32.xlu0 %v2394, 32
          %v2407 = vpop.permute.xlu0 %2406
          %2409 = vst.msk [vmem:[#allocation5] sm:$0x3] %vm1809, %v2407
          %2410 = vst.msk [vmem:[#allocation6] sm:$0x3] %vm1809, %v2395
          %2412 = vrot.lane.b32.xlu0 %v2395, 96
          %v2413 = vpop.permute.xlu0 %2412
          %2415 = vst.msk [vmem:[#allocation7] sm:$0x3] %vm1809, %v2413
          %v2416 = vld [vmem:[%s9] sm:$0xff]
          %v2417 = vld [vmem:[%s9 + $0x8] sm:$0xff]
          %v2418 = vld [vmem:[%s9 + $0x10] sm:$0xff]
          %v2419 = vld [vmem:[%s9 + $0x18] sm:$0xff]
          %v2420 = vld [vmem:[%s9 + $0x20] sm:$0xff]
          %v2421 = vld [vmem:[%s9 + $0x28] sm:$0xff]
          %v2422 = vld [vmem:[%s9 + $0x30] sm:$0xff]
          %v2423 = vld [vmem:[%s9 + $0x38] sm:$0xff]
          %v2424 = vld [vmem:[%s9 + $0x40] sm:$0xff]
          %v2425 = vld [vmem:[%s9 + $0x48] sm:$0xff]
          %v2426 = vld [vmem:[%s9 + $0x50] sm:$0xff]
          %v2427 = vld [vmem:[%s9 + $0x58] sm:$0xff]
          %v2428 = vld [vmem:[%s9 + $0x60] sm:$0xff]
          %v2429 = vld [vmem:[%s9 + $0x68] sm:$0xff]
          %v2430 = vld [vmem:[%s9 + $0x70] sm:$0xff]
          %v2431 = vld [vmem:[%s9 + $0x78] sm:$0xff]
          %v2432 = vld [vmem:[%s9 + $0x80] sm:$0xff]
          %v2433 = vld [vmem:[%s9 + $0x88] sm:$0xff]
          %v2434 = vld [vmem:[%s9 + $0x90] sm:$0xff]
          %v2435 = vld [vmem:[%s9 + $0x98] sm:$0xff]
          %v2436 = vld [vmem:[%s9 + $0xa0] sm:$0xff]
          %v2437 = vld [vmem:[%s9 + $0xa8] sm:$0xff]
          %v2438 = vld [vmem:[%s9 + $0xb0] sm:$0xff]
          %v2439 = vld [vmem:[%s9 + $0xb8] sm:$0xff]
          %v2440 = vld [vmem:[%s9 + $0xc0] sm:$0xff]
          %v2441 = vld [vmem:[%s9 + $0xc8] sm:$0xff]
          %v2442 = vld [vmem:[%s9 + $0xd0] sm:$0xff]
          %v2443 = vld [vmem:[%s9 + $0xd8] sm:$0xff]
          %v2444 = vld [vmem:[%s9 + $0xe0] sm:$0xff]
          %v2445 = vld [vmem:[%s9 + $0xe8] sm:$0xff]
          %v2446 = vld [vmem:[%s9 + $0xf0] sm:$0xff]
          %v2447 = vld [vmem:[%s9 + $0xf8] sm:$0xff]
          %v2448 = vld [vmem:[%s11] sm:$0x1]
          %v2450 = vlaneseq
          %v2451 = vshrl.u32 %v2450, 7
          %v2452 = vsub.s32 0, %v2451
          %v2453 = vrot.slane %v2448, %v2452
          %2455 = vmatprep.subr.mxu0 0.0
          %2456 = vmatpush1.msra.mxu0 %v2431
          %2457 = vmatprep.subr.mxu0 0.0
          %2458 = vmatpush1.msra.mxu0 %v2430
          %2459 = vmatprep.subr.mxu0 0.0
          %2460 = vmatpush1.msra.mxu0 %v2429
          %2461 = vmatprep.subr.mxu0 0.0
          %2462 = vmatpush1.msra.mxu0 %v2428
          %2463 = vmatprep.subr.mxu0 0.0
          %2464 = vmatpush1.msra.mxu0 %v2427
          %2465 = vmatprep.subr.mxu0 0.0
          %2466 = vmatpush1.msra.mxu0 %v2426
          %2467 = vmatprep.subr.mxu0 0.0
          %2468 = vmatpush1.msra.mxu0 %v2425
          %2469 = vmatprep.subr.mxu0 0.0
          %2470 = vmatpush1.msra.mxu0 %v2424
          %2471 = vmatprep.subr.mxu0 0.0
          %2472 = vmatpush1.msra.mxu0 %v2423
          %2473 = vmatprep.subr.mxu0 0.0
          %2474 = vmatpush1.msra.mxu0 %v2422
          %2475 = vmatprep.subr.mxu0 0.0
          %2476 = vmatpush1.msra.mxu0 %v2421
          %2477 = vmatprep.subr.mxu0 0.0
          %2478 = vmatpush1.msra.mxu0 %v2420
          %2479 = vmatprep.subr.mxu0 0.0
          %2480 = vmatpush1.msra.mxu0 %v2419
          %2481 = vmatprep.subr.mxu0 0.0
          %2482 = vmatpush1.msra.mxu0 %v2418
          %2483 = vmatprep.subr.mxu0 0.0
          %2484 = vmatpush1.msra.mxu0 %v2417
          %2485 = vmatprep.subr.mxu0 0.0
          %2486 = vmatpush1.msra.mxu0 %v2416
          %2487 = vmatprep.subr.mxu0 0.0
          %2488 = vmatpush2.msra.mxu0 %v2447
          %2489 = vmatprep.subr.mxu0 0.0
          %2490 = vmatpush2.msra.mxu0 %v2446
          %2491 = vmatprep.subr.mxu0 0.0
          %2492 = vmatpush2.msra.mxu0 %v2445
          %2493 = vmatprep.subr.mxu0 0.0
          %2494 = vmatpush2.msra.mxu0 %v2444
          %2495 = vmatprep.subr.mxu0 0.0
          %2496 = vmatpush2.msra.mxu0 %v2443
          %2497 = vmatprep.subr.mxu0 0.0
          %2498 = vmatpush2.msra.mxu0 %v2442
          %2499 = vmatprep.subr.mxu0 0.0
          %2500 = vmatpush2.msra.mxu0 %v2441
          %2501 = vmatprep.subr.mxu0 0.0
          %2502 = vmatpush2.msra.mxu0 %v2440
          %2503 = vmatprep.subr.mxu0 0.0
          %2504 = vmatpush2.msra.mxu0 %v2439
          %2505 = vmatprep.subr.mxu0 0.0
          %2506 = vmatpush2.msra.mxu0 %v2438
          %2507 = vmatprep.subr.mxu0 0.0
          %2508 = vmatpush2.msra.mxu0 %v2437
          %2509 = vmatprep.subr.mxu0 0.0
          %2510 = vmatpush2.msra.mxu0 %v2436
          %2511 = vmatprep.subr.mxu0 0.0
          %2512 = vmatpush2.msra.mxu0 %v2435
          %2513 = vmatprep.subr.mxu0 0.0
          %2514 = vmatpush2.msra.mxu0 %v2434
          %2515 = vmatprep.subr.mxu0 0.0
          %2516 = vmatpush2.msra.mxu0 %v2433
          %2517 = vmatprep.subr.mxu0 0.0
          %2518 = vmatpush2.msra.mxu0 %v2432
          %2519 = vmatprep.mubr.f32.mxu0 %v2234
          %2520 = vmatmul.mubr.f32.gmra.mxu0 %v2233
          %v2521 = vpop.f32.mrf.mxu0
          %v2522 = vadd.f32 %v2453, %v2521
          %v2523 = vpop.f32.mrf.mxu0
          %2524 = vdwg.mxu0
          %v2525 = vmax.f32 %v2522, 0.0
          %2526 = vst.msk [vmem:[#allocation3] sm:$0x3] %vm1940, %v2525
          %v2527 = vld [vmem:[%s17] sm:$0xff]
          %v2528 = vld [vmem:[%s17 + $0x8] sm:$0xff]
          %v2529 = vld [vmem:[%s17 + $0x10] sm:$0xff]
          %v2530 = vld [vmem:[%s17 + $0x18] sm:$0xff]
          %v2531 = vld [vmem:[%s17 + $0x20] sm:$0xff]
          %v2532 = vld [vmem:[%s17 + $0x28] sm:$0xff]
          %v2533 = vld [vmem:[%s17 + $0x30] sm:$0xff]
          %v2534 = vld [vmem:[%s17 + $0x38] sm:$0xff]
          %v2535 = vld [vmem:[%s17 + $0x40] sm:$0xff]
          %v2536 = vld [vmem:[%s17 + $0x48] sm:$0xff]
          %v2537 = vld [vmem:[%s17 + $0x50] sm:$0xff]
          %v2538 = vld [vmem:[%s17 + $0x58] sm:$0xff]
          %v2539 = vld [vmem:[%s17 + $0x60] sm:$0xff]
          %v2540 = vld [vmem:[%s17 + $0x68] sm:$0xff]
          %v2541 = vld [vmem:[%s17 + $0x70] sm:$0xff]
          %v2542 = vld [vmem:[%s17 + $0x78] sm:$0xff]
          %v2543 = vld [vmem:[#allocation10] sm:$0x3]
          %v2545 = vlaneseq
          %v2546 = vshrl.u32 %v2545, 7
          %v2547 = vsub.s32 0, %v2546
          %v2548 = vrot.slane %v2543, %v2547
          %v2549 = vlaneseq
          %v2550 = vshrl.u32 %v2549, 7
          %v2551 = vsub.s32 1, %v2550
          %v2552 = vrot.slane %v2543, %v2551
          %v2556 = vsel %vm1970, %v2525, 0
          %2558 = vmatprep.subr.mxu0 0.0
          %2559 = vmatpush1.msra.mxu0 0.0
          %2560 = vmatprep.subr.mxu0 0.0
          %2561 = vmatpush1.msra.mxu0 0.0
          %2562 = vmatprep.subr.mxu0 0.0
          %2563 = vmatpush1.msra.mxu0 0.0
          %2564 = vmatprep.subr.mxu0 0.0
          %2565 = vmatpush1.msra.mxu0 0.0
          %2566 = vmatprep.subr.mxu0 0.0
          %2567 = vmatpush1.msra.mxu0 0.0
          %2568 = vmatprep.subr.mxu0 0.0
          %2569 = vmatpush1.msra.mxu0 0.0
          %2570 = vmatprep.subr.mxu0 0.0
          %2571 = vmatpush1.msra.mxu0 0.0
          %2572 = vmatprep.subr.mxu0 0.0
          %2573 = vmatpush1.msra.mxu0 0.0
          %2574 = vmatprep.subr.mxu0 %v2542
          %2575 = vmatpush1.msra.mxu0 %v2541
          %2576 = vmatprep.subr.mxu0 %v2540
          %2577 = vmatpush1.msra.mxu0 %v2539
          %2578 = vmatprep.subr.mxu0 %v2538
          %2579 = vmatpush1.msra.mxu0 %v2537
          %2580 = vmatprep.subr.mxu0 %v2536
          %2581 = vmatpush1.msra.mxu0 %v2535
          %2582 = vmatprep.subr.mxu0 %v2534
          %2583 = vmatpush1.msra.mxu0 %v2533
          %2584 = vmatprep.subr.mxu0 %v2532
          %2585 = vmatpush1.msra.mxu0 %v2531
          %2586 = vmatprep.subr.mxu0 %v2530
          %2587 = vmatpush1.msra.mxu0 %v2529
          %2588 = vmatprep.subr.mxu0 %v2528
          %2589 = vmatpush1.msra.mxu0 %v2527
          %2590 = vmatprep.subr.mxu0 0.0
          %2591 = vmatpush2.msra.mxu0 0.0
          %2592 = vmatprep.subr.mxu0 0.0
          %2593 = vmatpush2.msra.mxu0 0.0
          %2594 = vmatprep.subr.mxu0 0.0
          %2595 = vmatpush2.msra.mxu0 0.0
          %2596 = vmatprep.subr.mxu0 0.0
          %2597 = vmatpush2.msra.mxu0 0.0
          %2598 = vmatprep.subr.mxu0 0.0
          %2599 = vmatpush2.msra.mxu0 0.0
          %2600 = vmatprep.subr.mxu0 0.0
          %2601 = vmatpush2.msra.mxu0 0.0
          %2602 = vmatprep.subr.mxu0 0.0
          %2603 = vmatpush2.msra.mxu0 0.0
          %2604 = vmatprep.subr.mxu0 0.0
          %2605 = vmatpush2.msra.mxu0 0.0
          %2606 = vmatprep.subr.mxu0 0.0
          %2607 = vmatpush2.msra.mxu0 0.0
          %2608 = vmatprep.subr.mxu0 0.0
          %2609 = vmatpush2.msra.mxu0 0.0
          %2610 = vmatprep.subr.mxu0 0.0
          %2611 = vmatpush2.msra.mxu0 0.0
          %2612 = vmatprep.subr.mxu0 0.0
          %2613 = vmatpush2.msra.mxu0 0.0
          %2614 = vmatprep.subr.mxu0 0.0
          %2615 = vmatpush2.msra.mxu0 0.0
          %2616 = vmatprep.subr.mxu0 0.0
          %2617 = vmatpush2.msra.mxu0 0.0
          %2618 = vmatprep.subr.mxu0 0.0
          %2619 = vmatpush2.msra.mxu0 0.0
          %2620 = vmatprep.subr.mxu0 0.0
          %2621 = vmatpush2.msra.mxu0 0.0
          %2622 = vmatprep.mubr.f32.mxu0 0.0
          %2623 = vmatmul.mubr.f32.gmra.mxu0 %v2556
          %v2624 = vpop.f32.mrf.mxu0
          %v2625 = vadd.f32 %v2548, %v2624
          %v2626 = vpop.f32.mrf.mxu0
          %v2627 = vadd.f32 %v2552, %v2626
          %2628 = vdwg.mxu0
          %v2629 = vtanh.pop %v2625
          %v2630 = vtanh.pop %v2627
          %2631 = vst.msk [vmem:[%s2047] sm:$0x3] %vm1809, %v2629
          %2633 = vrot.lane.b32.xlu0 %v2629, 96
          %v2634 = vpop.permute.xlu0 %2633
          %2636 = vst.msk [vmem:[%s2053] sm:$0x3] %vm1809, %v2634
          %2637 = vrot.lane.b32.xlu0 %v2629, 64
          %v2638 = vpop.permute.xlu0 %2637
          %2640 = vst.msk [vmem:[%s2058] sm:$0x3] %vm1809, %v2638
          %2641 = vrot.lane.b32.xlu0 %v2629, 32
          %v2642 = vpop.permute.xlu0 %2641
          %2644 = vst.msk [vmem:[%s2063] sm:$0x3] %vm1809, %v2642
          %2645 = vst.msk [vmem:[%s2065] sm:$0x3] %vm1809, %v2630
          %2647 = vrot.lane.b32.xlu0 %v2630, 96
          %v2648 = vpop.permute.xlu0 %2647
          %2650 = vst.msk [vmem:[%s2071] sm:$0x3] %vm1809, %v2648
          %vm2651 = vcmask 123904
          %2652 = vst.msk [vmem:[#allocation39] sm:$0x3] %vm2651, 0.0
          %2653 = vst.msk [vmem:[#allocation40] sm:$0x3] %vm2651, 0.0
        $region256: #{hvrnn_prednet_forward.1} parent=179 // pred_fallthru
          _
        %v2654 = vld [vmem:[#allocation2] sm:$0xf]
        %v2655 = vld [vmem:[#allocation3] sm:$0x3]
        %s2656 = scalar_lea.vmem [#allocation4], 2
        %v2657 = vld [vmem:[%s2656] sm:$0x3]
        %s2658 = scalar_lea.vmem [#allocation5], 2
        %v2659 = vld [vmem:[%s2658] sm:$0x3]
        %v2660 = vld [vmem:[%s31] sm:$0xff]
        %v2661 = vld [vmem:[%s31 + $0x8] sm:$0xff]
        %v2662 = vld [vmem:[%s31 + $0x10] sm:$0xff]
        %v2663 = vld [vmem:[%s31 + $0x18] sm:$0xff]
        %v2664 = vld [vmem:[%s31 + $0x20] sm:$0xff]
        %v2665 = vld [vmem:[%s31 + $0x28] sm:$0xff]
        %v2666 = vld [vmem:[%s31 + $0x30] sm:$0xff]
        %v2667 = vld [vmem:[%s31 + $0x38] sm:$0xff]
        %v2668 = vld [vmem:[%s33] sm:$0xff]
        %v2669 = vld [vmem:[%s33 + $0x8] sm:$0xff]
        %v2670 = vld [vmem:[%s33 + $0x10] sm:$0xff]
        %v2671 = vld [vmem:[%s33 + $0x18] sm:$0xff]
        %vm2672 = vcmask 261120
        %v2674 = vsel %vm2672, %v2657, 0
        %2676 = vmatprep.subr.mxu0 0.0
        %2677 = vmatpush1.msra.mxu0 0.0
        %2678 = vmatprep.subr.mxu0 0.0
        %2679 = vmatpush1.msra.mxu0 0.0
        %2680 = vmatprep.subr.mxu0 0.0
        %2681 = vmatpush1.msra.mxu0 0.0
        %2682 = vmatprep.subr.mxu0 0.0
        %2683 = vmatpush1.msra.mxu0 0.0
        %2684 = vmatprep.subr.mxu0 0.0
        %2685 = vmatpush1.msra.mxu0 0.0
        %2686 = vmatprep.subr.mxu0 0.0
        %2687 = vmatpush1.msra.mxu0 0.0
        %2688 = vmatprep.subr.mxu0 0.0
        %2689 = vmatpush1.msra.mxu0 0.0
        %2690 = vmatprep.subr.mxu0 0.0
        %2691 = vmatpush1.msra.mxu0 0.0
        %2692 = vmatprep.subr.mxu0 0.0
        %2693 = vmatpush1.msra.mxu0 0.0
        %2694 = vmatprep.subr.mxu0 0.0
        %2695 = vmatpush1.msra.mxu0 0.0
        %2696 = vmatprep.subr.mxu0 0.0
        %2697 = vmatpush1.msra.mxu0 0.0
        %2698 = vmatprep.subr.mxu0 0.0
        %2699 = vmatpush1.msra.mxu0 0.0
        %2700 = vmatprep.subr.mxu0 0.0
        %2701 = vmatpush1.msra.mxu0 %v2671
        %2702 = vmatprep.subr.mxu0 0.0
        %2703 = vmatpush1.msra.mxu0 %v2670
        %2704 = vmatprep.subr.mxu0 0.0
        %2705 = vmatpush1.msra.mxu0 %v2669
        %2706 = vmatprep.subr.mxu0 0.0
        %2707 = vmatpush1.msra.mxu0 %v2668
        %2708 = vmatprep.subr.mxu0 0.0
        %2709 = vmatpush2.msra.mxu0 0.0
        %2710 = vmatprep.subr.mxu0 0.0
        %2711 = vmatpush2.msra.mxu0 0.0
        %2712 = vmatprep.subr.mxu0 0.0
        %2713 = vmatpush2.msra.mxu0 0.0
        %2714 = vmatprep.subr.mxu0 0.0
        %2715 = vmatpush2.msra.mxu0 0.0
        %2716 = vmatprep.subr.mxu0 0.0
        %2717 = vmatpush2.msra.mxu0 0.0
        %2718 = vmatprep.subr.mxu0 0.0
        %2719 = vmatpush2.msra.mxu0 0.0
        %2720 = vmatprep.subr.mxu0 0.0
        %2721 = vmatpush2.msra.mxu0 0.0
        %2722 = vmatprep.subr.mxu0 0.0
        %2723 = vmatpush2.msra.mxu0 0.0
        %2724 = vmatprep.subr.mxu0 0.0
        %2725 = vmatpush2.msra.mxu0 0.0
        %2726 = vmatprep.subr.mxu0 0.0
        %2727 = vmatpush2.msra.mxu0 0.0
        %2728 = vmatprep.subr.mxu0 0.0
        %2729 = vmatpush2.msra.mxu0 0.0
        %2730 = vmatprep.subr.mxu0 0.0
        %2731 = vmatpush2.msra.mxu0 0.0
        %2732 = vmatprep.subr.mxu0 0.0
        %2733 = vmatpush2.msra.mxu0 0.0
        %2734 = vmatprep.subr.mxu0 0.0
        %2735 = vmatpush2.msra.mxu0 0.0
        %2736 = vmatprep.subr.mxu0 0.0
        %2737 = vmatpush2.msra.mxu0 0.0
        %2738 = vmatprep.subr.mxu0 0.0
        %2739 = vmatpush2.msra.mxu0 0.0
        %2740 = vmatprep.mubr.f32.mxu0 0.0
        %2741 = vmatmul.mubr.f32.gmra.mxu0 %v2674
        %v2742 = vpop.f32.mrf.mxu0
        %v2743 = vadd.f32 0.0, %v2742
        %v2744 = vpop.f32.mrf.mxu0
        %2745 = vdwg.mxu0
        %vm2746 = vcmask 523264
        %v2748 = vsel %vm2746, %v2655, 0
        %2750 = vmatprep.subr.mxu0 0.0
        %2751 = vmatpush1.msra.mxu0 0.0
        %2752 = vmatprep.subr.mxu0 0.0
        %2753 = vmatpush1.msra.mxu0 0.0
        %2754 = vmatprep.subr.mxu0 0.0
        %2755 = vmatpush1.msra.mxu0 0.0
        %2756 = vmatprep.subr.mxu0 0.0
        %2757 = vmatpush1.msra.mxu0 0.0
        %2758 = vmatprep.subr.mxu0 0.0
        %2759 = vmatpush1.msra.mxu0 0.0
        %2760 = vmatprep.subr.mxu0 0.0
        %2761 = vmatpush1.msra.mxu0 0.0
        %2762 = vmatprep.subr.mxu0 0.0
        %2763 = vmatpush1.msra.mxu0 0.0
        %2764 = vmatprep.subr.mxu0 0.0
        %2765 = vmatpush1.msra.mxu0 0.0
        %2766 = vmatprep.subr.mxu0 0.0
        %2767 = vmatpush1.msra.mxu0 %v2667
        %2768 = vmatprep.subr.mxu0 0.0
        %2769 = vmatpush1.msra.mxu0 %v2666
        %2770 = vmatprep.subr.mxu0 0.0
        %2771 = vmatpush1.msra.mxu0 %v2665
        %2772 = vmatprep.subr.mxu0 0.0
        %2773 = vmatpush1.msra.mxu0 %v2664
        %2774 = vmatprep.subr.mxu0 0.0
        %2775 = vmatpush1.msra.mxu0 %v2663
        %2776 = vmatprep.subr.mxu0 0.0
        %2777 = vmatpush1.msra.mxu0 %v2662
        %2778 = vmatprep.subr.mxu0 0.0
        %2779 = vmatpush1.msra.mxu0 %v2661
        %2780 = vmatprep.subr.mxu0 0.0
        %2781 = vmatpush1.msra.mxu0 %v2660
        %2782 = vmatprep.subr.mxu0 0.0
        %2783 = vmatpush2.msra.mxu0 0.0
        %2784 = vmatprep.subr.mxu0 0.0
        %2785 = vmatpush2.msra.mxu0 0.0
        %2786 = vmatprep.subr.mxu0 0.0
        %2787 = vmatpush2.msra.mxu0 0.0
        %2788 = vmatprep.subr.mxu0 0.0
        %2789 = vmatpush2.msra.mxu0 0.0
        %2790 = vmatprep.subr.mxu0 0.0
        %2791 = vmatpush2.msra.mxu0 0.0
        %2792 = vmatprep.subr.mxu0 0.0
        %2793 = vmatpush2.msra.mxu0 0.0
        %2794 = vmatprep.subr.mxu0 0.0
        %2795 = vmatpush2.msra.mxu0 0.0
        %2796 = vmatprep.subr.mxu0 0.0
        %2797 = vmatpush2.msra.mxu0 0.0
        %2798 = vmatprep.subr.mxu0 0.0
        %2799 = vmatpush2.msra.mxu0 0.0
        %2800 = vmatprep.subr.mxu0 0.0
        %2801 = vmatpush2.msra.mxu0 0.0
        %2802 = vmatprep.subr.mxu0 0.0
        %2803 = vmatpush2.msra.mxu0 0.0
        %2804 = vmatprep.subr.mxu0 0.0
        %2805 = vmatpush2.msra.mxu0 0.0
        %2806 = vmatprep.subr.mxu0 0.0
        %2807 = vmatpush2.msra.mxu0 0.0
        %2808 = vmatprep.subr.mxu0 0.0
        %2809 = vmatpush2.msra.mxu0 0.0
        %2810 = vmatprep.subr.mxu0 0.0
        %2811 = vmatpush2.msra.mxu0 0.0
        %2812 = vmatprep.subr.mxu0 0.0
        %2813 = vmatpush2.msra.mxu0 0.0
        %2814 = vmatprep.mubr.f32.mxu0 0.0
        %2815 = vmatmul.mubr.f32.gmra.mxu0 %v2748
        %v2816 = vpop.f32.mrf.mxu0
        %v2817 = vadd.f32 %v2743, %v2816
        %v2818 = vpop.f32.mrf.mxu0
        %2819 = vdwg.mxu0
        %v2820 = vld [vmem:[#allocation16] sm:$0x1]
        %v2822 = vlaneseq
        %v2823 = vshrl.u32 %v2822, 7
        %v2824 = vsub.s32 0, %v2823
        %v2825 = vrot.slane %v2820, %v2824
        %v2827 = vadd.f32 %v2817, %v2825
        %v2828 = vxor.u32 %v2827, 2147483648
        %v2829 = vmul.f32 %v2828, 1.442695
        %v2830 = vpow.pop %v2829
        %v2831 = vadd.f32 %v2830, 1.0
        %v2832 = vrcp.pop %v2831
        %v2833 = vmul.f32 1.0, %v2832
        %v2834 = vtanh.pop %v2827
        %2836 = vrot.lane.b32.xlu0 %v2659, 32
        %v2837 = vpop.permute.xlu0 %2836
        %v2839 = vmul.f32 %v2833, %v2837
        %2841 = vrot.lane.b32.xlu0 %v2834, 64
        %v2842 = vpop.permute.xlu0 %2841
        %v2844 = vmul.f32 %v2833, %v2842
        %2846 = vrot.lane.b32.xlu0 %v2844, 32
        %v2847 = vpop.permute.xlu0 %2846
        %v2849 = vadd.f32 %v2839, %v2847
        %v2850 = vtanh.pop %v2849
        %2852 = vrot.lane.b32.xlu0 %v2850, 64
        %v2853 = vpop.permute.xlu0 %2852
        %v2855 = vmul.f32 %v2833, %v2853
        %2857 = vrot.lane.b32.xlu0 %v2855, 32
        %v2858 = vpop.permute.xlu0 %2857
        %vm2860 = vcmask 254976
        %2861 = vst.msk [vmem:[%s2656] sm:$0x3] %vm2860, %v2858
        %2863 = vrot.lane.b32.xlu0 %v2849, 96
        %v2864 = vpop.permute.xlu0 %2863
        %2866 = vst.msk [vmem:[%s2658] sm:$0x3] %vm2860, %v2864
        %v2867 = vld [vmem:[%s37] sm:$0xff]
        %v2868 = vld [vmem:[%s37 + $0x8] sm:$0xff]
        %v2869 = vld [vmem:[%s37 + $0x10] sm:$0xff]
        %v2870 = vld [vmem:[%s37 + $0x18] sm:$0xff]
        %v2871 = vld [vmem:[#allocation18] sm:$0x1]
        %v2873 = vlaneseq
        %v2874 = vshrl.u32 %v2873, 7
        %v2875 = vsub.s32 0, %v2874
        %v2876 = vrot.slane %v2871, %v2875
        %v2878 = vsel %vm2672, %v2858, 0
        %2880 = vmatprep.subr.mxu0 0.0
        %2881 = vmatpush1.msra.mxu0 0.0
        %2882 = vmatprep.subr.mxu0 0.0
        %2883 = vmatpush1.msra.mxu0 0.0
        %2884 = vmatprep.subr.mxu0 0.0
        %2885 = vmatpush1.msra.mxu0 0.0
        %2886 = vmatprep.subr.mxu0 0.0
        %2887 = vmatpush1.msra.mxu0 0.0
        %2888 = vmatprep.subr.mxu0 0.0
        %2889 = vmatpush1.msra.mxu0 0.0
        %2890 = vmatprep.subr.mxu0 0.0
        %2891 = vmatpush1.msra.mxu0 0.0
        %2892 = vmatprep.subr.mxu0 0.0
        %2893 = vmatpush1.msra.mxu0 0.0
        %2894 = vmatprep.subr.mxu0 0.0
        %2895 = vmatpush1.msra.mxu0 0.0
        %2896 = vmatprep.subr.mxu0 0.0
        %2897 = vmatpush1.msra.mxu0 0.0
        %2898 = vmatprep.subr.mxu0 0.0
        %2899 = vmatpush1.msra.mxu0 0.0
        %2900 = vmatprep.subr.mxu0 0.0
        %2901 = vmatpush1.msra.mxu0 0.0
        %2902 = vmatprep.subr.mxu0 0.0
        %2903 = vmatpush1.msra.mxu0 0.0
        %2904 = vmatprep.subr.mxu0 0.0
        %2905 = vmatpush1.msra.mxu0 %v2870
        %2906 = vmatprep.subr.mxu0 0.0
        %2907 = vmatpush1.msra.mxu0 %v2869
        %2908 = vmatprep.subr.mxu0 0.0
        %2909 = vmatpush1.msra.mxu0 %v2868
        %2910 = vmatprep.subr.mxu0 0.0
        %2911 = vmatpush1.msra.mxu0 %v2867
        %2912 = vmatprep.subr.mxu0 0.0
        %2913 = vmatpush2.msra.mxu0 0.0
        %2914 = vmatprep.subr.mxu0 0.0
        %2915 = vmatpush2.msra.mxu0 0.0
        %2916 = vmatprep.subr.mxu0 0.0
        %2917 = vmatpush2.msra.mxu0 0.0
        %2918 = vmatprep.subr.mxu0 0.0
        %2919 = vmatpush2.msra.mxu0 0.0
        %2920 = vmatprep.subr.mxu0 0.0
        %2921 = vmatpush2.msra.mxu0 0.0
        %2922 = vmatprep.subr.mxu0 0.0
        %2923 = vmatpush2.msra.mxu0 0.0
        %2924 = vmatprep.subr.mxu0 0.0
        %2925 = vmatpush2.msra.mxu0 0.0
        %2926 = vmatprep.subr.mxu0 0.0
        %2927 = vmatpush2.msra.mxu0 0.0
        %2928 = vmatprep.subr.mxu0 0.0
        %2929 = vmatpush2.msra.mxu0 0.0
        %2930 = vmatprep.subr.mxu0 0.0
        %2931 = vmatpush2.msra.mxu0 0.0
        %2932 = vmatprep.subr.mxu0 0.0
        %2933 = vmatpush2.msra.mxu0 0.0
        %2934 = vmatprep.subr.mxu0 0.0
        %2935 = vmatpush2.msra.mxu0 0.0
        %2936 = vmatprep.subr.mxu0 0.0
        %2937 = vmatpush2.msra.mxu0 0.0
        %2938 = vmatprep.subr.mxu0 0.0
        %2939 = vmatpush2.msra.mxu0 0.0
        %2940 = vmatprep.subr.mxu0 0.0
        %2941 = vmatpush2.msra.mxu0 0.0
        %2942 = vmatprep.subr.mxu0 0.0
        %2943 = vmatpush2.msra.mxu0 0.0
        %2944 = vmatprep.mubr.f32.mxu0 0.0
        %2945 = vmatmul.mubr.f32.gmra.mxu0 %v2878
        %v2946 = vpop.f32.mrf.mxu0
        %v2947 = vadd.f32 %v2876, %v2946
        %v2948 = vpop.f32.mrf.mxu0
        %2949 = vdwg.mxu0
        %p2950 = scmp.gt.s32.totalorder %s109, 0
        // Predicated region
        $region257: #{hvrnn_prednet_forward.1} parent=179 // pred_check
          %p2951 = pneg %p2950
        $region258: #{hvrnn_prednet_forward.1} parent=179 // pred_check_branch
          %2953 = sbr.rel (%p2951) target = $region260
        $region259: #{hvrnn_prednet_forward.1} parent=179 // pred_region
          %s2954 = scalar_lea.vmem [#allocation6], 2
          %v2955 = vld [vmem:[%s2954] sm:$0x3]
          %s2956 = scalar_lea.vmem [#allocation7], 2
          %v2957 = vld [vmem:[%s2956] sm:$0x3]
          %v2958 = vld [vmem:[%s51] sm:$0xff]
          %v2959 = vld [vmem:[%s51 + $0x8] sm:$0xff]
          %v2960 = vld [vmem:[%s51 + $0x10] sm:$0xff]
          %v2961 = vld [vmem:[%s51 + $0x18] sm:$0xff]
          %v2962 = vld [vmem:[%s51 + $0x20] sm:$0xff]
          %v2963 = vld [vmem:[%s51 + $0x28] sm:$0xff]
          %v2964 = vld [vmem:[%s51 + $0x30] sm:$0xff]
          %v2965 = vld [vmem:[%s51 + $0x38] sm:$0xff]
          %v2966 = vld [vmem:[#allocation24] sm:$0xff]
          %v2967 = vld [vmem:[#allocation24 + $0x8] sm:$0xff]
          %v2968 = vld [vmem:[#allocation24 + $0x10] sm:$0xff]
          %v2969 = vld [vmem:[#allocation24 + $0x18] sm:$0xff]
          %v2971 = vsel %vm2672, %v2955, 0
          %2973 = vmatprep.subr.mxu0 0.0
          %2974 = vmatpush1.msra.mxu0 0.0
          %2975 = vmatprep.subr.mxu0 0.0
          %2976 = vmatpush1.msra.mxu0 0.0
          %2977 = vmatprep.subr.mxu0 0.0
          %2978 = vmatpush1.msra.mxu0 0.0
          %2979 = vmatprep.subr.mxu0 0.0
          %2980 = vmatpush1.msra.mxu0 0.0
          %2981 = vmatprep.subr.mxu0 0.0
          %2982 = vmatpush1.msra.mxu0 0.0
          %2983 = vmatprep.subr.mxu0 0.0
          %2984 = vmatpush1.msra.mxu0 0.0
          %2985 = vmatprep.subr.mxu0 0.0
          %2986 = vmatpush1.msra.mxu0 0.0
          %2987 = vmatprep.subr.mxu0 0.0
          %2988 = vmatpush1.msra.mxu0 0.0
          %2989 = vmatprep.subr.mxu0 0.0
          %2990 = vmatpush1.msra.mxu0 0.0
          %2991 = vmatprep.subr.mxu0 0.0
          %2992 = vmatpush1.msra.mxu0 0.0
          %2993 = vmatprep.subr.mxu0 0.0
          %2994 = vmatpush1.msra.mxu0 0.0
          %2995 = vmatprep.subr.mxu0 0.0
          %2996 = vmatpush1.msra.mxu0 0.0
          %2997 = vmatprep.subr.mxu0 0.0
          %2998 = vmatpush1.msra.mxu0 %v2969
          %2999 = vmatprep.subr.mxu0 0.0
          %3000 = vmatpush1.msra.mxu0 %v2968
          %3001 = vmatprep.subr.mxu0 0.0
          %3002 = vmatpush1.msra.mxu0 %v2967
          %3003 = vmatprep.subr.mxu0 0.0
          %3004 = vmatpush1.msra.mxu0 %v2966
          %3005 = vmatprep.subr.mxu0 0.0
          %3006 = vmatpush2.msra.mxu0 0.0
          %3007 = vmatprep.subr.mxu0 0.0
          %3008 = vmatpush2.msra.mxu0 0.0
          %3009 = vmatprep.subr.mxu0 0.0
          %3010 = vmatpush2.msra.mxu0 0.0
          %3011 = vmatprep.subr.mxu0 0.0
          %3012 = vmatpush2.msra.mxu0 0.0
          %3013 = vmatprep.subr.mxu0 0.0
          %3014 = vmatpush2.msra.mxu0 0.0
          %3015 = vmatprep.subr.mxu0 0.0
          %3016 = vmatpush2.msra.mxu0 0.0
          %3017 = vmatprep.subr.mxu0 0.0
          %3018 = vmatpush2.msra.mxu0 0.0
          %3019 = vmatprep.subr.mxu0 0.0
          %3020 = vmatpush2.msra.mxu0 0.0
          %3021 = vmatprep.subr.mxu0 0.0
          %3022 = vmatpush2.msra.mxu0 0.0
          %3023 = vmatprep.subr.mxu0 0.0
          %3024 = vmatpush2.msra.mxu0 0.0
          %3025 = vmatprep.subr.mxu0 0.0
          %3026 = vmatpush2.msra.mxu0 0.0
          %3027 = vmatprep.subr.mxu0 0.0
          %3028 = vmatpush2.msra.mxu0 0.0
          %3029 = vmatprep.subr.mxu0 0.0
          %3030 = vmatpush2.msra.mxu0 0.0
          %3031 = vmatprep.subr.mxu0 0.0
          %3032 = vmatpush2.msra.mxu0 0.0
          %3033 = vmatprep.subr.mxu0 0.0
          %3034 = vmatpush2.msra.mxu0 0.0
          %3035 = vmatprep.subr.mxu0 0.0
          %3036 = vmatpush2.msra.mxu0 0.0
          %3037 = vmatprep.mubr.f32.mxu0 0.0
          %3038 = vmatmul.mubr.f32.gmra.mxu0 %v2971
          %v3039 = vpop.f32.mrf.mxu0
          %v3040 = vadd.f32 0.0, %v3039
          %v3041 = vpop.f32.mrf.mxu0
          %3042 = vdwg.mxu0
          %3043 = vmatprep.subr.mxu0 0.0
          %3044 = vmatpush1.msra.mxu0 0.0
          %3045 = vmatprep.subr.mxu0 0.0
          %3046 = vmatpush1.msra.mxu0 0.0
          %3047 = vmatprep.subr.mxu0 0.0
          %3048 = vmatpush1.msra.mxu0 0.0
          %3049 = vmatprep.subr.mxu0 0.0
          %3050 = vmatpush1.msra.mxu0 0.0
          %3051 = vmatprep.subr.mxu0 0.0
          %3052 = vmatpush1.msra.mxu0 0.0
          %3053 = vmatprep.subr.mxu0 0.0
          %3054 = vmatpush1.msra.mxu0 0.0
          %3055 = vmatprep.subr.mxu0 0.0
          %3056 = vmatpush1.msra.mxu0 0.0
          %3057 = vmatprep.subr.mxu0 0.0
          %3058 = vmatpush1.msra.mxu0 0.0
          %3059 = vmatprep.subr.mxu0 0.0
          %3060 = vmatpush1.msra.mxu0 %v2965
          %3061 = vmatprep.subr.mxu0 0.0
          %3062 = vmatpush1.msra.mxu0 %v2964
          %3063 = vmatprep.subr.mxu0 0.0
          %3064 = vmatpush1.msra.mxu0 %v2963
          %3065 = vmatprep.subr.mxu0 0.0
          %3066 = vmatpush1.msra.mxu0 %v2962
          %3067 = vmatprep.subr.mxu0 0.0
          %3068 = vmatpush1.msra.mxu0 %v2961
          %3069 = vmatprep.subr.mxu0 0.0
          %3070 = vmatpush1.msra.mxu0 %v2960
          %3071 = vmatprep.subr.mxu0 0.0
          %3072 = vmatpush1.msra.mxu0 %v2959
          %3073 = vmatprep.subr.mxu0 0.0
          %3074 = vmatpush1.msra.mxu0 %v2958
          %3075 = vmatprep.subr.mxu0 0.0
          %3076 = vmatpush2.msra.mxu0 0.0
          %3077 = vmatprep.subr.mxu0 0.0
          %3078 = vmatpush2.msra.mxu0 0.0
          %3079 = vmatprep.subr.mxu0 0.0
          %3080 = vmatpush2.msra.mxu0 0.0
          %3081 = vmatprep.subr.mxu0 0.0
          %3082 = vmatpush2.msra.mxu0 0.0
          %3083 = vmatprep.subr.mxu0 0.0
          %3084 = vmatpush2.msra.mxu0 0.0
          %3085 = vmatprep.subr.mxu0 0.0
          %3086 = vmatpush2.msra.mxu0 0.0
          %3087 = vmatprep.subr.mxu0 0.0
          %3088 = vmatpush2.msra.mxu0 0.0
          %3089 = vmatprep.subr.mxu0 0.0
          %3090 = vmatpush2.msra.mxu0 0.0
          %3091 = vmatprep.subr.mxu0 0.0
          %3092 = vmatpush2.msra.mxu0 0.0
          %3093 = vmatprep.subr.mxu0 0.0
          %3094 = vmatpush2.msra.mxu0 0.0
          %3095 = vmatprep.subr.mxu0 0.0
          %3096 = vmatpush2.msra.mxu0 0.0
          %3097 = vmatprep.subr.mxu0 0.0
          %3098 = vmatpush2.msra.mxu0 0.0
          %3099 = vmatprep.subr.mxu0 0.0
          %3100 = vmatpush2.msra.mxu0 0.0
          %3101 = vmatprep.subr.mxu0 0.0
          %3102 = vmatpush2.msra.mxu0 0.0
          %3103 = vmatprep.subr.mxu0 0.0
          %3104 = vmatpush2.msra.mxu0 0.0
          %3105 = vmatprep.subr.mxu0 0.0
          %3106 = vmatpush2.msra.mxu0 0.0
          %3107 = vmatprep.mubr.f32.mxu0 0.0
          %3108 = vmatmul.mubr.f32.gmra.mxu0 %v2748
          %v3109 = vpop.f32.mrf.mxu0
          %v3110 = vadd.f32 %v3040, %v3109
          %v3111 = vpop.f32.mrf.mxu0
          %3112 = vdwg.mxu0
          %v3113 = vld [vmem:[#allocation25] sm:$0x1]
          %v3115 = vlaneseq
          %v3116 = vshrl.u32 %v3115, 7
          %v3117 = vsub.s32 0, %v3116
          %v3118 = vrot.slane %v3113, %v3117
          %v3120 = vadd.f32 %v3110, %v3118
          %v3121 = vxor.u32 %v3120, 2147483648
          %v3122 = vmul.f32 %v3121, 1.442695
          %v3123 = vpow.pop %v3122
          %v3124 = vadd.f32 %v3123, 1.0
          %v3125 = vrcp.pop %v3124
          %v3126 = vmul.f32 1.0, %v3125
          %v3127 = vtanh.pop %v3120
          %3129 = vrot.lane.b32.xlu0 %v2957, 32
          %v3130 = vpop.permute.xlu0 %3129
          %v3132 = vmul.f32 %v3126, %v3130
          %3134 = vrot.lane.b32.xlu0 %v3127, 64
          %v3135 = vpop.permute.xlu0 %3134
          %v3137 = vmul.f32 %v3126, %v3135
          %3139 = vrot.lane.b32.xlu0 %v3137, 32
          %v3140 = vpop.permute.xlu0 %3139
          %v3142 = vadd.f32 %v3132, %v3140
          %v3143 = vtanh.pop %v3142
          %3145 = vrot.lane.b32.xlu0 %v3143, 64
          %v3146 = vpop.permute.xlu0 %3145
          %v3148 = vmul.f32 %v3126, %v3146
          %3150 = vrot.lane.b32.xlu0 %v3148, 32
          %v3151 = vpop.permute.xlu0 %3150
          %3153 = vst.msk [vmem:[%s2954] sm:$0x3] %vm2860, %v3151
          %3155 = vrot.lane.b32.xlu0 %v3142, 96
          %v3156 = vpop.permute.xlu0 %3155
          %3158 = vst.msk [vmem:[%s2956] sm:$0x3] %vm2860, %v3156
          %v3159 = vld [vmem:[%s57] sm:$0xff]
          %v3160 = vld [vmem:[%s57 + $0x8] sm:$0xff]
          %v3161 = vld [vmem:[%s57 + $0x10] sm:$0xff]
          %v3162 = vld [vmem:[%s57 + $0x18] sm:$0xff]
          %v3163 = vld [vmem:[#allocation27] sm:$0x1]
          %v3165 = vlaneseq
          %v3166 = vshrl.u32 %v3165, 7
          %v3167 = vsub.s32 0, %v3166
          %v3168 = vrot.slane %v3163, %v3167
          %v3170 = vsel %vm2672, %v3151, 0
          %3172 = vmatprep.subr.mxu0 0.0
          %3173 = vmatpush1.msra.mxu0 0.0
          %3174 = vmatprep.subr.mxu0 0.0
          %3175 = vmatpush1.msra.mxu0 0.0
          %3176 = vmatprep.subr.mxu0 0.0
          %3177 = vmatpush1.msra.mxu0 0.0
          %3178 = vmatprep.subr.mxu0 0.0
          %3179 = vmatpush1.msra.mxu0 0.0
          %3180 = vmatprep.subr.mxu0 0.0
          %3181 = vmatpush1.msra.mxu0 0.0
          %3182 = vmatprep.subr.mxu0 0.0
          %3183 = vmatpush1.msra.mxu0 0.0
          %3184 = vmatprep.subr.mxu0 0.0
          %3185 = vmatpush1.msra.mxu0 0.0
          %3186 = vmatprep.subr.mxu0 0.0
          %3187 = vmatpush1.msra.mxu0 0.0
          %3188 = vmatprep.subr.mxu0 0.0
          %3189 = vmatpush1.msra.mxu0 0.0
          %3190 = vmatprep.subr.mxu0 0.0
          %3191 = vmatpush1.msra.mxu0 0.0
          %3192 = vmatprep.subr.mxu0 0.0
          %3193 = vmatpush1.msra.mxu0 0.0
          %3194 = vmatprep.subr.mxu0 0.0
          %3195 = vmatpush1.msra.mxu0 0.0
          %3196 = vmatprep.subr.mxu0 0.0
          %3197 = vmatpush1.msra.mxu0 %v3162
          %3198 = vmatprep.subr.mxu0 0.0
          %3199 = vmatpush1.msra.mxu0 %v3161
          %3200 = vmatprep.subr.mxu0 0.0
          %3201 = vmatpush1.msra.mxu0 %v3160
          %3202 = vmatprep.subr.mxu0 0.0
          %3203 = vmatpush1.msra.mxu0 %v3159
          %3204 = vmatprep.subr.mxu0 0.0
          %3205 = vmatpush2.msra.mxu0 0.0
          %3206 = vmatprep.subr.mxu0 0.0
          %3207 = vmatpush2.msra.mxu0 0.0
          %3208 = vmatprep.subr.mxu0 0.0
          %3209 = vmatpush2.msra.mxu0 0.0
          %3210 = vmatprep.subr.mxu0 0.0
          %3211 = vmatpush2.msra.mxu0 0.0
          %3212 = vmatprep.subr.mxu0 0.0
          %3213 = vmatpush2.msra.mxu0 0.0
          %3214 = vmatprep.subr.mxu0 0.0
          %3215 = vmatpush2.msra.mxu0 0.0
          %3216 = vmatprep.subr.mxu0 0.0
          %3217 = vmatpush2.msra.mxu0 0.0
          %3218 = vmatprep.subr.mxu0 0.0
          %3219 = vmatpush2.msra.mxu0 0.0
          %3220 = vmatprep.subr.mxu0 0.0
          %3221 = vmatpush2.msra.mxu0 0.0
          %3222 = vmatprep.subr.mxu0 0.0
          %3223 = vmatpush2.msra.mxu0 0.0
          %3224 = vmatprep.subr.mxu0 0.0
          %3225 = vmatpush2.msra.mxu0 0.0
          %3226 = vmatprep.subr.mxu0 0.0
          %3227 = vmatpush2.msra.mxu0 0.0
          %3228 = vmatprep.subr.mxu0 0.0
          %3229 = vmatpush2.msra.mxu0 0.0
          %3230 = vmatprep.subr.mxu0 0.0
          %3231 = vmatpush2.msra.mxu0 0.0
          %3232 = vmatprep.subr.mxu0 0.0
          %3233 = vmatpush2.msra.mxu0 0.0
          %3234 = vmatprep.subr.mxu0 0.0
          %3235 = vmatpush2.msra.mxu0 0.0
          %3236 = vmatprep.mubr.f32.mxu0 0.0
          %3237 = vmatmul.mubr.f32.gmra.mxu0 %v3170
          %v3238 = vpop.f32.mrf.mxu0
          %v3239 = vadd.f32 %v3168, %v3238
          %v3240 = vpop.f32.mrf.mxu0
          %3241 = vdwg.mxu0
          %vm3242 = vcmask 123904
          %3243 = vst.msk [vmem:[#allocation40] sm:$0x3] %vm3242, %v3239
        $region260: #{hvrnn_prednet_forward.1} parent=179 // pred_fallthru
          _
        %s3244 = scalar_lea.vmem [#allocation8], 2
        %v3245 = vld [vmem:[%s3244] sm:$0x3]
        %s3246 = scalar_lea.vmem [#allocation9], 2
        %v3247 = vld [vmem:[%s3246] sm:$0x3]
        %v3248 = vld [vmem:[#allocation33] sm:$0xff]
        %v3249 = vld [vmem:[#allocation34] sm:$0xff]
        %v3250 = vld [vmem:[#allocation34 + $0x8] sm:$0xff]
        %v3251 = vld [vmem:[#allocation34 + $0x10] sm:$0xff]
        %v3252 = vld [vmem:[#allocation34 + $0x18] sm:$0xff]
        %v3254 = vsel %vm2672, %v3245, 0
        %3256 = vmatprep.subr.mxu0 0.0
        %3257 = vmatpush1.msra.mxu0 0.0
        %3258 = vmatprep.subr.mxu0 0.0
        %3259 = vmatpush1.msra.mxu0 0.0
        %3260 = vmatprep.subr.mxu0 0.0
        %3261 = vmatpush1.msra.mxu0 0.0
        %3262 = vmatprep.subr.mxu0 0.0
        %3263 = vmatpush1.msra.mxu0 0.0
        %3264 = vmatprep.subr.mxu0 0.0
        %3265 = vmatpush1.msra.mxu0 0.0
        %3266 = vmatprep.subr.mxu0 0.0
        %3267 = vmatpush1.msra.mxu0 0.0
        %3268 = vmatprep.subr.mxu0 0.0
        %3269 = vmatpush1.msra.mxu0 0.0
        %3270 = vmatprep.subr.mxu0 0.0
        %3271 = vmatpush1.msra.mxu0 0.0
        %3272 = vmatprep.subr.mxu0 0.0
        %3273 = vmatpush1.msra.mxu0 0.0
        %3274 = vmatprep.subr.mxu0 0.0
        %3275 = vmatpush1.msra.mxu0 0.0
        %3276 = vmatprep.subr.mxu0 0.0
        %3277 = vmatpush1.msra.mxu0 0.0
        %3278 = vmatprep.subr.mxu0 0.0
        %3279 = vmatpush1.msra.mxu0 0.0
        %3280 = vmatprep.subr.mxu0 0.0
        %3281 = vmatpush1.msra.mxu0 %v3252
        %3282 = vmatprep.subr.mxu0 0.0
        %3283 = vmatpush1.msra.mxu0 %v3251
        %3284 = vmatprep.subr.mxu0 0.0
        %3285 = vmatpush1.msra.mxu0 %v3250
        %3286 = vmatprep.subr.mxu0 0.0
        %3287 = vmatpush1.msra.mxu0 %v3249
        %3288 = vmatprep.subr.mxu0 0.0
        %3289 = vmatpush2.msra.mxu0 0.0
        %3290 = vmatprep.subr.mxu0 0.0
        %3291 = vmatpush2.msra.mxu0 0.0
        %3292 = vmatprep.subr.mxu0 0.0
        %3293 = vmatpush2.msra.mxu0 0.0
        %3294 = vmatprep.subr.mxu0 0.0
        %3295 = vmatpush2.msra.mxu0 0.0
        %3296 = vmatprep.subr.mxu0 0.0
        %3297 = vmatpush2.msra.mxu0 0.0
        %3298 = vmatprep.subr.mxu0 0.0
        %3299 = vmatpush2.msra.mxu0 0.0
        %3300 = vmatprep.subr.mxu0 0.0
        %3301 = vmatpush2.msra.mxu0 0.0
        %3302 = vmatprep.subr.mxu0 0.0
        %3303 = vmatpush2.msra.mxu0 0.0
        %3304 = vmatprep.subr.mxu0 0.0
        %3305 = vmatpush2.msra.mxu0 0.0
        %3306 = vmatprep.subr.mxu0 0.0
        %3307 = vmatpush2.msra.mxu0 0.0
        %3308 = vmatprep.subr.mxu0 0.0
        %3309 = vmatpush2.msra.mxu0 0.0
        %3310 = vmatprep.subr.mxu0 0.0
        %3311 = vmatpush2.msra.mxu0 0.0
        %3312 = vmatprep.subr.mxu0 0.0
        %3313 = vmatpush2.msra.mxu0 0.0
        %3314 = vmatprep.subr.mxu0 0.0
        %3315 = vmatpush2.msra.mxu0 0.0
        %3316 = vmatprep.subr.mxu0 0.0
        %3317 = vmatpush2.msra.mxu0 0.0
        %3318 = vmatprep.subr.mxu0 0.0
        %3319 = vmatpush2.msra.mxu0 0.0
        %3320 = vmatprep.mubr.f32.mxu0 0.0
        %3321 = vmatmul.mubr.f32.gmra.mxu0 %v3254
        %v3322 = vpop.f32.mrf.mxu0
        %v3323 = vadd.f32 0.0, %v3322
        %v3324 = vpop.f32.mrf.mxu0
        %3325 = vdwg.mxu0
        %vm3326 = vcmask 64512
        %v3328 = vsel %vm3326, %v2947, 0
        %3330 = vmatprep.subr.mxu0 0.0
        %3331 = vmatpush1.msra.mxu0 0.0
        %3332 = vmatprep.subr.mxu0 0.0
        %3333 = vmatpush1.msra.mxu0 0.0
        %3334 = vmatprep.subr.mxu0 0.0
        %3335 = vmatpush1.msra.mxu0 0.0
        %3336 = vmatprep.subr.mxu0 0.0
        %3337 = vmatpush1.msra.mxu0 0.0
        %3338 = vmatprep.subr.mxu0 0.0
        %3339 = vmatpush1.msra.mxu0 0.0
        %3340 = vmatprep.subr.mxu0 0.0
        %3341 = vmatpush1.msra.mxu0 0.0
        %3342 = vmatprep.subr.mxu0 0.0
        %3343 = vmatpush1.msra.mxu0 0.0
        %3344 = vmatprep.subr.mxu0 0.0
        %3345 = vmatpush1.msra.mxu0 0.0
        %3346 = vmatprep.subr.mxu0 0.0
        %3347 = vmatpush1.msra.mxu0 0.0
        %3348 = vmatprep.subr.mxu0 0.0
        %3349 = vmatpush1.msra.mxu0 0.0
        %3350 = vmatprep.subr.mxu0 0.0
        %3351 = vmatpush1.msra.mxu0 0.0
        %3352 = vmatprep.subr.mxu0 0.0
        %3353 = vmatpush1.msra.mxu0 0.0
        %3354 = vmatprep.subr.mxu0 0.0
        %3355 = vmatpush1.msra.mxu0 0.0
        %3356 = vmatprep.subr.mxu0 0.0
        %3357 = vmatpush1.msra.mxu0 0.0
        %3358 = vmatprep.subr.mxu0 0.0
        %3359 = vmatpush1.msra.mxu0 0.0
        %3360 = vmatprep.subr.mxu0 0.0
        %3361 = vmatpush1.msra.mxu0 %v3248
        %3362 = vmatprep.subr.mxu0 0.0
        %3363 = vmatpush2.msra.mxu0 0.0
        %3364 = vmatprep.subr.mxu0 0.0
        %3365 = vmatpush2.msra.mxu0 0.0
        %3366 = vmatprep.subr.mxu0 0.0
        %3367 = vmatpush2.msra.mxu0 0.0
        %3368 = vmatprep.subr.mxu0 0.0
        %3369 = vmatpush2.msra.mxu0 0.0
        %3370 = vmatprep.subr.mxu0 0.0
        %3371 = vmatpush2.msra.mxu0 0.0
        %3372 = vmatprep.subr.mxu0 0.0
        %3373 = vmatpush2.msra.mxu0 0.0
        %3374 = vmatprep.subr.mxu0 0.0
        %3375 = vmatpush2.msra.mxu0 0.0
        %3376 = vmatprep.subr.mxu0 0.0
        %3377 = vmatpush2.msra.mxu0 0.0
        %3378 = vmatprep.subr.mxu0 0.0
        %3379 = vmatpush2.msra.mxu0 0.0
        %3380 = vmatprep.subr.mxu0 0.0
        %3381 = vmatpush2.msra.mxu0 0.0
        %3382 = vmatprep.subr.mxu0 0.0
        %3383 = vmatpush2.msra.mxu0 0.0
        %3384 = vmatprep.subr.mxu0 0.0
        %3385 = vmatpush2.msra.mxu0 0.0
        %3386 = vmatprep.subr.mxu0 0.0
        %3387 = vmatpush2.msra.mxu0 0.0
        %3388 = vmatprep.subr.mxu0 0.0
        %3389 = vmatpush2.msra.mxu0 0.0
        %3390 = vmatprep.subr.mxu0 0.0
        %3391 = vmatpush2.msra.mxu0 0.0
        %3392 = vmatprep.subr.mxu0 0.0
        %3393 = vmatpush2.msra.mxu0 0.0
        %3394 = vmatprep.mubr.f32.mxu0 0.0
        %3395 = vmatmul.mubr.f32.gmra.mxu0 %v3328
        %v3396 = vpop.f32.mrf.mxu0
        %v3397 = vadd.f32 %v3323, %v3396
        %v3398 = vpop.f32.mrf.mxu0
        %3399 = vdwg.mxu0
        %v3400 = vld [vmem:[#allocation36] sm:$0x1]
        %v3402 = vlaneseq
        %v3403 = vshrl.u32 %v3402, 7
        %v3404 = vsub.s32 0, %v3403
        %v3405 = vrot.slane %v3400, %v3404
        %v3407 = vadd.f32 %v3397, %v3405
        %v3408 = vxor.u32 %v3407, 2147483648
        %v3409 = vmul.f32 %v3408, 1.442695
        %v3410 = vpow.pop %v3409
        %v3411 = vadd.f32 %v3410, 1.0
        %v3412 = vrcp.pop %v3411
        %v3413 = vmul.f32 1.0, %v3412
        %v3414 = vtanh.pop %v3407
        %3416 = vrot.lane.b32.xlu0 %v3247, 32
        %v3417 = vpop.permute.xlu0 %3416
        %v3419 = vmul.f32 %v3413, %v3417
        %3421 = vrot.lane.b32.xlu0 %v3414, 64
        %v3422 = vpop.permute.xlu0 %3421
        %v3424 = vmul.f32 %v3413, %v3422
        %3426 = vrot.lane.b32.xlu0 %v3424, 32
        %v3427 = vpop.permute.xlu0 %3426
        %v3429 = vadd.f32 %v3419, %v3427
        %v3430 = vtanh.pop %v3429
        %3432 = vrot.lane.b32.xlu0 %v3430, 64
        %v3433 = vpop.permute.xlu0 %3432
        %v3435 = vmul.f32 %v3413, %v3433
        %3437 = vrot.lane.b32.xlu0 %v3435, 32
        %v3438 = vpop.permute.xlu0 %3437
        %3440 = vst.msk [vmem:[%s3244] sm:$0x3] %vm2860, %v3438
        %3442 = vrot.lane.b32.xlu0 %v3429, 96
        %v3443 = vpop.permute.xlu0 %3442
        %3445 = vst.msk [vmem:[%s3246] sm:$0x3] %vm2860, %v3443
        %v3446 = vld [vmem:[%s77] sm:$0xff]
        %v3447 = vld [vmem:[%s77 + $0x8] sm:$0xff]
        %v3448 = vld [vmem:[%s77 + $0x10] sm:$0xff]
        %v3449 = vld [vmem:[%s77 + $0x18] sm:$0xff]
        %v3450 = vld [vmem:[%s77 + $0x20] sm:$0xff]
        %v3451 = vld [vmem:[%s77 + $0x28] sm:$0xff]
        %v3452 = vld [vmem:[%s77 + $0x30] sm:$0xff]
        %v3453 = vld [vmem:[%s77 + $0x38] sm:$0xff]
        %v3454 = vld [vmem:[#allocation37] sm:$0x3]
        %v3456 = vlaneseq
        %v3457 = vshrl.u32 %v3456, 7
        %v3458 = vsub.s32 0, %v3457
        %v3459 = vrot.slane %v3454, %v3458
        %v3460 = vlaneseq
        %v3461 = vshrl.u32 %v3460, 7
        %v3462 = vsub.s32 1, %v3461
        %v3463 = vrot.slane %v3454, %v3462
        %v3466 = vsel %vm2672, %v3438, 0
        %3468 = vmatprep.subr.mxu0 0.0
        %3469 = vmatpush1.msra.mxu0 0.0
        %3470 = vmatprep.subr.mxu0 0.0
        %3471 = vmatpush1.msra.mxu0 0.0
        %3472 = vmatprep.subr.mxu0 0.0
        %3473 = vmatpush1.msra.mxu0 0.0
        %3474 = vmatprep.subr.mxu0 0.0
        %3475 = vmatpush1.msra.mxu0 0.0
        %3476 = vmatprep.subr.mxu0 0.0
        %3477 = vmatpush1.msra.mxu0 0.0
        %3478 = vmatprep.subr.mxu0 0.0
        %3479 = vmatpush1.msra.mxu0 0.0
        %3480 = vmatprep.subr.mxu0 0.0
        %3481 = vmatpush1.msra.mxu0 0.0
        %3482 = vmatprep.subr.mxu0 0.0
        %3483 = vmatpush1.msra.mxu0 0.0
        %3484 = vmatprep.subr.mxu0 0.0
        %3485 = vmatpush1.msra.mxu0 0.0
        %3486 = vmatprep.subr.mxu0 0.0
        %3487 = vmatpush1.msra.mxu0 0.0
        %3488 = vmatprep.subr.mxu0 0.0
        %3489 = vmatpush1.msra.mxu0 0.0
        %3490 = vmatprep.subr.mxu0 0.0
        %3491 = vmatpush1.msra.mxu0 0.0
        %3492 = vmatprep.subr.mxu0 %v3453
        %3493 = vmatpush1.msra.mxu0 %v3452
        %3494 = vmatprep.subr.mxu0 %v3451
        %3495 = vmatpush1.msra.mxu0 %v3450
        %3496 = vmatprep.subr.mxu0 %v3449
        %3497 = vmatpush1.msra.mxu0 %v3448
        %3498 = vmatprep.subr.mxu0 %v3447
        %3499 = vmatpush1.msra.mxu0 %v3446
        %3500 = vmatprep.subr.mxu0 0.0
        %3501 = vmatpush2.msra.mxu0 0.0
        %3502 = vmatprep.subr.mxu0 0.0
        %3503 = vmatpush2.msra.mxu0 0.0
        %3504 = vmatprep.subr.mxu0 0.0
        %3505 = vmatpush2.msra.mxu0 0.0
        %3506 = vmatprep.subr.mxu0 0.0
        %3507 = vmatpush2.msra.mxu0 0.0
        %3508 = vmatprep.subr.mxu0 0.0
        %3509 = vmatpush2.msra.mxu0 0.0
        %3510 = vmatprep.subr.mxu0 0.0
        %3511 = vmatpush2.msra.mxu0 0.0
        %3512 = vmatprep.subr.mxu0 0.0
        %3513 = vmatpush2.msra.mxu0 0.0
        %3514 = vmatprep.subr.mxu0 0.0
        %3515 = vmatpush2.msra.mxu0 0.0
        %3516 = vmatprep.subr.mxu0 0.0
        %3517 = vmatpush2.msra.mxu0 0.0
        %3518 = vmatprep.subr.mxu0 0.0
        %3519 = vmatpush2.msra.mxu0 0.0
        %3520 = vmatprep.subr.mxu0 0.0
        %3521 = vmatpush2.msra.mxu0 0.0
        %3522 = vmatprep.subr.mxu0 0.0
        %3523 = vmatpush2.msra.mxu0 0.0
        %3524 = vmatprep.subr.mxu0 0.0
        %3525 = vmatpush2.msra.mxu0 0.0
        %3526 = vmatprep.subr.mxu0 0.0
        %3527 = vmatpush2.msra.mxu0 0.0
        %3528 = vmatprep.subr.mxu0 0.0
        %3529 = vmatpush2.msra.mxu0 0.0
        %3530 = vmatprep.subr.mxu0 0.0
        %3531 = vmatpush2.msra.mxu0 0.0
        %3532 = vmatprep.mubr.f32.mxu0 0.0
        %3533 = vmatmul.mubr.f32.gmra.mxu0 %v3466
        %v3534 = vpop.f32.mrf.mxu0
        %v3535 = vadd.f32 %v3459, %v3534
        %v3536 = vpop.f32.mrf.mxu0
        %v3537 = vadd.f32 %v3463, %v3536
        %3538 = vdwg.mxu0
        %v3539 = vmax.f32 %v3535, 0.0
        %v3540 = vmax.f32 %v3537, 0.0
        %v3541 = vld [vmem:[#allocation4] sm:$0x3]
        %v3542 = vld [vmem:[#allocation5] sm:$0x3]
        %v3543 = vld [vmem:[%s21] sm:$0xff]
        %v3544 = vld [vmem:[%s21 + $0x8] sm:$0xff]
        %v3545 = vld [vmem:[%s21 + $0x10] sm:$0xff]
        %v3546 = vld [vmem:[%s21 + $0x18] sm:$0xff]
        %v3547 = vld [vmem:[%s21 + $0x20] sm:$0xff]
        %v3548 = vld [vmem:[%s21 + $0x28] sm:$0xff]
        %v3549 = vld [vmem:[%s21 + $0x30] sm:$0xff]
        %v3550 = vld [vmem:[%s21 + $0x38] sm:$0xff]
        %v3551 = vld [vmem:[%s21 + $0x40] sm:$0xff]
        %v3552 = vld [vmem:[%s21 + $0x48] sm:$0xff]
        %v3553 = vld [vmem:[%s21 + $0x50] sm:$0xff]
        %v3554 = vld [vmem:[%s21 + $0x58] sm:$0xff]
        %v3555 = vld [vmem:[%s21 + $0x60] sm:$0xff]
        %v3556 = vld [vmem:[%s21 + $0x68] sm:$0xff]
        %v3557 = vld [vmem:[%s21 + $0x70] sm:$0xff]
        %v3558 = vld [vmem:[%s21 + $0x78] sm:$0xff]
        %v3559 = vld [vmem:[%s21 + $0x80] sm:$0xff]
        %v3560 = vld [vmem:[%s21 + $0x88] sm:$0xff]
        %v3561 = vld [vmem:[%s21 + $0x90] sm:$0xff]
        %v3562 = vld [vmem:[%s21 + $0x98] sm:$0xff]
        %v3563 = vld [vmem:[%s21 + $0xa0] sm:$0xff]
        %v3564 = vld [vmem:[%s21 + $0xa8] sm:$0xff]
        %v3565 = vld [vmem:[%s21 + $0xb0] sm:$0xff]
        %v3566 = vld [vmem:[%s21 + $0xb8] sm:$0xff]
        %v3567 = vld [vmem:[%s21 + $0xc0] sm:$0xff]
        %v3568 = vld [vmem:[%s21 + $0xc8] sm:$0xff]
        %v3569 = vld [vmem:[%s21 + $0xd0] sm:$0xff]
        %v3570 = vld [vmem:[%s21 + $0xd8] sm:$0xff]
        %v3571 = vld [vmem:[%s21 + $0xe0] sm:$0xff]
        %v3572 = vld [vmem:[%s21 + $0xe8] sm:$0xff]
        %v3573 = vld [vmem:[%s21 + $0xf0] sm:$0xff]
        %v3574 = vld [vmem:[%s21 + $0xf8] sm:$0xff]
        %v3575 = vld [vmem:[%s23] sm:$0xff]
        %v3576 = vld [vmem:[%s23 + $0x8] sm:$0xff]
        %v3577 = vld [vmem:[%s23 + $0x10] sm:$0xff]
        %v3578 = vld [vmem:[%s23 + $0x18] sm:$0xff]
        %v3580 = vsel %vm2672, %v3541, 0
        %3582 = vmatprep.subr.mxu0 0.0
        %3583 = vmatpush1.msra.mxu0 0.0
        %3584 = vmatprep.subr.mxu0 0.0
        %3585 = vmatpush1.msra.mxu0 0.0
        %3586 = vmatprep.subr.mxu0 0.0
        %3587 = vmatpush1.msra.mxu0 0.0
        %3588 = vmatprep.subr.mxu0 0.0
        %3589 = vmatpush1.msra.mxu0 0.0
        %3590 = vmatprep.subr.mxu0 0.0
        %3591 = vmatpush1.msra.mxu0 0.0
        %3592 = vmatprep.subr.mxu0 0.0
        %3593 = vmatpush1.msra.mxu0 0.0
        %3594 = vmatprep.subr.mxu0 0.0
        %3595 = vmatpush1.msra.mxu0 0.0
        %3596 = vmatprep.subr.mxu0 0.0
        %3597 = vmatpush1.msra.mxu0 0.0
        %3598 = vmatprep.subr.mxu0 0.0
        %3599 = vmatpush1.msra.mxu0 0.0
        %3600 = vmatprep.subr.mxu0 0.0
        %3601 = vmatpush1.msra.mxu0 0.0
        %3602 = vmatprep.subr.mxu0 0.0
        %3603 = vmatpush1.msra.mxu0 0.0
        %3604 = vmatprep.subr.mxu0 0.0
        %3605 = vmatpush1.msra.mxu0 0.0
        %3606 = vmatprep.subr.mxu0 0.0
        %3607 = vmatpush1.msra.mxu0 %v3578
        %3608 = vmatprep.subr.mxu0 0.0
        %3609 = vmatpush1.msra.mxu0 %v3577
        %3610 = vmatprep.subr.mxu0 0.0
        %3611 = vmatpush1.msra.mxu0 %v3576
        %3612 = vmatprep.subr.mxu0 0.0
        %3613 = vmatpush1.msra.mxu0 %v3575
        %3614 = vmatprep.subr.mxu0 0.0
        %3615 = vmatpush2.msra.mxu0 0.0
        %3616 = vmatprep.subr.mxu0 0.0
        %3617 = vmatpush2.msra.mxu0 0.0
        %3618 = vmatprep.subr.mxu0 0.0
        %3619 = vmatpush2.msra.mxu0 0.0
        %3620 = vmatprep.subr.mxu0 0.0
        %3621 = vmatpush2.msra.mxu0 0.0
        %3622 = vmatprep.subr.mxu0 0.0
        %3623 = vmatpush2.msra.mxu0 0.0
        %3624 = vmatprep.subr.mxu0 0.0
        %3625 = vmatpush2.msra.mxu0 0.0
        %3626 = vmatprep.subr.mxu0 0.0
        %3627 = vmatpush2.msra.mxu0 0.0
        %3628 = vmatprep.subr.mxu0 0.0
        %3629 = vmatpush2.msra.mxu0 0.0
        %3630 = vmatprep.subr.mxu0 0.0
        %3631 = vmatpush2.msra.mxu0 0.0
        %3632 = vmatprep.subr.mxu0 0.0
        %3633 = vmatpush2.msra.mxu0 0.0
        %3634 = vmatprep.subr.mxu0 0.0
        %3635 = vmatpush2.msra.mxu0 0.0
        %3636 = vmatprep.subr.mxu0 0.0
        %3637 = vmatpush2.msra.mxu0 0.0
        %3638 = vmatprep.subr.mxu0 0.0
        %3639 = vmatpush2.msra.mxu0 0.0
        %3640 = vmatprep.subr.mxu0 0.0
        %3641 = vmatpush2.msra.mxu0 0.0
        %3642 = vmatprep.subr.mxu0 0.0
        %3643 = vmatpush2.msra.mxu0 0.0
        %3644 = vmatprep.subr.mxu0 0.0
        %3645 = vmatpush2.msra.mxu0 0.0
        %3646 = vmatprep.mubr.f32.mxu0 0.0
        %3647 = vmatmul.mubr.f32.gmra.mxu0 %v3580
        %v3648 = vpop.f32.mrf.mxu0
        %v3649 = vadd.f32 0.0, %v3648
        %v3650 = vpop.f32.mrf.mxu0
        %3651 = vdwg.mxu0
        %v3654 = vunpack.c.l.s4 1983009808
        %v3655 = vunpack.c.0.s8 %v3654
        %v3656 = vlaneseq
        %v3657 = vshrl.u32 %v3656, 7
        %v3658 = vsub.s32 %v3655, %v3657
        %v3659 = vrot.slane %v2654, %v3658
        %v3660 = vcombine.high %v3659, %v3659
        %3663 = vmatprep.subr.mxu0 0.0
        %3664 = vmatpush1.msra.mxu0 %v3558
        %3665 = vmatprep.subr.mxu0 0.0
        %3666 = vmatpush1.msra.mxu0 %v3557
        %3667 = vmatprep.subr.mxu0 0.0
        %3668 = vmatpush1.msra.mxu0 %v3556
        %3669 = vmatprep.subr.mxu0 0.0
        %3670 = vmatpush1.msra.mxu0 %v3555
        %3671 = vmatprep.subr.mxu0 0.0
        %3672 = vmatpush1.msra.mxu0 %v3554
        %3673 = vmatprep.subr.mxu0 0.0
        %3674 = vmatpush1.msra.mxu0 %v3553
        %3675 = vmatprep.subr.mxu0 0.0
        %3676 = vmatpush1.msra.mxu0 %v3552
        %3677 = vmatprep.subr.mxu0 0.0
        %3678 = vmatpush1.msra.mxu0 %v3551
        %3679 = vmatprep.subr.mxu0 0.0
        %3680 = vmatpush1.msra.mxu0 %v3550
        %3681 = vmatprep.subr.mxu0 0.0
        %3682 = vmatpush1.msra.mxu0 %v3549
        %3683 = vmatprep.subr.mxu0 0.0
        %3684 = vmatpush1.msra.mxu0 %v3548
        %3685 = vmatprep.subr.mxu0 0.0
        %3686 = vmatpush1.msra.mxu0 %v3547
        %3687 = vmatprep.subr.mxu0 0.0
        %3688 = vmatpush1.msra.mxu0 %v3546
        %3689 = vmatprep.subr.mxu0 0.0
        %3690 = vmatpush1.msra.mxu0 %v3545
        %3691 = vmatprep.subr.mxu0 0.0
        %3692 = vmatpush1.msra.mxu0 %v3544
        %3693 = vmatprep.subr.mxu0 0.0
        %3694 = vmatpush1.msra.mxu0 %v3543
        %3695 = vmatprep.subr.mxu0 0.0
        %3696 = vmatpush2.msra.mxu0 %v3574
        %3697 = vmatprep.subr.mxu0 0.0
        %3698 = vmatpush2.msra.mxu0 %v3573
        %3699 = vmatprep.subr.mxu0 0.0
        %3700 = vmatpush2.msra.mxu0 %v3572
        %3701 = vmatprep.subr.mxu0 0.0
        %3702 = vmatpush2.msra.mxu0 %v3571
        %3703 = vmatprep.subr.mxu0 0.0
        %3704 = vmatpush2.msra.mxu0 %v3570
        %3705 = vmatprep.subr.mxu0 0.0
        %3706 = vmatpush2.msra.mxu0 %v3569
        %3707 = vmatprep.subr.mxu0 0.0
        %3708 = vmatpush2.msra.mxu0 %v3568
        %3709 = vmatprep.subr.mxu0 0.0
        %3710 = vmatpush2.msra.mxu0 %v3567
        %3711 = vmatprep.subr.mxu0 0.0
        %3712 = vmatpush2.msra.mxu0 %v3566
        %3713 = vmatprep.subr.mxu0 0.0
        %3714 = vmatpush2.msra.mxu0 %v3565
        %3715 = vmatprep.subr.mxu0 0.0
        %3716 = vmatpush2.msra.mxu0 %v3564
        %3717 = vmatprep.subr.mxu0 0.0
        %3718 = vmatpush2.msra.mxu0 %v3563
        %3719 = vmatprep.subr.mxu0 0.0
        %3720 = vmatpush2.msra.mxu0 %v3562
        %3721 = vmatprep.subr.mxu0 0.0
        %3722 = vmatpush2.msra.mxu0 %v3561
        %3723 = vmatprep.subr.mxu0 0.0
        %3724 = vmatpush2.msra.mxu0 %v3560
        %3725 = vmatprep.subr.mxu0 0.0
        %3726 = vmatpush2.msra.mxu0 %v3559
        %3727 = vmatprep.mubr.f32.mxu0 %v3660
        %3728 = vmatmul.mubr.f32.gmra.mxu0 %v3659
        %v3729 = vpop.f32.mrf.mxu0
        %v3730 = vadd.f32 %v3649, %v3729
        %v3731 = vpop.f32.mrf.mxu0
        %3732 = vdwg.mxu0
        %v3733 = vld [vmem:[#allocation13] sm:$0x1]
        %v3735 = vlaneseq
        %v3736 = vshrl.u32 %v3735, 7
        %v3737 = vsub.s32 0, %v3736
        %v3738 = vrot.slane %v3733, %v3737
        %v3740 = vadd.f32 %v3730, %v3738
        %v3741 = vxor.u32 %v3740, 2147483648
        %v3742 = vmul.f32 %v3741, 1.442695
        %v3743 = vpow.pop %v3742
        %v3744 = vadd.f32 %v3743, 1.0
        %v3745 = vrcp.pop %v3744
        %v3746 = vmul.f32 1.0, %v3745
        %v3747 = vtanh.pop %v3740
        %3749 = vrot.lane.b32.xlu0 %v3542, 32
        %v3750 = vpop.permute.xlu0 %3749
        %v3752 = vmul.f32 %v3746, %v3750
        %3754 = vrot.lane.b32.xlu0 %v3747, 64
        %v3755 = vpop.permute.xlu0 %3754
        %v3757 = vmul.f32 %v3746, %v3755
        %3759 = vrot.lane.b32.xlu0 %v3757, 32
        %v3760 = vpop.permute.xlu0 %3759
        %v3762 = vadd.f32 %v3752, %v3760
        %v3763 = vtanh.pop %v3762
        %3765 = vrot.lane.b32.xlu0 %v3763, 64
        %v3766 = vpop.permute.xlu0 %3765
        %v3768 = vmul.f32 %v3746, %v3766
        %3770 = vrot.lane.b32.xlu0 %v3768, 32
        %v3771 = vpop.permute.xlu0 %3770
        %3773 = vst.msk [vmem:[#allocation4] sm:$0x3] %vm2860, %v3771
        %3775 = vrot.lane.b32.xlu0 %v3762, 96
        %v3776 = vpop.permute.xlu0 %3775
        %3778 = vst.msk [vmem:[#allocation5] sm:$0x3] %vm2860, %v3776
        %v3779 = vld [vmem:[%s27] sm:$0xff]
        %v3780 = vld [vmem:[%s27 + $0x8] sm:$0xff]
        %v3781 = vld [vmem:[%s27 + $0x10] sm:$0xff]
        %v3782 = vld [vmem:[%s27 + $0x18] sm:$0xff]
        %v3783 = vld [vmem:[#allocation15] sm:$0x1]
        %v3785 = vlaneseq
        %v3786 = vshrl.u32 %v3785, 7
        %v3787 = vsub.s32 0, %v3786
        %v3788 = vrot.slane %v3783, %v3787
        %v3790 = vsel %vm2672, %v3771, 0
        %3792 = vmatprep.subr.mxu0 0.0
        %3793 = vmatpush1.msra.mxu0 0.0
        %3794 = vmatprep.subr.mxu0 0.0
        %3795 = vmatpush1.msra.mxu0 0.0
        %3796 = vmatprep.subr.mxu0 0.0
        %3797 = vmatpush1.msra.mxu0 0.0
        %3798 = vmatprep.subr.mxu0 0.0
        %3799 = vmatpush1.msra.mxu0 0.0
        %3800 = vmatprep.subr.mxu0 0.0
        %3801 = vmatpush1.msra.mxu0 0.0
        %3802 = vmatprep.subr.mxu0 0.0
        %3803 = vmatpush1.msra.mxu0 0.0
        %3804 = vmatprep.subr.mxu0 0.0
        %3805 = vmatpush1.msra.mxu0 0.0
        %3806 = vmatprep.subr.mxu0 0.0
        %3807 = vmatpush1.msra.mxu0 0.0
        %3808 = vmatprep.subr.mxu0 0.0
        %3809 = vmatpush1.msra.mxu0 0.0
        %3810 = vmatprep.subr.mxu0 0.0
        %3811 = vmatpush1.msra.mxu0 0.0
        %3812 = vmatprep.subr.mxu0 0.0
        %3813 = vmatpush1.msra.mxu0 0.0
        %3814 = vmatprep.subr.mxu0 0.0
        %3815 = vmatpush1.msra.mxu0 0.0
        %3816 = vmatprep.subr.mxu0 0.0
        %3817 = vmatpush1.msra.mxu0 %v3782
        %3818 = vmatprep.subr.mxu0 0.0
        %3819 = vmatpush1.msra.mxu0 %v3781
        %3820 = vmatprep.subr.mxu0 0.0
        %3821 = vmatpush1.msra.mxu0 %v3780
        %3822 = vmatprep.subr.mxu0 0.0
        %3823 = vmatpush1.msra.mxu0 %v3779
        %3824 = vmatprep.subr.mxu0 0.0
        %3825 = vmatpush2.msra.mxu0 0.0
        %3826 = vmatprep.subr.mxu0 0.0
        %3827 = vmatpush2.msra.mxu0 0.0
        %3828 = vmatprep.subr.mxu0 0.0
        %3829 = vmatpush2.msra.mxu0 0.0
        %3830 = vmatprep.subr.mxu0 0.0
        %3831 = vmatpush2.msra.mxu0 0.0
        %3832 = vmatprep.subr.mxu0 0.0
        %3833 = vmatpush2.msra.mxu0 0.0
        %3834 = vmatprep.subr.mxu0 0.0
        %3835 = vmatpush2.msra.mxu0 0.0
        %3836 = vmatprep.subr.mxu0 0.0
        %3837 = vmatpush2.msra.mxu0 0.0
        %3838 = vmatprep.subr.mxu0 0.0
        %3839 = vmatpush2.msra.mxu0 0.0
        %3840 = vmatprep.subr.mxu0 0.0
        %3841 = vmatpush2.msra.mxu0 0.0
        %3842 = vmatprep.subr.mxu0 0.0
        %3843 = vmatpush2.msra.mxu0 0.0
        %3844 = vmatprep.subr.mxu0 0.0
        %3845 = vmatpush2.msra.mxu0 0.0
        %3846 = vmatprep.subr.mxu0 0.0
        %3847 = vmatpush2.msra.mxu0 0.0
        %3848 = vmatprep.subr.mxu0 0.0
        %3849 = vmatpush2.msra.mxu0 0.0
        %3850 = vmatprep.subr.mxu0 0.0
        %3851 = vmatpush2.msra.mxu0 0.0
        %3852 = vmatprep.subr.mxu0 0.0
        %3853 = vmatpush2.msra.mxu0 0.0
        %3854 = vmatprep.subr.mxu0 0.0
        %3855 = vmatpush2.msra.mxu0 0.0
        %3856 = vmatprep.mubr.f32.mxu0 0.0
        %3857 = vmatmul.mubr.f32.gmra.mxu0 %v3790
        %v3858 = vpop.f32.mrf.mxu0
        %v3859 = vadd.f32 %v3788, %v3858
        %v3860 = vpop.f32.mrf.mxu0
        %3861 = vdwg.mxu0
        // Predicated region
        $region261: #{hvrnn_prednet_forward.1} parent=179 // pred_check
          %p3862 = pneg %p2950
        $region262: #{hvrnn_prednet_forward.1} parent=179 // pred_check_branch
          %3864 = sbr.rel (%p3862) target = $region264
        $region263: #{hvrnn_prednet_forward.1} parent=179 // pred_region
          %v3865 = vld [vmem:[#allocation6] sm:$0x3]
          %v3866 = vld [vmem:[#allocation7] sm:$0x3]
          %v3867 = vld [vmem:[%s41] sm:$0xff]
          %v3868 = vld [vmem:[%s41 + $0x8] sm:$0xff]
          %v3869 = vld [vmem:[%s41 + $0x10] sm:$0xff]
          %v3870 = vld [vmem:[%s41 + $0x18] sm:$0xff]
          %v3871 = vld [vmem:[%s41 + $0x20] sm:$0xff]
          %v3872 = vld [vmem:[%s41 + $0x28] sm:$0xff]
          %v3873 = vld [vmem:[%s41 + $0x30] sm:$0xff]
          %v3874 = vld [vmem:[%s41 + $0x38] sm:$0xff]
          %v3875 = vld [vmem:[%s41 + $0x40] sm:$0xff]
          %v3876 = vld [vmem:[%s41 + $0x48] sm:$0xff]
          %v3877 = vld [vmem:[%s41 + $0x50] sm:$0xff]
          %v3878 = vld [vmem:[%s41 + $0x58] sm:$0xff]
          %v3879 = vld [vmem:[%s41 + $0x60] sm:$0xff]
          %v3880 = vld [vmem:[%s41 + $0x68] sm:$0xff]
          %v3881 = vld [vmem:[%s41 + $0x70] sm:$0xff]
          %v3882 = vld [vmem:[%s41 + $0x78] sm:$0xff]
          %v3883 = vld [vmem:[%s41 + $0x80] sm:$0xff]
          %v3884 = vld [vmem:[%s41 + $0x88] sm:$0xff]
          %v3885 = vld [vmem:[%s41 + $0x90] sm:$0xff]
          %v3886 = vld [vmem:[%s41 + $0x98] sm:$0xff]
          %v3887 = vld [vmem:[%s41 + $0xa0] sm:$0xff]
          %v3888 = vld [vmem:[%s41 + $0xa8] sm:$0xff]
          %v3889 = vld [vmem:[%s41 + $0xb0] sm:$0xff]
          %v3890 = vld [vmem:[%s41 + $0xb8] sm:$0xff]
          %v3891 = vld [vmem:[%s41 + $0xc0] sm:$0xff]
          %v3892 = vld [vmem:[%s41 + $0xc8] sm:$0xff]
          %v3893 = vld [vmem:[%s41 + $0xd0] sm:$0xff]
          %v3894 = vld [vmem:[%s41 + $0xd8] sm:$0xff]
          %v3895 = vld [vmem:[%s41 + $0xe0] sm:$0xff]
          %v3896 = vld [vmem:[%s41 + $0xe8] sm:$0xff]
          %v3897 = vld [vmem:[%s41 + $0xf0] sm:$0xff]
          %v3898 = vld [vmem:[%s41 + $0xf8] sm:$0xff]
          %v3899 = vld [vmem:[#allocation19] sm:$0xff]
          %v3900 = vld [vmem:[#allocation19 + $0x8] sm:$0xff]
          %v3901 = vld [vmem:[#allocation19 + $0x10] sm:$0xff]
          %v3902 = vld [vmem:[#allocation19 + $0x18] sm:$0xff]
          %v3904 = vsel %vm2672, %v3865, 0
          %3906 = vmatprep.subr.mxu0 0.0
          %3907 = vmatpush1.msra.mxu0 0.0
          %3908 = vmatprep.subr.mxu0 0.0
          %3909 = vmatpush1.msra.mxu0 0.0
          %3910 = vmatprep.subr.mxu0 0.0
          %3911 = vmatpush1.msra.mxu0 0.0
          %3912 = vmatprep.subr.mxu0 0.0
          %3913 = vmatpush1.msra.mxu0 0.0
          %3914 = vmatprep.subr.mxu0 0.0
          %3915 = vmatpush1.msra.mxu0 0.0
          %3916 = vmatprep.subr.mxu0 0.0
          %3917 = vmatpush1.msra.mxu0 0.0
          %3918 = vmatprep.subr.mxu0 0.0
          %3919 = vmatpush1.msra.mxu0 0.0
          %3920 = vmatprep.subr.mxu0 0.0
          %3921 = vmatpush1.msra.mxu0 0.0
          %3922 = vmatprep.subr.mxu0 0.0
          %3923 = vmatpush1.msra.mxu0 0.0
          %3924 = vmatprep.subr.mxu0 0.0
          %3925 = vmatpush1.msra.mxu0 0.0
          %3926 = vmatprep.subr.mxu0 0.0
          %3927 = vmatpush1.msra.mxu0 0.0
          %3928 = vmatprep.subr.mxu0 0.0
          %3929 = vmatpush1.msra.mxu0 0.0
          %3930 = vmatprep.subr.mxu0 0.0
          %3931 = vmatpush1.msra.mxu0 %v3902
          %3932 = vmatprep.subr.mxu0 0.0
          %3933 = vmatpush1.msra.mxu0 %v3901
          %3934 = vmatprep.subr.mxu0 0.0
          %3935 = vmatpush1.msra.mxu0 %v3900
          %3936 = vmatprep.subr.mxu0 0.0
          %3937 = vmatpush1.msra.mxu0 %v3899
          %3938 = vmatprep.subr.mxu0 0.0
          %3939 = vmatpush2.msra.mxu0 0.0
          %3940 = vmatprep.subr.mxu0 0.0
          %3941 = vmatpush2.msra.mxu0 0.0
          %3942 = vmatprep.subr.mxu0 0.0
          %3943 = vmatpush2.msra.mxu0 0.0
          %3944 = vmatprep.subr.mxu0 0.0
          %3945 = vmatpush2.msra.mxu0 0.0
          %3946 = vmatprep.subr.mxu0 0.0
          %3947 = vmatpush2.msra.mxu0 0.0
          %3948 = vmatprep.subr.mxu0 0.0
          %3949 = vmatpush2.msra.mxu0 0.0
          %3950 = vmatprep.subr.mxu0 0.0
          %3951 = vmatpush2.msra.mxu0 0.0
          %3952 = vmatprep.subr.mxu0 0.0
          %3953 = vmatpush2.msra.mxu0 0.0
          %3954 = vmatprep.subr.mxu0 0.0
          %3955 = vmatpush2.msra.mxu0 0.0
          %3956 = vmatprep.subr.mxu0 0.0
          %3957 = vmatpush2.msra.mxu0 0.0
          %3958 = vmatprep.subr.mxu0 0.0
          %3959 = vmatpush2.msra.mxu0 0.0
          %3960 = vmatprep.subr.mxu0 0.0
          %3961 = vmatpush2.msra.mxu0 0.0
          %3962 = vmatprep.subr.mxu0 0.0
          %3963 = vmatpush2.msra.mxu0 0.0
          %3964 = vmatprep.subr.mxu0 0.0
          %3965 = vmatpush2.msra.mxu0 0.0
          %3966 = vmatprep.subr.mxu0 0.0
          %3967 = vmatpush2.msra.mxu0 0.0
          %3968 = vmatprep.subr.mxu0 0.0
          %3969 = vmatpush2.msra.mxu0 0.0
          %3970 = vmatprep.mubr.f32.mxu0 0.0
          %3971 = vmatmul.mubr.f32.gmra.mxu0 %v3904
          %v3972 = vpop.f32.mrf.mxu0
          %v3973 = vadd.f32 0.0, %v3972
          %v3974 = vpop.f32.mrf.mxu0
          %3975 = vdwg.mxu0
          %3976 = vmatprep.subr.mxu0 0.0
          %3977 = vmatpush1.msra.mxu0 %v3882
          %3978 = vmatprep.subr.mxu0 0.0
          %3979 = vmatpush1.msra.mxu0 %v3881
          %3980 = vmatprep.subr.mxu0 0.0
          %3981 = vmatpush1.msra.mxu0 %v3880
          %3982 = vmatprep.subr.mxu0 0.0
          %3983 = vmatpush1.msra.mxu0 %v3879
          %3984 = vmatprep.subr.mxu0 0.0
          %3985 = vmatpush1.msra.mxu0 %v3878
          %3986 = vmatprep.subr.mxu0 0.0
          %3987 = vmatpush1.msra.mxu0 %v3877
          %3988 = vmatprep.subr.mxu0 0.0
          %3989 = vmatpush1.msra.mxu0 %v3876
          %3990 = vmatprep.subr.mxu0 0.0
          %3991 = vmatpush1.msra.mxu0 %v3875
          %3992 = vmatprep.subr.mxu0 0.0
          %3993 = vmatpush1.msra.mxu0 %v3874
          %3994 = vmatprep.subr.mxu0 0.0
          %3995 = vmatpush1.msra.mxu0 %v3873
          %3996 = vmatprep.subr.mxu0 0.0
          %3997 = vmatpush1.msra.mxu0 %v3872
          %3998 = vmatprep.subr.mxu0 0.0
          %3999 = vmatpush1.msra.mxu0 %v3871
          %4000 = vmatprep.subr.mxu0 0.0
          %4001 = vmatpush1.msra.mxu0 %v3870
          %4002 = vmatprep.subr.mxu0 0.0
          %4003 = vmatpush1.msra.mxu0 %v3869
          %4004 = vmatprep.subr.mxu0 0.0
          %4005 = vmatpush1.msra.mxu0 %v3868
          %4006 = vmatprep.subr.mxu0 0.0
          %4007 = vmatpush1.msra.mxu0 %v3867
          %4008 = vmatprep.subr.mxu0 0.0
          %4009 = vmatpush2.msra.mxu0 %v3898
          %4010 = vmatprep.subr.mxu0 0.0
          %4011 = vmatpush2.msra.mxu0 %v3897
          %4012 = vmatprep.subr.mxu0 0.0
          %4013 = vmatpush2.msra.mxu0 %v3896
          %4014 = vmatprep.subr.mxu0 0.0
          %4015 = vmatpush2.msra.mxu0 %v3895
          %4016 = vmatprep.subr.mxu0 0.0
          %4017 = vmatpush2.msra.mxu0 %v3894
          %4018 = vmatprep.subr.mxu0 0.0
          %4019 = vmatpush2.msra.mxu0 %v3893
          %4020 = vmatprep.subr.mxu0 0.0
          %4021 = vmatpush2.msra.mxu0 %v3892
          %4022 = vmatprep.subr.mxu0 0.0
          %4023 = vmatpush2.msra.mxu0 %v3891
          %4024 = vmatprep.subr.mxu0 0.0
          %4025 = vmatpush2.msra.mxu0 %v3890
          %4026 = vmatprep.subr.mxu0 0.0
          %4027 = vmatpush2.msra.mxu0 %v3889
          %4028 = vmatprep.subr.mxu0 0.0
          %4029 = vmatpush2.msra.mxu0 %v3888
          %4030 = vmatprep.subr.mxu0 0.0
          %4031 = vmatpush2.msra.mxu0 %v3887
          %4032 = vmatprep.subr.mxu0 0.0
          %4033 = vmatpush2.msra.mxu0 %v3886
          %4034 = vmatprep.subr.mxu0 0.0
          %4035 = vmatpush2.msra.mxu0 %v3885
          %4036 = vmatprep.subr.mxu0 0.0
          %4037 = vmatpush2.msra.mxu0 %v3884
          %4038 = vmatprep.subr.mxu0 0.0
          %4039 = vmatpush2.msra.mxu0 %v3883
          %4040 = vmatprep.mubr.f32.mxu0 %v3660
          %4041 = vmatmul.mubr.f32.gmra.mxu0 %v3659
          %v4042 = vpop.f32.mrf.mxu0
          %v4043 = vadd.f32 %v3973, %v4042
          %v4044 = vpop.f32.mrf.mxu0
          %4045 = vdwg.mxu0
          %v4046 = vld [vmem:[#allocation21] sm:$0x1]
          %v4048 = vlaneseq
          %v4049 = vshrl.u32 %v4048, 7
          %v4050 = vsub.s32 0, %v4049
          %v4051 = vrot.slane %v4046, %v4050
          %v4053 = vadd.f32 %v4043, %v4051
          %v4054 = vxor.u32 %v4053, 2147483648
          %v4055 = vmul.f32 %v4054, 1.442695
          %v4056 = vpow.pop %v4055
          %v4057 = vadd.f32 %v4056, 1.0
          %v4058 = vrcp.pop %v4057
          %v4059 = vmul.f32 1.0, %v4058
          %v4060 = vtanh.pop %v4053
          %4062 = vrot.lane.b32.xlu0 %v3866, 32
          %v4063 = vpop.permute.xlu0 %4062
          %v4065 = vmul.f32 %v4059, %v4063
          %4067 = vrot.lane.b32.xlu0 %v4060, 64
          %v4068 = vpop.permute.xlu0 %4067
          %v4070 = vmul.f32 %v4059, %v4068
          %4072 = vrot.lane.b32.xlu0 %v4070, 32
          %v4073 = vpop.permute.xlu0 %4072
          %v4075 = vadd.f32 %v4065, %v4073
          %v4076 = vtanh.pop %v4075
          %4078 = vrot.lane.b32.xlu0 %v4076, 64
          %v4079 = vpop.permute.xlu0 %4078
          %v4081 = vmul.f32 %v4059, %v4079
          %4083 = vrot.lane.b32.xlu0 %v4081, 32
          %v4084 = vpop.permute.xlu0 %4083
          %4086 = vst.msk [vmem:[#allocation6] sm:$0x3] %vm2860, %v4084
          %4088 = vrot.lane.b32.xlu0 %v4075, 96
          %v4089 = vpop.permute.xlu0 %4088
          %4091 = vst.msk [vmem:[#allocation7] sm:$0x3] %vm2860, %v4089
          %v4092 = vld [vmem:[%s47] sm:$0xff]
          %v4093 = vld [vmem:[%s47 + $0x8] sm:$0xff]
          %v4094 = vld [vmem:[%s47 + $0x10] sm:$0xff]
          %v4095 = vld [vmem:[%s47 + $0x18] sm:$0xff]
          %v4096 = vld [vmem:[#allocation22] sm:$0x1]
          %v4098 = vlaneseq
          %v4099 = vshrl.u32 %v4098, 7
          %v4100 = vsub.s32 0, %v4099
          %v4101 = vrot.slane %v4096, %v4100
          %v4103 = vsel %vm2672, %v4084, 0
          %4105 = vmatprep.subr.mxu0 0.0
          %4106 = vmatpush1.msra.mxu0 0.0
          %4107 = vmatprep.subr.mxu0 0.0
          %4108 = vmatpush1.msra.mxu0 0.0
          %4109 = vmatprep.subr.mxu0 0.0
          %4110 = vmatpush1.msra.mxu0 0.0
          %4111 = vmatprep.subr.mxu0 0.0
          %4112 = vmatpush1.msra.mxu0 0.0
          %4113 = vmatprep.subr.mxu0 0.0
          %4114 = vmatpush1.msra.mxu0 0.0
          %4115 = vmatprep.subr.mxu0 0.0
          %4116 = vmatpush1.msra.mxu0 0.0
          %4117 = vmatprep.subr.mxu0 0.0
          %4118 = vmatpush1.msra.mxu0 0.0
          %4119 = vmatprep.subr.mxu0 0.0
          %4120 = vmatpush1.msra.mxu0 0.0
          %4121 = vmatprep.subr.mxu0 0.0
          %4122 = vmatpush1.msra.mxu0 0.0
          %4123 = vmatprep.subr.mxu0 0.0
          %4124 = vmatpush1.msra.mxu0 0.0
          %4125 = vmatprep.subr.mxu0 0.0
          %4126 = vmatpush1.msra.mxu0 0.0
          %4127 = vmatprep.subr.mxu0 0.0
          %4128 = vmatpush1.msra.mxu0 0.0
          %4129 = vmatprep.subr.mxu0 0.0
          %4130 = vmatpush1.msra.mxu0 %v4095
          %4131 = vmatprep.subr.mxu0 0.0
          %4132 = vmatpush1.msra.mxu0 %v4094
          %4133 = vmatprep.subr.mxu0 0.0
          %4134 = vmatpush1.msra.mxu0 %v4093
          %4135 = vmatprep.subr.mxu0 0.0
          %4136 = vmatpush1.msra.mxu0 %v4092
          %4137 = vmatprep.subr.mxu0 0.0
          %4138 = vmatpush2.msra.mxu0 0.0
          %4139 = vmatprep.subr.mxu0 0.0
          %4140 = vmatpush2.msra.mxu0 0.0
          %4141 = vmatprep.subr.mxu0 0.0
          %4142 = vmatpush2.msra.mxu0 0.0
          %4143 = vmatprep.subr.mxu0 0.0
          %4144 = vmatpush2.msra.mxu0 0.0
          %4145 = vmatprep.subr.mxu0 0.0
          %4146 = vmatpush2.msra.mxu0 0.0
          %4147 = vmatprep.subr.mxu0 0.0
          %4148 = vmatpush2.msra.mxu0 0.0
          %4149 = vmatprep.subr.mxu0 0.0
          %4150 = vmatpush2.msra.mxu0 0.0
          %4151 = vmatprep.subr.mxu0 0.0
          %4152 = vmatpush2.msra.mxu0 0.0
          %4153 = vmatprep.subr.mxu0 0.0
          %4154 = vmatpush2.msra.mxu0 0.0
          %4155 = vmatprep.subr.mxu0 0.0
          %4156 = vmatpush2.msra.mxu0 0.0
          %4157 = vmatprep.subr.mxu0 0.0
          %4158 = vmatpush2.msra.mxu0 0.0
          %4159 = vmatprep.subr.mxu0 0.0
          %4160 = vmatpush2.msra.mxu0 0.0
          %4161 = vmatprep.subr.mxu0 0.0
          %4162 = vmatpush2.msra.mxu0 0.0
          %4163 = vmatprep.subr.mxu0 0.0
          %4164 = vmatpush2.msra.mxu0 0.0
          %4165 = vmatprep.subr.mxu0 0.0
          %4166 = vmatpush2.msra.mxu0 0.0
          %4167 = vmatprep.subr.mxu0 0.0
          %4168 = vmatpush2.msra.mxu0 0.0
          %4169 = vmatprep.mubr.f32.mxu0 0.0
          %4170 = vmatmul.mubr.f32.gmra.mxu0 %v4103
          %v4171 = vpop.f32.mrf.mxu0
          %v4172 = vadd.f32 %v4101, %v4171
          %v4173 = vpop.f32.mrf.mxu0
          %4174 = vdwg.mxu0
          %vm4175 = vcmask 123904
          %4176 = vst.msk [vmem:[#allocation39] sm:$0x3] %vm4175, %v4172
        $region264: #{hvrnn_prednet_forward.1} parent=179 // pred_fallthru
          _
        %v4177 = vld [vmem:[#allocation8] sm:$0x3]
        %v4178 = vld [vmem:[#allocation9] sm:$0x3]
        %v4179 = vld [vmem:[%s61] sm:$0xff]
        %v4180 = vld [vmem:[#allocation28] sm:$0xff]
        %v4181 = vld [vmem:[#allocation28 + $0x8] sm:$0xff]
        %v4182 = vld [vmem:[#allocation28 + $0x10] sm:$0xff]
        %v4183 = vld [vmem:[#allocation28 + $0x18] sm:$0xff]
        %v4185 = vsel %vm2672, %v4177, 0
        %4187 = vmatprep.subr.mxu0 0.0
        %4188 = vmatpush1.msra.mxu0 0.0
        %4189 = vmatprep.subr.mxu0 0.0
        %4190 = vmatpush1.msra.mxu0 0.0
        %4191 = vmatprep.subr.mxu0 0.0
        %4192 = vmatpush1.msra.mxu0 0.0
        %4193 = vmatprep.subr.mxu0 0.0
        %4194 = vmatpush1.msra.mxu0 0.0
        %4195 = vmatprep.subr.mxu0 0.0
        %4196 = vmatpush1.msra.mxu0 0.0
        %4197 = vmatprep.subr.mxu0 0.0
        %4198 = vmatpush1.msra.mxu0 0.0
        %4199 = vmatprep.subr.mxu0 0.0
        %4200 = vmatpush1.msra.mxu0 0.0
        %4201 = vmatprep.subr.mxu0 0.0
        %4202 = vmatpush1.msra.mxu0 0.0
        %4203 = vmatprep.subr.mxu0 0.0
        %4204 = vmatpush1.msra.mxu0 0.0
        %4205 = vmatprep.subr.mxu0 0.0
        %4206 = vmatpush1.msra.mxu0 0.0
        %4207 = vmatprep.subr.mxu0 0.0
        %4208 = vmatpush1.msra.mxu0 0.0
        %4209 = vmatprep.subr.mxu0 0.0
        %4210 = vmatpush1.msra.mxu0 0.0
        %4211 = vmatprep.subr.mxu0 0.0
        %4212 = vmatpush1.msra.mxu0 %v4183
        %4213 = vmatprep.subr.mxu0 0.0
        %4214 = vmatpush1.msra.mxu0 %v4182
        %4215 = vmatprep.subr.mxu0 0.0
        %4216 = vmatpush1.msra.mxu0 %v4181
        %4217 = vmatprep.subr.mxu0 0.0
        %4218 = vmatpush1.msra.mxu0 %v4180
        %4219 = vmatprep.subr.mxu0 0.0
        %4220 = vmatpush2.msra.mxu0 0.0
        %4221 = vmatprep.subr.mxu0 0.0
        %4222 = vmatpush2.msra.mxu0 0.0
        %4223 = vmatprep.subr.mxu0 0.0
        %4224 = vmatpush2.msra.mxu0 0.0
        %4225 = vmatprep.subr.mxu0 0.0
        %4226 = vmatpush2.msra.mxu0 0.0
        %4227 = vmatprep.subr.mxu0 0.0
        %4228 = vmatpush2.msra.mxu0 0.0
        %4229 = vmatprep.subr.mxu0 0.0
        %4230 = vmatpush2.msra.mxu0 0.0
        %4231 = vmatprep.subr.mxu0 0.0
        %4232 = vmatpush2.msra.mxu0 0.0
        %4233 = vmatprep.subr.mxu0 0.0
        %4234 = vmatpush2.msra.mxu0 0.0
        %4235 = vmatprep.subr.mxu0 0.0
        %4236 = vmatpush2.msra.mxu0 0.0
        %4237 = vmatprep.subr.mxu0 0.0
        %4238 = vmatpush2.msra.mxu0 0.0
        %4239 = vmatprep.subr.mxu0 0.0
        %4240 = vmatpush2.msra.mxu0 0.0
        %4241 = vmatprep.subr.mxu0 0.0
        %4242 = vmatpush2.msra.mxu0 0.0
        %4243 = vmatprep.subr.mxu0 0.0
        %4244 = vmatpush2.msra.mxu0 0.0
        %4245 = vmatprep.subr.mxu0 0.0
        %4246 = vmatpush2.msra.mxu0 0.0
        %4247 = vmatprep.subr.mxu0 0.0
        %4248 = vmatpush2.msra.mxu0 0.0
        %4249 = vmatprep.subr.mxu0 0.0
        %4250 = vmatpush2.msra.mxu0 0.0
        %4251 = vmatprep.mubr.f32.mxu0 0.0
        %4252 = vmatmul.mubr.f32.gmra.mxu0 %v4185
        %v4253 = vpop.f32.mrf.mxu0
        %v4254 = vadd.f32 0.0, %v4253
        %v4255 = vpop.f32.mrf.mxu0
        %4256 = vdwg.mxu0
        %v4258 = vsel %vm3326, %v3859, 0
        %4260 = vmatprep.subr.mxu0 0.0
        %4261 = vmatpush1.msra.mxu0 0.0
        %4262 = vmatprep.subr.mxu0 0.0
        %4263 = vmatpush1.msra.mxu0 0.0
        %4264 = vmatprep.subr.mxu0 0.0
        %4265 = vmatpush1.msra.mxu0 0.0
        %4266 = vmatprep.subr.mxu0 0.0
        %4267 = vmatpush1.msra.mxu0 0.0
        %4268 = vmatprep.subr.mxu0 0.0
        %4269 = vmatpush1.msra.mxu0 0.0
        %4270 = vmatprep.subr.mxu0 0.0
        %4271 = vmatpush1.msra.mxu0 0.0
        %4272 = vmatprep.subr.mxu0 0.0
        %4273 = vmatpush1.msra.mxu0 0.0
        %4274 = vmatprep.subr.mxu0 0.0
        %4275 = vmatpush1.msra.mxu0 0.0
        %4276 = vmatprep.subr.mxu0 0.0
        %4277 = vmatpush1.msra.mxu0 0.0
        %4278 = vmatprep.subr.mxu0 0.0
        %4279 = vmatpush1.msra.mxu0 0.0
        %4280 = vmatprep.subr.mxu0 0.0
        %4281 = vmatpush1.msra.mxu0 0.0
        %4282 = vmatprep.subr.mxu0 0.0
        %4283 = vmatpush1.msra.mxu0 0.0
        %4284 = vmatprep.subr.mxu0 0.0
        %4285 = vmatpush1.msra.mxu0 0.0
        %4286 = vmatprep.subr.mxu0 0.0
        %4287 = vmatpush1.msra.mxu0 0.0
        %4288 = vmatprep.subr.mxu0 0.0
        %4289 = vmatpush1.msra.mxu0 0.0
        %4290 = vmatprep.subr.mxu0 0.0
        %4291 = vmatpush1.msra.mxu0 %v4179
        %4292 = vmatprep.subr.mxu0 0.0
        %4293 = vmatpush2.msra.mxu0 0.0
        %4294 = vmatprep.subr.mxu0 0.0
        %4295 = vmatpush2.msra.mxu0 0.0
        %4296 = vmatprep.subr.mxu0 0.0
        %4297 = vmatpush2.msra.mxu0 0.0
        %4298 = vmatprep.subr.mxu0 0.0
        %4299 = vmatpush2.msra.mxu0 0.0
        %4300 = vmatprep.subr.mxu0 0.0
        %4301 = vmatpush2.msra.mxu0 0.0
        %4302 = vmatprep.subr.mxu0 0.0
        %4303 = vmatpush2.msra.mxu0 0.0
        %4304 = vmatprep.subr.mxu0 0.0
        %4305 = vmatpush2.msra.mxu0 0.0
        %4306 = vmatprep.subr.mxu0 0.0
        %4307 = vmatpush2.msra.mxu0 0.0
        %4308 = vmatprep.subr.mxu0 0.0
        %4309 = vmatpush2.msra.mxu0 0.0
        %4310 = vmatprep.subr.mxu0 0.0
        %4311 = vmatpush2.msra.mxu0 0.0
        %4312 = vmatprep.subr.mxu0 0.0
        %4313 = vmatpush2.msra.mxu0 0.0
        %4314 = vmatprep.subr.mxu0 0.0
        %4315 = vmatpush2.msra.mxu0 0.0
        %4316 = vmatprep.subr.mxu0 0.0
        %4317 = vmatpush2.msra.mxu0 0.0
        %4318 = vmatprep.subr.mxu0 0.0
        %4319 = vmatpush2.msra.mxu0 0.0
        %4320 = vmatprep.subr.mxu0 0.0
        %4321 = vmatpush2.msra.mxu0 0.0
        %4322 = vmatprep.subr.mxu0 0.0
        %4323 = vmatpush2.msra.mxu0 0.0
        %4324 = vmatprep.mubr.f32.mxu0 0.0
        %4325 = vmatmul.mubr.f32.gmra.mxu0 %v4258
        %v4326 = vpop.f32.mrf.mxu0
        %v4327 = vadd.f32 %v4254, %v4326
        %v4328 = vpop.f32.mrf.mxu0
        %4329 = vdwg.mxu0
        %v4330 = vld [vmem:[#allocation30] sm:$0x1]
        %v4332 = vlaneseq
        %v4333 = vshrl.u32 %v4332, 7
        %v4334 = vsub.s32 0, %v4333
        %v4335 = vrot.slane %v4330, %v4334
        %v4337 = vadd.f32 %v4327, %v4335
        %v4338 = vxor.u32 %v4337, 2147483648
        %v4339 = vmul.f32 %v4338, 1.442695
        %v4340 = vpow.pop %v4339
        %v4341 = vadd.f32 %v4340, 1.0
        %v4342 = vrcp.pop %v4341
        %v4343 = vmul.f32 1.0, %v4342
        %v4344 = vtanh.pop %v4337
        %4346 = vrot.lane.b32.xlu0 %v4178, 32
        %v4347 = vpop.permute.xlu0 %4346
        %v4349 = vmul.f32 %v4343, %v4347
        %4351 = vrot.lane.b32.xlu0 %v4344, 64
        %v4352 = vpop.permute.xlu0 %4351
        %v4354 = vmul.f32 %v4343, %v4352
        %4356 = vrot.lane.b32.xlu0 %v4354, 32
        %v4357 = vpop.permute.xlu0 %4356
        %v4359 = vadd.f32 %v4349, %v4357
        %v4360 = vtanh.pop %v4359
        %4362 = vrot.lane.b32.xlu0 %v4360, 64
        %v4363 = vpop.permute.xlu0 %4362
        %v4365 = vmul.f32 %v4343, %v4363
        %4367 = vrot.lane.b32.xlu0 %v4365, 32
        %v4368 = vpop.permute.xlu0 %4367
        %4370 = vst.msk [vmem:[#allocation8] sm:$0x3] %vm2860, %v4368
        %4372 = vrot.lane.b32.xlu0 %v4359, 96
        %v4373 = vpop.permute.xlu0 %4372
        %4375 = vst.msk [vmem:[#allocation9] sm:$0x3] %vm2860, %v4373
        %v4376 = vld [vmem:[%s67] sm:$0xff]
        %v4377 = vld [vmem:[%s67 + $0x8] sm:$0xff]
        %v4378 = vld [vmem:[%s67 + $0x10] sm:$0xff]
        %v4379 = vld [vmem:[%s67 + $0x18] sm:$0xff]
        %v4380 = vld [vmem:[%s67 + $0x20] sm:$0xff]
        %v4381 = vld [vmem:[%s67 + $0x28] sm:$0xff]
        %v4382 = vld [vmem:[%s67 + $0x30] sm:$0xff]
        %v4383 = vld [vmem:[%s67 + $0x38] sm:$0xff]
        %v4384 = vld [vmem:[#allocation31] sm:$0x3]
        %v4386 = vlaneseq
        %v4387 = vshrl.u32 %v4386, 7
        %v4388 = vsub.s32 0, %v4387
        %v4389 = vrot.slane %v4384, %v4388
        %v4390 = vlaneseq
        %v4391 = vshrl.u32 %v4390, 7
        %v4392 = vsub.s32 1, %v4391
        %v4393 = vrot.slane %v4384, %v4392
        %v4396 = vsel %vm2672, %v4368, 0
        %4398 = vmatprep.subr.mxu0 0.0
        %4399 = vmatpush1.msra.mxu0 0.0
        %4400 = vmatprep.subr.mxu0 0.0
        %4401 = vmatpush1.msra.mxu0 0.0
        %4402 = vmatprep.subr.mxu0 0.0
        %4403 = vmatpush1.msra.mxu0 0.0
        %4404 = vmatprep.subr.mxu0 0.0
        %4405 = vmatpush1.msra.mxu0 0.0
        %4406 = vmatprep.subr.mxu0 0.0
        %4407 = vmatpush1.msra.mxu0 0.0
        %4408 = vmatprep.subr.mxu0 0.0
        %4409 = vmatpush1.msra.mxu0 0.0
        %4410 = vmatprep.subr.mxu0 0.0
        %4411 = vmatpush1.msra.mxu0 0.0
        %4412 = vmatprep.subr.mxu0 0.0
        %4413 = vmatpush1.msra.mxu0 0.0
        %4414 = vmatprep.subr.mxu0 0.0
        %4415 = vmatpush1.msra.mxu0 0.0
        %4416 = vmatprep.subr.mxu0 0.0
        %4417 = vmatpush1.msra.mxu0 0.0
        %4418 = vmatprep.subr.mxu0 0.0
        %4419 = vmatpush1.msra.mxu0 0.0
        %4420 = vmatprep.subr.mxu0 0.0
        %4421 = vmatpush1.msra.mxu0 0.0
        %4422 = vmatprep.subr.mxu0 %v4383
        %4423 = vmatpush1.msra.mxu0 %v4382
        %4424 = vmatprep.subr.mxu0 %v4381
        %4425 = vmatpush1.msra.mxu0 %v4380
        %4426 = vmatprep.subr.mxu0 %v4379
        %4427 = vmatpush1.msra.mxu0 %v4378
        %4428 = vmatprep.subr.mxu0 %v4377
        %4429 = vmatpush1.msra.mxu0 %v4376
        %4430 = vmatprep.subr.mxu0 0.0
        %4431 = vmatpush2.msra.mxu0 0.0
        %4432 = vmatprep.subr.mxu0 0.0
        %4433 = vmatpush2.msra.mxu0 0.0
        %4434 = vmatprep.subr.mxu0 0.0
        %4435 = vmatpush2.msra.mxu0 0.0
        %4436 = vmatprep.subr.mxu0 0.0
        %4437 = vmatpush2.msra.mxu0 0.0
        %4438 = vmatprep.subr.mxu0 0.0
        %4439 = vmatpush2.msra.mxu0 0.0
        %4440 = vmatprep.subr.mxu0 0.0
        %4441 = vmatpush2.msra.mxu0 0.0
        %4442 = vmatprep.subr.mxu0 0.0
        %4443 = vmatpush2.msra.mxu0 0.0
        %4444 = vmatprep.subr.mxu0 0.0
        %4445 = vmatpush2.msra.mxu0 0.0
        %4446 = vmatprep.subr.mxu0 0.0
        %4447 = vmatpush2.msra.mxu0 0.0
        %4448 = vmatprep.subr.mxu0 0.0
        %4449 = vmatpush2.msra.mxu0 0.0
        %4450 = vmatprep.subr.mxu0 0.0
        %4451 = vmatpush2.msra.mxu0 0.0
        %4452 = vmatprep.subr.mxu0 0.0
        %4453 = vmatpush2.msra.mxu0 0.0
        %4454 = vmatprep.subr.mxu0 0.0
        %4455 = vmatpush2.msra.mxu0 0.0
        %4456 = vmatprep.subr.mxu0 0.0
        %4457 = vmatpush2.msra.mxu0 0.0
        %4458 = vmatprep.subr.mxu0 0.0
        %4459 = vmatpush2.msra.mxu0 0.0
        %4460 = vmatprep.subr.mxu0 0.0
        %4461 = vmatpush2.msra.mxu0 0.0
        %4462 = vmatprep.mubr.f32.mxu0 0.0
        %4463 = vmatmul.mubr.f32.gmra.mxu0 %v4396
        %v4464 = vpop.f32.mrf.mxu0
        %v4465 = vadd.f32 %v4389, %v4464
        %v4466 = vpop.f32.mrf.mxu0
        %v4467 = vadd.f32 %v4393, %v4466
        %4468 = vdwg.mxu0
        %v4469 = vxor.u32 %v4465, 2147483648
        %v4470 = vxor.u32 %v4467, 2147483648
        %v4471 = vmul.f32 %v4469, 1.442695
        %v4472 = vpow.pop %v4471
        %v4473 = vmul.f32 %v4470, 1.442695
        %v4474 = vpow.pop %v4473
        %v4475 = vadd.f32 %v4472, 1.0
        %v4476 = vadd.f32 %v4474, 1.0
        %v4477 = vrcp.pop %v4475
        %v4478 = vmul.f32 1.0, %v4477
        %v4479 = vrcp.pop %v4476
        %v4480 = vmul.f32 1.0, %v4479
        %v4483 = vcombine.low %v4478, %v4480
        %v4485 = vunpack.c.l.s4 1983009808
        %v4486 = vunpack.c.0.s8 %v4485
        %v4487 = vlaneseq
        %v4488 = vshrl.u32 %v4487, 7
        %v4489 = vsub.s32 %v4486, %v4488
        %v4490 = vrot.slane %v4483, %v4489
        %4492 = vst [vmem:[%s81] sm:$0xf] %v4490
        %v4493 = vld [vmem:[%s1482] sm:$0xf]
        %v4494 = vsub.f32 %v4493, %v4490
        %v4495 = vand.u32 2147483647, %v4494
        %v4496 = vld [vmem:[%s5] sm:$0xff]
        %v4497 = vld [vmem:[%s5 + $0x8] sm:$0xff]
        %v4498 = vld [vmem:[%s5 + $0x10] sm:$0xff]
        %v4499 = vld [vmem:[%s5 + $0x18] sm:$0xff]
        %v4500 = vld [vmem:[%s5 + $0x20] sm:$0xff]
        %v4501 = vld [vmem:[%s5 + $0x28] sm:$0xff]
        %v4502 = vld [vmem:[%s5 + $0x30] sm:$0xff]
        %v4503 = vld [vmem:[%s5 + $0x38] sm:$0xff]
        %v4504 = vld [vmem:[%s5 + $0x40] sm:$0xff]
        %v4505 = vld [vmem:[%s5 + $0x48] sm:$0xff]
        %v4506 = vld [vmem:[%s5 + $0x50] sm:$0xff]
        %v4507 = vld [vmem:[%s5 + $0x58] sm:$0xff]
        %v4508 = vld [vmem:[%s5 + $0x60] sm:$0xff]
        %v4509 = vld [vmem:[%s5 + $0x68] sm:$0xff]
        %v4510 = vld [vmem:[%s5 + $0x70] sm:$0xff]
        %v4511 = vld [vmem:[%s5 + $0x78] sm:$0xff]
        %v4512 = vld [vmem:[%s5 + $0x80] sm:$0xff]
        %v4513 = vld [vmem:[%s5 + $0x88] sm:$0xff]
        %v4514 = vld [vmem:[%s5 + $0x90] sm:$0xff]
        %v4515 = vld [vmem:[%s5 + $0x98] sm:$0xff]
        %v4516 = vld [vmem:[%s5 + $0xa0] sm:$0xff]
        %v4517 = vld [vmem:[%s5 + $0xa8] sm:$0xff]
        %v4518 = vld [vmem:[%s5 + $0xb0] sm:$0xff]
        %v4519 = vld [vmem:[%s5 + $0xb8] sm:$0xff]
        %v4520 = vld [vmem:[%s5 + $0xc0] sm:$0xff]
        %v4521 = vld [vmem:[%s5 + $0xc8] sm:$0xff]
        %v4522 = vld [vmem:[%s5 + $0xd0] sm:$0xff]
        %v4523 = vld [vmem:[%s5 + $0xd8] sm:$0xff]
        %v4524 = vld [vmem:[%s5 + $0xe0] sm:$0xff]
        %v4525 = vld [vmem:[%s5 + $0xe8] sm:$0xff]
        %v4526 = vld [vmem:[%s5 + $0xf0] sm:$0xff]
        %v4527 = vld [vmem:[%s5 + $0xf8] sm:$0xff]
        %v4528 = vld [vmem:[%s5 + $0x100] sm:$0xff]
        %v4529 = vld [vmem:[%s5 + $0x108] sm:$0xff]
        %v4530 = vld [vmem:[%s5 + $0x110] sm:$0xff]
        %v4531 = vld [vmem:[%s5 + $0x118] sm:$0xff]
        %v4532 = vld [vmem:[%s5 + $0x120] sm:$0xff]
        %v4533 = vld [vmem:[%s5 + $0x128] sm:$0xff]
        %v4534 = vld [vmem:[%s5 + $0x130] sm:$0xff]
        %v4535 = vld [vmem:[%s5 + $0x138] sm:$0xff]
        %v4536 = vld [vmem:[%s5 + $0x140] sm:$0xff]
        %v4537 = vld [vmem:[%s5 + $0x148] sm:$0xff]
        %v4538 = vld [vmem:[%s5 + $0x150] sm:$0xff]
        %v4539 = vld [vmem:[%s5 + $0x158] sm:$0xff]
        %v4540 = vld [vmem:[%s5 + $0x160] sm:$0xff]
        %v4541 = vld [vmem:[%s5 + $0x168] sm:$0xff]
        %v4542 = vld [vmem:[%s5 + $0x170] sm:$0xff]
        %v4543 = vld [vmem:[%s5 + $0x178] sm:$0xff]
        %v4544 = vld [vmem:[%s5 + $0x180] sm:$0xff]
        %v4545 = vld [vmem:[%s5 + $0x188] sm:$0xff]
        %v4546 = vld [vmem:[%s5 + $0x190] sm:$0xff]
        %v4547 = vld [vmem:[%s5 + $0x198] sm:$0xff]
        %v4548 = vld [vmem:[%s5 + $0x1a0] sm:$0xff]
        %v4549 = vld [vmem:[%s5 + $0x1a8] sm:$0xff]
        %v4550 = vld [vmem:[%s5 + $0x1b0] sm:$0xff]
        %v4551 = vld [vmem:[%s5 + $0x1b8] sm:$0xff]
        %v4552 = vld [vmem:[%s5 + $0x1c0] sm:$0xff]
        %v4553 = vld [vmem:[%s5 + $0x1c8] sm:$0xff]
        %v4554 = vld [vmem:[%s5 + $0x1d0] sm:$0xff]
        %v4555 = vld [vmem:[%s5 + $0x1d8] sm:$0xff]
        %v4556 = vld [vmem:[%s5 + $0x1e0] sm:$0xff]
        %v4557 = vld [vmem:[%s5 + $0x1e8] sm:$0xff]
        %v4558 = vld [vmem:[%s5 + $0x1f0] sm:$0xff]
        %v4559 = vld [vmem:[%s5 + $0x1f8] sm:$0xff]
        %v4560 = vld [vmem:[%s7] sm:$0x3]
        %v4562 = vlaneseq
        %v4563 = vshrl.u32 %v4562, 7
        %v4564 = vsub.s32 0, %v4563
        %v4565 = vrot.slane %v4560, %v4564
        %v4566 = vlaneseq
        %v4567 = vshrl.u32 %v4566, 7
        %v4568 = vsub.s32 1, %v4567
        %v4569 = vrot.slane %v4560, %v4568
        %v4574 = vunpack.c.l.s4 1983009808
        %v4575 = vunpack.c.0.s8 %v4574
        %v4576 = vlaneseq
        %v4577 = vshrl.u32 %v4576, 7
        %v4578 = vsub.s32 %v4575, %v4577
        %v4579 = vrot.slane %v4495, %v4578
        %v4580 = vcombine.high %v4579, %v4579
        %4583 = vmatprep.subr.mxu0 %v4527
        %4584 = vmatpush1.msra.mxu0 %v4526
        %4585 = vmatprep.subr.mxu0 %v4525
        %4586 = vmatpush1.msra.mxu0 %v4524
        %4587 = vmatprep.subr.mxu0 %v4523
        %4588 = vmatpush1.msra.mxu0 %v4522
        %4589 = vmatprep.subr.mxu0 %v4521
        %4590 = vmatpush1.msra.mxu0 %v4520
        %4591 = vmatprep.subr.mxu0 %v4519
        %4592 = vmatpush1.msra.mxu0 %v4518
        %4593 = vmatprep.subr.mxu0 %v4517
        %4594 = vmatpush1.msra.mxu0 %v4516
        %4595 = vmatprep.subr.mxu0 %v4515
        %4596 = vmatpush1.msra.mxu0 %v4514
        %4597 = vmatprep.subr.mxu0 %v4513
        %4598 = vmatpush1.msra.mxu0 %v4512
        %4599 = vmatprep.subr.mxu0 %v4511
        %4600 = vmatpush1.msra.mxu0 %v4510
        %4601 = vmatprep.subr.mxu0 %v4509
        %4602 = vmatpush1.msra.mxu0 %v4508
        %4603 = vmatprep.subr.mxu0 %v4507
        %4604 = vmatpush1.msra.mxu0 %v4506
        %4605 = vmatprep.subr.mxu0 %v4505
        %4606 = vmatpush1.msra.mxu0 %v4504
        %4607 = vmatprep.subr.mxu0 %v4503
        %4608 = vmatpush1.msra.mxu0 %v4502
        %4609 = vmatprep.subr.mxu0 %v4501
        %4610 = vmatpush1.msra.mxu0 %v4500
        %4611 = vmatprep.subr.mxu0 %v4499
        %4612 = vmatpush1.msra.mxu0 %v4498
        %4613 = vmatprep.subr.mxu0 %v4497
        %4614 = vmatpush1.msra.mxu0 %v4496
        %4615 = vmatprep.subr.mxu0 %v4559
        %4616 = vmatpush2.msra.mxu0 %v4558
        %4617 = vmatprep.subr.mxu0 %v4557
        %4618 = vmatpush2.msra.mxu0 %v4556
        %4619 = vmatprep.subr.mxu0 %v4555
        %4620 = vmatpush2.msra.mxu0 %v4554
        %4621 = vmatprep.subr.mxu0 %v4553
        %4622 = vmatpush2.msra.mxu0 %v4552
        %4623 = vmatprep.subr.mxu0 %v4551
        %4624 = vmatpush2.msra.mxu0 %v4550
        %4625 = vmatprep.subr.mxu0 %v4549
        %4626 = vmatpush2.msra.mxu0 %v4548
        %4627 = vmatprep.subr.mxu0 %v4547
        %4628 = vmatpush2.msra.mxu0 %v4546
        %4629 = vmatprep.subr.mxu0 %v4545
        %4630 = vmatpush2.msra.mxu0 %v4544
        %4631 = vmatprep.subr.mxu0 %v4543
        %4632 = vmatpush2.msra.mxu0 %v4542
        %4633 = vmatprep.subr.mxu0 %v4541
        %4634 = vmatpush2.msra.mxu0 %v4540
        %4635 = vmatprep.subr.mxu0 %v4539
        %4636 = vmatpush2.msra.mxu0 %v4538
        %4637 = vmatprep.subr.mxu0 %v4537
        %4638 = vmatpush2.msra.mxu0 %v4536
        %4639 = vmatprep.subr.mxu0 %v4535
        %4640 = vmatpush2.msra.mxu0 %v4534
        %4641 = vmatprep.subr.mxu0 %v4533
        %4642 = vmatpush2.msra.mxu0 %v4532
        %4643 = vmatprep.subr.mxu0 %v4531
        %4644 = vmatpush2.msra.mxu0 %v4530
        %4645 = vmatprep.subr.mxu0 %v4529
        %4646 = vmatpush2.msra.mxu0 %v4528
        %4647 = vmatprep.mubr.f32.mxu0 %v4580
        %4648 = vmatmul.mubr.f32.gmra.mxu0 %v4579
        %v4649 = vpop.f32.mrf.mxu0
        %v4650 = vadd.f32 %v4565, %v4649
        %v4651 = vpop.f32.mrf.mxu0
        %v4652 = vadd.f32 %v4569, %v4651
        %4653 = vdwg.mxu0
        %v4654 = vmax.f32 %v4650, 0.0
        %v4655 = vmax.f32 %v4652, 0.0
        %v4658 = vcombine.low %v4654, %v4655
        %v4660 = vunpack.c.l.s4 1983009808
        %v4661 = vunpack.c.0.s8 %v4660
        %v4662 = vlaneseq
        %v4663 = vshrl.u32 %v4662, 7
        %v4664 = vsub.s32 %v4661, %v4663
        %v4665 = vrot.slane %v4658, %v4664
        %4667 = vst [vmem:[#allocation2] sm:$0xf] %v4665
        %v4668 = vsub.f32 %v4654, %v3539
        %v4669 = vsub.f32 %v4655, %v3540
        %v4670 = vand.u32 2147483647, %v4668
        %v4671 = vand.u32 2147483647, %v4669
        %v4672 = vld [vmem:[%s9] sm:$0xff]
        %v4673 = vld [vmem:[%s9 + $0x8] sm:$0xff]
        %v4674 = vld [vmem:[%s9 + $0x10] sm:$0xff]
        %v4675 = vld [vmem:[%s9 + $0x18] sm:$0xff]
        %v4676 = vld [vmem:[%s9 + $0x20] sm:$0xff]
        %v4677 = vld [vmem:[%s9 + $0x28] sm:$0xff]
        %v4678 = vld [vmem:[%s9 + $0x30] sm:$0xff]
        %v4679 = vld [vmem:[%s9 + $0x38] sm:$0xff]
        %v4680 = vld [vmem:[%s9 + $0x40] sm:$0xff]
        %v4681 = vld [vmem:[%s9 + $0x48] sm:$0xff]
        %v4682 = vld [vmem:[%s9 + $0x50] sm:$0xff]
        %v4683 = vld [vmem:[%s9 + $0x58] sm:$0xff]
        %v4684 = vld [vmem:[%s9 + $0x60] sm:$0xff]
        %v4685 = vld [vmem:[%s9 + $0x68] sm:$0xff]
        %v4686 = vld [vmem:[%s9 + $0x70] sm:$0xff]
        %v4687 = vld [vmem:[%s9 + $0x78] sm:$0xff]
        %v4688 = vld [vmem:[%s9 + $0x80] sm:$0xff]
        %v4689 = vld [vmem:[%s9 + $0x88] sm:$0xff]
        %v4690 = vld [vmem:[%s9 + $0x90] sm:$0xff]
        %v4691 = vld [vmem:[%s9 + $0x98] sm:$0xff]
        %v4692 = vld [vmem:[%s9 + $0xa0] sm:$0xff]
        %v4693 = vld [vmem:[%s9 + $0xa8] sm:$0xff]
        %v4694 = vld [vmem:[%s9 + $0xb0] sm:$0xff]
        %v4695 = vld [vmem:[%s9 + $0xb8] sm:$0xff]
        %v4696 = vld [vmem:[%s9 + $0xc0] sm:$0xff]
        %v4697 = vld [vmem:[%s9 + $0xc8] sm:$0xff]
        %v4698 = vld [vmem:[%s9 + $0xd0] sm:$0xff]
        %v4699 = vld [vmem:[%s9 + $0xd8] sm:$0xff]
        %v4700 = vld [vmem:[%s9 + $0xe0] sm:$0xff]
        %v4701 = vld [vmem:[%s9 + $0xe8] sm:$0xff]
        %v4702 = vld [vmem:[%s9 + $0xf0] sm:$0xff]
        %v4703 = vld [vmem:[%s9 + $0xf8] sm:$0xff]
        %v4704 = vld [vmem:[%s11] sm:$0x1]
        %v4706 = vlaneseq
        %v4707 = vshrl.u32 %v4706, 7
        %v4708 = vsub.s32 0, %v4707
        %v4709 = vrot.slane %v4704, %v4708
        %4711 = vmatprep.subr.mxu0 0.0
        %4712 = vmatpush1.msra.mxu0 %v4687
        %4713 = vmatprep.subr.mxu0 0.0
        %4714 = vmatpush1.msra.mxu0 %v4686
        %4715 = vmatprep.subr.mxu0 0.0
        %4716 = vmatpush1.msra.mxu0 %v4685
        %4717 = vmatprep.subr.mxu0 0.0
        %4718 = vmatpush1.msra.mxu0 %v4684
        %4719 = vmatprep.subr.mxu0 0.0
        %4720 = vmatpush1.msra.mxu0 %v4683
        %4721 = vmatprep.subr.mxu0 0.0
        %4722 = vmatpush1.msra.mxu0 %v4682
        %4723 = vmatprep.subr.mxu0 0.0
        %4724 = vmatpush1.msra.mxu0 %v4681
        %4725 = vmatprep.subr.mxu0 0.0
        %4726 = vmatpush1.msra.mxu0 %v4680
        %4727 = vmatprep.subr.mxu0 0.0
        %4728 = vmatpush1.msra.mxu0 %v4679
        %4729 = vmatprep.subr.mxu0 0.0
        %4730 = vmatpush1.msra.mxu0 %v4678
        %4731 = vmatprep.subr.mxu0 0.0
        %4732 = vmatpush1.msra.mxu0 %v4677
        %4733 = vmatprep.subr.mxu0 0.0
        %4734 = vmatpush1.msra.mxu0 %v4676
        %4735 = vmatprep.subr.mxu0 0.0
        %4736 = vmatpush1.msra.mxu0 %v4675
        %4737 = vmatprep.subr.mxu0 0.0
        %4738 = vmatpush1.msra.mxu0 %v4674
        %4739 = vmatprep.subr.mxu0 0.0
        %4740 = vmatpush1.msra.mxu0 %v4673
        %4741 = vmatprep.subr.mxu0 0.0
        %4742 = vmatpush1.msra.mxu0 %v4672
        %4743 = vmatprep.subr.mxu0 0.0
        %4744 = vmatpush2.msra.mxu0 %v4703
        %4745 = vmatprep.subr.mxu0 0.0
        %4746 = vmatpush2.msra.mxu0 %v4702
        %4747 = vmatprep.subr.mxu0 0.0
        %4748 = vmatpush2.msra.mxu0 %v4701
        %4749 = vmatprep.subr.mxu0 0.0
        %4750 = vmatpush2.msra.mxu0 %v4700
        %4751 = vmatprep.subr.mxu0 0.0
        %4752 = vmatpush2.msra.mxu0 %v4699
        %4753 = vmatprep.subr.mxu0 0.0
        %4754 = vmatpush2.msra.mxu0 %v4698
        %4755 = vmatprep.subr.mxu0 0.0
        %4756 = vmatpush2.msra.mxu0 %v4697
        %4757 = vmatprep.subr.mxu0 0.0
        %4758 = vmatpush2.msra.mxu0 %v4696
        %4759 = vmatprep.subr.mxu0 0.0
        %4760 = vmatpush2.msra.mxu0 %v4695
        %4761 = vmatprep.subr.mxu0 0.0
        %4762 = vmatpush2.msra.mxu0 %v4694
        %4763 = vmatprep.subr.mxu0 0.0
        %4764 = vmatpush2.msra.mxu0 %v4693
        %4765 = vmatprep.subr.mxu0 0.0
        %4766 = vmatpush2.msra.mxu0 %v4692
        %4767 = vmatprep.subr.mxu0 0.0
        %4768 = vmatpush2.msra.mxu0 %v4691
        %4769 = vmatprep.subr.mxu0 0.0
        %4770 = vmatpush2.msra.mxu0 %v4690
        %4771 = vmatprep.subr.mxu0 0.0
        %4772 = vmatpush2.msra.mxu0 %v4689
        %4773 = vmatprep.subr.mxu0 0.0
        %4774 = vmatpush2.msra.mxu0 %v4688
        %4775 = vmatprep.mubr.f32.mxu0 %v4671
        %4776 = vmatmul.mubr.f32.gmra.mxu0 %v4670
        %v4777 = vpop.f32.mrf.mxu0
        %v4778 = vadd.f32 %v4709, %v4777
        %v4779 = vpop.f32.mrf.mxu0
        %4780 = vdwg.mxu0
        %v4781 = vmax.f32 %v4778, 0.0
        %vm4782 = vcmask 517120
        %4783 = vst.msk [vmem:[#allocation3] sm:$0x3] %vm4782, %v4781
        // Predicated region
        $region265: #{hvrnn_prednet_forward.1} parent=179 // pred_check
          %p4784 = pneg %p967
        $region266: #{hvrnn_prednet_forward.1} parent=179 // pred_check_branch
          %4786 = sbr.rel (%p4784) target = $region268
        $region267: #{hvrnn_prednet_forward.1} parent=179 // pred_region
          _
        $region268: #{hvrnn_prednet_forward.1} parent=179 // pred_fallthru
          _
        // Predicated region
        $region269: #{hvrnn_prednet_forward.1} parent=179 // pred_check
          %p4787 = pneg %p988
        $region270: #{hvrnn_prednet_forward.1} parent=179 // pred_check_branch
          %4789 = sbr.rel (%p4787) target = $region272
        $region271: #{hvrnn_prednet_forward.1} parent=179 // pred_region
          %s4791 = ssub.s32 32, 32
          %4792 = vsyncadd [#allocation12], %s4791
          %s4794 = sshll.u32 [#allocation39], 4
          %s4795 = int_to_ptr.vmem [resolvable:$true] %s4794
          %4797 = dma.vmem_to_hbm [thread:$0]  %s4795, 32, %s83, [#allocation12]
        $region272: #{hvrnn_prednet_forward.1} parent=179 // pred_fallthru
          _
        // Predicated region
        $region273: #{hvrnn_prednet_forward.1} parent=179 // pred_check
          %p4798 = pneg %p1009
        $region274: #{hvrnn_prednet_forward.1} parent=179 // pred_check_branch
          %4800 = sbr.rel (%p4798) target = $region276
        $region275: #{hvrnn_prednet_forward.1} parent=179 // pred_region
          %s4802 = ssub.s32 32, 32
          %4803 = vsyncadd [#allocation41], %s4802
          %s4805 = sshll.u32 [#allocation40], 4
          %s4806 = int_to_ptr.vmem [resolvable:$true] %s4805
          %4808 = dma.vmem_to_hbm [thread:$0]  %s4806, 32, %s85, [#allocation41]
        $region276: #{hvrnn_prednet_forward.1} parent=179 // pred_fallthru
          _
        // Predicated region
        $region277: #{hvrnn_prednet_forward.1} parent=179 // pred_check
          %p4809 = pneg %p967
        $region278: #{hvrnn_prednet_forward.1} parent=179 // pred_check_branch
          %4811 = sbr.rel (%p4809) target = $region280
        $region279: #{hvrnn_prednet_forward.1} parent=179 // pred_region
          _
        $region280: #{hvrnn_prednet_forward.1} parent=179 // pred_fallthru
          _
        // Predicated region
        $region281: #{hvrnn_prednet_forward.1} parent=179 // pred_check
          %p4812 = pneg %p988
        $region282: #{hvrnn_prednet_forward.1} parent=179 // pred_check_branch
          %4814 = sbr.rel (%p4812) target = $region284
        $region283: #{hvrnn_prednet_forward.1} parent=179 // pred_region
          %4815 = dma.done [#allocation12], 32
        $region284: #{hvrnn_prednet_forward.1} parent=179 // pred_fallthru
          _
        // Predicated region
        $region285: #{hvrnn_prednet_forward.1} parent=179 // pred_check
          %p4816 = pneg %p1009
        $region286: #{hvrnn_prednet_forward.1} parent=179 // pred_check_branch
          %4818 = sbr.rel (%p4816) target = $region288
        $region287: #{hvrnn_prednet_forward.1} parent=179 // pred_region
          %4819 = dma.done [#allocation41], 32
        $region288: #{hvrnn_prednet_forward.1} parent=179 // pred_fallthru
          _
      $region180: #{hvrnn_prednet_forward.1} parent=5 // pred_fallthru
        _
      %p4820 = scmp.le.s32.totalorder 2, %s104
      // Predicated region
      $region289: #{hvrnn_prednet_forward.1} parent=5 // pred_check
        %p4821 = pneg %p4820
      $region290: #{hvrnn_prednet_forward.1} parent=5 // pred_check_branch
        %4823 = sbr.rel (%p4821) target = $region292
      $region291: #{hvrnn_prednet_forward.1} parent=5 // pred_region
        %s4824 = ssub.s32 %s104, 2
      $region292: #{hvrnn_prednet_forward.1} parent=5 // pred_fallthru
        _
    $region6: #{hvrnn_prednet_forward.1} parent=1 // loop_footer
      %s108 = sadd.s32 1, %s104
    $region7: #{hvrnn_prednet_forward.1} parent=1 // loop_footer_branch
      %103 = sbr.rel target = $region3
    $region8: #{hvrnn_prednet_forward.1} parent=1 // loop_exit
      _
    %4825 = vsyncpa [#allocation11], 1
    %s4826 = scalar_lea.sflag [#allocation11], 1
    %4827 = vsyncpa %s4826, 1
    %4828 = vsyncpa [#allocation14], 1
    %4829 = vsyncpa [#allocation17], 1
    %4830 = vsyncpa [#allocation20], 1
    %4831 = vsyncpa [#allocation23], 1
    %4832 = vsyncpa [#allocation26], 1
    %4833 = vsyncpa [#allocation29], 1
    %4834 = vsyncpa [#allocation32], 1
    %4835 = vsyncpa [#allocation35], 1
    %4836 = vsyncpa [#allocation38], 1
    %4837 = vsyncpa [#allocation12], 1
    %s4838 = scalar_lea.sflag [#allocation12], 1
    %4839 = vsyncpa %s4838, 1
    %4840 = vsyncpa [#allocation41], 1

</llo_original>
